<compile_context>
chip_gen: v6e
topology: v6e:2x2x1
jax: 0.10.0
libtpu: 0.0.40
codegen_flags: <defaults>
</compile_context>

<pallas_src>
import math

import jax
import jax.numpy as jnp
from jax import lax
from jax.experimental import pallas as pl
from jax.experimental.pallas import tpu as pltpu

HIDDEN = 768
INTER = 3072


def _gelu_exact(x):
    # x * 0.5 * (1 + erf(x / sqrt(2)))  -- matches torch's exact-erf gelu.
    return x * 0.5 * (1.0 + lax.erf(x * (1.0 / math.sqrt(2.0))))


def bert_intermediate_kernel(x_ref, w_ref, b_ref, o_ref):
    # x_ref: (tm, 768) compute_dtype, w_ref: (768, 3072) compute_dtype (VMEM-resident),
    # b_ref: (1, 3072) f32, o_ref: (tm, 3072) out_dtype.
    acc = jnp.dot(x_ref[...], w_ref[...], preferred_element_type=jnp.float32)
    acc = acc + b_ref[...]                                # f32 bias broadcast over rows
    o_ref[...] = _gelu_exact(acc).astype(o_ref.dtype)     # exact erf-GELU in f32


def bert_intermediate(hidden_states, weight_t, bias, *, tm=256,
                      compute_dtype=jnp.bfloat16, out_dtype=None):
    """hidden_states: [B, S, 768]; weight_t: [768, 3072] (transposed vs torch's [out,in]);
    bias: [3072]."""
    B, S, K = hidden_states.shape
    assert K == HIDDEN
    M = B * S
    # If tm < M it is a multiple of 8 (256); if M < tm, the block equals the full dim.
    tm = min(tm, M)
    if out_dtype is None:
        out_dtype = hidden_states.dtype

    x2d = hidden_states.reshape(M, K).astype(compute_dtype)
    w = weight_t.astype(compute_dtype)
    b2d = bias.reshape(1, INTER).astype(jnp.float32)

    grid = (pl.cdiv(M, tm),)

    bytes_accessed = (x2d.size * x2d.dtype.itemsize
                      + w.size * w.dtype.itemsize
                      + b2d.size * b2d.dtype.itemsize
                      + M * INTER * jnp.dtype(out_dtype).itemsize)
    cost = pl.CostEstimate(flops=2 * M * K * INTER,
                           transcendentals=M * INTER,
                           bytes_accessed=bytes_accessed)

    out2d = pl.pallas_call(
        bert_intermediate_kernel,
        out_shape=jax.ShapeDtypeStruct((M, INTER), out_dtype),
        grid_spec=pltpu.PrefetchScalarGridSpec(
            num_scalar_prefetch=0,
            grid=grid,
            in_specs=[
                pl.BlockSpec((tm, K), lambda i: (i, 0)),      # activation row tile
                pl.BlockSpec((K, INTER), lambda i: (0, 0)),   # whole weight, VMEM-resident
                pl.BlockSpec((1, INTER), lambda i: (0, 0)),   # bias, VMEM-resident
            ],
            out_specs=pl.BlockSpec((tm, INTER), lambda i: (i, 0)),
        ),
        compiler_params=pltpu.CompilerParams(
            dimension_semantics=("parallel",),        # megacore sharding over row tiles
            vmem_limit_bytes=48 * 1024 * 1024,
        ),
        cost_estimate=cost,
    )(x2d, w, b2d)

    return out2d.reshape(B, S, INTER)


def _reference_exact(hidden_states, weight_t, bias):
    y = jnp.einsum("bsk,kn->bsn", hidden_states, weight_t,
                   preferred_element_type=jnp.float32) + bias
    return y * 0.5 * (1.0 + lax.erf(y / math.sqrt(2.0)))


def _reference_matched(hidden_states, weight_t, bias, compute_dtype=jnp.bfloat16):
    # Same bf16 operand rounding as the kernel, f32 accumulation, f32 epilogue.
    y = jnp.einsum("bsk,kn->bsn",
                   hidden_states.astype(compute_dtype),
                   weight_t.astype(compute_dtype),
                   preferred_element_type=jnp.float32) + bias
    return y * 0.5 * (1.0 + lax.erf(y / math.sqrt(2.0)))


if __name__ == "__main__":
    key = jax.random.PRNGKey(0)
    k_x, k_w, k_b = jax.random.split(key, 3)

    B, S = 2, 8
    x = jax.random.normal(k_x, (B, S, HIDDEN), dtype=jnp.float32)

    # Deterministic "Linear(768, 3072)" params, torch-style uniform(-1/sqrt(768), 1/sqrt(768)).
    bound = 1.0 / math.sqrt(HIDDEN)
    # torch stores weight as [out, in]; we keep the transposed [in, out] layout for the kernel.
    weight_t = jax.random.uniform(k_w, (HIDDEN, INTER), dtype=jnp.float32,
                                  minval=-bound, maxval=bound)
    bias = jax.random.uniform(k_b, (INTER,), dtype=jnp.float32,
                              minval=-bound, maxval=bound)

    out = bert_intermediate(x, weight_t, bias)
    out = jax.block_until_ready(out)
    assert out.shape == (B, S, INTER)

    # Tight check vs. a reference that applies the same bf16 operand rounding.
    ref_matched = jax.block_until_ready(_reference_matched(x, weight_t, bias))
    assert jnp.allclose(out, ref_matched, atol=5e-3, rtol=5e-3), "mismatch vs matched reference"

    # Loose check vs. the exact f32 torch-equivalent reference (bf16 MXU error budget).
    ref_exact = jax.block_until_ready(_reference_exact(x, weight_t, bias))
    assert jnp.allclose(out, ref_exact, atol=5e-2, rtol=5e-2), "mismatch vs exact f32 reference"

    print("KERNEL_OK")
</pallas_src>

<mosaic_0001>
module attributes {stable_mosaic.version = 11 : i64} {
  func.func @bert_intermediate_kernel(%arg0: i32, %arg1: memref<16x768xbf16, #tpu.memory_space<vmem>>, %arg2: memref<768x3072xbf16, #tpu.memory_space<vmem>>, %arg3: memref<1x3072xf32, #tpu.memory_space<vmem>>, %arg4: memref<16x3072xf32, #tpu.memory_space<vmem>>) attributes {dimension_semantics = [#tpu.dimension_semantics<parallel>], iteration_bounds = array<i64: 1>, scalar_prefetch = 0 : i64, scratch_operands = 0 : i64, tpu.core_type = #tpu.core_type<tc>, window_params = [{transform_indices = @transform_0, window_bounds = array<i64: 16, 768>}, {pipeline_mode = #tpu.pipeline_mode<synchronous>, transform_indices = @transform_1, window_bounds = array<i64: 768, 3072>}, {pipeline_mode = #tpu.pipeline_mode<synchronous>, transform_indices = @transform_2, window_bounds = array<i64: 1, 3072>}, {transform_indices = @transform_3, window_bounds = array<i64: 16, 3072>}]} {
    %c0 = arith.constant 0 : index
    %c0_0 = arith.constant 0 : index
    %0 = vector.load %arg1[%c0, %c0_0] : memref<16x768xbf16, #tpu.memory_space<vmem>>, vector<16x768xbf16>
    %c0_1 = arith.constant 0 : index
    %c0_2 = arith.constant 0 : index
    %1 = vector.load %arg2[%c0_1, %c0_2] : memref<768x3072xbf16, #tpu.memory_space<vmem>>, vector<768x3072xbf16>
    %cst = arith.constant dense<0.000000e+00> : vector<16x3072xf32>
    %2 = tpu.matmul %0, %1, %cst {dimension_numbers = #tpu.dot_dimension_numbers<[1], [0], [0], [1], [0, 0, 1, 1], [], []>} : vector<16x768xbf16>, vector<768x3072xbf16>, vector<16x3072xf32> -> vector<16x3072xf32>
    %c0_3 = arith.constant 0 : index
    %c0_4 = arith.constant 0 : index
    %3 = vector.load %arg3[%c0_3, %c0_4] : memref<1x3072xf32, #tpu.memory_space<vmem>>, vector<1x3072xf32>
    %4 = vector.broadcast %3 : vector<1x3072xf32> to vector<16x3072xf32>
    %5 = arith.addf %2, %4 : vector<16x3072xf32>
    %cst_5 = arith.constant 5.000000e-01 : f32
    %6 = vector.broadcast %cst_5 : f32 to vector<16x3072xf32>
    %7 = arith.mulf %5, %6 : vector<16x3072xf32>
    %cst_6 = arith.constant 0.707106769 : f32
    %8 = vector.broadcast %cst_6 : f32 to vector<16x3072xf32>
    %9 = arith.mulf %5, %8 : vector<16x3072xf32>
    %10 = math.erf %9 : vector<16x3072xf32>
    %cst_7 = arith.constant 1.000000e+00 : f32
    %11 = vector.broadcast %cst_7 : f32 to vector<16x3072xf32>
    %12 = arith.addf %11, %10 : vector<16x3072xf32>
    %13 = arith.mulf %7, %12 : vector<16x3072xf32>
    %c0_8 = arith.constant 0 : index
    %c0_9 = arith.constant 0 : index
    %14 = vector.load %arg4[%c0_8, %c0_9] : memref<16x3072xf32, #tpu.memory_space<vmem>>, vector<16x3072xf32>
    tpu.vector_store %arg4[%c0_8, %c0_9], %13 {strides = array<i32>} : memref<16x3072xf32, #tpu.memory_space<vmem>>, vector<16x3072xf32>,
    return
  }
  func.func @transform_0(%arg0: i32) -> (i32, i32) {
    %c0_i32 = arith.constant 0 : i32
    %c0_i32_0 = arith.constant 0 : i32
    return %arg0, %c0_i32 : i32, i32
  }
  func.func @transform_1(%arg0: i32) -> (i32, i32) {
    %c0_i32 = arith.constant 0 : i32
    %c0_i32_0 = arith.constant 0 : i32
    %c0_i32_1 = arith.constant 0 : i32
    return %c0_i32, %c0_i32_0 : i32, i32
  }
  func.func @transform_2(%arg0: i32) -> (i32, i32) {
    %c0_i32 = arith.constant 0 : i32
    %c0_i32_0 = arith.constant 0 : i32
    %c0_i32_1 = arith.constant 0 : i32
    return %c0_i32, %c0_i32_0 : i32, i32
  }
  func.func @transform_3(%arg0: i32) -> (i32, i32) {
    %c0_i32 = arith.constant 0 : i32
    %c0_i32_0 = arith.constant 0 : i32
    return %arg0, %c0_i32 : i32, i32
  }
}

</mosaic_0001>

<llo_original>
// kernel: tpu_custom_call.1
$region0: #{tpu_custom_call.1}
  #allocation0 [shape = 'u32[]', space=smem, size = 0x4, offset = 0x4, fixed_abs, tag = 'smem constant byte address 0x4 - core index']
  #allocation1 [shape = 'u32[144,128]{1,0:T(1,128)}', space=vmem, size = 0x12000, scoped, tag = 'internal scratch']
  %s0 = inlined_call_operand.hbm [shape: bf16[16,768], index: 0, kind: input, shape index: {}]
  %s1 = inlined_call_operand.hbm [shape: bf16[768,3072], index: 1, kind: input, shape index: {}]
  %s2 = inlined_call_operand.hbm [shape: f32[1,3072], index: 2, kind: input, shape index: {}]
  %s3 = inlined_call_operand.hbm [shape: f32[16,3072], index: 3, kind: output, shape index: {}]
  %s4 = sld [smem:[#allocation0]]
  $region34: #{tpu_custom_call.1} parent=0
    _
  %s6 = ssub.s32 1, %s4
  %s7 = scalar_select 0, %s6, %s4
  $region1: #{tpu_custom_call.1} parent=0
    #allocation2 [shape = 'u8[24576]{0}', space=vmem, size = 0x6000, scoped, tag = 'input window, operand 0, single buffered']
    #allocation3 [shape = 's32[1]{0}', space=sflag, size = 0x4, scoped, tag = 'scoped memory for tpu_custom_call.1']
    #allocation4 [shape = 's32[1]{0}', space=sflag, size = 0x4, scoped, tag = 'scoped memory for tpu_custom_call.1']
    #allocation5 [shape = 'u8[4718592]{0}', space=vmem, size = 0x480000, scoped, tag = 'input window, operand 1, single buffered']
    #allocation6 [shape = 's32[1]{0}', space=sflag, size = 0x4, scoped, tag = 'scoped memory for tpu_custom_call.1']
    #allocation7 [shape = 'u8[12288]{0}', space=vmem, size = 0x3000, scoped, tag = 'input window, operand 2, single buffered']
    #allocation8 [shape = 'u8[196608]{0}', space=vmem, size = 0x30000, scoped, tag = 'output window, operand 0, single buffered']
    %8 = vsyncpa [#allocation3], 0
    %9 = vsyncpa [#allocation6], 0
    %10 = vsyncpa [#allocation4], 0
    // Predicated region
    $region2: #{tpu_custom_call.1} parent=1 // pred_check
      _
    $region3: #{tpu_custom_call.1} parent=1 // pred_check_branch
      %12 = sbr.rel (0) target = $region5
    $region4: #{tpu_custom_call.1} parent=1 // pred_region
      %s14 = ssub.s32 768, 768
      %15 = vsyncadd [#allocation3], %s14
      %s16 = sshll.u32 [#allocation2], 4
      %s17 = int_to_ptr.vmem [resolvable:$true] %s16
      %22 = dma.hbm_to_vmem [thread:$0]  %s0, 768, %s17, [#allocation3], 384, 384, 24
    $region5: #{tpu_custom_call.1} parent=1 // pred_fallthru
      _
    // Predicated region
    $region6: #{tpu_custom_call.1} parent=1 // pred_check
      _
    $region7: #{tpu_custom_call.1} parent=1 // pred_check_branch
      %24 = sbr.rel (0) target = $region9
    $region8: #{tpu_custom_call.1} parent=1 // pred_region
      %s26 = ssub.s32 147456, 147456
      %27 = vsyncadd [#allocation6], %s26
      %s28 = sshll.u32 [#allocation5], 4
      %s29 = int_to_ptr.vmem [resolvable:$true] %s28
      %34 = dma.hbm_to_vmem [thread:$0]  %s1, 147456, %s29, [#allocation6], 1536, 1536, 96
    $region9: #{tpu_custom_call.1} parent=1 // pred_fallthru
      _
    // Predicated region
    $region10: #{tpu_custom_call.1} parent=1 // pred_check
      _
    $region11: #{tpu_custom_call.1} parent=1 // pred_check_branch
      %36 = sbr.rel (0) target = $region13
    $region12: #{tpu_custom_call.1} parent=1 // pred_region
      %s38 = ssub.s32 384, 384
      %39 = vsyncadd [#allocation6], %s38
      %s41 = sshll.u32 [#allocation7], 4
      %s42 = int_to_ptr.vmem [resolvable:$true] %s41
      %44 = dma.hbm_to_vmem [thread:$0]  %s2, 384, %s42, [#allocation6]
    $region13: #{tpu_custom_call.1} parent=1 // pred_fallthru
      _
    // Predicated region
    $region14: #{tpu_custom_call.1} parent=1 // pred_check
      _
    $region15: #{tpu_custom_call.1} parent=1 // pred_check_branch
      %46 = sbr.rel (0) target = $region17
    $region16: #{tpu_custom_call.1} parent=1 // pred_region
      %47 = dma.done [#allocation3], 768
    $region17: #{tpu_custom_call.1} parent=1 // pred_fallthru
      _
    // Predicated region
    $region18: #{tpu_custom_call.1} parent=1 // pred_check
      _
    $region19: #{tpu_custom_call.1} parent=1 // pred_check_branch
      %49 = sbr.rel (0) target = $region21
    $region20: #{tpu_custom_call.1} parent=1 // pred_region
      %50 = dma.done [#allocation6], 147456
    $region21: #{tpu_custom_call.1} parent=1 // pred_fallthru
      _
    // Predicated region
    $region22: #{tpu_custom_call.1} parent=1 // pred_check
      _
    $region23: #{tpu_custom_call.1} parent=1 // pred_check_branch
      %52 = sbr.rel (0) target = $region25
    $region24: #{tpu_custom_call.1} parent=1 // pred_region
      %53 = dma.done [#allocation6], 384
    $region25: #{tpu_custom_call.1} parent=1 // pred_fallthru
      _
    %v54 = vld [vmem:[#allocation2] sm:$0xff]
    %v55 = vld [vmem:[#allocation2 + $0x8] sm:$0xff]
    %v56 = vld [vmem:[#allocation2 + $0x10] sm:$0xff]
    %v57 = vld [vmem:[#allocation2 + $0x18] sm:$0xff]
    %v58 = vld [vmem:[#allocation2 + $0x20] sm:$0xff]
    %v59 = vld [vmem:[#allocation2 + $0x28] sm:$0xff]
    %v60 = vld [vmem:[#allocation5] sm:$0xff]
    %v61 = vld [vmem:[#allocation5 + $0x8] sm:$0xff]
    %v62 = vld [vmem:[#allocation5 + $0x10] sm:$0xff]
    %v63 = vld [vmem:[#allocation5 + $0x18] sm:$0xff]
    %v64 = vld [vmem:[#allocation5 + $0x20] sm:$0xff]
    %v65 = vld [vmem:[#allocation5 + $0x28] sm:$0xff]
    %v66 = vld [vmem:[#allocation5 + $0x30] sm:$0xff]
    %v67 = vld [vmem:[#allocation5 + $0x38] sm:$0xff]
    %v68 = vld [vmem:[#allocation5 + $0x40] sm:$0xff]
    %v69 = vld [vmem:[#allocation5 + $0x48] sm:$0xff]
    %v70 = vld [vmem:[#allocation5 + $0x50] sm:$0xff]
    %v71 = vld [vmem:[#allocation5 + $0x58] sm:$0xff]
    %v72 = vld [vmem:[#allocation5 + $0x60] sm:$0xff]
    %v73 = vld [vmem:[#allocation5 + $0x68] sm:$0xff]
    %v74 = vld [vmem:[#allocation5 + $0x70] sm:$0xff]
    %v75 = vld [vmem:[#allocation5 + $0x78] sm:$0xff]
    %v76 = vld [vmem:[#allocation5 + $0x80] sm:$0xff]
    %v77 = vld [vmem:[#allocation5 + $0x88] sm:$0xff]
    %v78 = vld [vmem:[#allocation5 + $0x90] sm:$0xff]
    %v79 = vld [vmem:[#allocation5 + $0x98] sm:$0xff]
    %v80 = vld [vmem:[#allocation5 + $0xa0] sm:$0xff]
    %v81 = vld [vmem:[#allocation5 + $0xa8] sm:$0xff]
    %v82 = vld [vmem:[#allocation5 + $0xb0] sm:$0xff]
    %v83 = vld [vmem:[#allocation5 + $0xb8] sm:$0xff]
    %v84 = vld [vmem:[#allocation5 + $0xc0] sm:$0xff]
    %v85 = vld [vmem:[#allocation5 + $0xc8] sm:$0xff]
    %v86 = vld [vmem:[#allocation5 + $0xd0] sm:$0xff]
    %v87 = vld [vmem:[#allocation5 + $0xd8] sm:$0xff]
    %v88 = vld [vmem:[#allocation5 + $0xe0] sm:$0xff]
    %v89 = vld [vmem:[#allocation5 + $0xe8] sm:$0xff]
    %v90 = vld [vmem:[#allocation5 + $0xf0] sm:$0xff]
    %v91 = vld [vmem:[#allocation5 + $0xf8] sm:$0xff]
    %v92 = vld [vmem:[#allocation5 + $0x100] sm:$0xff]
    %v93 = vld [vmem:[#allocation5 + $0x108] sm:$0xff]
    %v94 = vld [vmem:[#allocation5 + $0x110] sm:$0xff]
    %v95 = vld [vmem:[#allocation5 + $0x118] sm:$0xff]
    %v96 = vld [vmem:[#allocation5 + $0x120] sm:$0xff]
    %v97 = vld [vmem:[#allocation5 + $0x128] sm:$0xff]
    %v98 = vld [vmem:[#allocation5 + $0x130] sm:$0xff]
    %v99 = vld [vmem:[#allocation5 + $0x138] sm:$0xff]
    %v100 = vld [vmem:[#allocation5 + $0x140] sm:$0xff]
    %v101 = vld [vmem:[#allocation5 + $0x148] sm:$0xff]
    %v102 = vld [vmem:[#allocation5 + $0x150] sm:$0xff]
    %v103 = vld [vmem:[#allocation5 + $0x158] sm:$0xff]
    %v104 = vld [vmem:[#allocation5 + $0x160] sm:$0xff]
    %v105 = vld [vmem:[#allocation5 + $0x168] sm:$0xff]
    %v106 = vld [vmem:[#allocation5 + $0x170] sm:$0xff]
    %v107 = vld [vmem:[#allocation5 + $0x178] sm:$0xff]
    %v108 = vld [vmem:[#allocation5 + $0x180] sm:$0xff]
    %v109 = vld [vmem:[#allocation5 + $0x188] sm:$0xff]
    %v110 = vld [vmem:[#allocation5 + $0x190] sm:$0xff]
    %v111 = vld [vmem:[#allocation5 + $0x198] sm:$0xff]
    %v112 = vld [vmem:[#allocation5 + $0x1a0] sm:$0xff]
    %v113 = vld [vmem:[#allocation5 + $0x1a8] sm:$0xff]
    %v114 = vld [vmem:[#allocation5 + $0x1b0] sm:$0xff]
    %v115 = vld [vmem:[#allocation5 + $0x1b8] sm:$0xff]
    %v116 = vld [vmem:[#allocation5 + $0x1c0] sm:$0xff]
    %v117 = vld [vmem:[#allocation5 + $0x1c8] sm:$0xff]
    %v118 = vld [vmem:[#allocation5 + $0x1d0] sm:$0xff]
    %v119 = vld [vmem:[#allocation5 + $0x1d8] sm:$0xff]
    %v120 = vld [vmem:[#allocation5 + $0x1e0] sm:$0xff]
    %v121 = vld [vmem:[#allocation5 + $0x1e8] sm:$0xff]
    %v122 = vld [vmem:[#allocation5 + $0x1f0] sm:$0xff]
    %v123 = vld [vmem:[#allocation5 + $0x1f8] sm:$0xff]
    %v124 = vld [vmem:[#allocation5 + $0x200] sm:$0xff]
    %v125 = vld [vmem:[#allocation5 + $0x208] sm:$0xff]
    %v126 = vld [vmem:[#allocation5 + $0x210] sm:$0xff]
    %v127 = vld [vmem:[#allocation5 + $0x218] sm:$0xff]
    %v128 = vld [vmem:[#allocation5 + $0x220] sm:$0xff]
    %v129 = vld [vmem:[#allocation5 + $0x228] sm:$0xff]
    %v130 = vld [vmem:[#allocation5 + $0x230] sm:$0xff]
    %v131 = vld [vmem:[#allocation5 + $0x238] sm:$0xff]
    %v132 = vld [vmem:[#allocation5 + $0x240] sm:$0xff]
    %v133 = vld [vmem:[#allocation5 + $0x248] sm:$0xff]
    %v134 = vld [vmem:[#allocation5 + $0x250] sm:$0xff]
    %v135 = vld [vmem:[#allocation5 + $0x258] sm:$0xff]
    %v136 = vld [vmem:[#allocation5 + $0x260] sm:$0xff]
    %v137 = vld [vmem:[#allocation5 + $0x268] sm:$0xff]
    %v138 = vld [vmem:[#allocation5 + $0x270] sm:$0xff]
    %v139 = vld [vmem:[#allocation5 + $0x278] sm:$0xff]
    %v140 = vld [vmem:[#allocation5 + $0x280] sm:$0xff]
    %v141 = vld [vmem:[#allocation5 + $0x288] sm:$0xff]
    %v142 = vld [vmem:[#allocation5 + $0x290] sm:$0xff]
    %v143 = vld [vmem:[#allocation5 + $0x298] sm:$0xff]
    %v144 = vld [vmem:[#allocation5 + $0x2a0] sm:$0xff]
    %v145 = vld [vmem:[#allocation5 + $0x2a8] sm:$0xff]
    %v146 = vld [vmem:[#allocation5 + $0x2b0] sm:$0xff]
    %v147 = vld [vmem:[#allocation5 + $0x2b8] sm:$0xff]
    %v148 = vld [vmem:[#allocation5 + $0x2c0] sm:$0xff]
    %v149 = vld [vmem:[#allocation5 + $0x2c8] sm:$0xff]
    %v150 = vld [vmem:[#allocation5 + $0x2d0] sm:$0xff]
    %v151 = vld [vmem:[#allocation5 + $0x2d8] sm:$0xff]
    %v152 = vld [vmem:[#allocation5 + $0x2e0] sm:$0xff]
    %v153 = vld [vmem:[#allocation5 + $0x2e8] sm:$0xff]
    %v154 = vld [vmem:[#allocation5 + $0x2f0] sm:$0xff]
    %v155 = vld [vmem:[#allocation5 + $0x2f8] sm:$0xff]
    %v156 = vld [vmem:[#allocation5 + $0x300] sm:$0xff]
    %v157 = vld [vmem:[#allocation5 + $0x308] sm:$0xff]
    %v158 = vld [vmem:[#allocation5 + $0x310] sm:$0xff]
    %v159 = vld [vmem:[#allocation5 + $0x318] sm:$0xff]
    %v160 = vld [vmem:[#allocation5 + $0x320] sm:$0xff]
    %v161 = vld [vmem:[#allocation5 + $0x328] sm:$0xff]
    %v162 = vld [vmem:[#allocation5 + $0x330] sm:$0xff]
    %v163 = vld [vmem:[#allocation5 + $0x338] sm:$0xff]
    %v164 = vld [vmem:[#allocation5 + $0x340] sm:$0xff]
    %v165 = vld [vmem:[#allocation5 + $0x348] sm:$0xff]
    %v166 = vld [vmem:[#allocation5 + $0x350] sm:$0xff]
    %v167 = vld [vmem:[#allocation5 + $0x358] sm:$0xff]
    %v168 = vld [vmem:[#allocation5 + $0x360] sm:$0xff]
    %v169 = vld [vmem:[#allocation5 + $0x368] sm:$0xff]
    %v170 = vld [vmem:[#allocation5 + $0x370] sm:$0xff]
    %v171 = vld [vmem:[#allocation5 + $0x378] sm:$0xff]
    %v172 = vld [vmem:[#allocation5 + $0x380] sm:$0xff]
    %v173 = vld [vmem:[#allocation5 + $0x388] sm:$0xff]
    %v174 = vld [vmem:[#allocation5 + $0x390] sm:$0xff]
    %v175 = vld [vmem:[#allocation5 + $0x398] sm:$0xff]
    %v176 = vld [vmem:[#allocation5 + $0x3a0] sm:$0xff]
    %v177 = vld [vmem:[#allocation5 + $0x3a8] sm:$0xff]
    %v178 = vld [vmem:[#allocation5 + $0x3b0] sm:$0xff]
    %v179 = vld [vmem:[#allocation5 + $0x3b8] sm:$0xff]
    %v180 = vld [vmem:[#allocation5 + $0x3c0] sm:$0xff]
    %v181 = vld [vmem:[#allocation5 + $0x3c8] sm:$0xff]
    %v182 = vld [vmem:[#allocation5 + $0x3d0] sm:$0xff]
    %v183 = vld [vmem:[#allocation5 + $0x3d8] sm:$0xff]
    %v184 = vld [vmem:[#allocation5 + $0x3e0] sm:$0xff]
    %v185 = vld [vmem:[#allocation5 + $0x3e8] sm:$0xff]
    %v186 = vld [vmem:[#allocation5 + $0x3f0] sm:$0xff]
    %v187 = vld [vmem:[#allocation5 + $0x3f8] sm:$0xff]
    %v188 = vld [vmem:[#allocation5 + $0x400] sm:$0xff]
    %v189 = vld [vmem:[#allocation5 + $0x408] sm:$0xff]
    %v190 = vld [vmem:[#allocation5 + $0x410] sm:$0xff]
    %v191 = vld [vmem:[#allocation5 + $0x418] sm:$0xff]
    %v192 = vld [vmem:[#allocation5 + $0x420] sm:$0xff]
    %v193 = vld [vmem:[#allocation5 + $0x428] sm:$0xff]
    %v194 = vld [vmem:[#allocation5 + $0x430] sm:$0xff]
    %v195 = vld [vmem:[#allocation5 + $0x438] sm:$0xff]
    %v196 = vld [vmem:[#allocation5 + $0x440] sm:$0xff]
    %v197 = vld [vmem:[#allocation5 + $0x448] sm:$0xff]
    %v198 = vld [vmem:[#allocation5 + $0x450] sm:$0xff]
    %v199 = vld [vmem:[#allocation5 + $0x458] sm:$0xff]
    %v200 = vld [vmem:[#allocation5 + $0x460] sm:$0xff]
    %v201 = vld [vmem:[#allocation5 + $0x468] sm:$0xff]
    %v202 = vld [vmem:[#allocation5 + $0x470] sm:$0xff]
    %v203 = vld [vmem:[#allocation5 + $0x478] sm:$0xff]
    %v204 = vld [vmem:[#allocation5 + $0x480] sm:$0xff]
    %v205 = vld [vmem:[#allocation5 + $0x488] sm:$0xff]
    %v206 = vld [vmem:[#allocation5 + $0x490] sm:$0xff]
    %v207 = vld [vmem:[#allocation5 + $0x498] sm:$0xff]
    %v208 = vld [vmem:[#allocation5 + $0x4a0] sm:$0xff]
    %v209 = vld [vmem:[#allocation5 + $0x4a8] sm:$0xff]
    %v210 = vld [vmem:[#allocation5 + $0x4b0] sm:$0xff]
    %v211 = vld [vmem:[#allocation5 + $0x4b8] sm:$0xff]
    %v212 = vld [vmem:[#allocation5 + $0x4c0] sm:$0xff]
    %v213 = vld [vmem:[#allocation5 + $0x4c8] sm:$0xff]
    %v214 = vld [vmem:[#allocation5 + $0x4d0] sm:$0xff]
    %v215 = vld [vmem:[#allocation5 + $0x4d8] sm:$0xff]
    %v216 = vld [vmem:[#allocation5 + $0x4e0] sm:$0xff]
    %v217 = vld [vmem:[#allocation5 + $0x4e8] sm:$0xff]
    %v218 = vld [vmem:[#allocation5 + $0x4f0] sm:$0xff]
    %v219 = vld [vmem:[#allocation5 + $0x4f8] sm:$0xff]
    %v220 = vld [vmem:[#allocation5 + $0x500] sm:$0xff]
    %v221 = vld [vmem:[#allocation5 + $0x508] sm:$0xff]
    %v222 = vld [vmem:[#allocation5 + $0x510] sm:$0xff]
    %v223 = vld [vmem:[#allocation5 + $0x518] sm:$0xff]
    %v224 = vld [vmem:[#allocation5 + $0x520] sm:$0xff]
    %v225 = vld [vmem:[#allocation5 + $0x528] sm:$0xff]
    %v226 = vld [vmem:[#allocation5 + $0x530] sm:$0xff]
    %v227 = vld [vmem:[#allocation5 + $0x538] sm:$0xff]
    %v228 = vld [vmem:[#allocation5 + $0x540] sm:$0xff]
    %v229 = vld [vmem:[#allocation5 + $0x548] sm:$0xff]
    %v230 = vld [vmem:[#allocation5 + $0x550] sm:$0xff]
    %v231 = vld [vmem:[#allocation5 + $0x558] sm:$0xff]
    %v232 = vld [vmem:[#allocation5 + $0x560] sm:$0xff]
    %v233 = vld [vmem:[#allocation5 + $0x568] sm:$0xff]
    %v234 = vld [vmem:[#allocation5 + $0x570] sm:$0xff]
    %v235 = vld [vmem:[#allocation5 + $0x578] sm:$0xff]
    %v236 = vld [vmem:[#allocation5 + $0x580] sm:$0xff]
    %v237 = vld [vmem:[#allocation5 + $0x588] sm:$0xff]
    %v238 = vld [vmem:[#allocation5 + $0x590] sm:$0xff]
    %v239 = vld [vmem:[#allocation5 + $0x598] sm:$0xff]
    %v240 = vld [vmem:[#allocation5 + $0x5a0] sm:$0xff]
    %v241 = vld [vmem:[#allocation5 + $0x5a8] sm:$0xff]
    %v242 = vld [vmem:[#allocation5 + $0x5b0] sm:$0xff]
    %v243 = vld [vmem:[#allocation5 + $0x5b8] sm:$0xff]
    %v244 = vld [vmem:[#allocation5 + $0x5c0] sm:$0xff]
    %v245 = vld [vmem:[#allocation5 + $0x5c8] sm:$0xff]
    %v246 = vld [vmem:[#allocation5 + $0x5d0] sm:$0xff]
    %v247 = vld [vmem:[#allocation5 + $0x5d8] sm:$0xff]
    %v248 = vld [vmem:[#allocation5 + $0x5e0] sm:$0xff]
    %v249 = vld [vmem:[#allocation5 + $0x5e8] sm:$0xff]
    %v250 = vld [vmem:[#allocation5 + $0x5f0] sm:$0xff]
    %v251 = vld [vmem:[#allocation5 + $0x5f8] sm:$0xff]
    %v252 = vld [vmem:[#allocation5 + $0x600] sm:$0xff]
    %v253 = vld [vmem:[#allocation5 + $0x608] sm:$0xff]
    %v254 = vld [vmem:[#allocation5 + $0x610] sm:$0xff]
    %v255 = vld [vmem:[#allocation5 + $0x618] sm:$0xff]
    %v256 = vld [vmem:[#allocation5 + $0x620] sm:$0xff]
    %v257 = vld [vmem:[#allocation5 + $0x628] sm:$0xff]
    %v258 = vld [vmem:[#allocation5 + $0x630] sm:$0xff]
    %v259 = vld [vmem:[#allocation5 + $0x638] sm:$0xff]
    %v260 = vld [vmem:[#allocation5 + $0x640] sm:$0xff]
    %v261 = vld [vmem:[#allocation5 + $0x648] sm:$0xff]
    %v262 = vld [vmem:[#allocation5 + $0x650] sm:$0xff]
    %v263 = vld [vmem:[#allocation5 + $0x658] sm:$0xff]
    %v264 = vld [vmem:[#allocation5 + $0x660] sm:$0xff]
    %v265 = vld [vmem:[#allocation5 + $0x668] sm:$0xff]
    %v266 = vld [vmem:[#allocation5 + $0x670] sm:$0xff]
    %v267 = vld [vmem:[#allocation5 + $0x678] sm:$0xff]
    %v268 = vld [vmem:[#allocation5 + $0x680] sm:$0xff]
    %v269 = vld [vmem:[#allocation5 + $0x688] sm:$0xff]
    %v270 = vld [vmem:[#allocation5 + $0x690] sm:$0xff]
    %v271 = vld [vmem:[#allocation5 + $0x698] sm:$0xff]
    %v272 = vld [vmem:[#allocation5 + $0x6a0] sm:$0xff]
    %v273 = vld [vmem:[#allocation5 + $0x6a8] sm:$0xff]
    %v274 = vld [vmem:[#allocation5 + $0x6b0] sm:$0xff]
    %v275 = vld [vmem:[#allocation5 + $0x6b8] sm:$0xff]
    %v276 = vld [vmem:[#allocation5 + $0x6c0] sm:$0xff]
    %v277 = vld [vmem:[#allocation5 + $0x6c8] sm:$0xff]
    %v278 = vld [vmem:[#allocation5 + $0x6d0] sm:$0xff]
    %v279 = vld [vmem:[#allocation5 + $0x6d8] sm:$0xff]
    %v280 = vld [vmem:[#allocation5 + $0x6e0] sm:$0xff]
    %v281 = vld [vmem:[#allocation5 + $0x6e8] sm:$0xff]
    %v282 = vld [vmem:[#allocation5 + $0x6f0] sm:$0xff]
    %v283 = vld [vmem:[#allocation5 + $0x6f8] sm:$0xff]
    %v284 = vld [vmem:[#allocation5 + $0x700] sm:$0xff]
    %v285 = vld [vmem:[#allocation5 + $0x708] sm:$0xff]
    %v286 = vld [vmem:[#allocation5 + $0x710] sm:$0xff]
    %v287 = vld [vmem:[#allocation5 + $0x718] sm:$0xff]
    %v288 = vld [vmem:[#allocation5 + $0x720] sm:$0xff]
    %v289 = vld [vmem:[#allocation5 + $0x728] sm:$0xff]
    %v290 = vld [vmem:[#allocation5 + $0x730] sm:$0xff]
    %v291 = vld [vmem:[#allocation5 + $0x738] sm:$0xff]
    %v292 = vld [vmem:[#allocation5 + $0x740] sm:$0xff]
    %v293 = vld [vmem:[#allocation5 + $0x748] sm:$0xff]
    %v294 = vld [vmem:[#allocation5 + $0x750] sm:$0xff]
    %v295 = vld [vmem:[#allocation5 + $0x758] sm:$0xff]
    %v296 = vld [vmem:[#allocation5 + $0x760] sm:$0xff]
    %v297 = vld [vmem:[#allocation5 + $0x768] sm:$0xff]
    %v298 = vld [vmem:[#allocation5 + $0x770] sm:$0xff]
    %v299 = vld [vmem:[#allocation5 + $0x778] sm:$0xff]
    %v300 = vld [vmem:[#allocation5 + $0x780] sm:$0xff]
    %v301 = vld [vmem:[#allocation5 + $0x788] sm:$0xff]
    %v302 = vld [vmem:[#allocation5 + $0x790] sm:$0xff]
    %v303 = vld [vmem:[#allocation5 + $0x798] sm:$0xff]
    %v304 = vld [vmem:[#allocation5 + $0x7a0] sm:$0xff]
    %v305 = vld [vmem:[#allocation5 + $0x7a8] sm:$0xff]
    %v306 = vld [vmem:[#allocation5 + $0x7b0] sm:$0xff]
    %v307 = vld [vmem:[#allocation5 + $0x7b8] sm:$0xff]
    %v308 = vld [vmem:[#allocation5 + $0x7c0] sm:$0xff]
    %v309 = vld [vmem:[#allocation5 + $0x7c8] sm:$0xff]
    %v310 = vld [vmem:[#allocation5 + $0x7d0] sm:$0xff]
    %v311 = vld [vmem:[#allocation5 + $0x7d8] sm:$0xff]
    %v312 = vld [vmem:[#allocation5 + $0x7e0] sm:$0xff]
    %v313 = vld [vmem:[#allocation5 + $0x7e8] sm:$0xff]
    %v314 = vld [vmem:[#allocation5 + $0x7f0] sm:$0xff]
    %v315 = vld [vmem:[#allocation5 + $0x7f8] sm:$0xff]
    %v316 = vld [vmem:[#allocation5 + $0x800] sm:$0xff]
    %v317 = vld [vmem:[#allocation5 + $0x808] sm:$0xff]
    %v318 = vld [vmem:[#allocation5 + $0x810] sm:$0xff]
    %v319 = vld [vmem:[#allocation5 + $0x818] sm:$0xff]
    %v320 = vld [vmem:[#allocation5 + $0x820] sm:$0xff]
    %v321 = vld [vmem:[#allocation5 + $0x828] sm:$0xff]
    %v322 = vld [vmem:[#allocation5 + $0x830] sm:$0xff]
    %v323 = vld [vmem:[#allocation5 + $0x838] sm:$0xff]
    %v324 = vld [vmem:[#allocation5 + $0x840] sm:$0xff]
    %v325 = vld [vmem:[#allocation5 + $0x848] sm:$0xff]
    %v326 = vld [vmem:[#allocation5 + $0x850] sm:$0xff]
    %v327 = vld [vmem:[#allocation5 + $0x858] sm:$0xff]
    %v328 = vld [vmem:[#allocation5 + $0x860] sm:$0xff]
    %v329 = vld [vmem:[#allocation5 + $0x868] sm:$0xff]
    %v330 = vld [vmem:[#allocation5 + $0x870] sm:$0xff]
    %v331 = vld [vmem:[#allocation5 + $0x878] sm:$0xff]
    %v332 = vld [vmem:[#allocation5 + $0x880] sm:$0xff]
    %v333 = vld [vmem:[#allocation5 + $0x888] sm:$0xff]
    %v334 = vld [vmem:[#allocation5 + $0x890] sm:$0xff]
    %v335 = vld [vmem:[#allocation5 + $0x898] sm:$0xff]
    %v336 = vld [vmem:[#allocation5 + $0x8a0] sm:$0xff]
    %v337 = vld [vmem:[#allocation5 + $0x8a8] sm:$0xff]
    %v338 = vld [vmem:[#allocation5 + $0x8b0] sm:$0xff]
    %v339 = vld [vmem:[#allocation5 + $0x8b8] sm:$0xff]
    %v340 = vld [vmem:[#allocation5 + $0x8c0] sm:$0xff]
    %v341 = vld [vmem:[#allocation5 + $0x8c8] sm:$0xff]
    %v342 = vld [vmem:[#allocation5 + $0x8d0] sm:$0xff]
    %v343 = vld [vmem:[#allocation5 + $0x8d8] sm:$0xff]
    %v344 = vld [vmem:[#allocation5 + $0x8e0] sm:$0xff]
    %v345 = vld [vmem:[#allocation5 + $0x8e8] sm:$0xff]
    %v346 = vld [vmem:[#allocation5 + $0x8f0] sm:$0xff]
    %v347 = vld [vmem:[#allocation5 + $0x8f8] sm:$0xff]
    %v348 = vld [vmem:[#allocation5 + $0x900] sm:$0xff]
    %v349 = vld [vmem:[#allocation5 + $0x908] sm:$0xff]
    %v350 = vld [vmem:[#allocation5 + $0x910] sm:$0xff]
    %v351 = vld [vmem:[#allocation5 + $0x918] sm:$0xff]
    %v352 = vld [vmem:[#allocation5 + $0x920] sm:$0xff]
    %v353 = vld [vmem:[#allocation5 + $0x928] sm:$0xff]
    %v354 = vld [vmem:[#allocation5 + $0x930] sm:$0xff]
    %v355 = vld [vmem:[#allocation5 + $0x938] sm:$0xff]
    %v356 = vld [vmem:[#allocation5 + $0x940] sm:$0xff]
    %v357 = vld [vmem:[#allocation5 + $0x948] sm:$0xff]
    %v358 = vld [vmem:[#allocation5 + $0x950] sm:$0xff]
    %v359 = vld [vmem:[#allocation5 + $0x958] sm:$0xff]
    %v360 = vld [vmem:[#allocation5 + $0x960] sm:$0xff]
    %v361 = vld [vmem:[#allocation5 + $0x968] sm:$0xff]
    %v362 = vld [vmem:[#allocation5 + $0x970] sm:$0xff]
    %v363 = vld [vmem:[#allocation5 + $0x978] sm:$0xff]
    %v364 = vld [vmem:[#allocation5 + $0x980] sm:$0xff]
    %v365 = vld [vmem:[#allocation5 + $0x988] sm:$0xff]
    %v366 = vld [vmem:[#allocation5 + $0x990] sm:$0xff]
    %v367 = vld [vmem:[#allocation5 + $0x998] sm:$0xff]
    %v368 = vld [vmem:[#allocation5 + $0x9a0] sm:$0xff]
    %v369 = vld [vmem:[#allocation5 + $0x9a8] sm:$0xff]
    %v370 = vld [vmem:[#allocation5 + $0x9b0] sm:$0xff]
    %v371 = vld [vmem:[#allocation5 + $0x9b8] sm:$0xff]
    %v372 = vld [vmem:[#allocation5 + $0x9c0] sm:$0xff]
    %v373 = vld [vmem:[#allocation5 + $0x9c8] sm:$0xff]
    %v374 = vld [vmem:[#allocation5 + $0x9d0] sm:$0xff]
    %v375 = vld [vmem:[#allocation5 + $0x9d8] sm:$0xff]
    %v376 = vld [vmem:[#allocation5 + $0x9e0] sm:$0xff]
    %v377 = vld [vmem:[#allocation5 + $0x9e8] sm:$0xff]
    %v378 = vld [vmem:[#allocation5 + $0x9f0] sm:$0xff]
    %v379 = vld [vmem:[#allocation5 + $0x9f8] sm:$0xff]
    %v380 = vld [vmem:[#allocation5 + $0xa00] sm:$0xff]
    %v381 = vld [vmem:[#allocation5 + $0xa08] sm:$0xff]
    %v382 = vld [vmem:[#allocation5 + $0xa10] sm:$0xff]
    %v383 = vld [vmem:[#allocation5 + $0xa18] sm:$0xff]
    %v384 = vld [vmem:[#allocation5 + $0xa20] sm:$0xff]
    %v385 = vld [vmem:[#allocation5 + $0xa28] sm:$0xff]
    %v386 = vld [vmem:[#allocation5 + $0xa30] sm:$0xff]
    %v387 = vld [vmem:[#allocation5 + $0xa38] sm:$0xff]
    %v388 = vld [vmem:[#allocation5 + $0xa40] sm:$0xff]
    %v389 = vld [vmem:[#allocation5 + $0xa48] sm:$0xff]
    %v390 = vld [vmem:[#allocation5 + $0xa50] sm:$0xff]
    %v391 = vld [vmem:[#allocation5 + $0xa58] sm:$0xff]
    %v392 = vld [vmem:[#allocation5 + $0xa60] sm:$0xff]
    %v393 = vld [vmem:[#allocation5 + $0xa68] sm:$0xff]
    %v394 = vld [vmem:[#allocation5 + $0xa70] sm:$0xff]
    %v395 = vld [vmem:[#allocation5 + $0xa78] sm:$0xff]
    %v396 = vld [vmem:[#allocation5 + $0xa80] sm:$0xff]
    %v397 = vld [vmem:[#allocation5 + $0xa88] sm:$0xff]
    %v398 = vld [vmem:[#allocation5 + $0xa90] sm:$0xff]
    %v399 = vld [vmem:[#allocation5 + $0xa98] sm:$0xff]
    %v400 = vld [vmem:[#allocation5 + $0xaa0] sm:$0xff]
    %v401 = vld [vmem:[#allocation5 + $0xaa8] sm:$0xff]
    %v402 = vld [vmem:[#allocation5 + $0xab0] sm:$0xff]
    %v403 = vld [vmem:[#allocation5 + $0xab8] sm:$0xff]
    %v404 = vld [vmem:[#allocation5 + $0xac0] sm:$0xff]
    %v405 = vld [vmem:[#allocation5 + $0xac8] sm:$0xff]
    %v406 = vld [vmem:[#allocation5 + $0xad0] sm:$0xff]
    %v407 = vld [vmem:[#allocation5 + $0xad8] sm:$0xff]
    %v408 = vld [vmem:[#allocation5 + $0xae0] sm:$0xff]
    %v409 = vld [vmem:[#allocation5 + $0xae8] sm:$0xff]
    %v410 = vld [vmem:[#allocation5 + $0xaf0] sm:$0xff]
    %v411 = vld [vmem:[#allocation5 + $0xaf8] sm:$0xff]
    %v412 = vld [vmem:[#allocation5 + $0xb00] sm:$0xff]
    %v413 = vld [vmem:[#allocation5 + $0xb08] sm:$0xff]
    %v414 = vld [vmem:[#allocation5 + $0xb10] sm:$0xff]
    %v415 = vld [vmem:[#allocation5 + $0xb18] sm:$0xff]
    %v416 = vld [vmem:[#allocation5 + $0xb20] sm:$0xff]
    %v417 = vld [vmem:[#allocation5 + $0xb28] sm:$0xff]
    %v418 = vld [vmem:[#allocation5 + $0xb30] sm:$0xff]
    %v419 = vld [vmem:[#allocation5 + $0xb38] sm:$0xff]
    %v420 = vld [vmem:[#allocation5 + $0xb40] sm:$0xff]
    %v421 = vld [vmem:[#allocation5 + $0xb48] sm:$0xff]
    %v422 = vld [vmem:[#allocation5 + $0xb50] sm:$0xff]
    %v423 = vld [vmem:[#allocation5 + $0xb58] sm:$0xff]
    %v424 = vld [vmem:[#allocation5 + $0xb60] sm:$0xff]
    %v425 = vld [vmem:[#allocation5 + $0xb68] sm:$0xff]
    %v426 = vld [vmem:[#allocation5 + $0xb70] sm:$0xff]
    %v427 = vld [vmem:[#allocation5 + $0xb78] sm:$0xff]
    %v428 = vld [vmem:[#allocation5 + $0xb80] sm:$0xff]
    %v429 = vld [vmem:[#allocation5 + $0xb88] sm:$0xff]
    %v430 = vld [vmem:[#allocation5 + $0xb90] sm:$0xff]
    %v431 = vld [vmem:[#allocation5 + $0xb98] sm:$0xff]
    %v432 = vld [vmem:[#allocation5 + $0xba0] sm:$0xff]
    %v433 = vld [vmem:[#allocation5 + $0xba8] sm:$0xff]
    %v434 = vld [vmem:[#allocation5 + $0xbb0] sm:$0xff]
    %v435 = vld [vmem:[#allocation5 + $0xbb8] sm:$0xff]
    %v436 = vld [vmem:[#allocation5 + $0xbc0] sm:$0xff]
    %v437 = vld [vmem:[#allocation5 + $0xbc8] sm:$0xff]
    %v438 = vld [vmem:[#allocation5 + $0xbd0] sm:$0xff]
    %v439 = vld [vmem:[#allocation5 + $0xbd8] sm:$0xff]
    %v440 = vld [vmem:[#allocation5 + $0xbe0] sm:$0xff]
    %v441 = vld [vmem:[#allocation5 + $0xbe8] sm:$0xff]
    %v442 = vld [vmem:[#allocation5 + $0xbf0] sm:$0xff]
    %v443 = vld [vmem:[#allocation5 + $0xbf8] sm:$0xff]
    %v444 = vld [vmem:[#allocation5 + $0xc00] sm:$0xff]
    %v445 = vld [vmem:[#allocation5 + $0xc08] sm:$0xff]
    %v446 = vld [vmem:[#allocation5 + $0xc10] sm:$0xff]
    %v447 = vld [vmem:[#allocation5 + $0xc18] sm:$0xff]
    %v448 = vld [vmem:[#allocation5 + $0xc20] sm:$0xff]
    %v449 = vld [vmem:[#allocation5 + $0xc28] sm:$0xff]
    %v450 = vld [vmem:[#allocation5 + $0xc30] sm:$0xff]
    %v451 = vld [vmem:[#allocation5 + $0xc38] sm:$0xff]
    %v452 = vld [vmem:[#allocation5 + $0xc40] sm:$0xff]
    %v453 = vld [vmem:[#allocation5 + $0xc48] sm:$0xff]
    %v454 = vld [vmem:[#allocation5 + $0xc50] sm:$0xff]
    %v455 = vld [vmem:[#allocation5 + $0xc58] sm:$0xff]
    %v456 = vld [vmem:[#allocation5 + $0xc60] sm:$0xff]
    %v457 = vld [vmem:[#allocation5 + $0xc68] sm:$0xff]
    %v458 = vld [vmem:[#allocation5 + $0xc70] sm:$0xff]
    %v459 = vld [vmem:[#allocation5 + $0xc78] sm:$0xff]
    %v460 = vld [vmem:[#allocation5 + $0xc80] sm:$0xff]
    %v461 = vld [vmem:[#allocation5 + $0xc88] sm:$0xff]
    %v462 = vld [vmem:[#allocation5 + $0xc90] sm:$0xff]
    %v463 = vld [vmem:[#allocation5 + $0xc98] sm:$0xff]
    %v464 = vld [vmem:[#allocation5 + $0xca0] sm:$0xff]
    %v465 = vld [vmem:[#allocation5 + $0xca8] sm:$0xff]
    %v466 = vld [vmem:[#allocation5 + $0xcb0] sm:$0xff]
    %v467 = vld [vmem:[#allocation5 + $0xcb8] sm:$0xff]
    %v468 = vld [vmem:[#allocation5 + $0xcc0] sm:$0xff]
    %v469 = vld [vmem:[#allocation5 + $0xcc8] sm:$0xff]
    %v470 = vld [vmem:[#allocation5 + $0xcd0] sm:$0xff]
    %v471 = vld [vmem:[#allocation5 + $0xcd8] sm:$0xff]
    %v472 = vld [vmem:[#allocation5 + $0xce0] sm:$0xff]
    %v473 = vld [vmem:[#allocation5 + $0xce8] sm:$0xff]
    %v474 = vld [vmem:[#allocation5 + $0xcf0] sm:$0xff]
    %v475 = vld [vmem:[#allocation5 + $0xcf8] sm:$0xff]
    %v476 = vld [vmem:[#allocation5 + $0xd00] sm:$0xff]
    %v477 = vld [vmem:[#allocation5 + $0xd08] sm:$0xff]
    %v478 = vld [vmem:[#allocation5 + $0xd10] sm:$0xff]
    %v479 = vld [vmem:[#allocation5 + $0xd18] sm:$0xff]
    %v480 = vld [vmem:[#allocation5 + $0xd20] sm:$0xff]
    %v481 = vld [vmem:[#allocation5 + $0xd28] sm:$0xff]
    %v482 = vld [vmem:[#allocation5 + $0xd30] sm:$0xff]
    %v483 = vld [vmem:[#allocation5 + $0xd38] sm:$0xff]
    %v484 = vld [vmem:[#allocation5 + $0xd40] sm:$0xff]
    %v485 = vld [vmem:[#allocation5 + $0xd48] sm:$0xff]
    %v486 = vld [vmem:[#allocation5 + $0xd50] sm:$0xff]
    %v487 = vld [vmem:[#allocation5 + $0xd58] sm:$0xff]
    %v488 = vld [vmem:[#allocation5 + $0xd60] sm:$0xff]
    %v489 = vld [vmem:[#allocation5 + $0xd68] sm:$0xff]
    %v490 = vld [vmem:[#allocation5 + $0xd70] sm:$0xff]
    %v491 = vld [vmem:[#allocation5 + $0xd78] sm:$0xff]
    %v492 = vld [vmem:[#allocation5 + $0xd80] sm:$0xff]
    %v493 = vld [vmem:[#allocation5 + $0xd88] sm:$0xff]
    %v494 = vld [vmem:[#allocation5 + $0xd90] sm:$0xff]
    %v495 = vld [vmem:[#allocation5 + $0xd98] sm:$0xff]
    %v496 = vld [vmem:[#allocation5 + $0xda0] sm:$0xff]
    %v497 = vld [vmem:[#allocation5 + $0xda8] sm:$0xff]
    %v498 = vld [vmem:[#allocation5 + $0xdb0] sm:$0xff]
    %v499 = vld [vmem:[#allocation5 + $0xdb8] sm:$0xff]
    %v500 = vld [vmem:[#allocation5 + $0xdc0] sm:$0xff]
    %v501 = vld [vmem:[#allocation5 + $0xdc8] sm:$0xff]
    %v502 = vld [vmem:[#allocation5 + $0xdd0] sm:$0xff]
    %v503 = vld [vmem:[#allocation5 + $0xdd8] sm:$0xff]
    %v504 = vld [vmem:[#allocation5 + $0xde0] sm:$0xff]
    %v505 = vld [vmem:[#allocation5 + $0xde8] sm:$0xff]
    %v506 = vld [vmem:[#allocation5 + $0xdf0] sm:$0xff]
    %v507 = vld [vmem:[#allocation5 + $0xdf8] sm:$0xff]
    %v508 = vld [vmem:[#allocation5 + $0xe00] sm:$0xff]
    %v509 = vld [vmem:[#allocation5 + $0xe08] sm:$0xff]
    %v510 = vld [vmem:[#allocation5 + $0xe10] sm:$0xff]
    %v511 = vld [vmem:[#allocation5 + $0xe18] sm:$0xff]
    %v512 = vld [vmem:[#allocation5 + $0xe20] sm:$0xff]
    %v513 = vld [vmem:[#allocation5 + $0xe28] sm:$0xff]
    %v514 = vld [vmem:[#allocation5 + $0xe30] sm:$0xff]
    %v515 = vld [vmem:[#allocation5 + $0xe38] sm:$0xff]
    %v516 = vld [vmem:[#allocation5 + $0xe40] sm:$0xff]
    %v517 = vld [vmem:[#allocation5 + $0xe48] sm:$0xff]
    %v518 = vld [vmem:[#allocation5 + $0xe50] sm:$0xff]
    %v519 = vld [vmem:[#allocation5 + $0xe58] sm:$0xff]
    %v520 = vld [vmem:[#allocation5 + $0xe60] sm:$0xff]
    %v521 = vld [vmem:[#allocation5 + $0xe68] sm:$0xff]
    %v522 = vld [vmem:[#allocation5 + $0xe70] sm:$0xff]
    %v523 = vld [vmem:[#allocation5 + $0xe78] sm:$0xff]
    %v524 = vld [vmem:[#allocation5 + $0xe80] sm:$0xff]
    %v525 = vld [vmem:[#allocation5 + $0xe88] sm:$0xff]
    %v526 = vld [vmem:[#allocation5 + $0xe90] sm:$0xff]
    %v527 = vld [vmem:[#allocation5 + $0xe98] sm:$0xff]
    %v528 = vld [vmem:[#allocation5 + $0xea0] sm:$0xff]
    %v529 = vld [vmem:[#allocation5 + $0xea8] sm:$0xff]
    %v530 = vld [vmem:[#allocation5 + $0xeb0] sm:$0xff]
    %v531 = vld [vmem:[#allocation5 + $0xeb8] sm:$0xff]
    %v532 = vld [vmem:[#allocation5 + $0xec0] sm:$0xff]
    %v533 = vld [vmem:[#allocation5 + $0xec8] sm:$0xff]
    %v534 = vld [vmem:[#allocation5 + $0xed0] sm:$0xff]
    %v535 = vld [vmem:[#allocation5 + $0xed8] sm:$0xff]
    %v536 = vld [vmem:[#allocation5 + $0xee0] sm:$0xff]
    %v537 = vld [vmem:[#allocation5 + $0xee8] sm:$0xff]
    %v538 = vld [vmem:[#allocation5 + $0xef0] sm:$0xff]
    %v539 = vld [vmem:[#allocation5 + $0xef8] sm:$0xff]
    %v540 = vld [vmem:[#allocation5 + $0xf00] sm:$0xff]
    %v541 = vld [vmem:[#allocation5 + $0xf08] sm:$0xff]
    %v542 = vld [vmem:[#allocation5 + $0xf10] sm:$0xff]
    %v543 = vld [vmem:[#allocation5 + $0xf18] sm:$0xff]
    %v544 = vld [vmem:[#allocation5 + $0xf20] sm:$0xff]
    %v545 = vld [vmem:[#allocation5 + $0xf28] sm:$0xff]
    %v546 = vld [vmem:[#allocation5 + $0xf30] sm:$0xff]
    %v547 = vld [vmem:[#allocation5 + $0xf38] sm:$0xff]
    %v548 = vld [vmem:[#allocation5 + $0xf40] sm:$0xff]
    %v549 = vld [vmem:[#allocation5 + $0xf48] sm:$0xff]
    %v550 = vld [vmem:[#allocation5 + $0xf50] sm:$0xff]
    %v551 = vld [vmem:[#allocation5 + $0xf58] sm:$0xff]
    %v552 = vld [vmem:[#allocation5 + $0xf60] sm:$0xff]
    %v553 = vld [vmem:[#allocation5 + $0xf68] sm:$0xff]
    %v554 = vld [vmem:[#allocation5 + $0xf70] sm:$0xff]
    %v555 = vld [vmem:[#allocation5 + $0xf78] sm:$0xff]
    %v556 = vld [vmem:[#allocation5 + $0xf80] sm:$0xff]
    %v557 = vld [vmem:[#allocation5 + $0xf88] sm:$0xff]
    %v558 = vld [vmem:[#allocation5 + $0xf90] sm:$0xff]
    %v559 = vld [vmem:[#allocation5 + $0xf98] sm:$0xff]
    %v560 = vld [vmem:[#allocation5 + $0xfa0] sm:$0xff]
    %v561 = vld [vmem:[#allocation5 + $0xfa8] sm:$0xff]
    %v562 = vld [vmem:[#allocation5 + $0xfb0] sm:$0xff]
    %v563 = vld [vmem:[#allocation5 + $0xfb8] sm:$0xff]
    %v564 = vld [vmem:[#allocation5 + $0xfc0] sm:$0xff]
    %v565 = vld [vmem:[#allocation5 + $0xfc8] sm:$0xff]
    %v566 = vld [vmem:[#allocation5 + $0xfd0] sm:$0xff]
    %v567 = vld [vmem:[#allocation5 + $0xfd8] sm:$0xff]
    %v568 = vld [vmem:[#allocation5 + $0xfe0] sm:$0xff]
    %v569 = vld [vmem:[#allocation5 + $0xfe8] sm:$0xff]
    %v570 = vld [vmem:[#allocation5 + $0xff0] sm:$0xff]
    %v571 = vld [vmem:[#allocation5 + $0xff8] sm:$0xff]
    %v572 = vld [vmem:[#allocation5 + $0x1000] sm:$0xff]
    %v573 = vld [vmem:[#allocation5 + $0x1008] sm:$0xff]
    %v574 = vld [vmem:[#allocation5 + $0x1010] sm:$0xff]
    %v575 = vld [vmem:[#allocation5 + $0x1018] sm:$0xff]
    %v576 = vld [vmem:[#allocation5 + $0x1020] sm:$0xff]
    %v577 = vld [vmem:[#allocation5 + $0x1028] sm:$0xff]
    %v578 = vld [vmem:[#allocation5 + $0x1030] sm:$0xff]
    %v579 = vld [vmem:[#allocation5 + $0x1038] sm:$0xff]
    %v580 = vld [vmem:[#allocation5 + $0x1040] sm:$0xff]
    %v581 = vld [vmem:[#allocation5 + $0x1048] sm:$0xff]
    %v582 = vld [vmem:[#allocation5 + $0x1050] sm:$0xff]
    %v583 = vld [vmem:[#allocation5 + $0x1058] sm:$0xff]
    %v584 = vld [vmem:[#allocation5 + $0x1060] sm:$0xff]
    %v585 = vld [vmem:[#allocation5 + $0x1068] sm:$0xff]
    %v586 = vld [vmem:[#allocation5 + $0x1070] sm:$0xff]
    %v587 = vld [vmem:[#allocation5 + $0x1078] sm:$0xff]
    %v588 = vld [vmem:[#allocation5 + $0x1080] sm:$0xff]
    %v589 = vld [vmem:[#allocation5 + $0x1088] sm:$0xff]
    %v590 = vld [vmem:[#allocation5 + $0x1090] sm:$0xff]
    %v591 = vld [vmem:[#allocation5 + $0x1098] sm:$0xff]
    %v592 = vld [vmem:[#allocation5 + $0x10a0] sm:$0xff]
    %v593 = vld [vmem:[#allocation5 + $0x10a8] sm:$0xff]
    %v594 = vld [vmem:[#allocation5 + $0x10b0] sm:$0xff]
    %v595 = vld [vmem:[#allocation5 + $0x10b8] sm:$0xff]
    %v596 = vld [vmem:[#allocation5 + $0x10c0] sm:$0xff]
    %v597 = vld [vmem:[#allocation5 + $0x10c8] sm:$0xff]
    %v598 = vld [vmem:[#allocation5 + $0x10d0] sm:$0xff]
    %v599 = vld [vmem:[#allocation5 + $0x10d8] sm:$0xff]
    %v600 = vld [vmem:[#allocation5 + $0x10e0] sm:$0xff]
    %v601 = vld [vmem:[#allocation5 + $0x10e8] sm:$0xff]
    %v602 = vld [vmem:[#allocation5 + $0x10f0] sm:$0xff]
    %v603 = vld [vmem:[#allocation5 + $0x10f8] sm:$0xff]
    %v604 = vld [vmem:[#allocation5 + $0x1100] sm:$0xff]
    %v605 = vld [vmem:[#allocation5 + $0x1108] sm:$0xff]
    %v606 = vld [vmem:[#allocation5 + $0x1110] sm:$0xff]
    %v607 = vld [vmem:[#allocation5 + $0x1118] sm:$0xff]
    %v608 = vld [vmem:[#allocation5 + $0x1120] sm:$0xff]
    %v609 = vld [vmem:[#allocation5 + $0x1128] sm:$0xff]
    %v610 = vld [vmem:[#allocation5 + $0x1130] sm:$0xff]
    %v611 = vld [vmem:[#allocation5 + $0x1138] sm:$0xff]
    %v612 = vld [vmem:[#allocation5 + $0x1140] sm:$0xff]
    %v613 = vld [vmem:[#allocation5 + $0x1148] sm:$0xff]
    %v614 = vld [vmem:[#allocation5 + $0x1150] sm:$0xff]
    %v615 = vld [vmem:[#allocation5 + $0x1158] sm:$0xff]
    %v616 = vld [vmem:[#allocation5 + $0x1160] sm:$0xff]
    %v617 = vld [vmem:[#allocation5 + $0x1168] sm:$0xff]
    %v618 = vld [vmem:[#allocation5 + $0x1170] sm:$0xff]
    %v619 = vld [vmem:[#allocation5 + $0x1178] sm:$0xff]
    %v620 = vld [vmem:[#allocation5 + $0x1180] sm:$0xff]
    %v621 = vld [vmem:[#allocation5 + $0x1188] sm:$0xff]
    %v622 = vld [vmem:[#allocation5 + $0x1190] sm:$0xff]
    %v623 = vld [vmem:[#allocation5 + $0x1198] sm:$0xff]
    %v624 = vld [vmem:[#allocation5 + $0x11a0] sm:$0xff]
    %v625 = vld [vmem:[#allocation5 + $0x11a8] sm:$0xff]
    %v626 = vld [vmem:[#allocation5 + $0x11b0] sm:$0xff]
    %v627 = vld [vmem:[#allocation5 + $0x11b8] sm:$0xff]
    %v628 = vld [vmem:[#allocation5 + $0x11c0] sm:$0xff]
    %v629 = vld [vmem:[#allocation5 + $0x11c8] sm:$0xff]
    %v630 = vld [vmem:[#allocation5 + $0x11d0] sm:$0xff]
    %v631 = vld [vmem:[#allocation5 + $0x11d8] sm:$0xff]
    %v632 = vld [vmem:[#allocation5 + $0x11e0] sm:$0xff]
    %v633 = vld [vmem:[#allocation5 + $0x11e8] sm:$0xff]
    %v634 = vld [vmem:[#allocation5 + $0x11f0] sm:$0xff]
    %v635 = vld [vmem:[#allocation5 + $0x11f8] sm:$0xff]
    %v636 = vld [vmem:[#allocation5 + $0x1200] sm:$0xff]
    %v637 = vld [vmem:[#allocation5 + $0x1208] sm:$0xff]
    %v638 = vld [vmem:[#allocation5 + $0x1210] sm:$0xff]
    %v639 = vld [vmem:[#allocation5 + $0x1218] sm:$0xff]
    %v640 = vld [vmem:[#allocation5 + $0x1220] sm:$0xff]
    %v641 = vld [vmem:[#allocation5 + $0x1228] sm:$0xff]
    %v642 = vld [vmem:[#allocation5 + $0x1230] sm:$0xff]
    %v643 = vld [vmem:[#allocation5 + $0x1238] sm:$0xff]
    %v644 = vld [vmem:[#allocation5 + $0x1240] sm:$0xff]
    %v645 = vld [vmem:[#allocation5 + $0x1248] sm:$0xff]
    %v646 = vld [vmem:[#allocation5 + $0x1250] sm:$0xff]
    %v647 = vld [vmem:[#allocation5 + $0x1258] sm:$0xff]
    %v648 = vld [vmem:[#allocation5 + $0x1260] sm:$0xff]
    %v649 = vld [vmem:[#allocation5 + $0x1268] sm:$0xff]
    %v650 = vld [vmem:[#allocation5 + $0x1270] sm:$0xff]
    %v651 = vld [vmem:[#allocation5 + $0x1278] sm:$0xff]
    %v652 = vld [vmem:[#allocation5 + $0x1280] sm:$0xff]
    %v653 = vld [vmem:[#allocation5 + $0x1288] sm:$0xff]
    %v654 = vld [vmem:[#allocation5 + $0x1290] sm:$0xff]
    %v655 = vld [vmem:[#allocation5 + $0x1298] sm:$0xff]
    %v656 = vld [vmem:[#allocation5 + $0x12a0] sm:$0xff]
    %v657 = vld [vmem:[#allocation5 + $0x12a8] sm:$0xff]
    %v658 = vld [vmem:[#allocation5 + $0x12b0] sm:$0xff]
    %v659 = vld [vmem:[#allocation5 + $0x12b8] sm:$0xff]
    %v660 = vld [vmem:[#allocation5 + $0x12c0] sm:$0xff]
    %v661 = vld [vmem:[#allocation5 + $0x12c8] sm:$0xff]
    %v662 = vld [vmem:[#allocation5 + $0x12d0] sm:$0xff]
    %v663 = vld [vmem:[#allocation5 + $0x12d8] sm:$0xff]
    %v664 = vld [vmem:[#allocation5 + $0x12e0] sm:$0xff]
    %v665 = vld [vmem:[#allocation5 + $0x12e8] sm:$0xff]
    %v666 = vld [vmem:[#allocation5 + $0x12f0] sm:$0xff]
    %v667 = vld [vmem:[#allocation5 + $0x12f8] sm:$0xff]
    %v668 = vld [vmem:[#allocation5 + $0x1300] sm:$0xff]
    %v669 = vld [vmem:[#allocation5 + $0x1308] sm:$0xff]
    %v670 = vld [vmem:[#allocation5 + $0x1310] sm:$0xff]
    %v671 = vld [vmem:[#allocation5 + $0x1318] sm:$0xff]
    %v672 = vld [vmem:[#allocation5 + $0x1320] sm:$0xff]
    %v673 = vld [vmem:[#allocation5 + $0x1328] sm:$0xff]
    %v674 = vld [vmem:[#allocation5 + $0x1330] sm:$0xff]
    %v675 = vld [vmem:[#allocation5 + $0x1338] sm:$0xff]
    %v676 = vld [vmem:[#allocation5 + $0x1340] sm:$0xff]
    %v677 = vld [vmem:[#allocation5 + $0x1348] sm:$0xff]
    %v678 = vld [vmem:[#allocation5 + $0x1350] sm:$0xff]
    %v679 = vld [vmem:[#allocation5 + $0x1358] sm:$0xff]
    %v680 = vld [vmem:[#allocation5 + $0x1360] sm:$0xff]
    %v681 = vld [vmem:[#allocation5 + $0x1368] sm:$0xff]
    %v682 = vld [vmem:[#allocation5 + $0x1370] sm:$0xff]
    %v683 = vld [vmem:[#allocation5 + $0x1378] sm:$0xff]
    %v684 = vld [vmem:[#allocation5 + $0x1380] sm:$0xff]
    %v685 = vld [vmem:[#allocation5 + $0x1388] sm:$0xff]
    %v686 = vld [vmem:[#allocation5 + $0x1390] sm:$0xff]
    %v687 = vld [vmem:[#allocation5 + $0x1398] sm:$0xff]
    %v688 = vld [vmem:[#allocation5 + $0x13a0] sm:$0xff]
    %v689 = vld [vmem:[#allocation5 + $0x13a8] sm:$0xff]
    %v690 = vld [vmem:[#allocation5 + $0x13b0] sm:$0xff]
    %v691 = vld [vmem:[#allocation5 + $0x13b8] sm:$0xff]
    %v692 = vld [vmem:[#allocation5 + $0x13c0] sm:$0xff]
    %v693 = vld [vmem:[#allocation5 + $0x13c8] sm:$0xff]
    %v694 = vld [vmem:[#allocation5 + $0x13d0] sm:$0xff]
    %v695 = vld [vmem:[#allocation5 + $0x13d8] sm:$0xff]
    %v696 = vld [vmem:[#allocation5 + $0x13e0] sm:$0xff]
    %v697 = vld [vmem:[#allocation5 + $0x13e8] sm:$0xff]
    %v698 = vld [vmem:[#allocation5 + $0x13f0] sm:$0xff]
    %v699 = vld [vmem:[#allocation5 + $0x13f8] sm:$0xff]
    %v700 = vld [vmem:[#allocation5 + $0x1400] sm:$0xff]
    %v701 = vld [vmem:[#allocation5 + $0x1408] sm:$0xff]
    %v702 = vld [vmem:[#allocation5 + $0x1410] sm:$0xff]
    %v703 = vld [vmem:[#allocation5 + $0x1418] sm:$0xff]
    %v704 = vld [vmem:[#allocation5 + $0x1420] sm:$0xff]
    %v705 = vld [vmem:[#allocation5 + $0x1428] sm:$0xff]
    %v706 = vld [vmem:[#allocation5 + $0x1430] sm:$0xff]
    %v707 = vld [vmem:[#allocation5 + $0x1438] sm:$0xff]
    %v708 = vld [vmem:[#allocation5 + $0x1440] sm:$0xff]
    %v709 = vld [vmem:[#allocation5 + $0x1448] sm:$0xff]
    %v710 = vld [vmem:[#allocation5 + $0x1450] sm:$0xff]
    %v711 = vld [vmem:[#allocation5 + $0x1458] sm:$0xff]
    %v712 = vld [vmem:[#allocation5 + $0x1460] sm:$0xff]
    %v713 = vld [vmem:[#allocation5 + $0x1468] sm:$0xff]
    %v714 = vld [vmem:[#allocation5 + $0x1470] sm:$0xff]
    %v715 = vld [vmem:[#allocation5 + $0x1478] sm:$0xff]
    %v716 = vld [vmem:[#allocation5 + $0x1480] sm:$0xff]
    %v717 = vld [vmem:[#allocation5 + $0x1488] sm:$0xff]
    %v718 = vld [vmem:[#allocation5 + $0x1490] sm:$0xff]
    %v719 = vld [vmem:[#allocation5 + $0x1498] sm:$0xff]
    %v720 = vld [vmem:[#allocation5 + $0x14a0] sm:$0xff]
    %v721 = vld [vmem:[#allocation5 + $0x14a8] sm:$0xff]
    %v722 = vld [vmem:[#allocation5 + $0x14b0] sm:$0xff]
    %v723 = vld [vmem:[#allocation5 + $0x14b8] sm:$0xff]
    %v724 = vld [vmem:[#allocation5 + $0x14c0] sm:$0xff]
    %v725 = vld [vmem:[#allocation5 + $0x14c8] sm:$0xff]
    %v726 = vld [vmem:[#allocation5 + $0x14d0] sm:$0xff]
    %v727 = vld [vmem:[#allocation5 + $0x14d8] sm:$0xff]
    %v728 = vld [vmem:[#allocation5 + $0x14e0] sm:$0xff]
    %v729 = vld [vmem:[#allocation5 + $0x14e8] sm:$0xff]
    %v730 = vld [vmem:[#allocation5 + $0x14f0] sm:$0xff]
    %v731 = vld [vmem:[#allocation5 + $0x14f8] sm:$0xff]
    %v732 = vld [vmem:[#allocation5 + $0x1500] sm:$0xff]
    %v733 = vld [vmem:[#allocation5 + $0x1508] sm:$0xff]
    %v734 = vld [vmem:[#allocation5 + $0x1510] sm:$0xff]
    %v735 = vld [vmem:[#allocation5 + $0x1518] sm:$0xff]
    %v736 = vld [vmem:[#allocation5 + $0x1520] sm:$0xff]
    %v737 = vld [vmem:[#allocation5 + $0x1528] sm:$0xff]
    %v738 = vld [vmem:[#allocation5 + $0x1530] sm:$0xff]
    %v739 = vld [vmem:[#allocation5 + $0x1538] sm:$0xff]
    %v740 = vld [vmem:[#allocation5 + $0x1540] sm:$0xff]
    %v741 = vld [vmem:[#allocation5 + $0x1548] sm:$0xff]
    %v742 = vld [vmem:[#allocation5 + $0x1550] sm:$0xff]
    %v743 = vld [vmem:[#allocation5 + $0x1558] sm:$0xff]
    %v744 = vld [vmem:[#allocation5 + $0x1560] sm:$0xff]
    %v745 = vld [vmem:[#allocation5 + $0x1568] sm:$0xff]
    %v746 = vld [vmem:[#allocation5 + $0x1570] sm:$0xff]
    %v747 = vld [vmem:[#allocation5 + $0x1578] sm:$0xff]
    %v748 = vld [vmem:[#allocation5 + $0x1580] sm:$0xff]
    %v749 = vld [vmem:[#allocation5 + $0x1588] sm:$0xff]
    %v750 = vld [vmem:[#allocation5 + $0x1590] sm:$0xff]
    %v751 = vld [vmem:[#allocation5 + $0x1598] sm:$0xff]
    %v752 = vld [vmem:[#allocation5 + $0x15a0] sm:$0xff]
    %v753 = vld [vmem:[#allocation5 + $0x15a8] sm:$0xff]
    %v754 = vld [vmem:[#allocation5 + $0x15b0] sm:$0xff]
    %v755 = vld [vmem:[#allocation5 + $0x15b8] sm:$0xff]
    %v756 = vld [vmem:[#allocation5 + $0x15c0] sm:$0xff]
    %v757 = vld [vmem:[#allocation5 + $0x15c8] sm:$0xff]
    %v758 = vld [vmem:[#allocation5 + $0x15d0] sm:$0xff]
    %v759 = vld [vmem:[#allocation5 + $0x15d8] sm:$0xff]
    %v760 = vld [vmem:[#allocation5 + $0x15e0] sm:$0xff]
    %v761 = vld [vmem:[#allocation5 + $0x15e8] sm:$0xff]
    %v762 = vld [vmem:[#allocation5 + $0x15f0] sm:$0xff]
    %v763 = vld [vmem:[#allocation5 + $0x15f8] sm:$0xff]
    %v764 = vld [vmem:[#allocation5 + $0x1600] sm:$0xff]
    %v765 = vld [vmem:[#allocation5 + $0x1608] sm:$0xff]
    %v766 = vld [vmem:[#allocation5 + $0x1610] sm:$0xff]
    %v767 = vld [vmem:[#allocation5 + $0x1618] sm:$0xff]
    %v768 = vld [vmem:[#allocation5 + $0x1620] sm:$0xff]
    %v769 = vld [vmem:[#allocation5 + $0x1628] sm:$0xff]
    %v770 = vld [vmem:[#allocation5 + $0x1630] sm:$0xff]
    %v771 = vld [vmem:[#allocation5 + $0x1638] sm:$0xff]
    %v772 = vld [vmem:[#allocation5 + $0x1640] sm:$0xff]
    %v773 = vld [vmem:[#allocation5 + $0x1648] sm:$0xff]
    %v774 = vld [vmem:[#allocation5 + $0x1650] sm:$0xff]
    %v775 = vld [vmem:[#allocation5 + $0x1658] sm:$0xff]
    %v776 = vld [vmem:[#allocation5 + $0x1660] sm:$0xff]
    %v777 = vld [vmem:[#allocation5 + $0x1668] sm:$0xff]
    %v778 = vld [vmem:[#allocation5 + $0x1670] sm:$0xff]
    %v779 = vld [vmem:[#allocation5 + $0x1678] sm:$0xff]
    %v780 = vld [vmem:[#allocation5 + $0x1680] sm:$0xff]
    %v781 = vld [vmem:[#allocation5 + $0x1688] sm:$0xff]
    %v782 = vld [vmem:[#allocation5 + $0x1690] sm:$0xff]
    %v783 = vld [vmem:[#allocation5 + $0x1698] sm:$0xff]
    %v784 = vld [vmem:[#allocation5 + $0x16a0] sm:$0xff]
    %v785 = vld [vmem:[#allocation5 + $0x16a8] sm:$0xff]
    %v786 = vld [vmem:[#allocation5 + $0x16b0] sm:$0xff]
    %v787 = vld [vmem:[#allocation5 + $0x16b8] sm:$0xff]
    %v788 = vld [vmem:[#allocation5 + $0x16c0] sm:$0xff]
    %v789 = vld [vmem:[#allocation5 + $0x16c8] sm:$0xff]
    %v790 = vld [vmem:[#allocation5 + $0x16d0] sm:$0xff]
    %v791 = vld [vmem:[#allocation5 + $0x16d8] sm:$0xff]
    %v792 = vld [vmem:[#allocation5 + $0x16e0] sm:$0xff]
    %v793 = vld [vmem:[#allocation5 + $0x16e8] sm:$0xff]
    %v794 = vld [vmem:[#allocation5 + $0x16f0] sm:$0xff]
    %v795 = vld [vmem:[#allocation5 + $0x16f8] sm:$0xff]
    %v796 = vld [vmem:[#allocation5 + $0x1700] sm:$0xff]
    %v797 = vld [vmem:[#allocation5 + $0x1708] sm:$0xff]
    %v798 = vld [vmem:[#allocation5 + $0x1710] sm:$0xff]
    %v799 = vld [vmem:[#allocation5 + $0x1718] sm:$0xff]
    %v800 = vld [vmem:[#allocation5 + $0x1720] sm:$0xff]
    %v801 = vld [vmem:[#allocation5 + $0x1728] sm:$0xff]
    %v802 = vld [vmem:[#allocation5 + $0x1730] sm:$0xff]
    %v803 = vld [vmem:[#allocation5 + $0x1738] sm:$0xff]
    %v804 = vld [vmem:[#allocation5 + $0x1740] sm:$0xff]
    %v805 = vld [vmem:[#allocation5 + $0x1748] sm:$0xff]
    %v806 = vld [vmem:[#allocation5 + $0x1750] sm:$0xff]
    %v807 = vld [vmem:[#allocation5 + $0x1758] sm:$0xff]
    %v808 = vld [vmem:[#allocation5 + $0x1760] sm:$0xff]
    %v809 = vld [vmem:[#allocation5 + $0x1768] sm:$0xff]
    %v810 = vld [vmem:[#allocation5 + $0x1770] sm:$0xff]
    %v811 = vld [vmem:[#allocation5 + $0x1778] sm:$0xff]
    %v812 = vld [vmem:[#allocation5 + $0x1780] sm:$0xff]
    %v813 = vld [vmem:[#allocation5 + $0x1788] sm:$0xff]
    %v814 = vld [vmem:[#allocation5 + $0x1790] sm:$0xff]
    %v815 = vld [vmem:[#allocation5 + $0x1798] sm:$0xff]
    %v816 = vld [vmem:[#allocation5 + $0x17a0] sm:$0xff]
    %v817 = vld [vmem:[#allocation5 + $0x17a8] sm:$0xff]
    %v818 = vld [vmem:[#allocation5 + $0x17b0] sm:$0xff]
    %v819 = vld [vmem:[#allocation5 + $0x17b8] sm:$0xff]
    %v820 = vld [vmem:[#allocation5 + $0x17c0] sm:$0xff]
    %v821 = vld [vmem:[#allocation5 + $0x17c8] sm:$0xff]
    %v822 = vld [vmem:[#allocation5 + $0x17d0] sm:$0xff]
    %v823 = vld [vmem:[#allocation5 + $0x17d8] sm:$0xff]
    %v824 = vld [vmem:[#allocation5 + $0x17e0] sm:$0xff]
    %v825 = vld [vmem:[#allocation5 + $0x17e8] sm:$0xff]
    %v826 = vld [vmem:[#allocation5 + $0x17f0] sm:$0xff]
    %v827 = vld [vmem:[#allocation5 + $0x17f8] sm:$0xff]
    %v828 = vld [vmem:[#allocation5 + $0x1800] sm:$0xff]
    %v829 = vld [vmem:[#allocation5 + $0x1808] sm:$0xff]
    %v830 = vld [vmem:[#allocation5 + $0x1810] sm:$0xff]
    %v831 = vld [vmem:[#allocation5 + $0x1818] sm:$0xff]
    %v832 = vld [vmem:[#allocation5 + $0x1820] sm:$0xff]
    %v833 = vld [vmem:[#allocation5 + $0x1828] sm:$0xff]
    %v834 = vld [vmem:[#allocation5 + $0x1830] sm:$0xff]
    %v835 = vld [vmem:[#allocation5 + $0x1838] sm:$0xff]
    %v836 = vld [vmem:[#allocation5 + $0x1840] sm:$0xff]
    %v837 = vld [vmem:[#allocation5 + $0x1848] sm:$0xff]
    %v838 = vld [vmem:[#allocation5 + $0x1850] sm:$0xff]
    %v839 = vld [vmem:[#allocation5 + $0x1858] sm:$0xff]
    %v840 = vld [vmem:[#allocation5 + $0x1860] sm:$0xff]
    %v841 = vld [vmem:[#allocation5 + $0x1868] sm:$0xff]
    %v842 = vld [vmem:[#allocation5 + $0x1870] sm:$0xff]
    %v843 = vld [vmem:[#allocation5 + $0x1878] sm:$0xff]
    %v844 = vld [vmem:[#allocation5 + $0x1880] sm:$0xff]
    %v845 = vld [vmem:[#allocation5 + $0x1888] sm:$0xff]
    %v846 = vld [vmem:[#allocation5 + $0x1890] sm:$0xff]
    %v847 = vld [vmem:[#allocation5 + $0x1898] sm:$0xff]
    %v848 = vld [vmem:[#allocation5 + $0x18a0] sm:$0xff]
    %v849 = vld [vmem:[#allocation5 + $0x18a8] sm:$0xff]
    %v850 = vld [vmem:[#allocation5 + $0x18b0] sm:$0xff]
    %v851 = vld [vmem:[#allocation5 + $0x18b8] sm:$0xff]
    %v852 = vld [vmem:[#allocation5 + $0x18c0] sm:$0xff]
    %v853 = vld [vmem:[#allocation5 + $0x18c8] sm:$0xff]
    %v854 = vld [vmem:[#allocation5 + $0x18d0] sm:$0xff]
    %v855 = vld [vmem:[#allocation5 + $0x18d8] sm:$0xff]
    %v856 = vld [vmem:[#allocation5 + $0x18e0] sm:$0xff]
    %v857 = vld [vmem:[#allocation5 + $0x18e8] sm:$0xff]
    %v858 = vld [vmem:[#allocation5 + $0x18f0] sm:$0xff]
    %v859 = vld [vmem:[#allocation5 + $0x18f8] sm:$0xff]
    %v860 = vld [vmem:[#allocation5 + $0x1900] sm:$0xff]
    %v861 = vld [vmem:[#allocation5 + $0x1908] sm:$0xff]
    %v862 = vld [vmem:[#allocation5 + $0x1910] sm:$0xff]
    %v863 = vld [vmem:[#allocation5 + $0x1918] sm:$0xff]
    %v864 = vld [vmem:[#allocation5 + $0x1920] sm:$0xff]
    %v865 = vld [vmem:[#allocation5 + $0x1928] sm:$0xff]
    %v866 = vld [vmem:[#allocation5 + $0x1930] sm:$0xff]
    %v867 = vld [vmem:[#allocation5 + $0x1938] sm:$0xff]
    %v868 = vld [vmem:[#allocation5 + $0x1940] sm:$0xff]
    %v869 = vld [vmem:[#allocation5 + $0x1948] sm:$0xff]
    %v870 = vld [vmem:[#allocation5 + $0x1950] sm:$0xff]
    %v871 = vld [vmem:[#allocation5 + $0x1958] sm:$0xff]
    %v872 = vld [vmem:[#allocation5 + $0x1960] sm:$0xff]
    %v873 = vld [vmem:[#allocation5 + $0x1968] sm:$0xff]
    %v874 = vld [vmem:[#allocation5 + $0x1970] sm:$0xff]
    %v875 = vld [vmem:[#allocation5 + $0x1978] sm:$0xff]
    %v876 = vld [vmem:[#allocation5 + $0x1980] sm:$0xff]
    %v877 = vld [vmem:[#allocation5 + $0x1988] sm:$0xff]
    %v878 = vld [vmem:[#allocation5 + $0x1990] sm:$0xff]
    %v879 = vld [vmem:[#allocation5 + $0x1998] sm:$0xff]
    %v880 = vld [vmem:[#allocation5 + $0x19a0] sm:$0xff]
    %v881 = vld [vmem:[#allocation5 + $0x19a8] sm:$0xff]
    %v882 = vld [vmem:[#allocation5 + $0x19b0] sm:$0xff]
    %v883 = vld [vmem:[#allocation5 + $0x19b8] sm:$0xff]
    %v884 = vld [vmem:[#allocation5 + $0x19c0] sm:$0xff]
    %v885 = vld [vmem:[#allocation5 + $0x19c8] sm:$0xff]
    %v886 = vld [vmem:[#allocation5 + $0x19d0] sm:$0xff]
    %v887 = vld [vmem:[#allocation5 + $0x19d8] sm:$0xff]
    %v888 = vld [vmem:[#allocation5 + $0x19e0] sm:$0xff]
    %v889 = vld [vmem:[#allocation5 + $0x19e8] sm:$0xff]
    %v890 = vld [vmem:[#allocation5 + $0x19f0] sm:$0xff]
    %v891 = vld [vmem:[#allocation5 + $0x19f8] sm:$0xff]
    %v892 = vld [vmem:[#allocation5 + $0x1a00] sm:$0xff]
    %v893 = vld [vmem:[#allocation5 + $0x1a08] sm:$0xff]
    %v894 = vld [vmem:[#allocation5 + $0x1a10] sm:$0xff]
    %v895 = vld [vmem:[#allocation5 + $0x1a18] sm:$0xff]
    %v896 = vld [vmem:[#allocation5 + $0x1a20] sm:$0xff]
    %v897 = vld [vmem:[#allocation5 + $0x1a28] sm:$0xff]
    %v898 = vld [vmem:[#allocation5 + $0x1a30] sm:$0xff]
    %v899 = vld [vmem:[#allocation5 + $0x1a38] sm:$0xff]
    %v900 = vld [vmem:[#allocation5 + $0x1a40] sm:$0xff]
    %v901 = vld [vmem:[#allocation5 + $0x1a48] sm:$0xff]
    %v902 = vld [vmem:[#allocation5 + $0x1a50] sm:$0xff]
    %v903 = vld [vmem:[#allocation5 + $0x1a58] sm:$0xff]
    %v904 = vld [vmem:[#allocation5 + $0x1a60] sm:$0xff]
    %v905 = vld [vmem:[#allocation5 + $0x1a68] sm:$0xff]
    %v906 = vld [vmem:[#allocation5 + $0x1a70] sm:$0xff]
    %v907 = vld [vmem:[#allocation5 + $0x1a78] sm:$0xff]
    %v908 = vld [vmem:[#allocation5 + $0x1a80] sm:$0xff]
    %v909 = vld [vmem:[#allocation5 + $0x1a88] sm:$0xff]
    %v910 = vld [vmem:[#allocation5 + $0x1a90] sm:$0xff]
    %v911 = vld [vmem:[#allocation5 + $0x1a98] sm:$0xff]
    %v912 = vld [vmem:[#allocation5 + $0x1aa0] sm:$0xff]
    %v913 = vld [vmem:[#allocation5 + $0x1aa8] sm:$0xff]
    %v914 = vld [vmem:[#allocation5 + $0x1ab0] sm:$0xff]
    %v915 = vld [vmem:[#allocation5 + $0x1ab8] sm:$0xff]
    %v916 = vld [vmem:[#allocation5 + $0x1ac0] sm:$0xff]
    %v917 = vld [vmem:[#allocation5 + $0x1ac8] sm:$0xff]
    %v918 = vld [vmem:[#allocation5 + $0x1ad0] sm:$0xff]
    %v919 = vld [vmem:[#allocation5 + $0x1ad8] sm:$0xff]
    %v920 = vld [vmem:[#allocation5 + $0x1ae0] sm:$0xff]
    %v921 = vld [vmem:[#allocation5 + $0x1ae8] sm:$0xff]
    %v922 = vld [vmem:[#allocation5 + $0x1af0] sm:$0xff]
    %v923 = vld [vmem:[#allocation5 + $0x1af8] sm:$0xff]
    %v924 = vld [vmem:[#allocation5 + $0x1b00] sm:$0xff]
    %v925 = vld [vmem:[#allocation5 + $0x1b08] sm:$0xff]
    %v926 = vld [vmem:[#allocation5 + $0x1b10] sm:$0xff]
    %v927 = vld [vmem:[#allocation5 + $0x1b18] sm:$0xff]
    %v928 = vld [vmem:[#allocation5 + $0x1b20] sm:$0xff]
    %v929 = vld [vmem:[#allocation5 + $0x1b28] sm:$0xff]
    %v930 = vld [vmem:[#allocation5 + $0x1b30] sm:$0xff]
    %v931 = vld [vmem:[#allocation5 + $0x1b38] sm:$0xff]
    %v932 = vld [vmem:[#allocation5 + $0x1b40] sm:$0xff]
    %v933 = vld [vmem:[#allocation5 + $0x1b48] sm:$0xff]
    %v934 = vld [vmem:[#allocation5 + $0x1b50] sm:$0xff]
    %v935 = vld [vmem:[#allocation5 + $0x1b58] sm:$0xff]
    %v936 = vld [vmem:[#allocation5 + $0x1b60] sm:$0xff]
    %v937 = vld [vmem:[#allocation5 + $0x1b68] sm:$0xff]
    %v938 = vld [vmem:[#allocation5 + $0x1b70] sm:$0xff]
    %v939 = vld [vmem:[#allocation5 + $0x1b78] sm:$0xff]
    %v940 = vld [vmem:[#allocation5 + $0x1b80] sm:$0xff]
    %v941 = vld [vmem:[#allocation5 + $0x1b88] sm:$0xff]
    %v942 = vld [vmem:[#allocation5 + $0x1b90] sm:$0xff]
    %v943 = vld [vmem:[#allocation5 + $0x1b98] sm:$0xff]
    %v944 = vld [vmem:[#allocation5 + $0x1ba0] sm:$0xff]
    %v945 = vld [vmem:[#allocation5 + $0x1ba8] sm:$0xff]
    %v946 = vld [vmem:[#allocation5 + $0x1bb0] sm:$0xff]
    %v947 = vld [vmem:[#allocation5 + $0x1bb8] sm:$0xff]
    %v948 = vld [vmem:[#allocation5 + $0x1bc0] sm:$0xff]
    %v949 = vld [vmem:[#allocation5 + $0x1bc8] sm:$0xff]
    %v950 = vld [vmem:[#allocation5 + $0x1bd0] sm:$0xff]
    %v951 = vld [vmem:[#allocation5 + $0x1bd8] sm:$0xff]
    %v952 = vld [vmem:[#allocation5 + $0x1be0] sm:$0xff]
    %v953 = vld [vmem:[#allocation5 + $0x1be8] sm:$0xff]
    %v954 = vld [vmem:[#allocation5 + $0x1bf0] sm:$0xff]
    %v955 = vld [vmem:[#allocation5 + $0x1bf8] sm:$0xff]
    %v956 = vld [vmem:[#allocation5 + $0x1c00] sm:$0xff]
    %v957 = vld [vmem:[#allocation5 + $0x1c08] sm:$0xff]
    %v958 = vld [vmem:[#allocation5 + $0x1c10] sm:$0xff]
    %v959 = vld [vmem:[#allocation5 + $0x1c18] sm:$0xff]
    %v960 = vld [vmem:[#allocation5 + $0x1c20] sm:$0xff]
    %v961 = vld [vmem:[#allocation5 + $0x1c28] sm:$0xff]
    %v962 = vld [vmem:[#allocation5 + $0x1c30] sm:$0xff]
    %v963 = vld [vmem:[#allocation5 + $0x1c38] sm:$0xff]
    %v964 = vld [vmem:[#allocation5 + $0x1c40] sm:$0xff]
    %v965 = vld [vmem:[#allocation5 + $0x1c48] sm:$0xff]
    %v966 = vld [vmem:[#allocation5 + $0x1c50] sm:$0xff]
    %v967 = vld [vmem:[#allocation5 + $0x1c58] sm:$0xff]
    %v968 = vld [vmem:[#allocation5 + $0x1c60] sm:$0xff]
    %v969 = vld [vmem:[#allocation5 + $0x1c68] sm:$0xff]
    %v970 = vld [vmem:[#allocation5 + $0x1c70] sm:$0xff]
    %v971 = vld [vmem:[#allocation5 + $0x1c78] sm:$0xff]
    %v972 = vld [vmem:[#allocation5 + $0x1c80] sm:$0xff]
    %v973 = vld [vmem:[#allocation5 + $0x1c88] sm:$0xff]
    %v974 = vld [vmem:[#allocation5 + $0x1c90] sm:$0xff]
    %v975 = vld [vmem:[#allocation5 + $0x1c98] sm:$0xff]
    %v976 = vld [vmem:[#allocation5 + $0x1ca0] sm:$0xff]
    %v977 = vld [vmem:[#allocation5 + $0x1ca8] sm:$0xff]
    %v978 = vld [vmem:[#allocation5 + $0x1cb0] sm:$0xff]
    %v979 = vld [vmem:[#allocation5 + $0x1cb8] sm:$0xff]
    %v980 = vld [vmem:[#allocation5 + $0x1cc0] sm:$0xff]
    %v981 = vld [vmem:[#allocation5 + $0x1cc8] sm:$0xff]
    %v982 = vld [vmem:[#allocation5 + $0x1cd0] sm:$0xff]
    %v983 = vld [vmem:[#allocation5 + $0x1cd8] sm:$0xff]
    %v984 = vld [vmem:[#allocation5 + $0x1ce0] sm:$0xff]
    %v985 = vld [vmem:[#allocation5 + $0x1ce8] sm:$0xff]
    %v986 = vld [vmem:[#allocation5 + $0x1cf0] sm:$0xff]
    %v987 = vld [vmem:[#allocation5 + $0x1cf8] sm:$0xff]
    %v988 = vld [vmem:[#allocation5 + $0x1d00] sm:$0xff]
    %v989 = vld [vmem:[#allocation5 + $0x1d08] sm:$0xff]
    %v990 = vld [vmem:[#allocation5 + $0x1d10] sm:$0xff]
    %v991 = vld [vmem:[#allocation5 + $0x1d18] sm:$0xff]
    %v992 = vld [vmem:[#allocation5 + $0x1d20] sm:$0xff]
    %v993 = vld [vmem:[#allocation5 + $0x1d28] sm:$0xff]
    %v994 = vld [vmem:[#allocation5 + $0x1d30] sm:$0xff]
    %v995 = vld [vmem:[#allocation5 + $0x1d38] sm:$0xff]
    %v996 = vld [vmem:[#allocation5 + $0x1d40] sm:$0xff]
    %v997 = vld [vmem:[#allocation5 + $0x1d48] sm:$0xff]
    %v998 = vld [vmem:[#allocation5 + $0x1d50] sm:$0xff]
    %v999 = vld [vmem:[#allocation5 + $0x1d58] sm:$0xff]
    %v1000 = vld [vmem:[#allocation5 + $0x1d60] sm:$0xff]
    %v1001 = vld [vmem:[#allocation5 + $0x1d68] sm:$0xff]
    %v1002 = vld [vmem:[#allocation5 + $0x1d70] sm:$0xff]
    %v1003 = vld [vmem:[#allocation5 + $0x1d78] sm:$0xff]
    %v1004 = vld [vmem:[#allocation5 + $0x1d80] sm:$0xff]
    %v1005 = vld [vmem:[#allocation5 + $0x1d88] sm:$0xff]
    %v1006 = vld [vmem:[#allocation5 + $0x1d90] sm:$0xff]
    %v1007 = vld [vmem:[#allocation5 + $0x1d98] sm:$0xff]
    %v1008 = vld [vmem:[#allocation5 + $0x1da0] sm:$0xff]
    %v1009 = vld [vmem:[#allocation5 + $0x1da8] sm:$0xff]
    %v1010 = vld [vmem:[#allocation5 + $0x1db0] sm:$0xff]
    %v1011 = vld [vmem:[#allocation5 + $0x1db8] sm:$0xff]
    %v1012 = vld [vmem:[#allocation5 + $0x1dc0] sm:$0xff]
    %v1013 = vld [vmem:[#allocation5 + $0x1dc8] sm:$0xff]
    %v1014 = vld [vmem:[#allocation5 + $0x1dd0] sm:$0xff]
    %v1015 = vld [vmem:[#allocation5 + $0x1dd8] sm:$0xff]
    %v1016 = vld [vmem:[#allocation5 + $0x1de0] sm:$0xff]
    %v1017 = vld [vmem:[#allocation5 + $0x1de8] sm:$0xff]
    %v1018 = vld [vmem:[#allocation5 + $0x1df0] sm:$0xff]
    %v1019 = vld [vmem:[#allocation5 + $0x1df8] sm:$0xff]
    %v1020 = vld [vmem:[#allocation5 + $0x1e00] sm:$0xff]
    %v1021 = vld [vmem:[#allocation5 + $0x1e08] sm:$0xff]
    %v1022 = vld [vmem:[#allocation5 + $0x1e10] sm:$0xff]
    %v1023 = vld [vmem:[#allocation5 + $0x1e18] sm:$0xff]
    %v1024 = vld [vmem:[#allocation5 + $0x1e20] sm:$0xff]
    %v1025 = vld [vmem:[#allocation5 + $0x1e28] sm:$0xff]
    %v1026 = vld [vmem:[#allocation5 + $0x1e30] sm:$0xff]
    %v1027 = vld [vmem:[#allocation5 + $0x1e38] sm:$0xff]
    %v1028 = vld [vmem:[#allocation5 + $0x1e40] sm:$0xff]
    %v1029 = vld [vmem:[#allocation5 + $0x1e48] sm:$0xff]
    %v1030 = vld [vmem:[#allocation5 + $0x1e50] sm:$0xff]
    %v1031 = vld [vmem:[#allocation5 + $0x1e58] sm:$0xff]
    %v1032 = vld [vmem:[#allocation5 + $0x1e60] sm:$0xff]
    %v1033 = vld [vmem:[#allocation5 + $0x1e68] sm:$0xff]
    %v1034 = vld [vmem:[#allocation5 + $0x1e70] sm:$0xff]
    %v1035 = vld [vmem:[#allocation5 + $0x1e78] sm:$0xff]
    %v1036 = vld [vmem:[#allocation5 + $0x1e80] sm:$0xff]
    %v1037 = vld [vmem:[#allocation5 + $0x1e88] sm:$0xff]
    %v1038 = vld [vmem:[#allocation5 + $0x1e90] sm:$0xff]
    %v1039 = vld [vmem:[#allocation5 + $0x1e98] sm:$0xff]
    %v1040 = vld [vmem:[#allocation5 + $0x1ea0] sm:$0xff]
    %v1041 = vld [vmem:[#allocation5 + $0x1ea8] sm:$0xff]
    %v1042 = vld [vmem:[#allocation5 + $0x1eb0] sm:$0xff]
    %v1043 = vld [vmem:[#allocation5 + $0x1eb8] sm:$0xff]
    %v1044 = vld [vmem:[#allocation5 + $0x1ec0] sm:$0xff]
    %v1045 = vld [vmem:[#allocation5 + $0x1ec8] sm:$0xff]
    %v1046 = vld [vmem:[#allocation5 + $0x1ed0] sm:$0xff]
    %v1047 = vld [vmem:[#allocation5 + $0x1ed8] sm:$0xff]
    %v1048 = vld [vmem:[#allocation5 + $0x1ee0] sm:$0xff]
    %v1049 = vld [vmem:[#allocation5 + $0x1ee8] sm:$0xff]
    %v1050 = vld [vmem:[#allocation5 + $0x1ef0] sm:$0xff]
    %v1051 = vld [vmem:[#allocation5 + $0x1ef8] sm:$0xff]
    %v1052 = vld [vmem:[#allocation5 + $0x1f00] sm:$0xff]
    %v1053 = vld [vmem:[#allocation5 + $0x1f08] sm:$0xff]
    %v1054 = vld [vmem:[#allocation5 + $0x1f10] sm:$0xff]
    %v1055 = vld [vmem:[#allocation5 + $0x1f18] sm:$0xff]
    %v1056 = vld [vmem:[#allocation5 + $0x1f20] sm:$0xff]
    %v1057 = vld [vmem:[#allocation5 + $0x1f28] sm:$0xff]
    %v1058 = vld [vmem:[#allocation5 + $0x1f30] sm:$0xff]
    %v1059 = vld [vmem:[#allocation5 + $0x1f38] sm:$0xff]
    %v1060 = vld [vmem:[#allocation5 + $0x1f40] sm:$0xff]
    %v1061 = vld [vmem:[#allocation5 + $0x1f48] sm:$0xff]
    %v1062 = vld [vmem:[#allocation5 + $0x1f50] sm:$0xff]
    %v1063 = vld [vmem:[#allocation5 + $0x1f58] sm:$0xff]
    %v1064 = vld [vmem:[#allocation5 + $0x1f60] sm:$0xff]
    %v1065 = vld [vmem:[#allocation5 + $0x1f68] sm:$0xff]
    %v1066 = vld [vmem:[#allocation5 + $0x1f70] sm:$0xff]
    %v1067 = vld [vmem:[#allocation5 + $0x1f78] sm:$0xff]
    %v1068 = vld [vmem:[#allocation5 + $0x1f80] sm:$0xff]
    %v1069 = vld [vmem:[#allocation5 + $0x1f88] sm:$0xff]
    %v1070 = vld [vmem:[#allocation5 + $0x1f90] sm:$0xff]
    %v1071 = vld [vmem:[#allocation5 + $0x1f98] sm:$0xff]
    %v1072 = vld [vmem:[#allocation5 + $0x1fa0] sm:$0xff]
    %v1073 = vld [vmem:[#allocation5 + $0x1fa8] sm:$0xff]
    %v1074 = vld [vmem:[#allocation5 + $0x1fb0] sm:$0xff]
    %v1075 = vld [vmem:[#allocation5 + $0x1fb8] sm:$0xff]
    %v1076 = vld [vmem:[#allocation5 + $0x1fc0] sm:$0xff]
    %v1077 = vld [vmem:[#allocation5 + $0x1fc8] sm:$0xff]
    %v1078 = vld [vmem:[#allocation5 + $0x1fd0] sm:$0xff]
    %v1079 = vld [vmem:[#allocation5 + $0x1fd8] sm:$0xff]
    %v1080 = vld [vmem:[#allocation5 + $0x1fe0] sm:$0xff]
    %v1081 = vld [vmem:[#allocation5 + $0x1fe8] sm:$0xff]
    %v1082 = vld [vmem:[#allocation5 + $0x1ff0] sm:$0xff]
    %v1083 = vld [vmem:[#allocation5 + $0x1ff8] sm:$0xff]
    %v1084 = vld [vmem:[#allocation5 + $0x2000] sm:$0xff]
    %v1085 = vld [vmem:[#allocation5 + $0x2008] sm:$0xff]
    %v1086 = vld [vmem:[#allocation5 + $0x2010] sm:$0xff]
    %v1087 = vld [vmem:[#allocation5 + $0x2018] sm:$0xff]
    %v1088 = vld [vmem:[#allocation5 + $0x2020] sm:$0xff]
    %v1089 = vld [vmem:[#allocation5 + $0x2028] sm:$0xff]
    %v1090 = vld [vmem:[#allocation5 + $0x2030] sm:$0xff]
    %v1091 = vld [vmem:[#allocation5 + $0x2038] sm:$0xff]
    %v1092 = vld [vmem:[#allocation5 + $0x2040] sm:$0xff]
    %v1093 = vld [vmem:[#allocation5 + $0x2048] sm:$0xff]
    %v1094 = vld [vmem:[#allocation5 + $0x2050] sm:$0xff]
    %v1095 = vld [vmem:[#allocation5 + $0x2058] sm:$0xff]
    %v1096 = vld [vmem:[#allocation5 + $0x2060] sm:$0xff]
    %v1097 = vld [vmem:[#allocation5 + $0x2068] sm:$0xff]
    %v1098 = vld [vmem:[#allocation5 + $0x2070] sm:$0xff]
    %v1099 = vld [vmem:[#allocation5 + $0x2078] sm:$0xff]
    %v1100 = vld [vmem:[#allocation5 + $0x2080] sm:$0xff]
    %v1101 = vld [vmem:[#allocation5 + $0x2088] sm:$0xff]
    %v1102 = vld [vmem:[#allocation5 + $0x2090] sm:$0xff]
    %v1103 = vld [vmem:[#allocation5 + $0x2098] sm:$0xff]
    %v1104 = vld [vmem:[#allocation5 + $0x20a0] sm:$0xff]
    %v1105 = vld [vmem:[#allocation5 + $0x20a8] sm:$0xff]
    %v1106 = vld [vmem:[#allocation5 + $0x20b0] sm:$0xff]
    %v1107 = vld [vmem:[#allocation5 + $0x20b8] sm:$0xff]
    %v1108 = vld [vmem:[#allocation5 + $0x20c0] sm:$0xff]
    %v1109 = vld [vmem:[#allocation5 + $0x20c8] sm:$0xff]
    %v1110 = vld [vmem:[#allocation5 + $0x20d0] sm:$0xff]
    %v1111 = vld [vmem:[#allocation5 + $0x20d8] sm:$0xff]
    %v1112 = vld [vmem:[#allocation5 + $0x20e0] sm:$0xff]
    %v1113 = vld [vmem:[#allocation5 + $0x20e8] sm:$0xff]
    %v1114 = vld [vmem:[#allocation5 + $0x20f0] sm:$0xff]
    %v1115 = vld [vmem:[#allocation5 + $0x20f8] sm:$0xff]
    %v1116 = vld [vmem:[#allocation5 + $0x2100] sm:$0xff]
    %v1117 = vld [vmem:[#allocation5 + $0x2108] sm:$0xff]
    %v1118 = vld [vmem:[#allocation5 + $0x2110] sm:$0xff]
    %v1119 = vld [vmem:[#allocation5 + $0x2118] sm:$0xff]
    %v1120 = vld [vmem:[#allocation5 + $0x2120] sm:$0xff]
    %v1121 = vld [vmem:[#allocation5 + $0x2128] sm:$0xff]
    %v1122 = vld [vmem:[#allocation5 + $0x2130] sm:$0xff]
    %v1123 = vld [vmem:[#allocation5 + $0x2138] sm:$0xff]
    %v1124 = vld [vmem:[#allocation5 + $0x2140] sm:$0xff]
    %v1125 = vld [vmem:[#allocation5 + $0x2148] sm:$0xff]
    %v1126 = vld [vmem:[#allocation5 + $0x2150] sm:$0xff]
    %v1127 = vld [vmem:[#allocation5 + $0x2158] sm:$0xff]
    %v1128 = vld [vmem:[#allocation5 + $0x2160] sm:$0xff]
    %v1129 = vld [vmem:[#allocation5 + $0x2168] sm:$0xff]
    %v1130 = vld [vmem:[#allocation5 + $0x2170] sm:$0xff]
    %v1131 = vld [vmem:[#allocation5 + $0x2178] sm:$0xff]
    %v1132 = vld [vmem:[#allocation5 + $0x2180] sm:$0xff]
    %v1133 = vld [vmem:[#allocation5 + $0x2188] sm:$0xff]
    %v1134 = vld [vmem:[#allocation5 + $0x2190] sm:$0xff]
    %v1135 = vld [vmem:[#allocation5 + $0x2198] sm:$0xff]
    %v1136 = vld [vmem:[#allocation5 + $0x21a0] sm:$0xff]
    %v1137 = vld [vmem:[#allocation5 + $0x21a8] sm:$0xff]
    %v1138 = vld [vmem:[#allocation5 + $0x21b0] sm:$0xff]
    %v1139 = vld [vmem:[#allocation5 + $0x21b8] sm:$0xff]
    %v1140 = vld [vmem:[#allocation5 + $0x21c0] sm:$0xff]
    %v1141 = vld [vmem:[#allocation5 + $0x21c8] sm:$0xff]
    %v1142 = vld [vmem:[#allocation5 + $0x21d0] sm:$0xff]
    %v1143 = vld [vmem:[#allocation5 + $0x21d8] sm:$0xff]
    %v1144 = vld [vmem:[#allocation5 + $0x21e0] sm:$0xff]
    %v1145 = vld [vmem:[#allocation5 + $0x21e8] sm:$0xff]
    %v1146 = vld [vmem:[#allocation5 + $0x21f0] sm:$0xff]
    %v1147 = vld [vmem:[#allocation5 + $0x21f8] sm:$0xff]
    %v1148 = vld [vmem:[#allocation5 + $0x2200] sm:$0xff]
    %v1149 = vld [vmem:[#allocation5 + $0x2208] sm:$0xff]
    %v1150 = vld [vmem:[#allocation5 + $0x2210] sm:$0xff]
    %v1151 = vld [vmem:[#allocation5 + $0x2218] sm:$0xff]
    %v1152 = vld [vmem:[#allocation5 + $0x2220] sm:$0xff]
    %v1153 = vld [vmem:[#allocation5 + $0x2228] sm:$0xff]
    %v1154 = vld [vmem:[#allocation5 + $0x2230] sm:$0xff]
    %v1155 = vld [vmem:[#allocation5 + $0x2238] sm:$0xff]
    %v1156 = vld [vmem:[#allocation5 + $0x2240] sm:$0xff]
    %v1157 = vld [vmem:[#allocation5 + $0x2248] sm:$0xff]
    %v1158 = vld [vmem:[#allocation5 + $0x2250] sm:$0xff]
    %v1159 = vld [vmem:[#allocation5 + $0x2258] sm:$0xff]
    %v1160 = vld [vmem:[#allocation5 + $0x2260] sm:$0xff]
    %v1161 = vld [vmem:[#allocation5 + $0x2268] sm:$0xff]
    %v1162 = vld [vmem:[#allocation5 + $0x2270] sm:$0xff]
    %v1163 = vld [vmem:[#allocation5 + $0x2278] sm:$0xff]
    %v1164 = vld [vmem:[#allocation5 + $0x2280] sm:$0xff]
    %v1165 = vld [vmem:[#allocation5 + $0x2288] sm:$0xff]
    %v1166 = vld [vmem:[#allocation5 + $0x2290] sm:$0xff]
    %v1167 = vld [vmem:[#allocation5 + $0x2298] sm:$0xff]
    %v1168 = vld [vmem:[#allocation5 + $0x22a0] sm:$0xff]
    %v1169 = vld [vmem:[#allocation5 + $0x22a8] sm:$0xff]
    %v1170 = vld [vmem:[#allocation5 + $0x22b0] sm:$0xff]
    %v1171 = vld [vmem:[#allocation5 + $0x22b8] sm:$0xff]
    %v1172 = vld [vmem:[#allocation5 + $0x22c0] sm:$0xff]
    %v1173 = vld [vmem:[#allocation5 + $0x22c8] sm:$0xff]
    %v1174 = vld [vmem:[#allocation5 + $0x22d0] sm:$0xff]
    %v1175 = vld [vmem:[#allocation5 + $0x22d8] sm:$0xff]
    %v1176 = vld [vmem:[#allocation5 + $0x22e0] sm:$0xff]
    %v1177 = vld [vmem:[#allocation5 + $0x22e8] sm:$0xff]
    %v1178 = vld [vmem:[#allocation5 + $0x22f0] sm:$0xff]
    %v1179 = vld [vmem:[#allocation5 + $0x22f8] sm:$0xff]
    %v1180 = vld [vmem:[#allocation5 + $0x2300] sm:$0xff]
    %v1181 = vld [vmem:[#allocation5 + $0x2308] sm:$0xff]
    %v1182 = vld [vmem:[#allocation5 + $0x2310] sm:$0xff]
    %v1183 = vld [vmem:[#allocation5 + $0x2318] sm:$0xff]
    %v1184 = vld [vmem:[#allocation5 + $0x2320] sm:$0xff]
    %v1185 = vld [vmem:[#allocation5 + $0x2328] sm:$0xff]
    %v1186 = vld [vmem:[#allocation5 + $0x2330] sm:$0xff]
    %v1187 = vld [vmem:[#allocation5 + $0x2338] sm:$0xff]
    %v1188 = vld [vmem:[#allocation5 + $0x2340] sm:$0xff]
    %v1189 = vld [vmem:[#allocation5 + $0x2348] sm:$0xff]
    %v1190 = vld [vmem:[#allocation5 + $0x2350] sm:$0xff]
    %v1191 = vld [vmem:[#allocation5 + $0x2358] sm:$0xff]
    %v1192 = vld [vmem:[#allocation5 + $0x2360] sm:$0xff]
    %v1193 = vld [vmem:[#allocation5 + $0x2368] sm:$0xff]
    %v1194 = vld [vmem:[#allocation5 + $0x2370] sm:$0xff]
    %v1195 = vld [vmem:[#allocation5 + $0x2378] sm:$0xff]
    %v1196 = vld [vmem:[#allocation5 + $0x2380] sm:$0xff]
    %v1197 = vld [vmem:[#allocation5 + $0x2388] sm:$0xff]
    %v1198 = vld [vmem:[#allocation5 + $0x2390] sm:$0xff]
    %v1199 = vld [vmem:[#allocation5 + $0x2398] sm:$0xff]
    %v1200 = vld [vmem:[#allocation5 + $0x23a0] sm:$0xff]
    %v1201 = vld [vmem:[#allocation5 + $0x23a8] sm:$0xff]
    %v1202 = vld [vmem:[#allocation5 + $0x23b0] sm:$0xff]
    %v1203 = vld [vmem:[#allocation5 + $0x23b8] sm:$0xff]
    %v1204 = vld [vmem:[#allocation5 + $0x23c0] sm:$0xff]
    %v1205 = vld [vmem:[#allocation5 + $0x23c8] sm:$0xff]
    %v1206 = vld [vmem:[#allocation5 + $0x23d0] sm:$0xff]
    %v1207 = vld [vmem:[#allocation5 + $0x23d8] sm:$0xff]
    %v1208 = vld [vmem:[#allocation5 + $0x23e0] sm:$0xff]
    %v1209 = vld [vmem:[#allocation5 + $0x23e8] sm:$0xff]
    %v1210 = vld [vmem:[#allocation5 + $0x23f0] sm:$0xff]
    %v1211 = vld [vmem:[#allocation5 + $0x23f8] sm:$0xff]
    %v1212 = vld [vmem:[#allocation7] sm:$0xff]
    %v1213 = vld [vmem:[#allocation7 + $0x8] sm:$0xff]
    %v1214 = vld [vmem:[#allocation7 + $0x10] sm:$0xff]
    %v1218 = vlaneseq
    %v1219 = vshrl.u32 %v1218, 7
    %v1220 = vsub.s32 0, %v1219
    %v1221 = vrot.slane %v1212, %v1220
    %v1222 = vlaneseq
    %v1223 = vshrl.u32 %v1222, 7
    %v1224 = vsub.s32 1, %v1223
    %v1225 = vrot.slane %v1212, %v1224
    %v1226 = vlaneseq
    %v1227 = vshrl.u32 %v1226, 7
    %v1228 = vsub.s32 2, %v1227
    %v1229 = vrot.slane %v1212, %v1228
    %v1230 = vlaneseq
    %v1231 = vshrl.u32 %v1230, 7
    %v1232 = vsub.s32 3, %v1231
    %v1233 = vrot.slane %v1212, %v1232
    %v1234 = vlaneseq
    %v1235 = vshrl.u32 %v1234, 7
    %v1236 = vsub.s32 4, %v1235
    %v1237 = vrot.slane %v1212, %v1236
    %v1238 = vlaneseq
    %v1239 = vshrl.u32 %v1238, 7
    %v1240 = vsub.s32 5, %v1239
    %v1241 = vrot.slane %v1212, %v1240
    %v1242 = vlaneseq
    %v1243 = vshrl.u32 %v1242, 7
    %v1244 = vsub.s32 6, %v1243
    %v1245 = vrot.slane %v1212, %v1244
    %v1246 = vlaneseq
    %v1247 = vshrl.u32 %v1246, 7
    %v1248 = vsub.s32 7, %v1247
    %v1249 = vrot.slane %v1212, %v1248
    %v1250 = vlaneseq
    %v1251 = vshrl.u32 %v1250, 7
    %v1252 = vsub.s32 0, %v1251
    %v1253 = vrot.slane %v1213, %v1252
    %v1254 = vlaneseq
    %v1255 = vshrl.u32 %v1254, 7
    %v1256 = vsub.s32 1, %v1255
    %v1257 = vrot.slane %v1213, %v1256
    %v1258 = vlaneseq
    %v1259 = vshrl.u32 %v1258, 7
    %v1260 = vsub.s32 2, %v1259
    %v1261 = vrot.slane %v1213, %v1260
    %v1262 = vlaneseq
    %v1263 = vshrl.u32 %v1262, 7
    %v1264 = vsub.s32 3, %v1263
    %v1265 = vrot.slane %v1213, %v1264
    %v1266 = vlaneseq
    %v1267 = vshrl.u32 %v1266, 7
    %v1268 = vsub.s32 4, %v1267
    %v1269 = vrot.slane %v1213, %v1268
    %v1270 = vlaneseq
    %v1271 = vshrl.u32 %v1270, 7
    %v1272 = vsub.s32 5, %v1271
    %v1273 = vrot.slane %v1213, %v1272
    %v1274 = vlaneseq
    %v1275 = vshrl.u32 %v1274, 7
    %v1276 = vsub.s32 6, %v1275
    %v1277 = vrot.slane %v1213, %v1276
    %v1278 = vlaneseq
    %v1279 = vshrl.u32 %v1278, 7
    %v1280 = vsub.s32 7, %v1279
    %v1281 = vrot.slane %v1213, %v1280
    %v1282 = vlaneseq
    %v1283 = vshrl.u32 %v1282, 7
    %v1284 = vsub.s32 0, %v1283
    %v1285 = vrot.slane %v1214, %v1284
    %v1286 = vlaneseq
    %v1287 = vshrl.u32 %v1286, 7
    %v1288 = vsub.s32 1, %v1287
    %v1289 = vrot.slane %v1214, %v1288
    %v1290 = vlaneseq
    %v1291 = vshrl.u32 %v1290, 7
    %v1292 = vsub.s32 2, %v1291
    %v1293 = vrot.slane %v1214, %v1292
    %v1294 = vlaneseq
    %v1295 = vshrl.u32 %v1294, 7
    %v1296 = vsub.s32 3, %v1295
    %v1297 = vrot.slane %v1214, %v1296
    %v1298 = vlaneseq
    %v1299 = vshrl.u32 %v1298, 7
    %v1300 = vsub.s32 4, %v1299
    %v1301 = vrot.slane %v1214, %v1300
    %v1302 = vlaneseq
    %v1303 = vshrl.u32 %v1302, 7
    %v1304 = vsub.s32 5, %v1303
    %v1305 = vrot.slane %v1214, %v1304
    %v1306 = vlaneseq
    %v1307 = vshrl.u32 %v1306, 7
    %v1308 = vsub.s32 6, %v1307
    %v1309 = vrot.slane %v1214, %v1308
    %v1310 = vlaneseq
    %v1311 = vshrl.u32 %v1310, 7
    %v1312 = vsub.s32 7, %v1311
    %v1313 = vrot.slane %v1214, %v1312
    %v1344 = vunpack.c.l.b16 %v54
    %v1345 = vunpack.c.h.b16 %v54
    %v1346 = vunpack.c.l.b16 %v55
    %v1347 = vunpack.c.h.b16 %v55
    %v1348 = vunpack.c.l.b16 %v56
    %v1349 = vunpack.c.h.b16 %v56
    %v1350 = vunpack.c.l.b16 %v57
    %v1351 = vunpack.c.h.b16 %v57
    %v1352 = vunpack.c.l.b16 %v58
    %v1353 = vunpack.c.h.b16 %v58
    %v1354 = vunpack.c.l.b16 %v59
    %v1355 = vunpack.c.h.b16 %v59
    %v1356 = vpack.c.b16 %v1350, %v1344
    %v1357 = vpack.c.b16 %v1351, %v1345
    %v1358 = vpack.c.b16 %v1352, %v1346
    %v1359 = vpack.c.b16 %v1353, %v1347
    %v1360 = vpack.c.b16 %v1354, %v1348
    %v1361 = vpack.c.b16 %v1355, %v1349
    %v2520 = vunpack.c.l.b16 %v60
    %v2521 = vunpack.c.h.b16 %v60
    %v2522 = vunpack.c.l.b16 %v61
    %v2523 = vunpack.c.h.b16 %v61
    %v2524 = vunpack.c.l.b16 %v62
    %v2525 = vunpack.c.h.b16 %v62
    %v2526 = vunpack.c.l.b16 %v63
    %v2527 = vunpack.c.h.b16 %v63
    %v2528 = vunpack.c.l.b16 %v64
    %v2529 = vunpack.c.h.b16 %v64
    %v2530 = vunpack.c.l.b16 %v65
    %v2531 = vunpack.c.h.b16 %v65
    %v2532 = vunpack.c.l.b16 %v66
    %v2533 = vunpack.c.h.b16 %v66
    %v2534 = vunpack.c.l.b16 %v67
    %v2535 = vunpack.c.h.b16 %v67
    %v2536 = vunpack.c.l.b16 %v68
    %v2537 = vunpack.c.h.b16 %v68
    %v2538 = vunpack.c.l.b16 %v69
    %v2539 = vunpack.c.h.b16 %v69
    %v2540 = vunpack.c.l.b16 %v70
    %v2541 = vunpack.c.h.b16 %v70
    %v2542 = vunpack.c.l.b16 %v71
    %v2543 = vunpack.c.h.b16 %v71
    %v2544 = vunpack.c.l.b16 %v72
    %v2545 = vunpack.c.h.b16 %v72
    %v2546 = vunpack.c.l.b16 %v73
    %v2547 = vunpack.c.h.b16 %v73
    %v2548 = vunpack.c.l.b16 %v74
    %v2549 = vunpack.c.h.b16 %v74
    %v2550 = vunpack.c.l.b16 %v75
    %v2551 = vunpack.c.h.b16 %v75
    %v2552 = vunpack.c.l.b16 %v76
    %v2553 = vunpack.c.h.b16 %v76
    %v2554 = vunpack.c.l.b16 %v77
    %v2555 = vunpack.c.h.b16 %v77
    %v2556 = vunpack.c.l.b16 %v78
    %v2557 = vunpack.c.h.b16 %v78
    %v2558 = vunpack.c.l.b16 %v79
    %v2559 = vunpack.c.h.b16 %v79
    %v2560 = vunpack.c.l.b16 %v80
    %v2561 = vunpack.c.h.b16 %v80
    %v2562 = vunpack.c.l.b16 %v81
    %v2563 = vunpack.c.h.b16 %v81
    %v2564 = vunpack.c.l.b16 %v82
    %v2565 = vunpack.c.h.b16 %v82
    %v2566 = vunpack.c.l.b16 %v83
    %v2567 = vunpack.c.h.b16 %v83
    %v2568 = vunpack.c.l.b16 %v84
    %v2569 = vunpack.c.h.b16 %v84
    %v2570 = vunpack.c.l.b16 %v85
    %v2571 = vunpack.c.h.b16 %v85
    %v2572 = vunpack.c.l.b16 %v86
    %v2573 = vunpack.c.h.b16 %v86
    %v2574 = vunpack.c.l.b16 %v87
    %v2575 = vunpack.c.h.b16 %v87
    %v2576 = vunpack.c.l.b16 %v88
    %v2577 = vunpack.c.h.b16 %v88
    %v2578 = vunpack.c.l.b16 %v89
    %v2579 = vunpack.c.h.b16 %v89
    %v2580 = vunpack.c.l.b16 %v90
    %v2581 = vunpack.c.h.b16 %v90
    %v2582 = vunpack.c.l.b16 %v91
    %v2583 = vunpack.c.h.b16 %v91
    %v2584 = vunpack.c.l.b16 %v92
    %v2585 = vunpack.c.h.b16 %v92
    %v2586 = vunpack.c.l.b16 %v93
    %v2587 = vunpack.c.h.b16 %v93
    %v2588 = vunpack.c.l.b16 %v94
    %v2589 = vunpack.c.h.b16 %v94
    %v2590 = vunpack.c.l.b16 %v95
    %v2591 = vunpack.c.h.b16 %v95
    %v2592 = vunpack.c.l.b16 %v96
    %v2593 = vunpack.c.h.b16 %v96
    %v2594 = vunpack.c.l.b16 %v97
    %v2595 = vunpack.c.h.b16 %v97
    %v2596 = vunpack.c.l.b16 %v98
    %v2597 = vunpack.c.h.b16 %v98
    %v2598 = vunpack.c.l.b16 %v99
    %v2599 = vunpack.c.h.b16 %v99
    %v2600 = vunpack.c.l.b16 %v100
    %v2601 = vunpack.c.h.b16 %v100
    %v2602 = vunpack.c.l.b16 %v101
    %v2603 = vunpack.c.h.b16 %v101
    %v2604 = vunpack.c.l.b16 %v102
    %v2605 = vunpack.c.h.b16 %v102
    %v2606 = vunpack.c.l.b16 %v103
    %v2607 = vunpack.c.h.b16 %v103
    %v2608 = vunpack.c.l.b16 %v104
    %v2609 = vunpack.c.h.b16 %v104
    %v2610 = vunpack.c.l.b16 %v105
    %v2611 = vunpack.c.h.b16 %v105
    %v2612 = vunpack.c.l.b16 %v106
    %v2613 = vunpack.c.h.b16 %v106
    %v2614 = vunpack.c.l.b16 %v107
    %v2615 = vunpack.c.h.b16 %v107
    %v2616 = vunpack.c.l.b16 %v108
    %v2617 = vunpack.c.h.b16 %v108
    %v2618 = vunpack.c.l.b16 %v109
    %v2619 = vunpack.c.h.b16 %v109
    %v2620 = vunpack.c.l.b16 %v110
    %v2621 = vunpack.c.h.b16 %v110
    %v2622 = vunpack.c.l.b16 %v111
    %v2623 = vunpack.c.h.b16 %v111
    %v2624 = vunpack.c.l.b16 %v112
    %v2625 = vunpack.c.h.b16 %v112
    %v2626 = vunpack.c.l.b16 %v113
    %v2627 = vunpack.c.h.b16 %v113
    %v2628 = vunpack.c.l.b16 %v114
    %v2629 = vunpack.c.h.b16 %v114
    %v2630 = vunpack.c.l.b16 %v115
    %v2631 = vunpack.c.h.b16 %v115
    %v2632 = vunpack.c.l.b16 %v116
    %v2633 = vunpack.c.h.b16 %v116
    %v2634 = vunpack.c.l.b16 %v117
    %v2635 = vunpack.c.h.b16 %v117
    %v2636 = vunpack.c.l.b16 %v118
    %v2637 = vunpack.c.h.b16 %v118
    %v2638 = vunpack.c.l.b16 %v119
    %v2639 = vunpack.c.h.b16 %v119
    %v2640 = vunpack.c.l.b16 %v120
    %v2641 = vunpack.c.h.b16 %v120
    %v2642 = vunpack.c.l.b16 %v121
    %v2643 = vunpack.c.h.b16 %v121
    %v2644 = vunpack.c.l.b16 %v122
    %v2645 = vunpack.c.h.b16 %v122
    %v2646 = vunpack.c.l.b16 %v123
    %v2647 = vunpack.c.h.b16 %v123
    %v2648 = vunpack.c.l.b16 %v124
    %v2649 = vunpack.c.h.b16 %v124
    %v2650 = vunpack.c.l.b16 %v125
    %v2651 = vunpack.c.h.b16 %v125
    %v2652 = vunpack.c.l.b16 %v126
    %v2653 = vunpack.c.h.b16 %v126
    %v2654 = vunpack.c.l.b16 %v127
    %v2655 = vunpack.c.h.b16 %v127
    %v2656 = vunpack.c.l.b16 %v128
    %v2657 = vunpack.c.h.b16 %v128
    %v2658 = vunpack.c.l.b16 %v129
    %v2659 = vunpack.c.h.b16 %v129
    %v2660 = vunpack.c.l.b16 %v130
    %v2661 = vunpack.c.h.b16 %v130
    %v2662 = vunpack.c.l.b16 %v131
    %v2663 = vunpack.c.h.b16 %v131
    %v2664 = vunpack.c.l.b16 %v132
    %v2665 = vunpack.c.h.b16 %v132
    %v2666 = vunpack.c.l.b16 %v133
    %v2667 = vunpack.c.h.b16 %v133
    %v2668 = vunpack.c.l.b16 %v134
    %v2669 = vunpack.c.h.b16 %v134
    %v2670 = vunpack.c.l.b16 %v135
    %v2671 = vunpack.c.h.b16 %v135
    %v2672 = vunpack.c.l.b16 %v136
    %v2673 = vunpack.c.h.b16 %v136
    %v2674 = vunpack.c.l.b16 %v137
    %v2675 = vunpack.c.h.b16 %v137
    %v2676 = vunpack.c.l.b16 %v138
    %v2677 = vunpack.c.h.b16 %v138
    %v2678 = vunpack.c.l.b16 %v139
    %v2679 = vunpack.c.h.b16 %v139
    %v2680 = vunpack.c.l.b16 %v140
    %v2681 = vunpack.c.h.b16 %v140
    %v2682 = vunpack.c.l.b16 %v141
    %v2683 = vunpack.c.h.b16 %v141
    %v2684 = vunpack.c.l.b16 %v142
    %v2685 = vunpack.c.h.b16 %v142
    %v2686 = vunpack.c.l.b16 %v143
    %v2687 = vunpack.c.h.b16 %v143
    %v2688 = vunpack.c.l.b16 %v144
    %v2689 = vunpack.c.h.b16 %v144
    %v2690 = vunpack.c.l.b16 %v145
    %v2691 = vunpack.c.h.b16 %v145
    %v2692 = vunpack.c.l.b16 %v146
    %v2693 = vunpack.c.h.b16 %v146
    %v2694 = vunpack.c.l.b16 %v147
    %v2695 = vunpack.c.h.b16 %v147
    %v2696 = vunpack.c.l.b16 %v148
    %v2697 = vunpack.c.h.b16 %v148
    %v2698 = vunpack.c.l.b16 %v149
    %v2699 = vunpack.c.h.b16 %v149
    %v2700 = vunpack.c.l.b16 %v150
    %v2701 = vunpack.c.h.b16 %v150
    %v2702 = vunpack.c.l.b16 %v151
    %v2703 = vunpack.c.h.b16 %v151
    %v2704 = vunpack.c.l.b16 %v152
    %v2705 = vunpack.c.h.b16 %v152
    %v2706 = vunpack.c.l.b16 %v153
    %v2707 = vunpack.c.h.b16 %v153
    %v2708 = vunpack.c.l.b16 %v154
    %v2709 = vunpack.c.h.b16 %v154
    %v2710 = vunpack.c.l.b16 %v155
    %v2711 = vunpack.c.h.b16 %v155
    %v2712 = vunpack.c.l.b16 %v156
    %v2713 = vunpack.c.h.b16 %v156
    %v2714 = vunpack.c.l.b16 %v157
    %v2715 = vunpack.c.h.b16 %v157
    %v2716 = vunpack.c.l.b16 %v158
    %v2717 = vunpack.c.h.b16 %v158
    %v2718 = vunpack.c.l.b16 %v159
    %v2719 = vunpack.c.h.b16 %v159
    %v2720 = vunpack.c.l.b16 %v160
    %v2721 = vunpack.c.h.b16 %v160
    %v2722 = vunpack.c.l.b16 %v161
    %v2723 = vunpack.c.h.b16 %v161
    %v2724 = vunpack.c.l.b16 %v162
    %v2725 = vunpack.c.h.b16 %v162
    %v2726 = vunpack.c.l.b16 %v163
    %v2727 = vunpack.c.h.b16 %v163
    %v2728 = vunpack.c.l.b16 %v164
    %v2729 = vunpack.c.h.b16 %v164
    %v2730 = vunpack.c.l.b16 %v165
    %v2731 = vunpack.c.h.b16 %v165
    %v2732 = vunpack.c.l.b16 %v166
    %v2733 = vunpack.c.h.b16 %v166
    %v2734 = vunpack.c.l.b16 %v167
    %v2735 = vunpack.c.h.b16 %v167
    %v2736 = vunpack.c.l.b16 %v168
    %v2737 = vunpack.c.h.b16 %v168
    %v2738 = vunpack.c.l.b16 %v169
    %v2739 = vunpack.c.h.b16 %v169
    %v2740 = vunpack.c.l.b16 %v170
    %v2741 = vunpack.c.h.b16 %v170
    %v2742 = vunpack.c.l.b16 %v171
    %v2743 = vunpack.c.h.b16 %v171
    %v2744 = vunpack.c.l.b16 %v172
    %v2745 = vunpack.c.h.b16 %v172
    %v2746 = vunpack.c.l.b16 %v173
    %v2747 = vunpack.c.h.b16 %v173
    %v2748 = vunpack.c.l.b16 %v174
    %v2749 = vunpack.c.h.b16 %v174
    %v2750 = vunpack.c.l.b16 %v175
    %v2751 = vunpack.c.h.b16 %v175
    %v2752 = vunpack.c.l.b16 %v176
    %v2753 = vunpack.c.h.b16 %v176
    %v2754 = vunpack.c.l.b16 %v177
    %v2755 = vunpack.c.h.b16 %v177
    %v2756 = vunpack.c.l.b16 %v178
    %v2757 = vunpack.c.h.b16 %v178
    %v2758 = vunpack.c.l.b16 %v179
    %v2759 = vunpack.c.h.b16 %v179
    %v2760 = vunpack.c.l.b16 %v180
    %v2761 = vunpack.c.h.b16 %v180
    %v2762 = vunpack.c.l.b16 %v181
    %v2763 = vunpack.c.h.b16 %v181
    %v2764 = vunpack.c.l.b16 %v182
    %v2765 = vunpack.c.h.b16 %v182
    %v2766 = vunpack.c.l.b16 %v183
    %v2767 = vunpack.c.h.b16 %v183
    %v2768 = vunpack.c.l.b16 %v184
    %v2769 = vunpack.c.h.b16 %v184
    %v2770 = vunpack.c.l.b16 %v185
    %v2771 = vunpack.c.h.b16 %v185
    %v2772 = vunpack.c.l.b16 %v186
    %v2773 = vunpack.c.h.b16 %v186
    %v2774 = vunpack.c.l.b16 %v187
    %v2775 = vunpack.c.h.b16 %v187
    %v2776 = vunpack.c.l.b16 %v188
    %v2777 = vunpack.c.h.b16 %v188
    %v2778 = vunpack.c.l.b16 %v189
    %v2779 = vunpack.c.h.b16 %v189
    %v2780 = vunpack.c.l.b16 %v190
    %v2781 = vunpack.c.h.b16 %v190
    %v2782 = vunpack.c.l.b16 %v191
    %v2783 = vunpack.c.h.b16 %v191
    %v2784 = vunpack.c.l.b16 %v192
    %v2785 = vunpack.c.h.b16 %v192
    %v2786 = vunpack.c.l.b16 %v193
    %v2787 = vunpack.c.h.b16 %v193
    %v2788 = vunpack.c.l.b16 %v194
    %v2789 = vunpack.c.h.b16 %v194
    %v2790 = vunpack.c.l.b16 %v195
    %v2791 = vunpack.c.h.b16 %v195
    %v2792 = vunpack.c.l.b16 %v196
    %v2793 = vunpack.c.h.b16 %v196
    %v2794 = vunpack.c.l.b16 %v197
    %v2795 = vunpack.c.h.b16 %v197
    %v2796 = vunpack.c.l.b16 %v198
    %v2797 = vunpack.c.h.b16 %v198
    %v2798 = vunpack.c.l.b16 %v199
    %v2799 = vunpack.c.h.b16 %v199
    %v2800 = vunpack.c.l.b16 %v200
    %v2801 = vunpack.c.h.b16 %v200
    %v2802 = vunpack.c.l.b16 %v201
    %v2803 = vunpack.c.h.b16 %v201
    %v2804 = vunpack.c.l.b16 %v202
    %v2805 = vunpack.c.h.b16 %v202
    %v2806 = vunpack.c.l.b16 %v203
    %v2807 = vunpack.c.h.b16 %v203
    %v2808 = vunpack.c.l.b16 %v204
    %v2809 = vunpack.c.h.b16 %v204
    %v2810 = vunpack.c.l.b16 %v205
    %v2811 = vunpack.c.h.b16 %v205
    %v2812 = vunpack.c.l.b16 %v206
    %v2813 = vunpack.c.h.b16 %v206
    %v2814 = vunpack.c.l.b16 %v207
    %v2815 = vunpack.c.h.b16 %v207
    %v2816 = vunpack.c.l.b16 %v208
    %v2817 = vunpack.c.h.b16 %v208
    %v2818 = vunpack.c.l.b16 %v209
    %v2819 = vunpack.c.h.b16 %v209
    %v2820 = vunpack.c.l.b16 %v210
    %v2821 = vunpack.c.h.b16 %v210
    %v2822 = vunpack.c.l.b16 %v211
    %v2823 = vunpack.c.h.b16 %v211
    %v2824 = vunpack.c.l.b16 %v212
    %v2825 = vunpack.c.h.b16 %v212
    %v2826 = vunpack.c.l.b16 %v213
    %v2827 = vunpack.c.h.b16 %v213
    %v2828 = vunpack.c.l.b16 %v214
    %v2829 = vunpack.c.h.b16 %v214
    %v2830 = vunpack.c.l.b16 %v215
    %v2831 = vunpack.c.h.b16 %v215
    %v2832 = vunpack.c.l.b16 %v216
    %v2833 = vunpack.c.h.b16 %v216
    %v2834 = vunpack.c.l.b16 %v217
    %v2835 = vunpack.c.h.b16 %v217
    %v2836 = vunpack.c.l.b16 %v218
    %v2837 = vunpack.c.h.b16 %v218
    %v2838 = vunpack.c.l.b16 %v219
    %v2839 = vunpack.c.h.b16 %v219
    %v2840 = vunpack.c.l.b16 %v220
    %v2841 = vunpack.c.h.b16 %v220
    %v2842 = vunpack.c.l.b16 %v221
    %v2843 = vunpack.c.h.b16 %v221
    %v2844 = vunpack.c.l.b16 %v222
    %v2845 = vunpack.c.h.b16 %v222
    %v2846 = vunpack.c.l.b16 %v223
    %v2847 = vunpack.c.h.b16 %v223
    %v2848 = vunpack.c.l.b16 %v224
    %v2849 = vunpack.c.h.b16 %v224
    %v2850 = vunpack.c.l.b16 %v225
    %v2851 = vunpack.c.h.b16 %v225
    %v2852 = vunpack.c.l.b16 %v226
    %v2853 = vunpack.c.h.b16 %v226
    %v2854 = vunpack.c.l.b16 %v227
    %v2855 = vunpack.c.h.b16 %v227
    %v2856 = vunpack.c.l.b16 %v228
    %v2857 = vunpack.c.h.b16 %v228
    %v2858 = vunpack.c.l.b16 %v229
    %v2859 = vunpack.c.h.b16 %v229
    %v2860 = vunpack.c.l.b16 %v230
    %v2861 = vunpack.c.h.b16 %v230
    %v2862 = vunpack.c.l.b16 %v231
    %v2863 = vunpack.c.h.b16 %v231
    %v2864 = vunpack.c.l.b16 %v232
    %v2865 = vunpack.c.h.b16 %v232
    %v2866 = vunpack.c.l.b16 %v233
    %v2867 = vunpack.c.h.b16 %v233
    %v2868 = vunpack.c.l.b16 %v234
    %v2869 = vunpack.c.h.b16 %v234
    %v2870 = vunpack.c.l.b16 %v235
    %v2871 = vunpack.c.h.b16 %v235
    %v2872 = vunpack.c.l.b16 %v236
    %v2873 = vunpack.c.h.b16 %v236
    %v2874 = vunpack.c.l.b16 %v237
    %v2875 = vunpack.c.h.b16 %v237
    %v2876 = vunpack.c.l.b16 %v238
    %v2877 = vunpack.c.h.b16 %v238
    %v2878 = vunpack.c.l.b16 %v239
    %v2879 = vunpack.c.h.b16 %v239
    %v2880 = vunpack.c.l.b16 %v240
    %v2881 = vunpack.c.h.b16 %v240
    %v2882 = vunpack.c.l.b16 %v241
    %v2883 = vunpack.c.h.b16 %v241
    %v2884 = vunpack.c.l.b16 %v242
    %v2885 = vunpack.c.h.b16 %v242
    %v2886 = vunpack.c.l.b16 %v243
    %v2887 = vunpack.c.h.b16 %v243
    %v2888 = vunpack.c.l.b16 %v244
    %v2889 = vunpack.c.h.b16 %v244
    %v2890 = vunpack.c.l.b16 %v245
    %v2891 = vunpack.c.h.b16 %v245
    %v2892 = vunpack.c.l.b16 %v246
    %v2893 = vunpack.c.h.b16 %v246
    %v2894 = vunpack.c.l.b16 %v247
    %v2895 = vunpack.c.h.b16 %v247
    %v2896 = vunpack.c.l.b16 %v248
    %v2897 = vunpack.c.h.b16 %v248
    %v2898 = vunpack.c.l.b16 %v249
    %v2899 = vunpack.c.h.b16 %v249
    %v2900 = vunpack.c.l.b16 %v250
    %v2901 = vunpack.c.h.b16 %v250
    %v2902 = vunpack.c.l.b16 %v251
    %v2903 = vunpack.c.h.b16 %v251
    %v2904 = vunpack.c.l.b16 %v252
    %v2905 = vunpack.c.h.b16 %v252
    %v2906 = vunpack.c.l.b16 %v253
    %v2907 = vunpack.c.h.b16 %v253
    %v2908 = vunpack.c.l.b16 %v254
    %v2909 = vunpack.c.h.b16 %v254
    %v2910 = vunpack.c.l.b16 %v255
    %v2911 = vunpack.c.h.b16 %v255
    %v2912 = vunpack.c.l.b16 %v256
    %v2913 = vunpack.c.h.b16 %v256
    %v2914 = vunpack.c.l.b16 %v257
    %v2915 = vunpack.c.h.b16 %v257
    %v2916 = vunpack.c.l.b16 %v258
    %v2917 = vunpack.c.h.b16 %v258
    %v2918 = vunpack.c.l.b16 %v259
    %v2919 = vunpack.c.h.b16 %v259
    %v2920 = vunpack.c.l.b16 %v260
    %v2921 = vunpack.c.h.b16 %v260
    %v2922 = vunpack.c.l.b16 %v261
    %v2923 = vunpack.c.h.b16 %v261
    %v2924 = vunpack.c.l.b16 %v262
    %v2925 = vunpack.c.h.b16 %v262
    %v2926 = vunpack.c.l.b16 %v263
    %v2927 = vunpack.c.h.b16 %v263
    %v2928 = vunpack.c.l.b16 %v264
    %v2929 = vunpack.c.h.b16 %v264
    %v2930 = vunpack.c.l.b16 %v265
    %v2931 = vunpack.c.h.b16 %v265
    %v2932 = vunpack.c.l.b16 %v266
    %v2933 = vunpack.c.h.b16 %v266
    %v2934 = vunpack.c.l.b16 %v267
    %v2935 = vunpack.c.h.b16 %v267
    %v2936 = vunpack.c.l.b16 %v268
    %v2937 = vunpack.c.h.b16 %v268
    %v2938 = vunpack.c.l.b16 %v269
    %v2939 = vunpack.c.h.b16 %v269
    %v2940 = vunpack.c.l.b16 %v270
    %v2941 = vunpack.c.h.b16 %v270
    %v2942 = vunpack.c.l.b16 %v271
    %v2943 = vunpack.c.h.b16 %v271
    %v2944 = vunpack.c.l.b16 %v272
    %v2945 = vunpack.c.h.b16 %v272
    %v2946 = vunpack.c.l.b16 %v273
    %v2947 = vunpack.c.h.b16 %v273
    %v2948 = vunpack.c.l.b16 %v274
    %v2949 = vunpack.c.h.b16 %v274
    %v2950 = vunpack.c.l.b16 %v275
    %v2951 = vunpack.c.h.b16 %v275
    %v2952 = vunpack.c.l.b16 %v276
    %v2953 = vunpack.c.h.b16 %v276
    %v2954 = vunpack.c.l.b16 %v277
    %v2955 = vunpack.c.h.b16 %v277
    %v2956 = vunpack.c.l.b16 %v278
    %v2957 = vunpack.c.h.b16 %v278
    %v2958 = vunpack.c.l.b16 %v279
    %v2959 = vunpack.c.h.b16 %v279
    %v2960 = vunpack.c.l.b16 %v280
    %v2961 = vunpack.c.h.b16 %v280
    %v2962 = vunpack.c.l.b16 %v281
    %v2963 = vunpack.c.h.b16 %v281
    %v2964 = vunpack.c.l.b16 %v282
    %v2965 = vunpack.c.h.b16 %v282
    %v2966 = vunpack.c.l.b16 %v283
    %v2967 = vunpack.c.h.b16 %v283
    %v2968 = vunpack.c.l.b16 %v284
    %v2969 = vunpack.c.h.b16 %v284
    %v2970 = vunpack.c.l.b16 %v285
    %v2971 = vunpack.c.h.b16 %v285
    %v2972 = vunpack.c.l.b16 %v286
    %v2973 = vunpack.c.h.b16 %v286
    %v2974 = vunpack.c.l.b16 %v287
    %v2975 = vunpack.c.h.b16 %v287
    %v2976 = vunpack.c.l.b16 %v288
    %v2977 = vunpack.c.h.b16 %v288
    %v2978 = vunpack.c.l.b16 %v289
    %v2979 = vunpack.c.h.b16 %v289
    %v2980 = vunpack.c.l.b16 %v290
    %v2981 = vunpack.c.h.b16 %v290
    %v2982 = vunpack.c.l.b16 %v291
    %v2983 = vunpack.c.h.b16 %v291
    %v2984 = vunpack.c.l.b16 %v292
    %v2985 = vunpack.c.h.b16 %v292
    %v2986 = vunpack.c.l.b16 %v293
    %v2987 = vunpack.c.h.b16 %v293
    %v2988 = vunpack.c.l.b16 %v294
    %v2989 = vunpack.c.h.b16 %v294
    %v2990 = vunpack.c.l.b16 %v295
    %v2991 = vunpack.c.h.b16 %v295
    %v2992 = vunpack.c.l.b16 %v296
    %v2993 = vunpack.c.h.b16 %v296
    %v2994 = vunpack.c.l.b16 %v297
    %v2995 = vunpack.c.h.b16 %v297
    %v2996 = vunpack.c.l.b16 %v298
    %v2997 = vunpack.c.h.b16 %v298
    %v2998 = vunpack.c.l.b16 %v299
    %v2999 = vunpack.c.h.b16 %v299
    %v3000 = vunpack.c.l.b16 %v300
    %v3001 = vunpack.c.h.b16 %v300
    %v3002 = vunpack.c.l.b16 %v301
    %v3003 = vunpack.c.h.b16 %v301
    %v3004 = vunpack.c.l.b16 %v302
    %v3005 = vunpack.c.h.b16 %v302
    %v3006 = vunpack.c.l.b16 %v303
    %v3007 = vunpack.c.h.b16 %v303
    %v3008 = vunpack.c.l.b16 %v304
    %v3009 = vunpack.c.h.b16 %v304
    %v3010 = vunpack.c.l.b16 %v305
    %v3011 = vunpack.c.h.b16 %v305
    %v3012 = vunpack.c.l.b16 %v306
    %v3013 = vunpack.c.h.b16 %v306
    %v3014 = vunpack.c.l.b16 %v307
    %v3015 = vunpack.c.h.b16 %v307
    %v3016 = vunpack.c.l.b16 %v308
    %v3017 = vunpack.c.h.b16 %v308
    %v3018 = vunpack.c.l.b16 %v309
    %v3019 = vunpack.c.h.b16 %v309
    %v3020 = vunpack.c.l.b16 %v310
    %v3021 = vunpack.c.h.b16 %v310
    %v3022 = vunpack.c.l.b16 %v311
    %v3023 = vunpack.c.h.b16 %v311
    %v3024 = vunpack.c.l.b16 %v312
    %v3025 = vunpack.c.h.b16 %v312
    %v3026 = vunpack.c.l.b16 %v313
    %v3027 = vunpack.c.h.b16 %v313
    %v3028 = vunpack.c.l.b16 %v314
    %v3029 = vunpack.c.h.b16 %v314
    %v3030 = vunpack.c.l.b16 %v315
    %v3031 = vunpack.c.h.b16 %v315
    %v3032 = vunpack.c.l.b16 %v316
    %v3033 = vunpack.c.h.b16 %v316
    %v3034 = vunpack.c.l.b16 %v317
    %v3035 = vunpack.c.h.b16 %v317
    %v3036 = vunpack.c.l.b16 %v318
    %v3037 = vunpack.c.h.b16 %v318
    %v3038 = vunpack.c.l.b16 %v319
    %v3039 = vunpack.c.h.b16 %v319
    %v3040 = vunpack.c.l.b16 %v320
    %v3041 = vunpack.c.h.b16 %v320
    %v3042 = vunpack.c.l.b16 %v321
    %v3043 = vunpack.c.h.b16 %v321
    %v3044 = vunpack.c.l.b16 %v322
    %v3045 = vunpack.c.h.b16 %v322
    %v3046 = vunpack.c.l.b16 %v323
    %v3047 = vunpack.c.h.b16 %v323
    %v3048 = vunpack.c.l.b16 %v324
    %v3049 = vunpack.c.h.b16 %v324
    %v3050 = vunpack.c.l.b16 %v325
    %v3051 = vunpack.c.h.b16 %v325
    %v3052 = vunpack.c.l.b16 %v326
    %v3053 = vunpack.c.h.b16 %v326
    %v3054 = vunpack.c.l.b16 %v327
    %v3055 = vunpack.c.h.b16 %v327
    %v3056 = vunpack.c.l.b16 %v328
    %v3057 = vunpack.c.h.b16 %v328
    %v3058 = vunpack.c.l.b16 %v329
    %v3059 = vunpack.c.h.b16 %v329
    %v3060 = vunpack.c.l.b16 %v330
    %v3061 = vunpack.c.h.b16 %v330
    %v3062 = vunpack.c.l.b16 %v331
    %v3063 = vunpack.c.h.b16 %v331
    %v3064 = vunpack.c.l.b16 %v332
    %v3065 = vunpack.c.h.b16 %v332
    %v3066 = vunpack.c.l.b16 %v333
    %v3067 = vunpack.c.h.b16 %v333
    %v3068 = vunpack.c.l.b16 %v334
    %v3069 = vunpack.c.h.b16 %v334
    %v3070 = vunpack.c.l.b16 %v335
    %v3071 = vunpack.c.h.b16 %v335
    %v3072 = vunpack.c.l.b16 %v336
    %v3073 = vunpack.c.h.b16 %v336
    %v3074 = vunpack.c.l.b16 %v337
    %v3075 = vunpack.c.h.b16 %v337
    %v3076 = vunpack.c.l.b16 %v338
    %v3077 = vunpack.c.h.b16 %v338
    %v3078 = vunpack.c.l.b16 %v339
    %v3079 = vunpack.c.h.b16 %v339
    %v3080 = vunpack.c.l.b16 %v340
    %v3081 = vunpack.c.h.b16 %v340
    %v3082 = vunpack.c.l.b16 %v341
    %v3083 = vunpack.c.h.b16 %v341
    %v3084 = vunpack.c.l.b16 %v342
    %v3085 = vunpack.c.h.b16 %v342
    %v3086 = vunpack.c.l.b16 %v343
    %v3087 = vunpack.c.h.b16 %v343
    %v3088 = vunpack.c.l.b16 %v344
    %v3089 = vunpack.c.h.b16 %v344
    %v3090 = vunpack.c.l.b16 %v345
    %v3091 = vunpack.c.h.b16 %v345
    %v3092 = vunpack.c.l.b16 %v346
    %v3093 = vunpack.c.h.b16 %v346
    %v3094 = vunpack.c.l.b16 %v347
    %v3095 = vunpack.c.h.b16 %v347
    %v3096 = vunpack.c.l.b16 %v348
    %v3097 = vunpack.c.h.b16 %v348
    %v3098 = vunpack.c.l.b16 %v349
    %v3099 = vunpack.c.h.b16 %v349
    %v3100 = vunpack.c.l.b16 %v350
    %v3101 = vunpack.c.h.b16 %v350
    %v3102 = vunpack.c.l.b16 %v351
    %v3103 = vunpack.c.h.b16 %v351
    %v3104 = vunpack.c.l.b16 %v352
    %v3105 = vunpack.c.h.b16 %v352
    %v3106 = vunpack.c.l.b16 %v353
    %v3107 = vunpack.c.h.b16 %v353
    %v3108 = vunpack.c.l.b16 %v354
    %v3109 = vunpack.c.h.b16 %v354
    %v3110 = vunpack.c.l.b16 %v355
    %v3111 = vunpack.c.h.b16 %v355
    %v3112 = vunpack.c.l.b16 %v356
    %v3113 = vunpack.c.h.b16 %v356
    %v3114 = vunpack.c.l.b16 %v357
    %v3115 = vunpack.c.h.b16 %v357
    %v3116 = vunpack.c.l.b16 %v358
    %v3117 = vunpack.c.h.b16 %v358
    %v3118 = vunpack.c.l.b16 %v359
    %v3119 = vunpack.c.h.b16 %v359
    %v3120 = vunpack.c.l.b16 %v360
    %v3121 = vunpack.c.h.b16 %v360
    %v3122 = vunpack.c.l.b16 %v361
    %v3123 = vunpack.c.h.b16 %v361
    %v3124 = vunpack.c.l.b16 %v362
    %v3125 = vunpack.c.h.b16 %v362
    %v3126 = vunpack.c.l.b16 %v363
    %v3127 = vunpack.c.h.b16 %v363
    %v3128 = vunpack.c.l.b16 %v364
    %v3129 = vunpack.c.h.b16 %v364
    %v3130 = vunpack.c.l.b16 %v365
    %v3131 = vunpack.c.h.b16 %v365
    %v3132 = vunpack.c.l.b16 %v366
    %v3133 = vunpack.c.h.b16 %v366
    %v3134 = vunpack.c.l.b16 %v367
    %v3135 = vunpack.c.h.b16 %v367
    %v3136 = vunpack.c.l.b16 %v368
    %v3137 = vunpack.c.h.b16 %v368
    %v3138 = vunpack.c.l.b16 %v369
    %v3139 = vunpack.c.h.b16 %v369
    %v3140 = vunpack.c.l.b16 %v370
    %v3141 = vunpack.c.h.b16 %v370
    %v3142 = vunpack.c.l.b16 %v371
    %v3143 = vunpack.c.h.b16 %v371
    %v3144 = vunpack.c.l.b16 %v372
    %v3145 = vunpack.c.h.b16 %v372
    %v3146 = vunpack.c.l.b16 %v373
    %v3147 = vunpack.c.h.b16 %v373
    %v3148 = vunpack.c.l.b16 %v374
    %v3149 = vunpack.c.h.b16 %v374
    %v3150 = vunpack.c.l.b16 %v375
    %v3151 = vunpack.c.h.b16 %v375
    %v3152 = vunpack.c.l.b16 %v376
    %v3153 = vunpack.c.h.b16 %v376
    %v3154 = vunpack.c.l.b16 %v377
    %v3155 = vunpack.c.h.b16 %v377
    %v3156 = vunpack.c.l.b16 %v378
    %v3157 = vunpack.c.h.b16 %v378
    %v3158 = vunpack.c.l.b16 %v379
    %v3159 = vunpack.c.h.b16 %v379
    %v3160 = vunpack.c.l.b16 %v380
    %v3161 = vunpack.c.h.b16 %v380
    %v3162 = vunpack.c.l.b16 %v381
    %v3163 = vunpack.c.h.b16 %v381
    %v3164 = vunpack.c.l.b16 %v382
    %v3165 = vunpack.c.h.b16 %v382
    %v3166 = vunpack.c.l.b16 %v383
    %v3167 = vunpack.c.h.b16 %v383
    %v3168 = vunpack.c.l.b16 %v384
    %v3169 = vunpack.c.h.b16 %v384
    %v3170 = vunpack.c.l.b16 %v385
    %v3171 = vunpack.c.h.b16 %v385
    %v3172 = vunpack.c.l.b16 %v386
    %v3173 = vunpack.c.h.b16 %v386
    %v3174 = vunpack.c.l.b16 %v387
    %v3175 = vunpack.c.h.b16 %v387
    %v3176 = vunpack.c.l.b16 %v388
    %v3177 = vunpack.c.h.b16 %v388
    %v3178 = vunpack.c.l.b16 %v389
    %v3179 = vunpack.c.h.b16 %v389
    %v3180 = vunpack.c.l.b16 %v390
    %v3181 = vunpack.c.h.b16 %v390
    %v3182 = vunpack.c.l.b16 %v391
    %v3183 = vunpack.c.h.b16 %v391
    %v3184 = vunpack.c.l.b16 %v392
    %v3185 = vunpack.c.h.b16 %v392
    %v3186 = vunpack.c.l.b16 %v393
    %v3187 = vunpack.c.h.b16 %v393
    %v3188 = vunpack.c.l.b16 %v394
    %v3189 = vunpack.c.h.b16 %v394
    %v3190 = vunpack.c.l.b16 %v395
    %v3191 = vunpack.c.h.b16 %v395
    %v3192 = vunpack.c.l.b16 %v396
    %v3193 = vunpack.c.h.b16 %v396
    %v3194 = vunpack.c.l.b16 %v397
    %v3195 = vunpack.c.h.b16 %v397
    %v3196 = vunpack.c.l.b16 %v398
    %v3197 = vunpack.c.h.b16 %v398
    %v3198 = vunpack.c.l.b16 %v399
    %v3199 = vunpack.c.h.b16 %v399
    %v3200 = vunpack.c.l.b16 %v400
    %v3201 = vunpack.c.h.b16 %v400
    %v3202 = vunpack.c.l.b16 %v401
    %v3203 = vunpack.c.h.b16 %v401
    %v3204 = vunpack.c.l.b16 %v402
    %v3205 = vunpack.c.h.b16 %v402
    %v3206 = vunpack.c.l.b16 %v403
    %v3207 = vunpack.c.h.b16 %v403
    %v3208 = vunpack.c.l.b16 %v404
    %v3209 = vunpack.c.h.b16 %v404
    %v3210 = vunpack.c.l.b16 %v405
    %v3211 = vunpack.c.h.b16 %v405
    %v3212 = vunpack.c.l.b16 %v406
    %v3213 = vunpack.c.h.b16 %v406
    %v3214 = vunpack.c.l.b16 %v407
    %v3215 = vunpack.c.h.b16 %v407
    %v3216 = vunpack.c.l.b16 %v408
    %v3217 = vunpack.c.h.b16 %v408
    %v3218 = vunpack.c.l.b16 %v409
    %v3219 = vunpack.c.h.b16 %v409
    %v3220 = vunpack.c.l.b16 %v410
    %v3221 = vunpack.c.h.b16 %v410
    %v3222 = vunpack.c.l.b16 %v411
    %v3223 = vunpack.c.h.b16 %v411
    %v3224 = vunpack.c.l.b16 %v412
    %v3225 = vunpack.c.h.b16 %v412
    %v3226 = vunpack.c.l.b16 %v413
    %v3227 = vunpack.c.h.b16 %v413
    %v3228 = vunpack.c.l.b16 %v414
    %v3229 = vunpack.c.h.b16 %v414
    %v3230 = vunpack.c.l.b16 %v415
    %v3231 = vunpack.c.h.b16 %v415
    %v3232 = vunpack.c.l.b16 %v416
    %v3233 = vunpack.c.h.b16 %v416
    %v3234 = vunpack.c.l.b16 %v417
    %v3235 = vunpack.c.h.b16 %v417
    %v3236 = vunpack.c.l.b16 %v418
    %v3237 = vunpack.c.h.b16 %v418
    %v3238 = vunpack.c.l.b16 %v419
    %v3239 = vunpack.c.h.b16 %v419
    %v3240 = vunpack.c.l.b16 %v420
    %v3241 = vunpack.c.h.b16 %v420
    %v3242 = vunpack.c.l.b16 %v421
    %v3243 = vunpack.c.h.b16 %v421
    %v3244 = vunpack.c.l.b16 %v422
    %v3245 = vunpack.c.h.b16 %v422
    %v3246 = vunpack.c.l.b16 %v423
    %v3247 = vunpack.c.h.b16 %v423
    %v3248 = vunpack.c.l.b16 %v424
    %v3249 = vunpack.c.h.b16 %v424
    %v3250 = vunpack.c.l.b16 %v425
    %v3251 = vunpack.c.h.b16 %v425
    %v3252 = vunpack.c.l.b16 %v426
    %v3253 = vunpack.c.h.b16 %v426
    %v3254 = vunpack.c.l.b16 %v427
    %v3255 = vunpack.c.h.b16 %v427
    %v3256 = vunpack.c.l.b16 %v428
    %v3257 = vunpack.c.h.b16 %v428
    %v3258 = vunpack.c.l.b16 %v429
    %v3259 = vunpack.c.h.b16 %v429
    %v3260 = vunpack.c.l.b16 %v430
    %v3261 = vunpack.c.h.b16 %v430
    %v3262 = vunpack.c.l.b16 %v431
    %v3263 = vunpack.c.h.b16 %v431
    %v3264 = vunpack.c.l.b16 %v432
    %v3265 = vunpack.c.h.b16 %v432
    %v3266 = vunpack.c.l.b16 %v433
    %v3267 = vunpack.c.h.b16 %v433
    %v3268 = vunpack.c.l.b16 %v434
    %v3269 = vunpack.c.h.b16 %v434
    %v3270 = vunpack.c.l.b16 %v435
    %v3271 = vunpack.c.h.b16 %v435
    %v3272 = vunpack.c.l.b16 %v436
    %v3273 = vunpack.c.h.b16 %v436
    %v3274 = vunpack.c.l.b16 %v437
    %v3275 = vunpack.c.h.b16 %v437
    %v3276 = vunpack.c.l.b16 %v438
    %v3277 = vunpack.c.h.b16 %v438
    %v3278 = vunpack.c.l.b16 %v439
    %v3279 = vunpack.c.h.b16 %v439
    %v3280 = vunpack.c.l.b16 %v440
    %v3281 = vunpack.c.h.b16 %v440
    %v3282 = vunpack.c.l.b16 %v441
    %v3283 = vunpack.c.h.b16 %v441
    %v3284 = vunpack.c.l.b16 %v442
    %v3285 = vunpack.c.h.b16 %v442
    %v3286 = vunpack.c.l.b16 %v443
    %v3287 = vunpack.c.h.b16 %v443
    %v3288 = vunpack.c.l.b16 %v444
    %v3289 = vunpack.c.h.b16 %v444
    %v3290 = vunpack.c.l.b16 %v445
    %v3291 = vunpack.c.h.b16 %v445
    %v3292 = vunpack.c.l.b16 %v446
    %v3293 = vunpack.c.h.b16 %v446
    %v3294 = vunpack.c.l.b16 %v447
    %v3295 = vunpack.c.h.b16 %v447
    %v3296 = vunpack.c.l.b16 %v448
    %v3297 = vunpack.c.h.b16 %v448
    %v3298 = vunpack.c.l.b16 %v449
    %v3299 = vunpack.c.h.b16 %v449
    %v3300 = vunpack.c.l.b16 %v450
    %v3301 = vunpack.c.h.b16 %v450
    %v3302 = vunpack.c.l.b16 %v451
    %v3303 = vunpack.c.h.b16 %v451
    %v3304 = vunpack.c.l.b16 %v452
    %v3305 = vunpack.c.h.b16 %v452
    %v3306 = vunpack.c.l.b16 %v453
    %v3307 = vunpack.c.h.b16 %v453
    %v3308 = vunpack.c.l.b16 %v454
    %v3309 = vunpack.c.h.b16 %v454
    %v3310 = vunpack.c.l.b16 %v455
    %v3311 = vunpack.c.h.b16 %v455
    %v3312 = vunpack.c.l.b16 %v456
    %v3313 = vunpack.c.h.b16 %v456
    %v3314 = vunpack.c.l.b16 %v457
    %v3315 = vunpack.c.h.b16 %v457
    %v3316 = vunpack.c.l.b16 %v458
    %v3317 = vunpack.c.h.b16 %v458
    %v3318 = vunpack.c.l.b16 %v459
    %v3319 = vunpack.c.h.b16 %v459
    %v3320 = vunpack.c.l.b16 %v460
    %v3321 = vunpack.c.h.b16 %v460
    %v3322 = vunpack.c.l.b16 %v461
    %v3323 = vunpack.c.h.b16 %v461
    %v3324 = vunpack.c.l.b16 %v462
    %v3325 = vunpack.c.h.b16 %v462
    %v3326 = vunpack.c.l.b16 %v463
    %v3327 = vunpack.c.h.b16 %v463
    %v3328 = vunpack.c.l.b16 %v464
    %v3329 = vunpack.c.h.b16 %v464
    %v3330 = vunpack.c.l.b16 %v465
    %v3331 = vunpack.c.h.b16 %v465
    %v3332 = vunpack.c.l.b16 %v466
    %v3333 = vunpack.c.h.b16 %v466
    %v3334 = vunpack.c.l.b16 %v467
    %v3335 = vunpack.c.h.b16 %v467
    %v3336 = vunpack.c.l.b16 %v468
    %v3337 = vunpack.c.h.b16 %v468
    %v3338 = vunpack.c.l.b16 %v469
    %v3339 = vunpack.c.h.b16 %v469
    %v3340 = vunpack.c.l.b16 %v470
    %v3341 = vunpack.c.h.b16 %v470
    %v3342 = vunpack.c.l.b16 %v471
    %v3343 = vunpack.c.h.b16 %v471
    %v3344 = vunpack.c.l.b16 %v472
    %v3345 = vunpack.c.h.b16 %v472
    %v3346 = vunpack.c.l.b16 %v473
    %v3347 = vunpack.c.h.b16 %v473
    %v3348 = vunpack.c.l.b16 %v474
    %v3349 = vunpack.c.h.b16 %v474
    %v3350 = vunpack.c.l.b16 %v475
    %v3351 = vunpack.c.h.b16 %v475
    %v3352 = vunpack.c.l.b16 %v476
    %v3353 = vunpack.c.h.b16 %v476
    %v3354 = vunpack.c.l.b16 %v477
    %v3355 = vunpack.c.h.b16 %v477
    %v3356 = vunpack.c.l.b16 %v478
    %v3357 = vunpack.c.h.b16 %v478
    %v3358 = vunpack.c.l.b16 %v479
    %v3359 = vunpack.c.h.b16 %v479
    %v3360 = vunpack.c.l.b16 %v480
    %v3361 = vunpack.c.h.b16 %v480
    %v3362 = vunpack.c.l.b16 %v481
    %v3363 = vunpack.c.h.b16 %v481
    %v3364 = vunpack.c.l.b16 %v482
    %v3365 = vunpack.c.h.b16 %v482
    %v3366 = vunpack.c.l.b16 %v483
    %v3367 = vunpack.c.h.b16 %v483
    %v3368 = vunpack.c.l.b16 %v484
    %v3369 = vunpack.c.h.b16 %v484
    %v3370 = vunpack.c.l.b16 %v485
    %v3371 = vunpack.c.h.b16 %v485
    %v3372 = vunpack.c.l.b16 %v486
    %v3373 = vunpack.c.h.b16 %v486
    %v3374 = vunpack.c.l.b16 %v487
    %v3375 = vunpack.c.h.b16 %v487
    %v3376 = vunpack.c.l.b16 %v488
    %v3377 = vunpack.c.h.b16 %v488
    %v3378 = vunpack.c.l.b16 %v489
    %v3379 = vunpack.c.h.b16 %v489
    %v3380 = vunpack.c.l.b16 %v490
    %v3381 = vunpack.c.h.b16 %v490
    %v3382 = vunpack.c.l.b16 %v491
    %v3383 = vunpack.c.h.b16 %v491
    %v3384 = vunpack.c.l.b16 %v492
    %v3385 = vunpack.c.h.b16 %v492
    %v3386 = vunpack.c.l.b16 %v493
    %v3387 = vunpack.c.h.b16 %v493
    %v3388 = vunpack.c.l.b16 %v494
    %v3389 = vunpack.c.h.b16 %v494
    %v3390 = vunpack.c.l.b16 %v495
    %v3391 = vunpack.c.h.b16 %v495
    %v3392 = vunpack.c.l.b16 %v496
    %v3393 = vunpack.c.h.b16 %v496
    %v3394 = vunpack.c.l.b16 %v497
    %v3395 = vunpack.c.h.b16 %v497
    %v3396 = vunpack.c.l.b16 %v498
    %v3397 = vunpack.c.h.b16 %v498
    %v3398 = vunpack.c.l.b16 %v499
    %v3399 = vunpack.c.h.b16 %v499
    %v3400 = vunpack.c.l.b16 %v500
    %v3401 = vunpack.c.h.b16 %v500
    %v3402 = vunpack.c.l.b16 %v501
    %v3403 = vunpack.c.h.b16 %v501
    %v3404 = vunpack.c.l.b16 %v502
    %v3405 = vunpack.c.h.b16 %v502
    %v3406 = vunpack.c.l.b16 %v503
    %v3407 = vunpack.c.h.b16 %v503
    %v3408 = vunpack.c.l.b16 %v504
    %v3409 = vunpack.c.h.b16 %v504
    %v3410 = vunpack.c.l.b16 %v505
    %v3411 = vunpack.c.h.b16 %v505
    %v3412 = vunpack.c.l.b16 %v506
    %v3413 = vunpack.c.h.b16 %v506
    %v3414 = vunpack.c.l.b16 %v507
    %v3415 = vunpack.c.h.b16 %v507
    %v3416 = vunpack.c.l.b16 %v508
    %v3417 = vunpack.c.h.b16 %v508
    %v3418 = vunpack.c.l.b16 %v509
    %v3419 = vunpack.c.h.b16 %v509
    %v3420 = vunpack.c.l.b16 %v510
    %v3421 = vunpack.c.h.b16 %v510
    %v3422 = vunpack.c.l.b16 %v511
    %v3423 = vunpack.c.h.b16 %v511
    %v3424 = vunpack.c.l.b16 %v512
    %v3425 = vunpack.c.h.b16 %v512
    %v3426 = vunpack.c.l.b16 %v513
    %v3427 = vunpack.c.h.b16 %v513
    %v3428 = vunpack.c.l.b16 %v514
    %v3429 = vunpack.c.h.b16 %v514
    %v3430 = vunpack.c.l.b16 %v515
    %v3431 = vunpack.c.h.b16 %v515
    %v3432 = vunpack.c.l.b16 %v516
    %v3433 = vunpack.c.h.b16 %v516
    %v3434 = vunpack.c.l.b16 %v517
    %v3435 = vunpack.c.h.b16 %v517
    %v3436 = vunpack.c.l.b16 %v518
    %v3437 = vunpack.c.h.b16 %v518
    %v3438 = vunpack.c.l.b16 %v519
    %v3439 = vunpack.c.h.b16 %v519
    %v3440 = vunpack.c.l.b16 %v520
    %v3441 = vunpack.c.h.b16 %v520
    %v3442 = vunpack.c.l.b16 %v521
    %v3443 = vunpack.c.h.b16 %v521
    %v3444 = vunpack.c.l.b16 %v522
    %v3445 = vunpack.c.h.b16 %v522
    %v3446 = vunpack.c.l.b16 %v523
    %v3447 = vunpack.c.h.b16 %v523
    %v3448 = vunpack.c.l.b16 %v524
    %v3449 = vunpack.c.h.b16 %v524
    %v3450 = vunpack.c.l.b16 %v525
    %v3451 = vunpack.c.h.b16 %v525
    %v3452 = vunpack.c.l.b16 %v526
    %v3453 = vunpack.c.h.b16 %v526
    %v3454 = vunpack.c.l.b16 %v527
    %v3455 = vunpack.c.h.b16 %v527
    %v3456 = vunpack.c.l.b16 %v528
    %v3457 = vunpack.c.h.b16 %v528
    %v3458 = vunpack.c.l.b16 %v529
    %v3459 = vunpack.c.h.b16 %v529
    %v3460 = vunpack.c.l.b16 %v530
    %v3461 = vunpack.c.h.b16 %v530
    %v3462 = vunpack.c.l.b16 %v531
    %v3463 = vunpack.c.h.b16 %v531
    %v3464 = vunpack.c.l.b16 %v532
    %v3465 = vunpack.c.h.b16 %v532
    %v3466 = vunpack.c.l.b16 %v533
    %v3467 = vunpack.c.h.b16 %v533
    %v3468 = vunpack.c.l.b16 %v534
    %v3469 = vunpack.c.h.b16 %v534
    %v3470 = vunpack.c.l.b16 %v535
    %v3471 = vunpack.c.h.b16 %v535
    %v3472 = vunpack.c.l.b16 %v536
    %v3473 = vunpack.c.h.b16 %v536
    %v3474 = vunpack.c.l.b16 %v537
    %v3475 = vunpack.c.h.b16 %v537
    %v3476 = vunpack.c.l.b16 %v538
    %v3477 = vunpack.c.h.b16 %v538
    %v3478 = vunpack.c.l.b16 %v539
    %v3479 = vunpack.c.h.b16 %v539
    %v3480 = vunpack.c.l.b16 %v540
    %v3481 = vunpack.c.h.b16 %v540
    %v3482 = vunpack.c.l.b16 %v541
    %v3483 = vunpack.c.h.b16 %v541
    %v3484 = vunpack.c.l.b16 %v542
    %v3485 = vunpack.c.h.b16 %v542
    %v3486 = vunpack.c.l.b16 %v543
    %v3487 = vunpack.c.h.b16 %v543
    %v3488 = vunpack.c.l.b16 %v544
    %v3489 = vunpack.c.h.b16 %v544
    %v3490 = vunpack.c.l.b16 %v545
    %v3491 = vunpack.c.h.b16 %v545
    %v3492 = vunpack.c.l.b16 %v546
    %v3493 = vunpack.c.h.b16 %v546
    %v3494 = vunpack.c.l.b16 %v547
    %v3495 = vunpack.c.h.b16 %v547
    %v3496 = vunpack.c.l.b16 %v548
    %v3497 = vunpack.c.h.b16 %v548
    %v3498 = vunpack.c.l.b16 %v549
    %v3499 = vunpack.c.h.b16 %v549
    %v3500 = vunpack.c.l.b16 %v550
    %v3501 = vunpack.c.h.b16 %v550
    %v3502 = vunpack.c.l.b16 %v551
    %v3503 = vunpack.c.h.b16 %v551
    %v3504 = vunpack.c.l.b16 %v552
    %v3505 = vunpack.c.h.b16 %v552
    %v3506 = vunpack.c.l.b16 %v553
    %v3507 = vunpack.c.h.b16 %v553
    %v3508 = vunpack.c.l.b16 %v554
    %v3509 = vunpack.c.h.b16 %v554
    %v3510 = vunpack.c.l.b16 %v555
    %v3511 = vunpack.c.h.b16 %v555
    %v3512 = vunpack.c.l.b16 %v556
    %v3513 = vunpack.c.h.b16 %v556
    %v3514 = vunpack.c.l.b16 %v557
    %v3515 = vunpack.c.h.b16 %v557
    %v3516 = vunpack.c.l.b16 %v558
    %v3517 = vunpack.c.h.b16 %v558
    %v3518 = vunpack.c.l.b16 %v559
    %v3519 = vunpack.c.h.b16 %v559
    %v3520 = vunpack.c.l.b16 %v560
    %v3521 = vunpack.c.h.b16 %v560
    %v3522 = vunpack.c.l.b16 %v561
    %v3523 = vunpack.c.h.b16 %v561
    %v3524 = vunpack.c.l.b16 %v562
    %v3525 = vunpack.c.h.b16 %v562
    %v3526 = vunpack.c.l.b16 %v563
    %v3527 = vunpack.c.h.b16 %v563
    %v3528 = vunpack.c.l.b16 %v564
    %v3529 = vunpack.c.h.b16 %v564
    %v3530 = vunpack.c.l.b16 %v565
    %v3531 = vunpack.c.h.b16 %v565
    %v3532 = vunpack.c.l.b16 %v566
    %v3533 = vunpack.c.h.b16 %v566
    %v3534 = vunpack.c.l.b16 %v567
    %v3535 = vunpack.c.h.b16 %v567
    %v3536 = vunpack.c.l.b16 %v568
    %v3537 = vunpack.c.h.b16 %v568
    %v3538 = vunpack.c.l.b16 %v569
    %v3539 = vunpack.c.h.b16 %v569
    %v3540 = vunpack.c.l.b16 %v570
    %v3541 = vunpack.c.h.b16 %v570
    %v3542 = vunpack.c.l.b16 %v571
    %v3543 = vunpack.c.h.b16 %v571
    %v3544 = vunpack.c.l.b16 %v572
    %v3545 = vunpack.c.h.b16 %v572
    %v3546 = vunpack.c.l.b16 %v573
    %v3547 = vunpack.c.h.b16 %v573
    %v3548 = vunpack.c.l.b16 %v574
    %v3549 = vunpack.c.h.b16 %v574
    %v3550 = vunpack.c.l.b16 %v575
    %v3551 = vunpack.c.h.b16 %v575
    %v3552 = vunpack.c.l.b16 %v576
    %v3553 = vunpack.c.h.b16 %v576
    %v3554 = vunpack.c.l.b16 %v577
    %v3555 = vunpack.c.h.b16 %v577
    %v3556 = vunpack.c.l.b16 %v578
    %v3557 = vunpack.c.h.b16 %v578
    %v3558 = vunpack.c.l.b16 %v579
    %v3559 = vunpack.c.h.b16 %v579
    %v3560 = vunpack.c.l.b16 %v580
    %v3561 = vunpack.c.h.b16 %v580
    %v3562 = vunpack.c.l.b16 %v581
    %v3563 = vunpack.c.h.b16 %v581
    %v3564 = vunpack.c.l.b16 %v582
    %v3565 = vunpack.c.h.b16 %v582
    %v3566 = vunpack.c.l.b16 %v583
    %v3567 = vunpack.c.h.b16 %v583
    %v3568 = vunpack.c.l.b16 %v584
    %v3569 = vunpack.c.h.b16 %v584
    %v3570 = vunpack.c.l.b16 %v585
    %v3571 = vunpack.c.h.b16 %v585
    %v3572 = vunpack.c.l.b16 %v586
    %v3573 = vunpack.c.h.b16 %v586
    %v3574 = vunpack.c.l.b16 %v587
    %v3575 = vunpack.c.h.b16 %v587
    %v3576 = vunpack.c.l.b16 %v588
    %v3577 = vunpack.c.h.b16 %v588
    %v3578 = vunpack.c.l.b16 %v589
    %v3579 = vunpack.c.h.b16 %v589
    %v3580 = vunpack.c.l.b16 %v590
    %v3581 = vunpack.c.h.b16 %v590
    %v3582 = vunpack.c.l.b16 %v591
    %v3583 = vunpack.c.h.b16 %v591
    %v3584 = vunpack.c.l.b16 %v592
    %v3585 = vunpack.c.h.b16 %v592
    %v3586 = vunpack.c.l.b16 %v593
    %v3587 = vunpack.c.h.b16 %v593
    %v3588 = vunpack.c.l.b16 %v594
    %v3589 = vunpack.c.h.b16 %v594
    %v3590 = vunpack.c.l.b16 %v595
    %v3591 = vunpack.c.h.b16 %v595
    %v3592 = vunpack.c.l.b16 %v596
    %v3593 = vunpack.c.h.b16 %v596
    %v3594 = vunpack.c.l.b16 %v597
    %v3595 = vunpack.c.h.b16 %v597
    %v3596 = vunpack.c.l.b16 %v598
    %v3597 = vunpack.c.h.b16 %v598
    %v3598 = vunpack.c.l.b16 %v599
    %v3599 = vunpack.c.h.b16 %v599
    %v3600 = vunpack.c.l.b16 %v600
    %v3601 = vunpack.c.h.b16 %v600
    %v3602 = vunpack.c.l.b16 %v601
    %v3603 = vunpack.c.h.b16 %v601
    %v3604 = vunpack.c.l.b16 %v602
    %v3605 = vunpack.c.h.b16 %v602
    %v3606 = vunpack.c.l.b16 %v603
    %v3607 = vunpack.c.h.b16 %v603
    %v3608 = vunpack.c.l.b16 %v604
    %v3609 = vunpack.c.h.b16 %v604
    %v3610 = vunpack.c.l.b16 %v605
    %v3611 = vunpack.c.h.b16 %v605
    %v3612 = vunpack.c.l.b16 %v606
    %v3613 = vunpack.c.h.b16 %v606
    %v3614 = vunpack.c.l.b16 %v607
    %v3615 = vunpack.c.h.b16 %v607
    %v3616 = vunpack.c.l.b16 %v608
    %v3617 = vunpack.c.h.b16 %v608
    %v3618 = vunpack.c.l.b16 %v609
    %v3619 = vunpack.c.h.b16 %v609
    %v3620 = vunpack.c.l.b16 %v610
    %v3621 = vunpack.c.h.b16 %v610
    %v3622 = vunpack.c.l.b16 %v611
    %v3623 = vunpack.c.h.b16 %v611
    %v3624 = vunpack.c.l.b16 %v612
    %v3625 = vunpack.c.h.b16 %v612
    %v3626 = vunpack.c.l.b16 %v613
    %v3627 = vunpack.c.h.b16 %v613
    %v3628 = vunpack.c.l.b16 %v614
    %v3629 = vunpack.c.h.b16 %v614
    %v3630 = vunpack.c.l.b16 %v615
    %v3631 = vunpack.c.h.b16 %v615
    %v3632 = vunpack.c.l.b16 %v616
    %v3633 = vunpack.c.h.b16 %v616
    %v3634 = vunpack.c.l.b16 %v617
    %v3635 = vunpack.c.h.b16 %v617
    %v3636 = vunpack.c.l.b16 %v618
    %v3637 = vunpack.c.h.b16 %v618
    %v3638 = vunpack.c.l.b16 %v619
    %v3639 = vunpack.c.h.b16 %v619
    %v3640 = vunpack.c.l.b16 %v620
    %v3641 = vunpack.c.h.b16 %v620
    %v3642 = vunpack.c.l.b16 %v621
    %v3643 = vunpack.c.h.b16 %v621
    %v3644 = vunpack.c.l.b16 %v622
    %v3645 = vunpack.c.h.b16 %v622
    %v3646 = vunpack.c.l.b16 %v623
    %v3647 = vunpack.c.h.b16 %v623
    %v3648 = vunpack.c.l.b16 %v624
    %v3649 = vunpack.c.h.b16 %v624
    %v3650 = vunpack.c.l.b16 %v625
    %v3651 = vunpack.c.h.b16 %v625
    %v3652 = vunpack.c.l.b16 %v626
    %v3653 = vunpack.c.h.b16 %v626
    %v3654 = vunpack.c.l.b16 %v627
    %v3655 = vunpack.c.h.b16 %v627
    %v3656 = vunpack.c.l.b16 %v628
    %v3657 = vunpack.c.h.b16 %v628
    %v3658 = vunpack.c.l.b16 %v629
    %v3659 = vunpack.c.h.b16 %v629
    %v3660 = vunpack.c.l.b16 %v630
    %v3661 = vunpack.c.h.b16 %v630
    %v3662 = vunpack.c.l.b16 %v631
    %v3663 = vunpack.c.h.b16 %v631
    %v3664 = vunpack.c.l.b16 %v632
    %v3665 = vunpack.c.h.b16 %v632
    %v3666 = vunpack.c.l.b16 %v633
    %v3667 = vunpack.c.h.b16 %v633
    %v3668 = vunpack.c.l.b16 %v634
    %v3669 = vunpack.c.h.b16 %v634
    %v3670 = vunpack.c.l.b16 %v635
    %v3671 = vunpack.c.h.b16 %v635
    %v3672 = vunpack.c.l.b16 %v636
    %v3673 = vunpack.c.h.b16 %v636
    %v3674 = vunpack.c.l.b16 %v637
    %v3675 = vunpack.c.h.b16 %v637
    %v3676 = vunpack.c.l.b16 %v638
    %v3677 = vunpack.c.h.b16 %v638
    %v3678 = vunpack.c.l.b16 %v639
    %v3679 = vunpack.c.h.b16 %v639
    %v3680 = vunpack.c.l.b16 %v640
    %v3681 = vunpack.c.h.b16 %v640
    %v3682 = vunpack.c.l.b16 %v641
    %v3683 = vunpack.c.h.b16 %v641
    %v3684 = vunpack.c.l.b16 %v642
    %v3685 = vunpack.c.h.b16 %v642
    %v3686 = vunpack.c.l.b16 %v643
    %v3687 = vunpack.c.h.b16 %v643
    %v3688 = vunpack.c.l.b16 %v644
    %v3689 = vunpack.c.h.b16 %v644
    %v3690 = vunpack.c.l.b16 %v645
    %v3691 = vunpack.c.h.b16 %v645
    %v3692 = vunpack.c.l.b16 %v646
    %v3693 = vunpack.c.h.b16 %v646
    %v3694 = vunpack.c.l.b16 %v647
    %v3695 = vunpack.c.h.b16 %v647
    %v3696 = vunpack.c.l.b16 %v648
    %v3697 = vunpack.c.h.b16 %v648
    %v3698 = vunpack.c.l.b16 %v649
    %v3699 = vunpack.c.h.b16 %v649
    %v3700 = vunpack.c.l.b16 %v650
    %v3701 = vunpack.c.h.b16 %v650
    %v3702 = vunpack.c.l.b16 %v651
    %v3703 = vunpack.c.h.b16 %v651
    %v3704 = vunpack.c.l.b16 %v652
    %v3705 = vunpack.c.h.b16 %v652
    %v3706 = vunpack.c.l.b16 %v653
    %v3707 = vunpack.c.h.b16 %v653
    %v3708 = vunpack.c.l.b16 %v654
    %v3709 = vunpack.c.h.b16 %v654
    %v3710 = vunpack.c.l.b16 %v655
    %v3711 = vunpack.c.h.b16 %v655
    %v3712 = vunpack.c.l.b16 %v656
    %v3713 = vunpack.c.h.b16 %v656
    %v3714 = vunpack.c.l.b16 %v657
    %v3715 = vunpack.c.h.b16 %v657
    %v3716 = vunpack.c.l.b16 %v658
    %v3717 = vunpack.c.h.b16 %v658
    %v3718 = vunpack.c.l.b16 %v659
    %v3719 = vunpack.c.h.b16 %v659
    %v3720 = vunpack.c.l.b16 %v660
    %v3721 = vunpack.c.h.b16 %v660
    %v3722 = vunpack.c.l.b16 %v661
    %v3723 = vunpack.c.h.b16 %v661
    %v3724 = vunpack.c.l.b16 %v662
    %v3725 = vunpack.c.h.b16 %v662
    %v3726 = vunpack.c.l.b16 %v663
    %v3727 = vunpack.c.h.b16 %v663
    %v3728 = vunpack.c.l.b16 %v664
    %v3729 = vunpack.c.h.b16 %v664
    %v3730 = vunpack.c.l.b16 %v665
    %v3731 = vunpack.c.h.b16 %v665
    %v3732 = vunpack.c.l.b16 %v666
    %v3733 = vunpack.c.h.b16 %v666
    %v3734 = vunpack.c.l.b16 %v667
    %v3735 = vunpack.c.h.b16 %v667
    %v3736 = vunpack.c.l.b16 %v668
    %v3737 = vunpack.c.h.b16 %v668
    %v3738 = vunpack.c.l.b16 %v669
    %v3739 = vunpack.c.h.b16 %v669
    %v3740 = vunpack.c.l.b16 %v670
    %v3741 = vunpack.c.h.b16 %v670
    %v3742 = vunpack.c.l.b16 %v671
    %v3743 = vunpack.c.h.b16 %v671
    %v3744 = vunpack.c.l.b16 %v672
    %v3745 = vunpack.c.h.b16 %v672
    %v3746 = vunpack.c.l.b16 %v673
    %v3747 = vunpack.c.h.b16 %v673
    %v3748 = vunpack.c.l.b16 %v674
    %v3749 = vunpack.c.h.b16 %v674
    %v3750 = vunpack.c.l.b16 %v675
    %v3751 = vunpack.c.h.b16 %v675
    %v3752 = vunpack.c.l.b16 %v676
    %v3753 = vunpack.c.h.b16 %v676
    %v3754 = vunpack.c.l.b16 %v677
    %v3755 = vunpack.c.h.b16 %v677
    %v3756 = vunpack.c.l.b16 %v678
    %v3757 = vunpack.c.h.b16 %v678
    %v3758 = vunpack.c.l.b16 %v679
    %v3759 = vunpack.c.h.b16 %v679
    %v3760 = vunpack.c.l.b16 %v680
    %v3761 = vunpack.c.h.b16 %v680
    %v3762 = vunpack.c.l.b16 %v681
    %v3763 = vunpack.c.h.b16 %v681
    %v3764 = vunpack.c.l.b16 %v682
    %v3765 = vunpack.c.h.b16 %v682
    %v3766 = vunpack.c.l.b16 %v683
    %v3767 = vunpack.c.h.b16 %v683
    %v3768 = vunpack.c.l.b16 %v684
    %v3769 = vunpack.c.h.b16 %v684
    %v3770 = vunpack.c.l.b16 %v685
    %v3771 = vunpack.c.h.b16 %v685
    %v3772 = vunpack.c.l.b16 %v686
    %v3773 = vunpack.c.h.b16 %v686
    %v3774 = vunpack.c.l.b16 %v687
    %v3775 = vunpack.c.h.b16 %v687
    %v3776 = vunpack.c.l.b16 %v688
    %v3777 = vunpack.c.h.b16 %v688
    %v3778 = vunpack.c.l.b16 %v689
    %v3779 = vunpack.c.h.b16 %v689
    %v3780 = vunpack.c.l.b16 %v690
    %v3781 = vunpack.c.h.b16 %v690
    %v3782 = vunpack.c.l.b16 %v691
    %v3783 = vunpack.c.h.b16 %v691
    %v3784 = vunpack.c.l.b16 %v692
    %v3785 = vunpack.c.h.b16 %v692
    %v3786 = vunpack.c.l.b16 %v693
    %v3787 = vunpack.c.h.b16 %v693
    %v3788 = vunpack.c.l.b16 %v694
    %v3789 = vunpack.c.h.b16 %v694
    %v3790 = vunpack.c.l.b16 %v695
    %v3791 = vunpack.c.h.b16 %v695
    %v3792 = vunpack.c.l.b16 %v696
    %v3793 = vunpack.c.h.b16 %v696
    %v3794 = vunpack.c.l.b16 %v697
    %v3795 = vunpack.c.h.b16 %v697
    %v3796 = vunpack.c.l.b16 %v698
    %v3797 = vunpack.c.h.b16 %v698
    %v3798 = vunpack.c.l.b16 %v699
    %v3799 = vunpack.c.h.b16 %v699
    %v3800 = vunpack.c.l.b16 %v700
    %v3801 = vunpack.c.h.b16 %v700
    %v3802 = vunpack.c.l.b16 %v701
    %v3803 = vunpack.c.h.b16 %v701
    %v3804 = vunpack.c.l.b16 %v702
    %v3805 = vunpack.c.h.b16 %v702
    %v3806 = vunpack.c.l.b16 %v703
    %v3807 = vunpack.c.h.b16 %v703
    %v3808 = vunpack.c.l.b16 %v704
    %v3809 = vunpack.c.h.b16 %v704
    %v3810 = vunpack.c.l.b16 %v705
    %v3811 = vunpack.c.h.b16 %v705
    %v3812 = vunpack.c.l.b16 %v706
    %v3813 = vunpack.c.h.b16 %v706
    %v3814 = vunpack.c.l.b16 %v707
    %v3815 = vunpack.c.h.b16 %v707
    %v3816 = vunpack.c.l.b16 %v708
    %v3817 = vunpack.c.h.b16 %v708
    %v3818 = vunpack.c.l.b16 %v709
    %v3819 = vunpack.c.h.b16 %v709
    %v3820 = vunpack.c.l.b16 %v710
    %v3821 = vunpack.c.h.b16 %v710
    %v3822 = vunpack.c.l.b16 %v711
    %v3823 = vunpack.c.h.b16 %v711
    %v3824 = vunpack.c.l.b16 %v712
    %v3825 = vunpack.c.h.b16 %v712
    %v3826 = vunpack.c.l.b16 %v713
    %v3827 = vunpack.c.h.b16 %v713
    %v3828 = vunpack.c.l.b16 %v714
    %v3829 = vunpack.c.h.b16 %v714
    %v3830 = vunpack.c.l.b16 %v715
    %v3831 = vunpack.c.h.b16 %v715
    %v3832 = vunpack.c.l.b16 %v716
    %v3833 = vunpack.c.h.b16 %v716
    %v3834 = vunpack.c.l.b16 %v717
    %v3835 = vunpack.c.h.b16 %v717
    %v3836 = vunpack.c.l.b16 %v718
    %v3837 = vunpack.c.h.b16 %v718
    %v3838 = vunpack.c.l.b16 %v719
    %v3839 = vunpack.c.h.b16 %v719
    %v3840 = vunpack.c.l.b16 %v720
    %v3841 = vunpack.c.h.b16 %v720
    %v3842 = vunpack.c.l.b16 %v721
    %v3843 = vunpack.c.h.b16 %v721
    %v3844 = vunpack.c.l.b16 %v722
    %v3845 = vunpack.c.h.b16 %v722
    %v3846 = vunpack.c.l.b16 %v723
    %v3847 = vunpack.c.h.b16 %v723
    %v3848 = vunpack.c.l.b16 %v724
    %v3849 = vunpack.c.h.b16 %v724
    %v3850 = vunpack.c.l.b16 %v725
    %v3851 = vunpack.c.h.b16 %v725
    %v3852 = vunpack.c.l.b16 %v726
    %v3853 = vunpack.c.h.b16 %v726
    %v3854 = vunpack.c.l.b16 %v727
    %v3855 = vunpack.c.h.b16 %v727
    %v3856 = vunpack.c.l.b16 %v728
    %v3857 = vunpack.c.h.b16 %v728
    %v3858 = vunpack.c.l.b16 %v729
    %v3859 = vunpack.c.h.b16 %v729
    %v3860 = vunpack.c.l.b16 %v730
    %v3861 = vunpack.c.h.b16 %v730
    %v3862 = vunpack.c.l.b16 %v731
    %v3863 = vunpack.c.h.b16 %v731
    %v3864 = vunpack.c.l.b16 %v732
    %v3865 = vunpack.c.h.b16 %v732
    %v3866 = vunpack.c.l.b16 %v733
    %v3867 = vunpack.c.h.b16 %v733
    %v3868 = vunpack.c.l.b16 %v734
    %v3869 = vunpack.c.h.b16 %v734
    %v3870 = vunpack.c.l.b16 %v735
    %v3871 = vunpack.c.h.b16 %v735
    %v3872 = vunpack.c.l.b16 %v736
    %v3873 = vunpack.c.h.b16 %v736
    %v3874 = vunpack.c.l.b16 %v737
    %v3875 = vunpack.c.h.b16 %v737
    %v3876 = vunpack.c.l.b16 %v738
    %v3877 = vunpack.c.h.b16 %v738
    %v3878 = vunpack.c.l.b16 %v739
    %v3879 = vunpack.c.h.b16 %v739
    %v3880 = vunpack.c.l.b16 %v740
    %v3881 = vunpack.c.h.b16 %v740
    %v3882 = vunpack.c.l.b16 %v741
    %v3883 = vunpack.c.h.b16 %v741
    %v3884 = vunpack.c.l.b16 %v742
    %v3885 = vunpack.c.h.b16 %v742
    %v3886 = vunpack.c.l.b16 %v743
    %v3887 = vunpack.c.h.b16 %v743
    %v3888 = vunpack.c.l.b16 %v744
    %v3889 = vunpack.c.h.b16 %v744
    %v3890 = vunpack.c.l.b16 %v745
    %v3891 = vunpack.c.h.b16 %v745
    %v3892 = vunpack.c.l.b16 %v746
    %v3893 = vunpack.c.h.b16 %v746
    %v3894 = vunpack.c.l.b16 %v747
    %v3895 = vunpack.c.h.b16 %v747
    %v3896 = vunpack.c.l.b16 %v748
    %v3897 = vunpack.c.h.b16 %v748
    %v3898 = vunpack.c.l.b16 %v749
    %v3899 = vunpack.c.h.b16 %v749
    %v3900 = vunpack.c.l.b16 %v750
    %v3901 = vunpack.c.h.b16 %v750
    %v3902 = vunpack.c.l.b16 %v751
    %v3903 = vunpack.c.h.b16 %v751
    %v3904 = vunpack.c.l.b16 %v752
    %v3905 = vunpack.c.h.b16 %v752
    %v3906 = vunpack.c.l.b16 %v753
    %v3907 = vunpack.c.h.b16 %v753
    %v3908 = vunpack.c.l.b16 %v754
    %v3909 = vunpack.c.h.b16 %v754
    %v3910 = vunpack.c.l.b16 %v755
    %v3911 = vunpack.c.h.b16 %v755
    %v3912 = vunpack.c.l.b16 %v756
    %v3913 = vunpack.c.h.b16 %v756
    %v3914 = vunpack.c.l.b16 %v757
    %v3915 = vunpack.c.h.b16 %v757
    %v3916 = vunpack.c.l.b16 %v758
    %v3917 = vunpack.c.h.b16 %v758
    %v3918 = vunpack.c.l.b16 %v759
    %v3919 = vunpack.c.h.b16 %v759
    %v3920 = vunpack.c.l.b16 %v760
    %v3921 = vunpack.c.h.b16 %v760
    %v3922 = vunpack.c.l.b16 %v761
    %v3923 = vunpack.c.h.b16 %v761
    %v3924 = vunpack.c.l.b16 %v762
    %v3925 = vunpack.c.h.b16 %v762
    %v3926 = vunpack.c.l.b16 %v763
    %v3927 = vunpack.c.h.b16 %v763
    %v3928 = vunpack.c.l.b16 %v764
    %v3929 = vunpack.c.h.b16 %v764
    %v3930 = vunpack.c.l.b16 %v765
    %v3931 = vunpack.c.h.b16 %v765
    %v3932 = vunpack.c.l.b16 %v766
    %v3933 = vunpack.c.h.b16 %v766
    %v3934 = vunpack.c.l.b16 %v767
    %v3935 = vunpack.c.h.b16 %v767
    %v3936 = vunpack.c.l.b16 %v768
    %v3937 = vunpack.c.h.b16 %v768
    %v3938 = vunpack.c.l.b16 %v769
    %v3939 = vunpack.c.h.b16 %v769
    %v3940 = vunpack.c.l.b16 %v770
    %v3941 = vunpack.c.h.b16 %v770
    %v3942 = vunpack.c.l.b16 %v771
    %v3943 = vunpack.c.h.b16 %v771
    %v3944 = vunpack.c.l.b16 %v772
    %v3945 = vunpack.c.h.b16 %v772
    %v3946 = vunpack.c.l.b16 %v773
    %v3947 = vunpack.c.h.b16 %v773
    %v3948 = vunpack.c.l.b16 %v774
    %v3949 = vunpack.c.h.b16 %v774
    %v3950 = vunpack.c.l.b16 %v775
    %v3951 = vunpack.c.h.b16 %v775
    %v3952 = vunpack.c.l.b16 %v776
    %v3953 = vunpack.c.h.b16 %v776
    %v3954 = vunpack.c.l.b16 %v777
    %v3955 = vunpack.c.h.b16 %v777
    %v3956 = vunpack.c.l.b16 %v778
    %v3957 = vunpack.c.h.b16 %v778
    %v3958 = vunpack.c.l.b16 %v779
    %v3959 = vunpack.c.h.b16 %v779
    %v3960 = vunpack.c.l.b16 %v780
    %v3961 = vunpack.c.h.b16 %v780
    %v3962 = vunpack.c.l.b16 %v781
    %v3963 = vunpack.c.h.b16 %v781
    %v3964 = vunpack.c.l.b16 %v782
    %v3965 = vunpack.c.h.b16 %v782
    %v3966 = vunpack.c.l.b16 %v783
    %v3967 = vunpack.c.h.b16 %v783
    %v3968 = vunpack.c.l.b16 %v784
    %v3969 = vunpack.c.h.b16 %v784
    %v3970 = vunpack.c.l.b16 %v785
    %v3971 = vunpack.c.h.b16 %v785
    %v3972 = vunpack.c.l.b16 %v786
    %v3973 = vunpack.c.h.b16 %v786
    %v3974 = vunpack.c.l.b16 %v787
    %v3975 = vunpack.c.h.b16 %v787
    %v3976 = vunpack.c.l.b16 %v788
    %v3977 = vunpack.c.h.b16 %v788
    %v3978 = vunpack.c.l.b16 %v789
    %v3979 = vunpack.c.h.b16 %v789
    %v3980 = vunpack.c.l.b16 %v790
    %v3981 = vunpack.c.h.b16 %v790
    %v3982 = vunpack.c.l.b16 %v791
    %v3983 = vunpack.c.h.b16 %v791
    %v3984 = vunpack.c.l.b16 %v792
    %v3985 = vunpack.c.h.b16 %v792
    %v3986 = vunpack.c.l.b16 %v793
    %v3987 = vunpack.c.h.b16 %v793
    %v3988 = vunpack.c.l.b16 %v794
    %v3989 = vunpack.c.h.b16 %v794
    %v3990 = vunpack.c.l.b16 %v795
    %v3991 = vunpack.c.h.b16 %v795
    %v3992 = vunpack.c.l.b16 %v796
    %v3993 = vunpack.c.h.b16 %v796
    %v3994 = vunpack.c.l.b16 %v797
    %v3995 = vunpack.c.h.b16 %v797
    %v3996 = vunpack.c.l.b16 %v798
    %v3997 = vunpack.c.h.b16 %v798
    %v3998 = vunpack.c.l.b16 %v799
    %v3999 = vunpack.c.h.b16 %v799
    %v4000 = vunpack.c.l.b16 %v800
    %v4001 = vunpack.c.h.b16 %v800
    %v4002 = vunpack.c.l.b16 %v801
    %v4003 = vunpack.c.h.b16 %v801
    %v4004 = vunpack.c.l.b16 %v802
    %v4005 = vunpack.c.h.b16 %v802
    %v4006 = vunpack.c.l.b16 %v803
    %v4007 = vunpack.c.h.b16 %v803
    %v4008 = vunpack.c.l.b16 %v804
    %v4009 = vunpack.c.h.b16 %v804
    %v4010 = vunpack.c.l.b16 %v805
    %v4011 = vunpack.c.h.b16 %v805
    %v4012 = vunpack.c.l.b16 %v806
    %v4013 = vunpack.c.h.b16 %v806
    %v4014 = vunpack.c.l.b16 %v807
    %v4015 = vunpack.c.h.b16 %v807
    %v4016 = vunpack.c.l.b16 %v808
    %v4017 = vunpack.c.h.b16 %v808
    %v4018 = vunpack.c.l.b16 %v809
    %v4019 = vunpack.c.h.b16 %v809
    %v4020 = vunpack.c.l.b16 %v810
    %v4021 = vunpack.c.h.b16 %v810
    %v4022 = vunpack.c.l.b16 %v811
    %v4023 = vunpack.c.h.b16 %v811
    %v4024 = vunpack.c.l.b16 %v812
    %v4025 = vunpack.c.h.b16 %v812
    %v4026 = vunpack.c.l.b16 %v813
    %v4027 = vunpack.c.h.b16 %v813
    %v4028 = vunpack.c.l.b16 %v814
    %v4029 = vunpack.c.h.b16 %v814
    %v4030 = vunpack.c.l.b16 %v815
    %v4031 = vunpack.c.h.b16 %v815
    %v4032 = vunpack.c.l.b16 %v816
    %v4033 = vunpack.c.h.b16 %v816
    %v4034 = vunpack.c.l.b16 %v817
    %v4035 = vunpack.c.h.b16 %v817
    %v4036 = vunpack.c.l.b16 %v818
    %v4037 = vunpack.c.h.b16 %v818
    %v4038 = vunpack.c.l.b16 %v819
    %v4039 = vunpack.c.h.b16 %v819
    %v4040 = vunpack.c.l.b16 %v820
    %v4041 = vunpack.c.h.b16 %v820
    %v4042 = vunpack.c.l.b16 %v821
    %v4043 = vunpack.c.h.b16 %v821
    %v4044 = vunpack.c.l.b16 %v822
    %v4045 = vunpack.c.h.b16 %v822
    %v4046 = vunpack.c.l.b16 %v823
    %v4047 = vunpack.c.h.b16 %v823
    %v4048 = vunpack.c.l.b16 %v824
    %v4049 = vunpack.c.h.b16 %v824
    %v4050 = vunpack.c.l.b16 %v825
    %v4051 = vunpack.c.h.b16 %v825
    %v4052 = vunpack.c.l.b16 %v826
    %v4053 = vunpack.c.h.b16 %v826
    %v4054 = vunpack.c.l.b16 %v827
    %v4055 = vunpack.c.h.b16 %v827
    %v4056 = vunpack.c.l.b16 %v828
    %v4057 = vunpack.c.h.b16 %v828
    %v4058 = vunpack.c.l.b16 %v829
    %v4059 = vunpack.c.h.b16 %v829
    %v4060 = vunpack.c.l.b16 %v830
    %v4061 = vunpack.c.h.b16 %v830
    %v4062 = vunpack.c.l.b16 %v831
    %v4063 = vunpack.c.h.b16 %v831
    %v4064 = vunpack.c.l.b16 %v832
    %v4065 = vunpack.c.h.b16 %v832
    %v4066 = vunpack.c.l.b16 %v833
    %v4067 = vunpack.c.h.b16 %v833
    %v4068 = vunpack.c.l.b16 %v834
    %v4069 = vunpack.c.h.b16 %v834
    %v4070 = vunpack.c.l.b16 %v835
    %v4071 = vunpack.c.h.b16 %v835
    %v4072 = vunpack.c.l.b16 %v836
    %v4073 = vunpack.c.h.b16 %v836
    %v4074 = vunpack.c.l.b16 %v837
    %v4075 = vunpack.c.h.b16 %v837
    %v4076 = vunpack.c.l.b16 %v838
    %v4077 = vunpack.c.h.b16 %v838
    %v4078 = vunpack.c.l.b16 %v839
    %v4079 = vunpack.c.h.b16 %v839
    %v4080 = vunpack.c.l.b16 %v840
    %v4081 = vunpack.c.h.b16 %v840
    %v4082 = vunpack.c.l.b16 %v841
    %v4083 = vunpack.c.h.b16 %v841
    %v4084 = vunpack.c.l.b16 %v842
    %v4085 = vunpack.c.h.b16 %v842
    %v4086 = vunpack.c.l.b16 %v843
    %v4087 = vunpack.c.h.b16 %v843
    %v4088 = vunpack.c.l.b16 %v844
    %v4089 = vunpack.c.h.b16 %v844
    %v4090 = vunpack.c.l.b16 %v845
    %v4091 = vunpack.c.h.b16 %v845
    %v4092 = vunpack.c.l.b16 %v846
    %v4093 = vunpack.c.h.b16 %v846
    %v4094 = vunpack.c.l.b16 %v847
    %v4095 = vunpack.c.h.b16 %v847
    %v4096 = vunpack.c.l.b16 %v848
    %v4097 = vunpack.c.h.b16 %v848
    %v4098 = vunpack.c.l.b16 %v849
    %v4099 = vunpack.c.h.b16 %v849
    %v4100 = vunpack.c.l.b16 %v850
    %v4101 = vunpack.c.h.b16 %v850
    %v4102 = vunpack.c.l.b16 %v851
    %v4103 = vunpack.c.h.b16 %v851
    %v4104 = vunpack.c.l.b16 %v852
    %v4105 = vunpack.c.h.b16 %v852
    %v4106 = vunpack.c.l.b16 %v853
    %v4107 = vunpack.c.h.b16 %v853
    %v4108 = vunpack.c.l.b16 %v854
    %v4109 = vunpack.c.h.b16 %v854
    %v4110 = vunpack.c.l.b16 %v855
    %v4111 = vunpack.c.h.b16 %v855
    %v4112 = vunpack.c.l.b16 %v856
    %v4113 = vunpack.c.h.b16 %v856
    %v4114 = vunpack.c.l.b16 %v857
    %v4115 = vunpack.c.h.b16 %v857
    %v4116 = vunpack.c.l.b16 %v858
    %v4117 = vunpack.c.h.b16 %v858
    %v4118 = vunpack.c.l.b16 %v859
    %v4119 = vunpack.c.h.b16 %v859
    %v4120 = vunpack.c.l.b16 %v860
    %v4121 = vunpack.c.h.b16 %v860
    %v4122 = vunpack.c.l.b16 %v861
    %v4123 = vunpack.c.h.b16 %v861
    %v4124 = vunpack.c.l.b16 %v862
    %v4125 = vunpack.c.h.b16 %v862
    %v4126 = vunpack.c.l.b16 %v863
    %v4127 = vunpack.c.h.b16 %v863
    %v4128 = vunpack.c.l.b16 %v864
    %v4129 = vunpack.c.h.b16 %v864
    %v4130 = vunpack.c.l.b16 %v865
    %v4131 = vunpack.c.h.b16 %v865
    %v4132 = vunpack.c.l.b16 %v866
    %v4133 = vunpack.c.h.b16 %v866
    %v4134 = vunpack.c.l.b16 %v867
    %v4135 = vunpack.c.h.b16 %v867
    %v4136 = vunpack.c.l.b16 %v868
    %v4137 = vunpack.c.h.b16 %v868
    %v4138 = vunpack.c.l.b16 %v869
    %v4139 = vunpack.c.h.b16 %v869
    %v4140 = vunpack.c.l.b16 %v870
    %v4141 = vunpack.c.h.b16 %v870
    %v4142 = vunpack.c.l.b16 %v871
    %v4143 = vunpack.c.h.b16 %v871
    %v4144 = vunpack.c.l.b16 %v872
    %v4145 = vunpack.c.h.b16 %v872
    %v4146 = vunpack.c.l.b16 %v873
    %v4147 = vunpack.c.h.b16 %v873
    %v4148 = vunpack.c.l.b16 %v874
    %v4149 = vunpack.c.h.b16 %v874
    %v4150 = vunpack.c.l.b16 %v875
    %v4151 = vunpack.c.h.b16 %v875
    %v4152 = vunpack.c.l.b16 %v876
    %v4153 = vunpack.c.h.b16 %v876
    %v4154 = vunpack.c.l.b16 %v877
    %v4155 = vunpack.c.h.b16 %v877
    %v4156 = vunpack.c.l.b16 %v878
    %v4157 = vunpack.c.h.b16 %v878
    %v4158 = vunpack.c.l.b16 %v879
    %v4159 = vunpack.c.h.b16 %v879
    %v4160 = vunpack.c.l.b16 %v880
    %v4161 = vunpack.c.h.b16 %v880
    %v4162 = vunpack.c.l.b16 %v881
    %v4163 = vunpack.c.h.b16 %v881
    %v4164 = vunpack.c.l.b16 %v882
    %v4165 = vunpack.c.h.b16 %v882
    %v4166 = vunpack.c.l.b16 %v883
    %v4167 = vunpack.c.h.b16 %v883
    %v4168 = vunpack.c.l.b16 %v884
    %v4169 = vunpack.c.h.b16 %v884
    %v4170 = vunpack.c.l.b16 %v885
    %v4171 = vunpack.c.h.b16 %v885
    %v4172 = vunpack.c.l.b16 %v886
    %v4173 = vunpack.c.h.b16 %v886
    %v4174 = vunpack.c.l.b16 %v887
    %v4175 = vunpack.c.h.b16 %v887
    %v4176 = vunpack.c.l.b16 %v888
    %v4177 = vunpack.c.h.b16 %v888
    %v4178 = vunpack.c.l.b16 %v889
    %v4179 = vunpack.c.h.b16 %v889
    %v4180 = vunpack.c.l.b16 %v890
    %v4181 = vunpack.c.h.b16 %v890
    %v4182 = vunpack.c.l.b16 %v891
    %v4183 = vunpack.c.h.b16 %v891
    %v4184 = vunpack.c.l.b16 %v892
    %v4185 = vunpack.c.h.b16 %v892
    %v4186 = vunpack.c.l.b16 %v893
    %v4187 = vunpack.c.h.b16 %v893
    %v4188 = vunpack.c.l.b16 %v894
    %v4189 = vunpack.c.h.b16 %v894
    %v4190 = vunpack.c.l.b16 %v895
    %v4191 = vunpack.c.h.b16 %v895
    %v4192 = vunpack.c.l.b16 %v896
    %v4193 = vunpack.c.h.b16 %v896
    %v4194 = vunpack.c.l.b16 %v897
    %v4195 = vunpack.c.h.b16 %v897
    %v4196 = vunpack.c.l.b16 %v898
    %v4197 = vunpack.c.h.b16 %v898
    %v4198 = vunpack.c.l.b16 %v899
    %v4199 = vunpack.c.h.b16 %v899
    %v4200 = vunpack.c.l.b16 %v900
    %v4201 = vunpack.c.h.b16 %v900
    %v4202 = vunpack.c.l.b16 %v901
    %v4203 = vunpack.c.h.b16 %v901
    %v4204 = vunpack.c.l.b16 %v902
    %v4205 = vunpack.c.h.b16 %v902
    %v4206 = vunpack.c.l.b16 %v903
    %v4207 = vunpack.c.h.b16 %v903
    %v4208 = vunpack.c.l.b16 %v904
    %v4209 = vunpack.c.h.b16 %v904
    %v4210 = vunpack.c.l.b16 %v905
    %v4211 = vunpack.c.h.b16 %v905
    %v4212 = vunpack.c.l.b16 %v906
    %v4213 = vunpack.c.h.b16 %v906
    %v4214 = vunpack.c.l.b16 %v907
    %v4215 = vunpack.c.h.b16 %v907
    %v4216 = vunpack.c.l.b16 %v908
    %v4217 = vunpack.c.h.b16 %v908
    %v4218 = vunpack.c.l.b16 %v909
    %v4219 = vunpack.c.h.b16 %v909
    %v4220 = vunpack.c.l.b16 %v910
    %v4221 = vunpack.c.h.b16 %v910
    %v4222 = vunpack.c.l.b16 %v911
    %v4223 = vunpack.c.h.b16 %v911
    %v4224 = vunpack.c.l.b16 %v912
    %v4225 = vunpack.c.h.b16 %v912
    %v4226 = vunpack.c.l.b16 %v913
    %v4227 = vunpack.c.h.b16 %v913
    %v4228 = vunpack.c.l.b16 %v914
    %v4229 = vunpack.c.h.b16 %v914
    %v4230 = vunpack.c.l.b16 %v915
    %v4231 = vunpack.c.h.b16 %v915
    %v4232 = vunpack.c.l.b16 %v916
    %v4233 = vunpack.c.h.b16 %v916
    %v4234 = vunpack.c.l.b16 %v917
    %v4235 = vunpack.c.h.b16 %v917
    %v4236 = vunpack.c.l.b16 %v918
    %v4237 = vunpack.c.h.b16 %v918
    %v4238 = vunpack.c.l.b16 %v919
    %v4239 = vunpack.c.h.b16 %v919
    %v4240 = vunpack.c.l.b16 %v920
    %v4241 = vunpack.c.h.b16 %v920
    %v4242 = vunpack.c.l.b16 %v921
    %v4243 = vunpack.c.h.b16 %v921
    %v4244 = vunpack.c.l.b16 %v922
    %v4245 = vunpack.c.h.b16 %v922
    %v4246 = vunpack.c.l.b16 %v923
    %v4247 = vunpack.c.h.b16 %v923
    %v4248 = vunpack.c.l.b16 %v924
    %v4249 = vunpack.c.h.b16 %v924
    %v4250 = vunpack.c.l.b16 %v925
    %v4251 = vunpack.c.h.b16 %v925
    %v4252 = vunpack.c.l.b16 %v926
    %v4253 = vunpack.c.h.b16 %v926
    %v4254 = vunpack.c.l.b16 %v927
    %v4255 = vunpack.c.h.b16 %v927
    %v4256 = vunpack.c.l.b16 %v928
    %v4257 = vunpack.c.h.b16 %v928
    %v4258 = vunpack.c.l.b16 %v929
    %v4259 = vunpack.c.h.b16 %v929
    %v4260 = vunpack.c.l.b16 %v930
    %v4261 = vunpack.c.h.b16 %v930
    %v4262 = vunpack.c.l.b16 %v931
    %v4263 = vunpack.c.h.b16 %v931
    %v4264 = vunpack.c.l.b16 %v932
    %v4265 = vunpack.c.h.b16 %v932
    %v4266 = vunpack.c.l.b16 %v933
    %v4267 = vunpack.c.h.b16 %v933
    %v4268 = vunpack.c.l.b16 %v934
    %v4269 = vunpack.c.h.b16 %v934
    %v4270 = vunpack.c.l.b16 %v935
    %v4271 = vunpack.c.h.b16 %v935
    %v4272 = vunpack.c.l.b16 %v936
    %v4273 = vunpack.c.h.b16 %v936
    %v4274 = vunpack.c.l.b16 %v937
    %v4275 = vunpack.c.h.b16 %v937
    %v4276 = vunpack.c.l.b16 %v938
    %v4277 = vunpack.c.h.b16 %v938
    %v4278 = vunpack.c.l.b16 %v939
    %v4279 = vunpack.c.h.b16 %v939
    %v4280 = vunpack.c.l.b16 %v940
    %v4281 = vunpack.c.h.b16 %v940
    %v4282 = vunpack.c.l.b16 %v941
    %v4283 = vunpack.c.h.b16 %v941
    %v4284 = vunpack.c.l.b16 %v942
    %v4285 = vunpack.c.h.b16 %v942
    %v4286 = vunpack.c.l.b16 %v943
    %v4287 = vunpack.c.h.b16 %v943
    %v4288 = vunpack.c.l.b16 %v944
    %v4289 = vunpack.c.h.b16 %v944
    %v4290 = vunpack.c.l.b16 %v945
    %v4291 = vunpack.c.h.b16 %v945
    %v4292 = vunpack.c.l.b16 %v946
    %v4293 = vunpack.c.h.b16 %v946
    %v4294 = vunpack.c.l.b16 %v947
    %v4295 = vunpack.c.h.b16 %v947
    %v4296 = vunpack.c.l.b16 %v948
    %v4297 = vunpack.c.h.b16 %v948
    %v4298 = vunpack.c.l.b16 %v949
    %v4299 = vunpack.c.h.b16 %v949
    %v4300 = vunpack.c.l.b16 %v950
    %v4301 = vunpack.c.h.b16 %v950
    %v4302 = vunpack.c.l.b16 %v951
    %v4303 = vunpack.c.h.b16 %v951
    %v4304 = vunpack.c.l.b16 %v952
    %v4305 = vunpack.c.h.b16 %v952
    %v4306 = vunpack.c.l.b16 %v953
    %v4307 = vunpack.c.h.b16 %v953
    %v4308 = vunpack.c.l.b16 %v954
    %v4309 = vunpack.c.h.b16 %v954
    %v4310 = vunpack.c.l.b16 %v955
    %v4311 = vunpack.c.h.b16 %v955
    %v4312 = vunpack.c.l.b16 %v956
    %v4313 = vunpack.c.h.b16 %v956
    %v4314 = vunpack.c.l.b16 %v957
    %v4315 = vunpack.c.h.b16 %v957
    %v4316 = vunpack.c.l.b16 %v958
    %v4317 = vunpack.c.h.b16 %v958
    %v4318 = vunpack.c.l.b16 %v959
    %v4319 = vunpack.c.h.b16 %v959
    %v4320 = vunpack.c.l.b16 %v960
    %v4321 = vunpack.c.h.b16 %v960
    %v4322 = vunpack.c.l.b16 %v961
    %v4323 = vunpack.c.h.b16 %v961
    %v4324 = vunpack.c.l.b16 %v962
    %v4325 = vunpack.c.h.b16 %v962
    %v4326 = vunpack.c.l.b16 %v963
    %v4327 = vunpack.c.h.b16 %v963
    %v4328 = vunpack.c.l.b16 %v964
    %v4329 = vunpack.c.h.b16 %v964
    %v4330 = vunpack.c.l.b16 %v965
    %v4331 = vunpack.c.h.b16 %v965
    %v4332 = vunpack.c.l.b16 %v966
    %v4333 = vunpack.c.h.b16 %v966
    %v4334 = vunpack.c.l.b16 %v967
    %v4335 = vunpack.c.h.b16 %v967
    %v4336 = vunpack.c.l.b16 %v968
    %v4337 = vunpack.c.h.b16 %v968
    %v4338 = vunpack.c.l.b16 %v969
    %v4339 = vunpack.c.h.b16 %v969
    %v4340 = vunpack.c.l.b16 %v970
    %v4341 = vunpack.c.h.b16 %v970
    %v4342 = vunpack.c.l.b16 %v971
    %v4343 = vunpack.c.h.b16 %v971
    %v4344 = vunpack.c.l.b16 %v972
    %v4345 = vunpack.c.h.b16 %v972
    %v4346 = vunpack.c.l.b16 %v973
    %v4347 = vunpack.c.h.b16 %v973
    %v4348 = vunpack.c.l.b16 %v974
    %v4349 = vunpack.c.h.b16 %v974
    %v4350 = vunpack.c.l.b16 %v975
    %v4351 = vunpack.c.h.b16 %v975
    %v4352 = vunpack.c.l.b16 %v976
    %v4353 = vunpack.c.h.b16 %v976
    %v4354 = vunpack.c.l.b16 %v977
    %v4355 = vunpack.c.h.b16 %v977
    %v4356 = vunpack.c.l.b16 %v978
    %v4357 = vunpack.c.h.b16 %v978
    %v4358 = vunpack.c.l.b16 %v979
    %v4359 = vunpack.c.h.b16 %v979
    %v4360 = vunpack.c.l.b16 %v980
    %v4361 = vunpack.c.h.b16 %v980
    %v4362 = vunpack.c.l.b16 %v981
    %v4363 = vunpack.c.h.b16 %v981
    %v4364 = vunpack.c.l.b16 %v982
    %v4365 = vunpack.c.h.b16 %v982
    %v4366 = vunpack.c.l.b16 %v983
    %v4367 = vunpack.c.h.b16 %v983
    %v4368 = vunpack.c.l.b16 %v984
    %v4369 = vunpack.c.h.b16 %v984
    %v4370 = vunpack.c.l.b16 %v985
    %v4371 = vunpack.c.h.b16 %v985
    %v4372 = vunpack.c.l.b16 %v986
    %v4373 = vunpack.c.h.b16 %v986
    %v4374 = vunpack.c.l.b16 %v987
    %v4375 = vunpack.c.h.b16 %v987
    %v4376 = vunpack.c.l.b16 %v988
    %v4377 = vunpack.c.h.b16 %v988
    %v4378 = vunpack.c.l.b16 %v989
    %v4379 = vunpack.c.h.b16 %v989
    %v4380 = vunpack.c.l.b16 %v990
    %v4381 = vunpack.c.h.b16 %v990
    %v4382 = vunpack.c.l.b16 %v991
    %v4383 = vunpack.c.h.b16 %v991
    %v4384 = vunpack.c.l.b16 %v992
    %v4385 = vunpack.c.h.b16 %v992
    %v4386 = vunpack.c.l.b16 %v993
    %v4387 = vunpack.c.h.b16 %v993
    %v4388 = vunpack.c.l.b16 %v994
    %v4389 = vunpack.c.h.b16 %v994
    %v4390 = vunpack.c.l.b16 %v995
    %v4391 = vunpack.c.h.b16 %v995
    %v4392 = vunpack.c.l.b16 %v996
    %v4393 = vunpack.c.h.b16 %v996
    %v4394 = vunpack.c.l.b16 %v997
    %v4395 = vunpack.c.h.b16 %v997
    %v4396 = vunpack.c.l.b16 %v998
    %v4397 = vunpack.c.h.b16 %v998
    %v4398 = vunpack.c.l.b16 %v999
    %v4399 = vunpack.c.h.b16 %v999
    %v4400 = vunpack.c.l.b16 %v1000
    %v4401 = vunpack.c.h.b16 %v1000
    %v4402 = vunpack.c.l.b16 %v1001
    %v4403 = vunpack.c.h.b16 %v1001
    %v4404 = vunpack.c.l.b16 %v1002
    %v4405 = vunpack.c.h.b16 %v1002
    %v4406 = vunpack.c.l.b16 %v1003
    %v4407 = vunpack.c.h.b16 %v1003
    %v4408 = vunpack.c.l.b16 %v1004
    %v4409 = vunpack.c.h.b16 %v1004
    %v4410 = vunpack.c.l.b16 %v1005
    %v4411 = vunpack.c.h.b16 %v1005
    %v4412 = vunpack.c.l.b16 %v1006
    %v4413 = vunpack.c.h.b16 %v1006
    %v4414 = vunpack.c.l.b16 %v1007
    %v4415 = vunpack.c.h.b16 %v1007
    %v4416 = vunpack.c.l.b16 %v1008
    %v4417 = vunpack.c.h.b16 %v1008
    %v4418 = vunpack.c.l.b16 %v1009
    %v4419 = vunpack.c.h.b16 %v1009
    %v4420 = vunpack.c.l.b16 %v1010
    %v4421 = vunpack.c.h.b16 %v1010
    %v4422 = vunpack.c.l.b16 %v1011
    %v4423 = vunpack.c.h.b16 %v1011
    %v4424 = vunpack.c.l.b16 %v1012
    %v4425 = vunpack.c.h.b16 %v1012
    %v4426 = vunpack.c.l.b16 %v1013
    %v4427 = vunpack.c.h.b16 %v1013
    %v4428 = vunpack.c.l.b16 %v1014
    %v4429 = vunpack.c.h.b16 %v1014
    %v4430 = vunpack.c.l.b16 %v1015
    %v4431 = vunpack.c.h.b16 %v1015
    %v4432 = vunpack.c.l.b16 %v1016
    %v4433 = vunpack.c.h.b16 %v1016
    %v4434 = vunpack.c.l.b16 %v1017
    %v4435 = vunpack.c.h.b16 %v1017
    %v4436 = vunpack.c.l.b16 %v1018
    %v4437 = vunpack.c.h.b16 %v1018
    %v4438 = vunpack.c.l.b16 %v1019
    %v4439 = vunpack.c.h.b16 %v1019
    %v4440 = vunpack.c.l.b16 %v1020
    %v4441 = vunpack.c.h.b16 %v1020
    %v4442 = vunpack.c.l.b16 %v1021
    %v4443 = vunpack.c.h.b16 %v1021
    %v4444 = vunpack.c.l.b16 %v1022
    %v4445 = vunpack.c.h.b16 %v1022
    %v4446 = vunpack.c.l.b16 %v1023
    %v4447 = vunpack.c.h.b16 %v1023
    %v4448 = vunpack.c.l.b16 %v1024
    %v4449 = vunpack.c.h.b16 %v1024
    %v4450 = vunpack.c.l.b16 %v1025
    %v4451 = vunpack.c.h.b16 %v1025
    %v4452 = vunpack.c.l.b16 %v1026
    %v4453 = vunpack.c.h.b16 %v1026
    %v4454 = vunpack.c.l.b16 %v1027
    %v4455 = vunpack.c.h.b16 %v1027
    %v4456 = vunpack.c.l.b16 %v1028
    %v4457 = vunpack.c.h.b16 %v1028
    %v4458 = vunpack.c.l.b16 %v1029
    %v4459 = vunpack.c.h.b16 %v1029
    %v4460 = vunpack.c.l.b16 %v1030
    %v4461 = vunpack.c.h.b16 %v1030
    %v4462 = vunpack.c.l.b16 %v1031
    %v4463 = vunpack.c.h.b16 %v1031
    %v4464 = vunpack.c.l.b16 %v1032
    %v4465 = vunpack.c.h.b16 %v1032
    %v4466 = vunpack.c.l.b16 %v1033
    %v4467 = vunpack.c.h.b16 %v1033
    %v4468 = vunpack.c.l.b16 %v1034
    %v4469 = vunpack.c.h.b16 %v1034
    %v4470 = vunpack.c.l.b16 %v1035
    %v4471 = vunpack.c.h.b16 %v1035
    %v4472 = vunpack.c.l.b16 %v1036
    %v4473 = vunpack.c.h.b16 %v1036
    %v4474 = vunpack.c.l.b16 %v1037
    %v4475 = vunpack.c.h.b16 %v1037
    %v4476 = vunpack.c.l.b16 %v1038
    %v4477 = vunpack.c.h.b16 %v1038
    %v4478 = vunpack.c.l.b16 %v1039
    %v4479 = vunpack.c.h.b16 %v1039
    %v4480 = vunpack.c.l.b16 %v1040
    %v4481 = vunpack.c.h.b16 %v1040
    %v4482 = vunpack.c.l.b16 %v1041
    %v4483 = vunpack.c.h.b16 %v1041
    %v4484 = vunpack.c.l.b16 %v1042
    %v4485 = vunpack.c.h.b16 %v1042
    %v4486 = vunpack.c.l.b16 %v1043
    %v4487 = vunpack.c.h.b16 %v1043
    %v4488 = vunpack.c.l.b16 %v1044
    %v4489 = vunpack.c.h.b16 %v1044
    %v4490 = vunpack.c.l.b16 %v1045
    %v4491 = vunpack.c.h.b16 %v1045
    %v4492 = vunpack.c.l.b16 %v1046
    %v4493 = vunpack.c.h.b16 %v1046
    %v4494 = vunpack.c.l.b16 %v1047
    %v4495 = vunpack.c.h.b16 %v1047
    %v4496 = vunpack.c.l.b16 %v1048
    %v4497 = vunpack.c.h.b16 %v1048
    %v4498 = vunpack.c.l.b16 %v1049
    %v4499 = vunpack.c.h.b16 %v1049
    %v4500 = vunpack.c.l.b16 %v1050
    %v4501 = vunpack.c.h.b16 %v1050
    %v4502 = vunpack.c.l.b16 %v1051
    %v4503 = vunpack.c.h.b16 %v1051
    %v4504 = vunpack.c.l.b16 %v1052
    %v4505 = vunpack.c.h.b16 %v1052
    %v4506 = vunpack.c.l.b16 %v1053
    %v4507 = vunpack.c.h.b16 %v1053
    %v4508 = vunpack.c.l.b16 %v1054
    %v4509 = vunpack.c.h.b16 %v1054
    %v4510 = vunpack.c.l.b16 %v1055
    %v4511 = vunpack.c.h.b16 %v1055
    %v4512 = vunpack.c.l.b16 %v1056
    %v4513 = vunpack.c.h.b16 %v1056
    %v4514 = vunpack.c.l.b16 %v1057
    %v4515 = vunpack.c.h.b16 %v1057
    %v4516 = vunpack.c.l.b16 %v1058
    %v4517 = vunpack.c.h.b16 %v1058
    %v4518 = vunpack.c.l.b16 %v1059
    %v4519 = vunpack.c.h.b16 %v1059
    %v4520 = vunpack.c.l.b16 %v1060
    %v4521 = vunpack.c.h.b16 %v1060
    %v4522 = vunpack.c.l.b16 %v1061
    %v4523 = vunpack.c.h.b16 %v1061
    %v4524 = vunpack.c.l.b16 %v1062
    %v4525 = vunpack.c.h.b16 %v1062
    %v4526 = vunpack.c.l.b16 %v1063
    %v4527 = vunpack.c.h.b16 %v1063
    %v4528 = vunpack.c.l.b16 %v1064
    %v4529 = vunpack.c.h.b16 %v1064
    %v4530 = vunpack.c.l.b16 %v1065
    %v4531 = vunpack.c.h.b16 %v1065
    %v4532 = vunpack.c.l.b16 %v1066
    %v4533 = vunpack.c.h.b16 %v1066
    %v4534 = vunpack.c.l.b16 %v1067
    %v4535 = vunpack.c.h.b16 %v1067
    %v4536 = vunpack.c.l.b16 %v1068
    %v4537 = vunpack.c.h.b16 %v1068
    %v4538 = vunpack.c.l.b16 %v1069
    %v4539 = vunpack.c.h.b16 %v1069
    %v4540 = vunpack.c.l.b16 %v1070
    %v4541 = vunpack.c.h.b16 %v1070
    %v4542 = vunpack.c.l.b16 %v1071
    %v4543 = vunpack.c.h.b16 %v1071
    %v4544 = vunpack.c.l.b16 %v1072
    %v4545 = vunpack.c.h.b16 %v1072
    %v4546 = vunpack.c.l.b16 %v1073
    %v4547 = vunpack.c.h.b16 %v1073
    %v4548 = vunpack.c.l.b16 %v1074
    %v4549 = vunpack.c.h.b16 %v1074
    %v4550 = vunpack.c.l.b16 %v1075
    %v4551 = vunpack.c.h.b16 %v1075
    %v4552 = vunpack.c.l.b16 %v1076
    %v4553 = vunpack.c.h.b16 %v1076
    %v4554 = vunpack.c.l.b16 %v1077
    %v4555 = vunpack.c.h.b16 %v1077
    %v4556 = vunpack.c.l.b16 %v1078
    %v4557 = vunpack.c.h.b16 %v1078
    %v4558 = vunpack.c.l.b16 %v1079
    %v4559 = vunpack.c.h.b16 %v1079
    %v4560 = vunpack.c.l.b16 %v1080
    %v4561 = vunpack.c.h.b16 %v1080
    %v4562 = vunpack.c.l.b16 %v1081
    %v4563 = vunpack.c.h.b16 %v1081
    %v4564 = vunpack.c.l.b16 %v1082
    %v4565 = vunpack.c.h.b16 %v1082
    %v4566 = vunpack.c.l.b16 %v1083
    %v4567 = vunpack.c.h.b16 %v1083
    %v4568 = vunpack.c.l.b16 %v1084
    %v4569 = vunpack.c.h.b16 %v1084
    %v4570 = vunpack.c.l.b16 %v1085
    %v4571 = vunpack.c.h.b16 %v1085
    %v4572 = vunpack.c.l.b16 %v1086
    %v4573 = vunpack.c.h.b16 %v1086
    %v4574 = vunpack.c.l.b16 %v1087
    %v4575 = vunpack.c.h.b16 %v1087
    %v4576 = vunpack.c.l.b16 %v1088
    %v4577 = vunpack.c.h.b16 %v1088
    %v4578 = vunpack.c.l.b16 %v1089
    %v4579 = vunpack.c.h.b16 %v1089
    %v4580 = vunpack.c.l.b16 %v1090
    %v4581 = vunpack.c.h.b16 %v1090
    %v4582 = vunpack.c.l.b16 %v1091
    %v4583 = vunpack.c.h.b16 %v1091
    %v4584 = vunpack.c.l.b16 %v1092
    %v4585 = vunpack.c.h.b16 %v1092
    %v4586 = vunpack.c.l.b16 %v1093
    %v4587 = vunpack.c.h.b16 %v1093
    %v4588 = vunpack.c.l.b16 %v1094
    %v4589 = vunpack.c.h.b16 %v1094
    %v4590 = vunpack.c.l.b16 %v1095
    %v4591 = vunpack.c.h.b16 %v1095
    %v4592 = vunpack.c.l.b16 %v1096
    %v4593 = vunpack.c.h.b16 %v1096
    %v4594 = vunpack.c.l.b16 %v1097
    %v4595 = vunpack.c.h.b16 %v1097
    %v4596 = vunpack.c.l.b16 %v1098
    %v4597 = vunpack.c.h.b16 %v1098
    %v4598 = vunpack.c.l.b16 %v1099
    %v4599 = vunpack.c.h.b16 %v1099
    %v4600 = vunpack.c.l.b16 %v1100
    %v4601 = vunpack.c.h.b16 %v1100
    %v4602 = vunpack.c.l.b16 %v1101
    %v4603 = vunpack.c.h.b16 %v1101
    %v4604 = vunpack.c.l.b16 %v1102
    %v4605 = vunpack.c.h.b16 %v1102
    %v4606 = vunpack.c.l.b16 %v1103
    %v4607 = vunpack.c.h.b16 %v1103
    %v4608 = vunpack.c.l.b16 %v1104
    %v4609 = vunpack.c.h.b16 %v1104
    %v4610 = vunpack.c.l.b16 %v1105
    %v4611 = vunpack.c.h.b16 %v1105
    %v4612 = vunpack.c.l.b16 %v1106
    %v4613 = vunpack.c.h.b16 %v1106
    %v4614 = vunpack.c.l.b16 %v1107
    %v4615 = vunpack.c.h.b16 %v1107
    %v4616 = vunpack.c.l.b16 %v1108
    %v4617 = vunpack.c.h.b16 %v1108
    %v4618 = vunpack.c.l.b16 %v1109
    %v4619 = vunpack.c.h.b16 %v1109
    %v4620 = vunpack.c.l.b16 %v1110
    %v4621 = vunpack.c.h.b16 %v1110
    %v4622 = vunpack.c.l.b16 %v1111
    %v4623 = vunpack.c.h.b16 %v1111
    %v4624 = vunpack.c.l.b16 %v1112
    %v4625 = vunpack.c.h.b16 %v1112
    %v4626 = vunpack.c.l.b16 %v1113
    %v4627 = vunpack.c.h.b16 %v1113
    %v4628 = vunpack.c.l.b16 %v1114
    %v4629 = vunpack.c.h.b16 %v1114
    %v4630 = vunpack.c.l.b16 %v1115
    %v4631 = vunpack.c.h.b16 %v1115
    %v4632 = vunpack.c.l.b16 %v1116
    %v4633 = vunpack.c.h.b16 %v1116
    %v4634 = vunpack.c.l.b16 %v1117
    %v4635 = vunpack.c.h.b16 %v1117
    %v4636 = vunpack.c.l.b16 %v1118
    %v4637 = vunpack.c.h.b16 %v1118
    %v4638 = vunpack.c.l.b16 %v1119
    %v4639 = vunpack.c.h.b16 %v1119
    %v4640 = vunpack.c.l.b16 %v1120
    %v4641 = vunpack.c.h.b16 %v1120
    %v4642 = vunpack.c.l.b16 %v1121
    %v4643 = vunpack.c.h.b16 %v1121
    %v4644 = vunpack.c.l.b16 %v1122
    %v4645 = vunpack.c.h.b16 %v1122
    %v4646 = vunpack.c.l.b16 %v1123
    %v4647 = vunpack.c.h.b16 %v1123
    %v4648 = vunpack.c.l.b16 %v1124
    %v4649 = vunpack.c.h.b16 %v1124
    %v4650 = vunpack.c.l.b16 %v1125
    %v4651 = vunpack.c.h.b16 %v1125
    %v4652 = vunpack.c.l.b16 %v1126
    %v4653 = vunpack.c.h.b16 %v1126
    %v4654 = vunpack.c.l.b16 %v1127
    %v4655 = vunpack.c.h.b16 %v1127
    %v4656 = vunpack.c.l.b16 %v1128
    %v4657 = vunpack.c.h.b16 %v1128
    %v4658 = vunpack.c.l.b16 %v1129
    %v4659 = vunpack.c.h.b16 %v1129
    %v4660 = vunpack.c.l.b16 %v1130
    %v4661 = vunpack.c.h.b16 %v1130
    %v4662 = vunpack.c.l.b16 %v1131
    %v4663 = vunpack.c.h.b16 %v1131
    %v4664 = vunpack.c.l.b16 %v1132
    %v4665 = vunpack.c.h.b16 %v1132
    %v4666 = vunpack.c.l.b16 %v1133
    %v4667 = vunpack.c.h.b16 %v1133
    %v4668 = vunpack.c.l.b16 %v1134
    %v4669 = vunpack.c.h.b16 %v1134
    %v4670 = vunpack.c.l.b16 %v1135
    %v4671 = vunpack.c.h.b16 %v1135
    %v4672 = vunpack.c.l.b16 %v1136
    %v4673 = vunpack.c.h.b16 %v1136
    %v4674 = vunpack.c.l.b16 %v1137
    %v4675 = vunpack.c.h.b16 %v1137
    %v4676 = vunpack.c.l.b16 %v1138
    %v4677 = vunpack.c.h.b16 %v1138
    %v4678 = vunpack.c.l.b16 %v1139
    %v4679 = vunpack.c.h.b16 %v1139
    %v4680 = vunpack.c.l.b16 %v1140
    %v4681 = vunpack.c.h.b16 %v1140
    %v4682 = vunpack.c.l.b16 %v1141
    %v4683 = vunpack.c.h.b16 %v1141
    %v4684 = vunpack.c.l.b16 %v1142
    %v4685 = vunpack.c.h.b16 %v1142
    %v4686 = vunpack.c.l.b16 %v1143
    %v4687 = vunpack.c.h.b16 %v1143
    %v4688 = vunpack.c.l.b16 %v1144
    %v4689 = vunpack.c.h.b16 %v1144
    %v4690 = vunpack.c.l.b16 %v1145
    %v4691 = vunpack.c.h.b16 %v1145
    %v4692 = vunpack.c.l.b16 %v1146
    %v4693 = vunpack.c.h.b16 %v1146
    %v4694 = vunpack.c.l.b16 %v1147
    %v4695 = vunpack.c.h.b16 %v1147
    %v4696 = vunpack.c.l.b16 %v1148
    %v4697 = vunpack.c.h.b16 %v1148
    %v4698 = vunpack.c.l.b16 %v1149
    %v4699 = vunpack.c.h.b16 %v1149
    %v4700 = vunpack.c.l.b16 %v1150
    %v4701 = vunpack.c.h.b16 %v1150
    %v4702 = vunpack.c.l.b16 %v1151
    %v4703 = vunpack.c.h.b16 %v1151
    %v4704 = vunpack.c.l.b16 %v1152
    %v4705 = vunpack.c.h.b16 %v1152
    %v4706 = vunpack.c.l.b16 %v1153
    %v4707 = vunpack.c.h.b16 %v1153
    %v4708 = vunpack.c.l.b16 %v1154
    %v4709 = vunpack.c.h.b16 %v1154
    %v4710 = vunpack.c.l.b16 %v1155
    %v4711 = vunpack.c.h.b16 %v1155
    %v4712 = vunpack.c.l.b16 %v1156
    %v4713 = vunpack.c.h.b16 %v1156
    %v4714 = vunpack.c.l.b16 %v1157
    %v4715 = vunpack.c.h.b16 %v1157
    %v4716 = vunpack.c.l.b16 %v1158
    %v4717 = vunpack.c.h.b16 %v1158
    %v4718 = vunpack.c.l.b16 %v1159
    %v4719 = vunpack.c.h.b16 %v1159
    %v4720 = vunpack.c.l.b16 %v1160
    %v4721 = vunpack.c.h.b16 %v1160
    %v4722 = vunpack.c.l.b16 %v1161
    %v4723 = vunpack.c.h.b16 %v1161
    %v4724 = vunpack.c.l.b16 %v1162
    %v4725 = vunpack.c.h.b16 %v1162
    %v4726 = vunpack.c.l.b16 %v1163
    %v4727 = vunpack.c.h.b16 %v1163
    %v4728 = vunpack.c.l.b16 %v1164
    %v4729 = vunpack.c.h.b16 %v1164
    %v4730 = vunpack.c.l.b16 %v1165
    %v4731 = vunpack.c.h.b16 %v1165
    %v4732 = vunpack.c.l.b16 %v1166
    %v4733 = vunpack.c.h.b16 %v1166
    %v4734 = vunpack.c.l.b16 %v1167
    %v4735 = vunpack.c.h.b16 %v1167
    %v4736 = vunpack.c.l.b16 %v1168
    %v4737 = vunpack.c.h.b16 %v1168
    %v4738 = vunpack.c.l.b16 %v1169
    %v4739 = vunpack.c.h.b16 %v1169
    %v4740 = vunpack.c.l.b16 %v1170
    %v4741 = vunpack.c.h.b16 %v1170
    %v4742 = vunpack.c.l.b16 %v1171
    %v4743 = vunpack.c.h.b16 %v1171
    %v4744 = vunpack.c.l.b16 %v1172
    %v4745 = vunpack.c.h.b16 %v1172
    %v4746 = vunpack.c.l.b16 %v1173
    %v4747 = vunpack.c.h.b16 %v1173
    %v4748 = vunpack.c.l.b16 %v1174
    %v4749 = vunpack.c.h.b16 %v1174
    %v4750 = vunpack.c.l.b16 %v1175
    %v4751 = vunpack.c.h.b16 %v1175
    %v4752 = vunpack.c.l.b16 %v1176
    %v4753 = vunpack.c.h.b16 %v1176
    %v4754 = vunpack.c.l.b16 %v1177
    %v4755 = vunpack.c.h.b16 %v1177
    %v4756 = vunpack.c.l.b16 %v1178
    %v4757 = vunpack.c.h.b16 %v1178
    %v4758 = vunpack.c.l.b16 %v1179
    %v4759 = vunpack.c.h.b16 %v1179
    %v4760 = vunpack.c.l.b16 %v1180
    %v4761 = vunpack.c.h.b16 %v1180
    %v4762 = vunpack.c.l.b16 %v1181
    %v4763 = vunpack.c.h.b16 %v1181
    %v4764 = vunpack.c.l.b16 %v1182
    %v4765 = vunpack.c.h.b16 %v1182
    %v4766 = vunpack.c.l.b16 %v1183
    %v4767 = vunpack.c.h.b16 %v1183
    %v4768 = vunpack.c.l.b16 %v1184
    %v4769 = vunpack.c.h.b16 %v1184
    %v4770 = vunpack.c.l.b16 %v1185
    %v4771 = vunpack.c.h.b16 %v1185
    %v4772 = vunpack.c.l.b16 %v1186
    %v4773 = vunpack.c.h.b16 %v1186
    %v4774 = vunpack.c.l.b16 %v1187
    %v4775 = vunpack.c.h.b16 %v1187
    %v4776 = vunpack.c.l.b16 %v1188
    %v4777 = vunpack.c.h.b16 %v1188
    %v4778 = vunpack.c.l.b16 %v1189
    %v4779 = vunpack.c.h.b16 %v1189
    %v4780 = vunpack.c.l.b16 %v1190
    %v4781 = vunpack.c.h.b16 %v1190
    %v4782 = vunpack.c.l.b16 %v1191
    %v4783 = vunpack.c.h.b16 %v1191
    %v4784 = vunpack.c.l.b16 %v1192
    %v4785 = vunpack.c.h.b16 %v1192
    %v4786 = vunpack.c.l.b16 %v1193
    %v4787 = vunpack.c.h.b16 %v1193
    %v4788 = vunpack.c.l.b16 %v1194
    %v4789 = vunpack.c.h.b16 %v1194
    %v4790 = vunpack.c.l.b16 %v1195
    %v4791 = vunpack.c.h.b16 %v1195
    %v4792 = vunpack.c.l.b16 %v1196
    %v4793 = vunpack.c.h.b16 %v1196
    %v4794 = vunpack.c.l.b16 %v1197
    %v4795 = vunpack.c.h.b16 %v1197
    %v4796 = vunpack.c.l.b16 %v1198
    %v4797 = vunpack.c.h.b16 %v1198
    %v4798 = vunpack.c.l.b16 %v1199
    %v4799 = vunpack.c.h.b16 %v1199
    %v4800 = vunpack.c.l.b16 %v1200
    %v4801 = vunpack.c.h.b16 %v1200
    %v4802 = vunpack.c.l.b16 %v1201
    %v4803 = vunpack.c.h.b16 %v1201
    %v4804 = vunpack.c.l.b16 %v1202
    %v4805 = vunpack.c.h.b16 %v1202
    %v4806 = vunpack.c.l.b16 %v1203
    %v4807 = vunpack.c.h.b16 %v1203
    %v4808 = vunpack.c.l.b16 %v1204
    %v4809 = vunpack.c.h.b16 %v1204
    %v4810 = vunpack.c.l.b16 %v1205
    %v4811 = vunpack.c.h.b16 %v1205
    %v4812 = vunpack.c.l.b16 %v1206
    %v4813 = vunpack.c.h.b16 %v1206
    %v4814 = vunpack.c.l.b16 %v1207
    %v4815 = vunpack.c.h.b16 %v1207
    %v4816 = vunpack.c.l.b16 %v1208
    %v4817 = vunpack.c.h.b16 %v1208
    %v4818 = vunpack.c.l.b16 %v1209
    %v4819 = vunpack.c.h.b16 %v1209
    %v4820 = vunpack.c.l.b16 %v1210
    %v4821 = vunpack.c.h.b16 %v1210
    %v4822 = vunpack.c.l.b16 %v1211
    %v4823 = vunpack.c.h.b16 %v1211
    %v4824 = vpack.c.b16 %v2544, %v2520
    %v4825 = vpack.c.b16 %v2545, %v2521
    %v4826 = vpack.c.b16 %v2546, %v2522
    %v4827 = vpack.c.b16 %v2547, %v2523
    %v4828 = vpack.c.b16 %v2548, %v2524
    %v4829 = vpack.c.b16 %v2549, %v2525
    %v4830 = vpack.c.b16 %v2550, %v2526
    %v4831 = vpack.c.b16 %v2551, %v2527
    %v4832 = vpack.c.b16 %v2552, %v2528
    %v4833 = vpack.c.b16 %v2553, %v2529
    %v4834 = vpack.c.b16 %v2554, %v2530
    %v4835 = vpack.c.b16 %v2555, %v2531
    %v4836 = vpack.c.b16 %v2556, %v2532
    %v4837 = vpack.c.b16 %v2557, %v2533
    %v4838 = vpack.c.b16 %v2558, %v2534
    %v4839 = vpack.c.b16 %v2559, %v2535
    %v4840 = vpack.c.b16 %v2560, %v2536
    %v4841 = vpack.c.b16 %v2561, %v2537
    %v4842 = vpack.c.b16 %v2562, %v2538
    %v4843 = vpack.c.b16 %v2563, %v2539
    %v4844 = vpack.c.b16 %v2564, %v2540
    %v4845 = vpack.c.b16 %v2565, %v2541
    %v4846 = vpack.c.b16 %v2566, %v2542
    %v4847 = vpack.c.b16 %v2567, %v2543
    %v4848 = vpack.c.b16 %v2592, %v2568
    %v4849 = vpack.c.b16 %v2593, %v2569
    %v4850 = vpack.c.b16 %v2594, %v2570
    %v4851 = vpack.c.b16 %v2595, %v2571
    %v4852 = vpack.c.b16 %v2596, %v2572
    %v4853 = vpack.c.b16 %v2597, %v2573
    %v4854 = vpack.c.b16 %v2598, %v2574
    %v4855 = vpack.c.b16 %v2599, %v2575
    %v4856 = vpack.c.b16 %v2600, %v2576
    %v4857 = vpack.c.b16 %v2601, %v2577
    %v4858 = vpack.c.b16 %v2602, %v2578
    %v4859 = vpack.c.b16 %v2603, %v2579
    %v4860 = vpack.c.b16 %v2604, %v2580
    %v4861 = vpack.c.b16 %v2605, %v2581
    %v4862 = vpack.c.b16 %v2606, %v2582
    %v4863 = vpack.c.b16 %v2607, %v2583
    %v4864 = vpack.c.b16 %v2608, %v2584
    %v4865 = vpack.c.b16 %v2609, %v2585
    %v4866 = vpack.c.b16 %v2610, %v2586
    %v4867 = vpack.c.b16 %v2611, %v2587
    %v4868 = vpack.c.b16 %v2612, %v2588
    %v4869 = vpack.c.b16 %v2613, %v2589
    %v4870 = vpack.c.b16 %v2614, %v2590
    %v4871 = vpack.c.b16 %v2615, %v2591
    %v4872 = vpack.c.b16 %v2640, %v2616
    %v4873 = vpack.c.b16 %v2641, %v2617
    %v4874 = vpack.c.b16 %v2642, %v2618
    %v4875 = vpack.c.b16 %v2643, %v2619
    %v4876 = vpack.c.b16 %v2644, %v2620
    %v4877 = vpack.c.b16 %v2645, %v2621
    %v4878 = vpack.c.b16 %v2646, %v2622
    %v4879 = vpack.c.b16 %v2647, %v2623
    %v4880 = vpack.c.b16 %v2648, %v2624
    %v4881 = vpack.c.b16 %v2649, %v2625
    %v4882 = vpack.c.b16 %v2650, %v2626
    %v4883 = vpack.c.b16 %v2651, %v2627
    %v4884 = vpack.c.b16 %v2652, %v2628
    %v4885 = vpack.c.b16 %v2653, %v2629
    %v4886 = vpack.c.b16 %v2654, %v2630
    %v4887 = vpack.c.b16 %v2655, %v2631
    %v4888 = vpack.c.b16 %v2656, %v2632
    %v4889 = vpack.c.b16 %v2657, %v2633
    %v4890 = vpack.c.b16 %v2658, %v2634
    %v4891 = vpack.c.b16 %v2659, %v2635
    %v4892 = vpack.c.b16 %v2660, %v2636
    %v4893 = vpack.c.b16 %v2661, %v2637
    %v4894 = vpack.c.b16 %v2662, %v2638
    %v4895 = vpack.c.b16 %v2663, %v2639
    %v4896 = vpack.c.b16 %v2688, %v2664
    %v4897 = vpack.c.b16 %v2689, %v2665
    %v4898 = vpack.c.b16 %v2690, %v2666
    %v4899 = vpack.c.b16 %v2691, %v2667
    %v4900 = vpack.c.b16 %v2692, %v2668
    %v4901 = vpack.c.b16 %v2693, %v2669
    %v4902 = vpack.c.b16 %v2694, %v2670
    %v4903 = vpack.c.b16 %v2695, %v2671
    %v4904 = vpack.c.b16 %v2696, %v2672
    %v4905 = vpack.c.b16 %v2697, %v2673
    %v4906 = vpack.c.b16 %v2698, %v2674
    %v4907 = vpack.c.b16 %v2699, %v2675
    %v4908 = vpack.c.b16 %v2700, %v2676
    %v4909 = vpack.c.b16 %v2701, %v2677
    %v4910 = vpack.c.b16 %v2702, %v2678
    %v4911 = vpack.c.b16 %v2703, %v2679
    %v4912 = vpack.c.b16 %v2704, %v2680
    %v4913 = vpack.c.b16 %v2705, %v2681
    %v4914 = vpack.c.b16 %v2706, %v2682
    %v4915 = vpack.c.b16 %v2707, %v2683
    %v4916 = vpack.c.b16 %v2708, %v2684
    %v4917 = vpack.c.b16 %v2709, %v2685
    %v4918 = vpack.c.b16 %v2710, %v2686
    %v4919 = vpack.c.b16 %v2711, %v2687
    %v4920 = vpack.c.b16 %v2736, %v2712
    %v4921 = vpack.c.b16 %v2737, %v2713
    %v4922 = vpack.c.b16 %v2738, %v2714
    %v4923 = vpack.c.b16 %v2739, %v2715
    %v4924 = vpack.c.b16 %v2740, %v2716
    %v4925 = vpack.c.b16 %v2741, %v2717
    %v4926 = vpack.c.b16 %v2742, %v2718
    %v4927 = vpack.c.b16 %v2743, %v2719
    %v4928 = vpack.c.b16 %v2744, %v2720
    %v4929 = vpack.c.b16 %v2745, %v2721
    %v4930 = vpack.c.b16 %v2746, %v2722
    %v4931 = vpack.c.b16 %v2747, %v2723
    %v4932 = vpack.c.b16 %v2748, %v2724
    %v4933 = vpack.c.b16 %v2749, %v2725
    %v4934 = vpack.c.b16 %v2750, %v2726
    %v4935 = vpack.c.b16 %v2751, %v2727
    %v4936 = vpack.c.b16 %v2752, %v2728
    %v4937 = vpack.c.b16 %v2753, %v2729
    %v4938 = vpack.c.b16 %v2754, %v2730
    %v4939 = vpack.c.b16 %v2755, %v2731
    %v4940 = vpack.c.b16 %v2756, %v2732
    %v4941 = vpack.c.b16 %v2757, %v2733
    %v4942 = vpack.c.b16 %v2758, %v2734
    %v4943 = vpack.c.b16 %v2759, %v2735
    %v4944 = vpack.c.b16 %v2784, %v2760
    %v4945 = vpack.c.b16 %v2785, %v2761
    %v4946 = vpack.c.b16 %v2786, %v2762
    %v4947 = vpack.c.b16 %v2787, %v2763
    %v4948 = vpack.c.b16 %v2788, %v2764
    %v4949 = vpack.c.b16 %v2789, %v2765
    %v4950 = vpack.c.b16 %v2790, %v2766
    %v4951 = vpack.c.b16 %v2791, %v2767
    %v4952 = vpack.c.b16 %v2792, %v2768
    %v4953 = vpack.c.b16 %v2793, %v2769
    %v4954 = vpack.c.b16 %v2794, %v2770
    %v4955 = vpack.c.b16 %v2795, %v2771
    %v4956 = vpack.c.b16 %v2796, %v2772
    %v4957 = vpack.c.b16 %v2797, %v2773
    %v4958 = vpack.c.b16 %v2798, %v2774
    %v4959 = vpack.c.b16 %v2799, %v2775
    %v4960 = vpack.c.b16 %v2800, %v2776
    %v4961 = vpack.c.b16 %v2801, %v2777
    %v4962 = vpack.c.b16 %v2802, %v2778
    %v4963 = vpack.c.b16 %v2803, %v2779
    %v4964 = vpack.c.b16 %v2804, %v2780
    %v4965 = vpack.c.b16 %v2805, %v2781
    %v4966 = vpack.c.b16 %v2806, %v2782
    %v4967 = vpack.c.b16 %v2807, %v2783
    %v4968 = vpack.c.b16 %v2832, %v2808
    %v4969 = vpack.c.b16 %v2833, %v2809
    %v4970 = vpack.c.b16 %v2834, %v2810
    %v4971 = vpack.c.b16 %v2835, %v2811
    %v4972 = vpack.c.b16 %v2836, %v2812
    %v4973 = vpack.c.b16 %v2837, %v2813
    %v4974 = vpack.c.b16 %v2838, %v2814
    %v4975 = vpack.c.b16 %v2839, %v2815
    %v4976 = vpack.c.b16 %v2840, %v2816
    %v4977 = vpack.c.b16 %v2841, %v2817
    %v4978 = vpack.c.b16 %v2842, %v2818
    %v4979 = vpack.c.b16 %v2843, %v2819
    %v4980 = vpack.c.b16 %v2844, %v2820
    %v4981 = vpack.c.b16 %v2845, %v2821
    %v4982 = vpack.c.b16 %v2846, %v2822
    %v4983 = vpack.c.b16 %v2847, %v2823
    %v4984 = vpack.c.b16 %v2848, %v2824
    %v4985 = vpack.c.b16 %v2849, %v2825
    %v4986 = vpack.c.b16 %v2850, %v2826
    %v4987 = vpack.c.b16 %v2851, %v2827
    %v4988 = vpack.c.b16 %v2852, %v2828
    %v4989 = vpack.c.b16 %v2853, %v2829
    %v4990 = vpack.c.b16 %v2854, %v2830
    %v4991 = vpack.c.b16 %v2855, %v2831
    %v4992 = vpack.c.b16 %v2880, %v2856
    %v4993 = vpack.c.b16 %v2881, %v2857
    %v4994 = vpack.c.b16 %v2882, %v2858
    %v4995 = vpack.c.b16 %v2883, %v2859
    %v4996 = vpack.c.b16 %v2884, %v2860
    %v4997 = vpack.c.b16 %v2885, %v2861
    %v4998 = vpack.c.b16 %v2886, %v2862
    %v4999 = vpack.c.b16 %v2887, %v2863
    %v5000 = vpack.c.b16 %v2888, %v2864
    %v5001 = vpack.c.b16 %v2889, %v2865
    %v5002 = vpack.c.b16 %v2890, %v2866
    %v5003 = vpack.c.b16 %v2891, %v2867
    %v5004 = vpack.c.b16 %v2892, %v2868
    %v5005 = vpack.c.b16 %v2893, %v2869
    %v5006 = vpack.c.b16 %v2894, %v2870
    %v5007 = vpack.c.b16 %v2895, %v2871
    %v5008 = vpack.c.b16 %v2896, %v2872
    %v5009 = vpack.c.b16 %v2897, %v2873
    %v5010 = vpack.c.b16 %v2898, %v2874
    %v5011 = vpack.c.b16 %v2899, %v2875
    %v5012 = vpack.c.b16 %v2900, %v2876
    %v5013 = vpack.c.b16 %v2901, %v2877
    %v5014 = vpack.c.b16 %v2902, %v2878
    %v5015 = vpack.c.b16 %v2903, %v2879
    %v5016 = vpack.c.b16 %v2928, %v2904
    %v5017 = vpack.c.b16 %v2929, %v2905
    %v5018 = vpack.c.b16 %v2930, %v2906
    %v5019 = vpack.c.b16 %v2931, %v2907
    %v5020 = vpack.c.b16 %v2932, %v2908
    %v5021 = vpack.c.b16 %v2933, %v2909
    %v5022 = vpack.c.b16 %v2934, %v2910
    %v5023 = vpack.c.b16 %v2935, %v2911
    %v5024 = vpack.c.b16 %v2936, %v2912
    %v5025 = vpack.c.b16 %v2937, %v2913
    %v5026 = vpack.c.b16 %v2938, %v2914
    %v5027 = vpack.c.b16 %v2939, %v2915
    %v5028 = vpack.c.b16 %v2940, %v2916
    %v5029 = vpack.c.b16 %v2941, %v2917
    %v5030 = vpack.c.b16 %v2942, %v2918
    %v5031 = vpack.c.b16 %v2943, %v2919
    %v5032 = vpack.c.b16 %v2944, %v2920
    %v5033 = vpack.c.b16 %v2945, %v2921
    %v5034 = vpack.c.b16 %v2946, %v2922
    %v5035 = vpack.c.b16 %v2947, %v2923
    %v5036 = vpack.c.b16 %v2948, %v2924
    %v5037 = vpack.c.b16 %v2949, %v2925
    %v5038 = vpack.c.b16 %v2950, %v2926
    %v5039 = vpack.c.b16 %v2951, %v2927
    %v5040 = vpack.c.b16 %v2976, %v2952
    %v5041 = vpack.c.b16 %v2977, %v2953
    %v5042 = vpack.c.b16 %v2978, %v2954
    %v5043 = vpack.c.b16 %v2979, %v2955
    %v5044 = vpack.c.b16 %v2980, %v2956
    %v5045 = vpack.c.b16 %v2981, %v2957
    %v5046 = vpack.c.b16 %v2982, %v2958
    %v5047 = vpack.c.b16 %v2983, %v2959
    %v5048 = vpack.c.b16 %v2984, %v2960
    %v5049 = vpack.c.b16 %v2985, %v2961
    %v5050 = vpack.c.b16 %v2986, %v2962
    %v5051 = vpack.c.b16 %v2987, %v2963
    %v5052 = vpack.c.b16 %v2988, %v2964
    %v5053 = vpack.c.b16 %v2989, %v2965
    %v5054 = vpack.c.b16 %v2990, %v2966
    %v5055 = vpack.c.b16 %v2991, %v2967
    %v5056 = vpack.c.b16 %v2992, %v2968
    %v5057 = vpack.c.b16 %v2993, %v2969
    %v5058 = vpack.c.b16 %v2994, %v2970
    %v5059 = vpack.c.b16 %v2995, %v2971
    %v5060 = vpack.c.b16 %v2996, %v2972
    %v5061 = vpack.c.b16 %v2997, %v2973
    %v5062 = vpack.c.b16 %v2998, %v2974
    %v5063 = vpack.c.b16 %v2999, %v2975
    %v5064 = vpack.c.b16 %v3024, %v3000
    %v5065 = vpack.c.b16 %v3025, %v3001
    %v5066 = vpack.c.b16 %v3026, %v3002
    %v5067 = vpack.c.b16 %v3027, %v3003
    %v5068 = vpack.c.b16 %v3028, %v3004
    %v5069 = vpack.c.b16 %v3029, %v3005
    %v5070 = vpack.c.b16 %v3030, %v3006
    %v5071 = vpack.c.b16 %v3031, %v3007
    %v5072 = vpack.c.b16 %v3032, %v3008
    %v5073 = vpack.c.b16 %v3033, %v3009
    %v5074 = vpack.c.b16 %v3034, %v3010
    %v5075 = vpack.c.b16 %v3035, %v3011
    %v5076 = vpack.c.b16 %v3036, %v3012
    %v5077 = vpack.c.b16 %v3037, %v3013
    %v5078 = vpack.c.b16 %v3038, %v3014
    %v5079 = vpack.c.b16 %v3039, %v3015
    %v5080 = vpack.c.b16 %v3040, %v3016
    %v5081 = vpack.c.b16 %v3041, %v3017
    %v5082 = vpack.c.b16 %v3042, %v3018
    %v5083 = vpack.c.b16 %v3043, %v3019
    %v5084 = vpack.c.b16 %v3044, %v3020
    %v5085 = vpack.c.b16 %v3045, %v3021
    %v5086 = vpack.c.b16 %v3046, %v3022
    %v5087 = vpack.c.b16 %v3047, %v3023
    %v5088 = vpack.c.b16 %v3072, %v3048
    %v5089 = vpack.c.b16 %v3073, %v3049
    %v5090 = vpack.c.b16 %v3074, %v3050
    %v5091 = vpack.c.b16 %v3075, %v3051
    %v5092 = vpack.c.b16 %v3076, %v3052
    %v5093 = vpack.c.b16 %v3077, %v3053
    %v5094 = vpack.c.b16 %v3078, %v3054
    %v5095 = vpack.c.b16 %v3079, %v3055
    %v5096 = vpack.c.b16 %v3080, %v3056
    %v5097 = vpack.c.b16 %v3081, %v3057
    %v5098 = vpack.c.b16 %v3082, %v3058
    %v5099 = vpack.c.b16 %v3083, %v3059
    %v5100 = vpack.c.b16 %v3084, %v3060
    %v5101 = vpack.c.b16 %v3085, %v3061
    %v5102 = vpack.c.b16 %v3086, %v3062
    %v5103 = vpack.c.b16 %v3087, %v3063
    %v5104 = vpack.c.b16 %v3088, %v3064
    %v5105 = vpack.c.b16 %v3089, %v3065
    %v5106 = vpack.c.b16 %v3090, %v3066
    %v5107 = vpack.c.b16 %v3091, %v3067
    %v5108 = vpack.c.b16 %v3092, %v3068
    %v5109 = vpack.c.b16 %v3093, %v3069
    %v5110 = vpack.c.b16 %v3094, %v3070
    %v5111 = vpack.c.b16 %v3095, %v3071
    %v5112 = vpack.c.b16 %v3120, %v3096
    %v5113 = vpack.c.b16 %v3121, %v3097
    %v5114 = vpack.c.b16 %v3122, %v3098
    %v5115 = vpack.c.b16 %v3123, %v3099
    %v5116 = vpack.c.b16 %v3124, %v3100
    %v5117 = vpack.c.b16 %v3125, %v3101
    %v5118 = vpack.c.b16 %v3126, %v3102
    %v5119 = vpack.c.b16 %v3127, %v3103
    %v5120 = vpack.c.b16 %v3128, %v3104
    %v5121 = vpack.c.b16 %v3129, %v3105
    %v5122 = vpack.c.b16 %v3130, %v3106
    %v5123 = vpack.c.b16 %v3131, %v3107
    %v5124 = vpack.c.b16 %v3132, %v3108
    %v5125 = vpack.c.b16 %v3133, %v3109
    %v5126 = vpack.c.b16 %v3134, %v3110
    %v5127 = vpack.c.b16 %v3135, %v3111
    %v5128 = vpack.c.b16 %v3136, %v3112
    %v5129 = vpack.c.b16 %v3137, %v3113
    %v5130 = vpack.c.b16 %v3138, %v3114
    %v5131 = vpack.c.b16 %v3139, %v3115
    %v5132 = vpack.c.b16 %v3140, %v3116
    %v5133 = vpack.c.b16 %v3141, %v3117
    %v5134 = vpack.c.b16 %v3142, %v3118
    %v5135 = vpack.c.b16 %v3143, %v3119
    %v5136 = vpack.c.b16 %v3168, %v3144
    %v5137 = vpack.c.b16 %v3169, %v3145
    %v5138 = vpack.c.b16 %v3170, %v3146
    %v5139 = vpack.c.b16 %v3171, %v3147
    %v5140 = vpack.c.b16 %v3172, %v3148
    %v5141 = vpack.c.b16 %v3173, %v3149
    %v5142 = vpack.c.b16 %v3174, %v3150
    %v5143 = vpack.c.b16 %v3175, %v3151
    %v5144 = vpack.c.b16 %v3176, %v3152
    %v5145 = vpack.c.b16 %v3177, %v3153
    %v5146 = vpack.c.b16 %v3178, %v3154
    %v5147 = vpack.c.b16 %v3179, %v3155
    %v5148 = vpack.c.b16 %v3180, %v3156
    %v5149 = vpack.c.b16 %v3181, %v3157
    %v5150 = vpack.c.b16 %v3182, %v3158
    %v5151 = vpack.c.b16 %v3183, %v3159
    %v5152 = vpack.c.b16 %v3184, %v3160
    %v5153 = vpack.c.b16 %v3185, %v3161
    %v5154 = vpack.c.b16 %v3186, %v3162
    %v5155 = vpack.c.b16 %v3187, %v3163
    %v5156 = vpack.c.b16 %v3188, %v3164
    %v5157 = vpack.c.b16 %v3189, %v3165
    %v5158 = vpack.c.b16 %v3190, %v3166
    %v5159 = vpack.c.b16 %v3191, %v3167
    %v5160 = vpack.c.b16 %v3216, %v3192
    %v5161 = vpack.c.b16 %v3217, %v3193
    %v5162 = vpack.c.b16 %v3218, %v3194
    %v5163 = vpack.c.b16 %v3219, %v3195
    %v5164 = vpack.c.b16 %v3220, %v3196
    %v5165 = vpack.c.b16 %v3221, %v3197
    %v5166 = vpack.c.b16 %v3222, %v3198
    %v5167 = vpack.c.b16 %v3223, %v3199
    %v5168 = vpack.c.b16 %v3224, %v3200
    %v5169 = vpack.c.b16 %v3225, %v3201
    %v5170 = vpack.c.b16 %v3226, %v3202
    %v5171 = vpack.c.b16 %v3227, %v3203
    %v5172 = vpack.c.b16 %v3228, %v3204
    %v5173 = vpack.c.b16 %v3229, %v3205
    %v5174 = vpack.c.b16 %v3230, %v3206
    %v5175 = vpack.c.b16 %v3231, %v3207
    %v5176 = vpack.c.b16 %v3232, %v3208
    %v5177 = vpack.c.b16 %v3233, %v3209
    %v5178 = vpack.c.b16 %v3234, %v3210
    %v5179 = vpack.c.b16 %v3235, %v3211
    %v5180 = vpack.c.b16 %v3236, %v3212
    %v5181 = vpack.c.b16 %v3237, %v3213
    %v5182 = vpack.c.b16 %v3238, %v3214
    %v5183 = vpack.c.b16 %v3239, %v3215
    %v5184 = vpack.c.b16 %v3264, %v3240
    %v5185 = vpack.c.b16 %v3265, %v3241
    %v5186 = vpack.c.b16 %v3266, %v3242
    %v5187 = vpack.c.b16 %v3267, %v3243
    %v5188 = vpack.c.b16 %v3268, %v3244
    %v5189 = vpack.c.b16 %v3269, %v3245
    %v5190 = vpack.c.b16 %v3270, %v3246
    %v5191 = vpack.c.b16 %v3271, %v3247
    %v5192 = vpack.c.b16 %v3272, %v3248
    %v5193 = vpack.c.b16 %v3273, %v3249
    %v5194 = vpack.c.b16 %v3274, %v3250
    %v5195 = vpack.c.b16 %v3275, %v3251
    %v5196 = vpack.c.b16 %v3276, %v3252
    %v5197 = vpack.c.b16 %v3277, %v3253
    %v5198 = vpack.c.b16 %v3278, %v3254
    %v5199 = vpack.c.b16 %v3279, %v3255
    %v5200 = vpack.c.b16 %v3280, %v3256
    %v5201 = vpack.c.b16 %v3281, %v3257
    %v5202 = vpack.c.b16 %v3282, %v3258
    %v5203 = vpack.c.b16 %v3283, %v3259
    %v5204 = vpack.c.b16 %v3284, %v3260
    %v5205 = vpack.c.b16 %v3285, %v3261
    %v5206 = vpack.c.b16 %v3286, %v3262
    %v5207 = vpack.c.b16 %v3287, %v3263
    %v5208 = vpack.c.b16 %v3312, %v3288
    %v5209 = vpack.c.b16 %v3313, %v3289
    %v5210 = vpack.c.b16 %v3314, %v3290
    %v5211 = vpack.c.b16 %v3315, %v3291
    %v5212 = vpack.c.b16 %v3316, %v3292
    %v5213 = vpack.c.b16 %v3317, %v3293
    %v5214 = vpack.c.b16 %v3318, %v3294
    %v5215 = vpack.c.b16 %v3319, %v3295
    %v5216 = vpack.c.b16 %v3320, %v3296
    %v5217 = vpack.c.b16 %v3321, %v3297
    %v5218 = vpack.c.b16 %v3322, %v3298
    %v5219 = vpack.c.b16 %v3323, %v3299
    %v5220 = vpack.c.b16 %v3324, %v3300
    %v5221 = vpack.c.b16 %v3325, %v3301
    %v5222 = vpack.c.b16 %v3326, %v3302
    %v5223 = vpack.c.b16 %v3327, %v3303
    %v5224 = vpack.c.b16 %v3328, %v3304
    %v5225 = vpack.c.b16 %v3329, %v3305
    %v5226 = vpack.c.b16 %v3330, %v3306
    %v5227 = vpack.c.b16 %v3331, %v3307
    %v5228 = vpack.c.b16 %v3332, %v3308
    %v5229 = vpack.c.b16 %v3333, %v3309
    %v5230 = vpack.c.b16 %v3334, %v3310
    %v5231 = vpack.c.b16 %v3335, %v3311
    %v5232 = vpack.c.b16 %v3360, %v3336
    %v5233 = vpack.c.b16 %v3361, %v3337
    %v5234 = vpack.c.b16 %v3362, %v3338
    %v5235 = vpack.c.b16 %v3363, %v3339
    %v5236 = vpack.c.b16 %v3364, %v3340
    %v5237 = vpack.c.b16 %v3365, %v3341
    %v5238 = vpack.c.b16 %v3366, %v3342
    %v5239 = vpack.c.b16 %v3367, %v3343
    %v5240 = vpack.c.b16 %v3368, %v3344
    %v5241 = vpack.c.b16 %v3369, %v3345
    %v5242 = vpack.c.b16 %v3370, %v3346
    %v5243 = vpack.c.b16 %v3371, %v3347
    %v5244 = vpack.c.b16 %v3372, %v3348
    %v5245 = vpack.c.b16 %v3373, %v3349
    %v5246 = vpack.c.b16 %v3374, %v3350
    %v5247 = vpack.c.b16 %v3375, %v3351
    %v5248 = vpack.c.b16 %v3376, %v3352
    %v5249 = vpack.c.b16 %v3377, %v3353
    %v5250 = vpack.c.b16 %v3378, %v3354
    %v5251 = vpack.c.b16 %v3379, %v3355
    %v5252 = vpack.c.b16 %v3380, %v3356
    %v5253 = vpack.c.b16 %v3381, %v3357
    %v5254 = vpack.c.b16 %v3382, %v3358
    %v5255 = vpack.c.b16 %v3383, %v3359
    %v5256 = vpack.c.b16 %v3408, %v3384
    %v5257 = vpack.c.b16 %v3409, %v3385
    %v5258 = vpack.c.b16 %v3410, %v3386
    %v5259 = vpack.c.b16 %v3411, %v3387
    %v5260 = vpack.c.b16 %v3412, %v3388
    %v5261 = vpack.c.b16 %v3413, %v3389
    %v5262 = vpack.c.b16 %v3414, %v3390
    %v5263 = vpack.c.b16 %v3415, %v3391
    %v5264 = vpack.c.b16 %v3416, %v3392
    %v5265 = vpack.c.b16 %v3417, %v3393
    %v5266 = vpack.c.b16 %v3418, %v3394
    %v5267 = vpack.c.b16 %v3419, %v3395
    %v5268 = vpack.c.b16 %v3420, %v3396
    %v5269 = vpack.c.b16 %v3421, %v3397
    %v5270 = vpack.c.b16 %v3422, %v3398
    %v5271 = vpack.c.b16 %v3423, %v3399
    %v5272 = vpack.c.b16 %v3424, %v3400
    %v5273 = vpack.c.b16 %v3425, %v3401
    %v5274 = vpack.c.b16 %v3426, %v3402
    %v5275 = vpack.c.b16 %v3427, %v3403
    %v5276 = vpack.c.b16 %v3428, %v3404
    %v5277 = vpack.c.b16 %v3429, %v3405
    %v5278 = vpack.c.b16 %v3430, %v3406
    %v5279 = vpack.c.b16 %v3431, %v3407
    %v5280 = vpack.c.b16 %v3456, %v3432
    %v5281 = vpack.c.b16 %v3457, %v3433
    %v5282 = vpack.c.b16 %v3458, %v3434
    %v5283 = vpack.c.b16 %v3459, %v3435
    %v5284 = vpack.c.b16 %v3460, %v3436
    %v5285 = vpack.c.b16 %v3461, %v3437
    %v5286 = vpack.c.b16 %v3462, %v3438
    %v5287 = vpack.c.b16 %v3463, %v3439
    %v5288 = vpack.c.b16 %v3464, %v3440
    %v5289 = vpack.c.b16 %v3465, %v3441
    %v5290 = vpack.c.b16 %v3466, %v3442
    %v5291 = vpack.c.b16 %v3467, %v3443
    %v5292 = vpack.c.b16 %v3468, %v3444
    %v5293 = vpack.c.b16 %v3469, %v3445
    %v5294 = vpack.c.b16 %v3470, %v3446
    %v5295 = vpack.c.b16 %v3471, %v3447
    %v5296 = vpack.c.b16 %v3472, %v3448
    %v5297 = vpack.c.b16 %v3473, %v3449
    %v5298 = vpack.c.b16 %v3474, %v3450
    %v5299 = vpack.c.b16 %v3475, %v3451
    %v5300 = vpack.c.b16 %v3476, %v3452
    %v5301 = vpack.c.b16 %v3477, %v3453
    %v5302 = vpack.c.b16 %v3478, %v3454
    %v5303 = vpack.c.b16 %v3479, %v3455
    %v5304 = vpack.c.b16 %v3504, %v3480
    %v5305 = vpack.c.b16 %v3505, %v3481
    %v5306 = vpack.c.b16 %v3506, %v3482
    %v5307 = vpack.c.b16 %v3507, %v3483
    %v5308 = vpack.c.b16 %v3508, %v3484
    %v5309 = vpack.c.b16 %v3509, %v3485
    %v5310 = vpack.c.b16 %v3510, %v3486
    %v5311 = vpack.c.b16 %v3511, %v3487
    %v5312 = vpack.c.b16 %v3512, %v3488
    %v5313 = vpack.c.b16 %v3513, %v3489
    %v5314 = vpack.c.b16 %v3514, %v3490
    %v5315 = vpack.c.b16 %v3515, %v3491
    %v5316 = vpack.c.b16 %v3516, %v3492
    %v5317 = vpack.c.b16 %v3517, %v3493
    %v5318 = vpack.c.b16 %v3518, %v3494
    %v5319 = vpack.c.b16 %v3519, %v3495
    %v5320 = vpack.c.b16 %v3520, %v3496
    %v5321 = vpack.c.b16 %v3521, %v3497
    %v5322 = vpack.c.b16 %v3522, %v3498
    %v5323 = vpack.c.b16 %v3523, %v3499
    %v5324 = vpack.c.b16 %v3524, %v3500
    %v5325 = vpack.c.b16 %v3525, %v3501
    %v5326 = vpack.c.b16 %v3526, %v3502
    %v5327 = vpack.c.b16 %v3527, %v3503
    %v5328 = vpack.c.b16 %v3552, %v3528
    %v5329 = vpack.c.b16 %v3553, %v3529
    %v5330 = vpack.c.b16 %v3554, %v3530
    %v5331 = vpack.c.b16 %v3555, %v3531
    %v5332 = vpack.c.b16 %v3556, %v3532
    %v5333 = vpack.c.b16 %v3557, %v3533
    %v5334 = vpack.c.b16 %v3558, %v3534
    %v5335 = vpack.c.b16 %v3559, %v3535
    %v5336 = vpack.c.b16 %v3560, %v3536
    %v5337 = vpack.c.b16 %v3561, %v3537
    %v5338 = vpack.c.b16 %v3562, %v3538
    %v5339 = vpack.c.b16 %v3563, %v3539
    %v5340 = vpack.c.b16 %v3564, %v3540
    %v5341 = vpack.c.b16 %v3565, %v3541
    %v5342 = vpack.c.b16 %v3566, %v3542
    %v5343 = vpack.c.b16 %v3567, %v3543
    %v5344 = vpack.c.b16 %v3568, %v3544
    %v5345 = vpack.c.b16 %v3569, %v3545
    %v5346 = vpack.c.b16 %v3570, %v3546
    %v5347 = vpack.c.b16 %v3571, %v3547
    %v5348 = vpack.c.b16 %v3572, %v3548
    %v5349 = vpack.c.b16 %v3573, %v3549
    %v5350 = vpack.c.b16 %v3574, %v3550
    %v5351 = vpack.c.b16 %v3575, %v3551
    %v5352 = vpack.c.b16 %v3600, %v3576
    %v5353 = vpack.c.b16 %v3601, %v3577
    %v5354 = vpack.c.b16 %v3602, %v3578
    %v5355 = vpack.c.b16 %v3603, %v3579
    %v5356 = vpack.c.b16 %v3604, %v3580
    %v5357 = vpack.c.b16 %v3605, %v3581
    %v5358 = vpack.c.b16 %v3606, %v3582
    %v5359 = vpack.c.b16 %v3607, %v3583
    %v5360 = vpack.c.b16 %v3608, %v3584
    %v5361 = vpack.c.b16 %v3609, %v3585
    %v5362 = vpack.c.b16 %v3610, %v3586
    %v5363 = vpack.c.b16 %v3611, %v3587
    %v5364 = vpack.c.b16 %v3612, %v3588
    %v5365 = vpack.c.b16 %v3613, %v3589
    %v5366 = vpack.c.b16 %v3614, %v3590
    %v5367 = vpack.c.b16 %v3615, %v3591
    %v5368 = vpack.c.b16 %v3616, %v3592
    %v5369 = vpack.c.b16 %v3617, %v3593
    %v5370 = vpack.c.b16 %v3618, %v3594
    %v5371 = vpack.c.b16 %v3619, %v3595
    %v5372 = vpack.c.b16 %v3620, %v3596
    %v5373 = vpack.c.b16 %v3621, %v3597
    %v5374 = vpack.c.b16 %v3622, %v3598
    %v5375 = vpack.c.b16 %v3623, %v3599
    %v5376 = vpack.c.b16 %v3648, %v3624
    %v5377 = vpack.c.b16 %v3649, %v3625
    %v5378 = vpack.c.b16 %v3650, %v3626
    %v5379 = vpack.c.b16 %v3651, %v3627
    %v5380 = vpack.c.b16 %v3652, %v3628
    %v5381 = vpack.c.b16 %v3653, %v3629
    %v5382 = vpack.c.b16 %v3654, %v3630
    %v5383 = vpack.c.b16 %v3655, %v3631
    %v5384 = vpack.c.b16 %v3656, %v3632
    %v5385 = vpack.c.b16 %v3657, %v3633
    %v5386 = vpack.c.b16 %v3658, %v3634
    %v5387 = vpack.c.b16 %v3659, %v3635
    %v5388 = vpack.c.b16 %v3660, %v3636
    %v5389 = vpack.c.b16 %v3661, %v3637
    %v5390 = vpack.c.b16 %v3662, %v3638
    %v5391 = vpack.c.b16 %v3663, %v3639
    %v5392 = vpack.c.b16 %v3664, %v3640
    %v5393 = vpack.c.b16 %v3665, %v3641
    %v5394 = vpack.c.b16 %v3666, %v3642
    %v5395 = vpack.c.b16 %v3667, %v3643
    %v5396 = vpack.c.b16 %v3668, %v3644
    %v5397 = vpack.c.b16 %v3669, %v3645
    %v5398 = vpack.c.b16 %v3670, %v3646
    %v5399 = vpack.c.b16 %v3671, %v3647
    %v5400 = vpack.c.b16 %v3696, %v3672
    %v5401 = vpack.c.b16 %v3697, %v3673
    %v5402 = vpack.c.b16 %v3698, %v3674
    %v5403 = vpack.c.b16 %v3699, %v3675
    %v5404 = vpack.c.b16 %v3700, %v3676
    %v5405 = vpack.c.b16 %v3701, %v3677
    %v5406 = vpack.c.b16 %v3702, %v3678
    %v5407 = vpack.c.b16 %v3703, %v3679
    %v5408 = vpack.c.b16 %v3704, %v3680
    %v5409 = vpack.c.b16 %v3705, %v3681
    %v5410 = vpack.c.b16 %v3706, %v3682
    %v5411 = vpack.c.b16 %v3707, %v3683
    %v5412 = vpack.c.b16 %v3708, %v3684
    %v5413 = vpack.c.b16 %v3709, %v3685
    %v5414 = vpack.c.b16 %v3710, %v3686
    %v5415 = vpack.c.b16 %v3711, %v3687
    %v5416 = vpack.c.b16 %v3712, %v3688
    %v5417 = vpack.c.b16 %v3713, %v3689
    %v5418 = vpack.c.b16 %v3714, %v3690
    %v5419 = vpack.c.b16 %v3715, %v3691
    %v5420 = vpack.c.b16 %v3716, %v3692
    %v5421 = vpack.c.b16 %v3717, %v3693
    %v5422 = vpack.c.b16 %v3718, %v3694
    %v5423 = vpack.c.b16 %v3719, %v3695
    %v5424 = vpack.c.b16 %v3744, %v3720
    %v5425 = vpack.c.b16 %v3745, %v3721
    %v5426 = vpack.c.b16 %v3746, %v3722
    %v5427 = vpack.c.b16 %v3747, %v3723
    %v5428 = vpack.c.b16 %v3748, %v3724
    %v5429 = vpack.c.b16 %v3749, %v3725
    %v5430 = vpack.c.b16 %v3750, %v3726
    %v5431 = vpack.c.b16 %v3751, %v3727
    %v5432 = vpack.c.b16 %v3752, %v3728
    %v5433 = vpack.c.b16 %v3753, %v3729
    %v5434 = vpack.c.b16 %v3754, %v3730
    %v5435 = vpack.c.b16 %v3755, %v3731
    %v5436 = vpack.c.b16 %v3756, %v3732
    %v5437 = vpack.c.b16 %v3757, %v3733
    %v5438 = vpack.c.b16 %v3758, %v3734
    %v5439 = vpack.c.b16 %v3759, %v3735
    %v5440 = vpack.c.b16 %v3760, %v3736
    %v5441 = vpack.c.b16 %v3761, %v3737
    %v5442 = vpack.c.b16 %v3762, %v3738
    %v5443 = vpack.c.b16 %v3763, %v3739
    %v5444 = vpack.c.b16 %v3764, %v3740
    %v5445 = vpack.c.b16 %v3765, %v3741
    %v5446 = vpack.c.b16 %v3766, %v3742
    %v5447 = vpack.c.b16 %v3767, %v3743
    %v5448 = vpack.c.b16 %v3792, %v3768
    %v5449 = vpack.c.b16 %v3793, %v3769
    %v5450 = vpack.c.b16 %v3794, %v3770
    %v5451 = vpack.c.b16 %v3795, %v3771
    %v5452 = vpack.c.b16 %v3796, %v3772
    %v5453 = vpack.c.b16 %v3797, %v3773
    %v5454 = vpack.c.b16 %v3798, %v3774
    %v5455 = vpack.c.b16 %v3799, %v3775
    %v5456 = vpack.c.b16 %v3800, %v3776
    %v5457 = vpack.c.b16 %v3801, %v3777
    %v5458 = vpack.c.b16 %v3802, %v3778
    %v5459 = vpack.c.b16 %v3803, %v3779
    %v5460 = vpack.c.b16 %v3804, %v3780
    %v5461 = vpack.c.b16 %v3805, %v3781
    %v5462 = vpack.c.b16 %v3806, %v3782
    %v5463 = vpack.c.b16 %v3807, %v3783
    %v5464 = vpack.c.b16 %v3808, %v3784
    %v5465 = vpack.c.b16 %v3809, %v3785
    %v5466 = vpack.c.b16 %v3810, %v3786
    %v5467 = vpack.c.b16 %v3811, %v3787
    %v5468 = vpack.c.b16 %v3812, %v3788
    %v5469 = vpack.c.b16 %v3813, %v3789
    %v5470 = vpack.c.b16 %v3814, %v3790
    %v5471 = vpack.c.b16 %v3815, %v3791
    %v5472 = vpack.c.b16 %v3840, %v3816
    %v5473 = vpack.c.b16 %v3841, %v3817
    %v5474 = vpack.c.b16 %v3842, %v3818
    %v5475 = vpack.c.b16 %v3843, %v3819
    %v5476 = vpack.c.b16 %v3844, %v3820
    %v5477 = vpack.c.b16 %v3845, %v3821
    %v5478 = vpack.c.b16 %v3846, %v3822
    %v5479 = vpack.c.b16 %v3847, %v3823
    %v5480 = vpack.c.b16 %v3848, %v3824
    %v5481 = vpack.c.b16 %v3849, %v3825
    %v5482 = vpack.c.b16 %v3850, %v3826
    %v5483 = vpack.c.b16 %v3851, %v3827
    %v5484 = vpack.c.b16 %v3852, %v3828
    %v5485 = vpack.c.b16 %v3853, %v3829
    %v5486 = vpack.c.b16 %v3854, %v3830
    %v5487 = vpack.c.b16 %v3855, %v3831
    %v5488 = vpack.c.b16 %v3856, %v3832
    %v5489 = vpack.c.b16 %v3857, %v3833
    %v5490 = vpack.c.b16 %v3858, %v3834
    %v5491 = vpack.c.b16 %v3859, %v3835
    %v5492 = vpack.c.b16 %v3860, %v3836
    %v5493 = vpack.c.b16 %v3861, %v3837
    %v5494 = vpack.c.b16 %v3862, %v3838
    %v5495 = vpack.c.b16 %v3863, %v3839
    %v5496 = vpack.c.b16 %v3888, %v3864
    %v5497 = vpack.c.b16 %v3889, %v3865
    %v5498 = vpack.c.b16 %v3890, %v3866
    %v5499 = vpack.c.b16 %v3891, %v3867
    %v5500 = vpack.c.b16 %v3892, %v3868
    %v5501 = vpack.c.b16 %v3893, %v3869
    %v5502 = vpack.c.b16 %v3894, %v3870
    %v5503 = vpack.c.b16 %v3895, %v3871
    %v5504 = vpack.c.b16 %v3896, %v3872
    %v5505 = vpack.c.b16 %v3897, %v3873
    %v5506 = vpack.c.b16 %v3898, %v3874
    %v5507 = vpack.c.b16 %v3899, %v3875
    %v5508 = vpack.c.b16 %v3900, %v3876
    %v5509 = vpack.c.b16 %v3901, %v3877
    %v5510 = vpack.c.b16 %v3902, %v3878
    %v5511 = vpack.c.b16 %v3903, %v3879
    %v5512 = vpack.c.b16 %v3904, %v3880
    %v5513 = vpack.c.b16 %v3905, %v3881
    %v5514 = vpack.c.b16 %v3906, %v3882
    %v5515 = vpack.c.b16 %v3907, %v3883
    %v5516 = vpack.c.b16 %v3908, %v3884
    %v5517 = vpack.c.b16 %v3909, %v3885
    %v5518 = vpack.c.b16 %v3910, %v3886
    %v5519 = vpack.c.b16 %v3911, %v3887
    %v5520 = vpack.c.b16 %v3936, %v3912
    %v5521 = vpack.c.b16 %v3937, %v3913
    %v5522 = vpack.c.b16 %v3938, %v3914
    %v5523 = vpack.c.b16 %v3939, %v3915
    %v5524 = vpack.c.b16 %v3940, %v3916
    %v5525 = vpack.c.b16 %v3941, %v3917
    %v5526 = vpack.c.b16 %v3942, %v3918
    %v5527 = vpack.c.b16 %v3943, %v3919
    %v5528 = vpack.c.b16 %v3944, %v3920
    %v5529 = vpack.c.b16 %v3945, %v3921
    %v5530 = vpack.c.b16 %v3946, %v3922
    %v5531 = vpack.c.b16 %v3947, %v3923
    %v5532 = vpack.c.b16 %v3948, %v3924
    %v5533 = vpack.c.b16 %v3949, %v3925
    %v5534 = vpack.c.b16 %v3950, %v3926
    %v5535 = vpack.c.b16 %v3951, %v3927
    %v5536 = vpack.c.b16 %v3952, %v3928
    %v5537 = vpack.c.b16 %v3953, %v3929
    %v5538 = vpack.c.b16 %v3954, %v3930
    %v5539 = vpack.c.b16 %v3955, %v3931
    %v5540 = vpack.c.b16 %v3956, %v3932
    %v5541 = vpack.c.b16 %v3957, %v3933
    %v5542 = vpack.c.b16 %v3958, %v3934
    %v5543 = vpack.c.b16 %v3959, %v3935
    %v5544 = vpack.c.b16 %v3984, %v3960
    %v5545 = vpack.c.b16 %v3985, %v3961
    %v5546 = vpack.c.b16 %v3986, %v3962
    %v5547 = vpack.c.b16 %v3987, %v3963
    %v5548 = vpack.c.b16 %v3988, %v3964
    %v5549 = vpack.c.b16 %v3989, %v3965
    %v5550 = vpack.c.b16 %v3990, %v3966
    %v5551 = vpack.c.b16 %v3991, %v3967
    %v5552 = vpack.c.b16 %v3992, %v3968
    %v5553 = vpack.c.b16 %v3993, %v3969
    %v5554 = vpack.c.b16 %v3994, %v3970
    %v5555 = vpack.c.b16 %v3995, %v3971
    %v5556 = vpack.c.b16 %v3996, %v3972
    %v5557 = vpack.c.b16 %v3997, %v3973
    %v5558 = vpack.c.b16 %v3998, %v3974
    %v5559 = vpack.c.b16 %v3999, %v3975
    %v5560 = vpack.c.b16 %v4000, %v3976
    %v5561 = vpack.c.b16 %v4001, %v3977
    %v5562 = vpack.c.b16 %v4002, %v3978
    %v5563 = vpack.c.b16 %v4003, %v3979
    %v5564 = vpack.c.b16 %v4004, %v3980
    %v5565 = vpack.c.b16 %v4005, %v3981
    %v5566 = vpack.c.b16 %v4006, %v3982
    %v5567 = vpack.c.b16 %v4007, %v3983
    %v5568 = vpack.c.b16 %v4032, %v4008
    %v5569 = vpack.c.b16 %v4033, %v4009
    %v5570 = vpack.c.b16 %v4034, %v4010
    %v5571 = vpack.c.b16 %v4035, %v4011
    %v5572 = vpack.c.b16 %v4036, %v4012
    %v5573 = vpack.c.b16 %v4037, %v4013
    %v5574 = vpack.c.b16 %v4038, %v4014
    %v5575 = vpack.c.b16 %v4039, %v4015
    %v5576 = vpack.c.b16 %v4040, %v4016
    %v5577 = vpack.c.b16 %v4041, %v4017
    %v5578 = vpack.c.b16 %v4042, %v4018
    %v5579 = vpack.c.b16 %v4043, %v4019
    %v5580 = vpack.c.b16 %v4044, %v4020
    %v5581 = vpack.c.b16 %v4045, %v4021
    %v5582 = vpack.c.b16 %v4046, %v4022
    %v5583 = vpack.c.b16 %v4047, %v4023
    %v5584 = vpack.c.b16 %v4048, %v4024
    %v5585 = vpack.c.b16 %v4049, %v4025
    %v5586 = vpack.c.b16 %v4050, %v4026
    %v5587 = vpack.c.b16 %v4051, %v4027
    %v5588 = vpack.c.b16 %v4052, %v4028
    %v5589 = vpack.c.b16 %v4053, %v4029
    %v5590 = vpack.c.b16 %v4054, %v4030
    %v5591 = vpack.c.b16 %v4055, %v4031
    %v5592 = vpack.c.b16 %v4080, %v4056
    %v5593 = vpack.c.b16 %v4081, %v4057
    %v5594 = vpack.c.b16 %v4082, %v4058
    %v5595 = vpack.c.b16 %v4083, %v4059
    %v5596 = vpack.c.b16 %v4084, %v4060
    %v5597 = vpack.c.b16 %v4085, %v4061
    %v5598 = vpack.c.b16 %v4086, %v4062
    %v5599 = vpack.c.b16 %v4087, %v4063
    %v5600 = vpack.c.b16 %v4088, %v4064
    %v5601 = vpack.c.b16 %v4089, %v4065
    %v5602 = vpack.c.b16 %v4090, %v4066
    %v5603 = vpack.c.b16 %v4091, %v4067
    %v5604 = vpack.c.b16 %v4092, %v4068
    %v5605 = vpack.c.b16 %v4093, %v4069
    %v5606 = vpack.c.b16 %v4094, %v4070
    %v5607 = vpack.c.b16 %v4095, %v4071
    %v5608 = vpack.c.b16 %v4096, %v4072
    %v5609 = vpack.c.b16 %v4097, %v4073
    %v5610 = vpack.c.b16 %v4098, %v4074
    %v5611 = vpack.c.b16 %v4099, %v4075
    %v5612 = vpack.c.b16 %v4100, %v4076
    %v5613 = vpack.c.b16 %v4101, %v4077
    %v5614 = vpack.c.b16 %v4102, %v4078
    %v5615 = vpack.c.b16 %v4103, %v4079
    %v5616 = vpack.c.b16 %v4128, %v4104
    %v5617 = vpack.c.b16 %v4129, %v4105
    %v5618 = vpack.c.b16 %v4130, %v4106
    %v5619 = vpack.c.b16 %v4131, %v4107
    %v5620 = vpack.c.b16 %v4132, %v4108
    %v5621 = vpack.c.b16 %v4133, %v4109
    %v5622 = vpack.c.b16 %v4134, %v4110
    %v5623 = vpack.c.b16 %v4135, %v4111
    %v5624 = vpack.c.b16 %v4136, %v4112
    %v5625 = vpack.c.b16 %v4137, %v4113
    %v5626 = vpack.c.b16 %v4138, %v4114
    %v5627 = vpack.c.b16 %v4139, %v4115
    %v5628 = vpack.c.b16 %v4140, %v4116
    %v5629 = vpack.c.b16 %v4141, %v4117
    %v5630 = vpack.c.b16 %v4142, %v4118
    %v5631 = vpack.c.b16 %v4143, %v4119
    %v5632 = vpack.c.b16 %v4144, %v4120
    %v5633 = vpack.c.b16 %v4145, %v4121
    %v5634 = vpack.c.b16 %v4146, %v4122
    %v5635 = vpack.c.b16 %v4147, %v4123
    %v5636 = vpack.c.b16 %v4148, %v4124
    %v5637 = vpack.c.b16 %v4149, %v4125
    %v5638 = vpack.c.b16 %v4150, %v4126
    %v5639 = vpack.c.b16 %v4151, %v4127
    %v5640 = vpack.c.b16 %v4176, %v4152
    %v5641 = vpack.c.b16 %v4177, %v4153
    %v5642 = vpack.c.b16 %v4178, %v4154
    %v5643 = vpack.c.b16 %v4179, %v4155
    %v5644 = vpack.c.b16 %v4180, %v4156
    %v5645 = vpack.c.b16 %v4181, %v4157
    %v5646 = vpack.c.b16 %v4182, %v4158
    %v5647 = vpack.c.b16 %v4183, %v4159
    %v5648 = vpack.c.b16 %v4184, %v4160
    %v5649 = vpack.c.b16 %v4185, %v4161
    %v5650 = vpack.c.b16 %v4186, %v4162
    %v5651 = vpack.c.b16 %v4187, %v4163
    %v5652 = vpack.c.b16 %v4188, %v4164
    %v5653 = vpack.c.b16 %v4189, %v4165
    %v5654 = vpack.c.b16 %v4190, %v4166
    %v5655 = vpack.c.b16 %v4191, %v4167
    %v5656 = vpack.c.b16 %v4192, %v4168
    %v5657 = vpack.c.b16 %v4193, %v4169
    %v5658 = vpack.c.b16 %v4194, %v4170
    %v5659 = vpack.c.b16 %v4195, %v4171
    %v5660 = vpack.c.b16 %v4196, %v4172
    %v5661 = vpack.c.b16 %v4197, %v4173
    %v5662 = vpack.c.b16 %v4198, %v4174
    %v5663 = vpack.c.b16 %v4199, %v4175
    %v5664 = vpack.c.b16 %v4224, %v4200
    %v5665 = vpack.c.b16 %v4225, %v4201
    %v5666 = vpack.c.b16 %v4226, %v4202
    %v5667 = vpack.c.b16 %v4227, %v4203
    %v5668 = vpack.c.b16 %v4228, %v4204
    %v5669 = vpack.c.b16 %v4229, %v4205
    %v5670 = vpack.c.b16 %v4230, %v4206
    %v5671 = vpack.c.b16 %v4231, %v4207
    %v5672 = vpack.c.b16 %v4232, %v4208
    %v5673 = vpack.c.b16 %v4233, %v4209
    %v5674 = vpack.c.b16 %v4234, %v4210
    %v5675 = vpack.c.b16 %v4235, %v4211
    %v5676 = vpack.c.b16 %v4236, %v4212
    %v5677 = vpack.c.b16 %v4237, %v4213
    %v5678 = vpack.c.b16 %v4238, %v4214
    %v5679 = vpack.c.b16 %v4239, %v4215
    %v5680 = vpack.c.b16 %v4240, %v4216
    %v5681 = vpack.c.b16 %v4241, %v4217
    %v5682 = vpack.c.b16 %v4242, %v4218
    %v5683 = vpack.c.b16 %v4243, %v4219
    %v5684 = vpack.c.b16 %v4244, %v4220
    %v5685 = vpack.c.b16 %v4245, %v4221
    %v5686 = vpack.c.b16 %v4246, %v4222
    %v5687 = vpack.c.b16 %v4247, %v4223
    %v5688 = vpack.c.b16 %v4272, %v4248
    %v5689 = vpack.c.b16 %v4273, %v4249
    %v5690 = vpack.c.b16 %v4274, %v4250
    %v5691 = vpack.c.b16 %v4275, %v4251
    %v5692 = vpack.c.b16 %v4276, %v4252
    %v5693 = vpack.c.b16 %v4277, %v4253
    %v5694 = vpack.c.b16 %v4278, %v4254
    %v5695 = vpack.c.b16 %v4279, %v4255
    %v5696 = vpack.c.b16 %v4280, %v4256
    %v5697 = vpack.c.b16 %v4281, %v4257
    %v5698 = vpack.c.b16 %v4282, %v4258
    %v5699 = vpack.c.b16 %v4283, %v4259
    %v5700 = vpack.c.b16 %v4284, %v4260
    %v5701 = vpack.c.b16 %v4285, %v4261
    %v5702 = vpack.c.b16 %v4286, %v4262
    %v5703 = vpack.c.b16 %v4287, %v4263
    %v5704 = vpack.c.b16 %v4288, %v4264
    %v5705 = vpack.c.b16 %v4289, %v4265
    %v5706 = vpack.c.b16 %v4290, %v4266
    %v5707 = vpack.c.b16 %v4291, %v4267
    %v5708 = vpack.c.b16 %v4292, %v4268
    %v5709 = vpack.c.b16 %v4293, %v4269
    %v5710 = vpack.c.b16 %v4294, %v4270
    %v5711 = vpack.c.b16 %v4295, %v4271
    %v5712 = vpack.c.b16 %v4320, %v4296
    %v5713 = vpack.c.b16 %v4321, %v4297
    %v5714 = vpack.c.b16 %v4322, %v4298
    %v5715 = vpack.c.b16 %v4323, %v4299
    %v5716 = vpack.c.b16 %v4324, %v4300
    %v5717 = vpack.c.b16 %v4325, %v4301
    %v5718 = vpack.c.b16 %v4326, %v4302
    %v5719 = vpack.c.b16 %v4327, %v4303
    %v5720 = vpack.c.b16 %v4328, %v4304
    %v5721 = vpack.c.b16 %v4329, %v4305
    %v5722 = vpack.c.b16 %v4330, %v4306
    %v5723 = vpack.c.b16 %v4331, %v4307
    %v5724 = vpack.c.b16 %v4332, %v4308
    %v5725 = vpack.c.b16 %v4333, %v4309
    %v5726 = vpack.c.b16 %v4334, %v4310
    %v5727 = vpack.c.b16 %v4335, %v4311
    %v5728 = vpack.c.b16 %v4336, %v4312
    %v5729 = vpack.c.b16 %v4337, %v4313
    %v5730 = vpack.c.b16 %v4338, %v4314
    %v5731 = vpack.c.b16 %v4339, %v4315
    %v5732 = vpack.c.b16 %v4340, %v4316
    %v5733 = vpack.c.b16 %v4341, %v4317
    %v5734 = vpack.c.b16 %v4342, %v4318
    %v5735 = vpack.c.b16 %v4343, %v4319
    %v5736 = vpack.c.b16 %v4368, %v4344
    %v5737 = vpack.c.b16 %v4369, %v4345
    %v5738 = vpack.c.b16 %v4370, %v4346
    %v5739 = vpack.c.b16 %v4371, %v4347
    %v5740 = vpack.c.b16 %v4372, %v4348
    %v5741 = vpack.c.b16 %v4373, %v4349
    %v5742 = vpack.c.b16 %v4374, %v4350
    %v5743 = vpack.c.b16 %v4375, %v4351
    %v5744 = vpack.c.b16 %v4376, %v4352
    %v5745 = vpack.c.b16 %v4377, %v4353
    %v5746 = vpack.c.b16 %v4378, %v4354
    %v5747 = vpack.c.b16 %v4379, %v4355
    %v5748 = vpack.c.b16 %v4380, %v4356
    %v5749 = vpack.c.b16 %v4381, %v4357
    %v5750 = vpack.c.b16 %v4382, %v4358
    %v5751 = vpack.c.b16 %v4383, %v4359
    %v5752 = vpack.c.b16 %v4384, %v4360
    %v5753 = vpack.c.b16 %v4385, %v4361
    %v5754 = vpack.c.b16 %v4386, %v4362
    %v5755 = vpack.c.b16 %v4387, %v4363
    %v5756 = vpack.c.b16 %v4388, %v4364
    %v5757 = vpack.c.b16 %v4389, %v4365
    %v5758 = vpack.c.b16 %v4390, %v4366
    %v5759 = vpack.c.b16 %v4391, %v4367
    %v5760 = vpack.c.b16 %v4416, %v4392
    %v5761 = vpack.c.b16 %v4417, %v4393
    %v5762 = vpack.c.b16 %v4418, %v4394
    %v5763 = vpack.c.b16 %v4419, %v4395
    %v5764 = vpack.c.b16 %v4420, %v4396
    %v5765 = vpack.c.b16 %v4421, %v4397
    %v5766 = vpack.c.b16 %v4422, %v4398
    %v5767 = vpack.c.b16 %v4423, %v4399
    %v5768 = vpack.c.b16 %v4424, %v4400
    %v5769 = vpack.c.b16 %v4425, %v4401
    %v5770 = vpack.c.b16 %v4426, %v4402
    %v5771 = vpack.c.b16 %v4427, %v4403
    %v5772 = vpack.c.b16 %v4428, %v4404
    %v5773 = vpack.c.b16 %v4429, %v4405
    %v5774 = vpack.c.b16 %v4430, %v4406
    %v5775 = vpack.c.b16 %v4431, %v4407
    %v5776 = vpack.c.b16 %v4432, %v4408
    %v5777 = vpack.c.b16 %v4433, %v4409
    %v5778 = vpack.c.b16 %v4434, %v4410
    %v5779 = vpack.c.b16 %v4435, %v4411
    %v5780 = vpack.c.b16 %v4436, %v4412
    %v5781 = vpack.c.b16 %v4437, %v4413
    %v5782 = vpack.c.b16 %v4438, %v4414
    %v5783 = vpack.c.b16 %v4439, %v4415
    %v5784 = vpack.c.b16 %v4464, %v4440
    %v5785 = vpack.c.b16 %v4465, %v4441
    %v5786 = vpack.c.b16 %v4466, %v4442
    %v5787 = vpack.c.b16 %v4467, %v4443
    %v5788 = vpack.c.b16 %v4468, %v4444
    %v5789 = vpack.c.b16 %v4469, %v4445
    %v5790 = vpack.c.b16 %v4470, %v4446
    %v5791 = vpack.c.b16 %v4471, %v4447
    %v5792 = vpack.c.b16 %v4472, %v4448
    %v5793 = vpack.c.b16 %v4473, %v4449
    %v5794 = vpack.c.b16 %v4474, %v4450
    %v5795 = vpack.c.b16 %v4475, %v4451
    %v5796 = vpack.c.b16 %v4476, %v4452
    %v5797 = vpack.c.b16 %v4477, %v4453
    %v5798 = vpack.c.b16 %v4478, %v4454
    %v5799 = vpack.c.b16 %v4479, %v4455
    %v5800 = vpack.c.b16 %v4480, %v4456
    %v5801 = vpack.c.b16 %v4481, %v4457
    %v5802 = vpack.c.b16 %v4482, %v4458
    %v5803 = vpack.c.b16 %v4483, %v4459
    %v5804 = vpack.c.b16 %v4484, %v4460
    %v5805 = vpack.c.b16 %v4485, %v4461
    %v5806 = vpack.c.b16 %v4486, %v4462
    %v5807 = vpack.c.b16 %v4487, %v4463
    %v5808 = vpack.c.b16 %v4512, %v4488
    %v5809 = vpack.c.b16 %v4513, %v4489
    %v5810 = vpack.c.b16 %v4514, %v4490
    %v5811 = vpack.c.b16 %v4515, %v4491
    %v5812 = vpack.c.b16 %v4516, %v4492
    %v5813 = vpack.c.b16 %v4517, %v4493
    %v5814 = vpack.c.b16 %v4518, %v4494
    %v5815 = vpack.c.b16 %v4519, %v4495
    %v5816 = vpack.c.b16 %v4520, %v4496
    %v5817 = vpack.c.b16 %v4521, %v4497
    %v5818 = vpack.c.b16 %v4522, %v4498
    %v5819 = vpack.c.b16 %v4523, %v4499
    %v5820 = vpack.c.b16 %v4524, %v4500
    %v5821 = vpack.c.b16 %v4525, %v4501
    %v5822 = vpack.c.b16 %v4526, %v4502
    %v5823 = vpack.c.b16 %v4527, %v4503
    %v5824 = vpack.c.b16 %v4528, %v4504
    %v5825 = vpack.c.b16 %v4529, %v4505
    %v5826 = vpack.c.b16 %v4530, %v4506
    %v5827 = vpack.c.b16 %v4531, %v4507
    %v5828 = vpack.c.b16 %v4532, %v4508
    %v5829 = vpack.c.b16 %v4533, %v4509
    %v5830 = vpack.c.b16 %v4534, %v4510
    %v5831 = vpack.c.b16 %v4535, %v4511
    %v5832 = vpack.c.b16 %v4560, %v4536
    %v5833 = vpack.c.b16 %v4561, %v4537
    %v5834 = vpack.c.b16 %v4562, %v4538
    %v5835 = vpack.c.b16 %v4563, %v4539
    %v5836 = vpack.c.b16 %v4564, %v4540
    %v5837 = vpack.c.b16 %v4565, %v4541
    %v5838 = vpack.c.b16 %v4566, %v4542
    %v5839 = vpack.c.b16 %v4567, %v4543
    %v5840 = vpack.c.b16 %v4568, %v4544
    %v5841 = vpack.c.b16 %v4569, %v4545
    %v5842 = vpack.c.b16 %v4570, %v4546
    %v5843 = vpack.c.b16 %v4571, %v4547
    %v5844 = vpack.c.b16 %v4572, %v4548
    %v5845 = vpack.c.b16 %v4573, %v4549
    %v5846 = vpack.c.b16 %v4574, %v4550
    %v5847 = vpack.c.b16 %v4575, %v4551
    %v5848 = vpack.c.b16 %v4576, %v4552
    %v5849 = vpack.c.b16 %v4577, %v4553
    %v5850 = vpack.c.b16 %v4578, %v4554
    %v5851 = vpack.c.b16 %v4579, %v4555
    %v5852 = vpack.c.b16 %v4580, %v4556
    %v5853 = vpack.c.b16 %v4581, %v4557
    %v5854 = vpack.c.b16 %v4582, %v4558
    %v5855 = vpack.c.b16 %v4583, %v4559
    %v5856 = vpack.c.b16 %v4608, %v4584
    %v5857 = vpack.c.b16 %v4609, %v4585
    %v5858 = vpack.c.b16 %v4610, %v4586
    %v5859 = vpack.c.b16 %v4611, %v4587
    %v5860 = vpack.c.b16 %v4612, %v4588
    %v5861 = vpack.c.b16 %v4613, %v4589
    %v5862 = vpack.c.b16 %v4614, %v4590
    %v5863 = vpack.c.b16 %v4615, %v4591
    %v5864 = vpack.c.b16 %v4616, %v4592
    %v5865 = vpack.c.b16 %v4617, %v4593
    %v5866 = vpack.c.b16 %v4618, %v4594
    %v5867 = vpack.c.b16 %v4619, %v4595
    %v5868 = vpack.c.b16 %v4620, %v4596
    %v5869 = vpack.c.b16 %v4621, %v4597
    %v5870 = vpack.c.b16 %v4622, %v4598
    %v5871 = vpack.c.b16 %v4623, %v4599
    %v5872 = vpack.c.b16 %v4624, %v4600
    %v5873 = vpack.c.b16 %v4625, %v4601
    %v5874 = vpack.c.b16 %v4626, %v4602
    %v5875 = vpack.c.b16 %v4627, %v4603
    %v5876 = vpack.c.b16 %v4628, %v4604
    %v5877 = vpack.c.b16 %v4629, %v4605
    %v5878 = vpack.c.b16 %v4630, %v4606
    %v5879 = vpack.c.b16 %v4631, %v4607
    %v5880 = vpack.c.b16 %v4656, %v4632
    %v5881 = vpack.c.b16 %v4657, %v4633
    %v5882 = vpack.c.b16 %v4658, %v4634
    %v5883 = vpack.c.b16 %v4659, %v4635
    %v5884 = vpack.c.b16 %v4660, %v4636
    %v5885 = vpack.c.b16 %v4661, %v4637
    %v5886 = vpack.c.b16 %v4662, %v4638
    %v5887 = vpack.c.b16 %v4663, %v4639
    %v5888 = vpack.c.b16 %v4664, %v4640
    %v5889 = vpack.c.b16 %v4665, %v4641
    %v5890 = vpack.c.b16 %v4666, %v4642
    %v5891 = vpack.c.b16 %v4667, %v4643
    %v5892 = vpack.c.b16 %v4668, %v4644
    %v5893 = vpack.c.b16 %v4669, %v4645
    %v5894 = vpack.c.b16 %v4670, %v4646
    %v5895 = vpack.c.b16 %v4671, %v4647
    %v5896 = vpack.c.b16 %v4672, %v4648
    %v5897 = vpack.c.b16 %v4673, %v4649
    %v5898 = vpack.c.b16 %v4674, %v4650
    %v5899 = vpack.c.b16 %v4675, %v4651
    %v5900 = vpack.c.b16 %v4676, %v4652
    %v5901 = vpack.c.b16 %v4677, %v4653
    %v5902 = vpack.c.b16 %v4678, %v4654
    %v5903 = vpack.c.b16 %v4679, %v4655
    %v5904 = vpack.c.b16 %v4704, %v4680
    %v5905 = vpack.c.b16 %v4705, %v4681
    %v5906 = vpack.c.b16 %v4706, %v4682
    %v5907 = vpack.c.b16 %v4707, %v4683
    %v5908 = vpack.c.b16 %v4708, %v4684
    %v5909 = vpack.c.b16 %v4709, %v4685
    %v5910 = vpack.c.b16 %v4710, %v4686
    %v5911 = vpack.c.b16 %v4711, %v4687
    %v5912 = vpack.c.b16 %v4712, %v4688
    %v5913 = vpack.c.b16 %v4713, %v4689
    %v5914 = vpack.c.b16 %v4714, %v4690
    %v5915 = vpack.c.b16 %v4715, %v4691
    %v5916 = vpack.c.b16 %v4716, %v4692
    %v5917 = vpack.c.b16 %v4717, %v4693
    %v5918 = vpack.c.b16 %v4718, %v4694
    %v5919 = vpack.c.b16 %v4719, %v4695
    %v5920 = vpack.c.b16 %v4720, %v4696
    %v5921 = vpack.c.b16 %v4721, %v4697
    %v5922 = vpack.c.b16 %v4722, %v4698
    %v5923 = vpack.c.b16 %v4723, %v4699
    %v5924 = vpack.c.b16 %v4724, %v4700
    %v5925 = vpack.c.b16 %v4725, %v4701
    %v5926 = vpack.c.b16 %v4726, %v4702
    %v5927 = vpack.c.b16 %v4727, %v4703
    %v5928 = vpack.c.b16 %v4752, %v4728
    %v5929 = vpack.c.b16 %v4753, %v4729
    %v5930 = vpack.c.b16 %v4754, %v4730
    %v5931 = vpack.c.b16 %v4755, %v4731
    %v5932 = vpack.c.b16 %v4756, %v4732
    %v5933 = vpack.c.b16 %v4757, %v4733
    %v5934 = vpack.c.b16 %v4758, %v4734
    %v5935 = vpack.c.b16 %v4759, %v4735
    %v5936 = vpack.c.b16 %v4760, %v4736
    %v5937 = vpack.c.b16 %v4761, %v4737
    %v5938 = vpack.c.b16 %v4762, %v4738
    %v5939 = vpack.c.b16 %v4763, %v4739
    %v5940 = vpack.c.b16 %v4764, %v4740
    %v5941 = vpack.c.b16 %v4765, %v4741
    %v5942 = vpack.c.b16 %v4766, %v4742
    %v5943 = vpack.c.b16 %v4767, %v4743
    %v5944 = vpack.c.b16 %v4768, %v4744
    %v5945 = vpack.c.b16 %v4769, %v4745
    %v5946 = vpack.c.b16 %v4770, %v4746
    %v5947 = vpack.c.b16 %v4771, %v4747
    %v5948 = vpack.c.b16 %v4772, %v4748
    %v5949 = vpack.c.b16 %v4773, %v4749
    %v5950 = vpack.c.b16 %v4774, %v4750
    %v5951 = vpack.c.b16 %v4775, %v4751
    %v5952 = vpack.c.b16 %v4800, %v4776
    %v5953 = vpack.c.b16 %v4801, %v4777
    %v5954 = vpack.c.b16 %v4802, %v4778
    %v5955 = vpack.c.b16 %v4803, %v4779
    %v5956 = vpack.c.b16 %v4804, %v4780
    %v5957 = vpack.c.b16 %v4805, %v4781
    %v5958 = vpack.c.b16 %v4806, %v4782
    %v5959 = vpack.c.b16 %v4807, %v4783
    %v5960 = vpack.c.b16 %v4808, %v4784
    %v5961 = vpack.c.b16 %v4809, %v4785
    %v5962 = vpack.c.b16 %v4810, %v4786
    %v5963 = vpack.c.b16 %v4811, %v4787
    %v5964 = vpack.c.b16 %v4812, %v4788
    %v5965 = vpack.c.b16 %v4813, %v4789
    %v5966 = vpack.c.b16 %v4814, %v4790
    %v5967 = vpack.c.b16 %v4815, %v4791
    %v5968 = vpack.c.b16 %v4816, %v4792
    %v5969 = vpack.c.b16 %v4817, %v4793
    %v5970 = vpack.c.b16 %v4818, %v4794
    %v5971 = vpack.c.b16 %v4819, %v4795
    %v5972 = vpack.c.b16 %v4820, %v4796
    %v5973 = vpack.c.b16 %v4821, %v4797
    %v5974 = vpack.c.b16 %v4822, %v4798
    %v5975 = vpack.c.b16 %v4823, %v4799
    %7128 = vmatprep.subr.bf16.mxu0 %v4993
    %7129 = vmatpush1.bf16.msra.mxu0 %v4992
    %7130 = vmatprep.subr.bf16.mxu0 %v4969
    %7131 = vmatpush1.bf16.msra.mxu0 %v4968
    %7132 = vmatprep.subr.bf16.mxu0 %v4945
    %7133 = vmatpush1.bf16.msra.mxu0 %v4944
    %7134 = vmatprep.subr.bf16.mxu0 %v4921
    %7135 = vmatpush1.bf16.msra.mxu0 %v4920
    %7136 = vmatprep.subr.bf16.mxu0 %v4897
    %7137 = vmatpush1.bf16.msra.mxu0 %v4896
    %7138 = vmatprep.subr.bf16.mxu0 %v4873
    %7139 = vmatpush1.bf16.msra.mxu0 %v4872
    %7140 = vmatprep.subr.bf16.mxu0 %v4849
    %7141 = vmatpush1.bf16.msra.mxu0 %v4848
    %7142 = vmatprep.subr.bf16.mxu0 %v4825
    %7143 = vmatpush1.bf16.msra.mxu0 %v4824
    %7144 = vmatprep.subr.bf16.mxu0 %v5185
    %7145 = vmatpush2.bf16.msra.mxu0 %v5184
    %7146 = vmatprep.subr.bf16.mxu0 %v5161
    %7147 = vmatpush2.bf16.msra.mxu0 %v5160
    %7148 = vmatprep.subr.bf16.mxu0 %v5137
    %7149 = vmatpush2.bf16.msra.mxu0 %v5136
    %7150 = vmatprep.subr.bf16.mxu0 %v5113
    %7151 = vmatpush2.bf16.msra.mxu0 %v5112
    %7152 = vmatprep.subr.bf16.mxu0 %v5089
    %7153 = vmatpush2.bf16.msra.mxu0 %v5088
    %7154 = vmatprep.subr.bf16.mxu0 %v5065
    %7155 = vmatpush2.bf16.msra.mxu0 %v5064
    %7156 = vmatprep.subr.bf16.mxu0 %v5041
    %7157 = vmatpush2.bf16.msra.mxu0 %v5040
    %7158 = vmatprep.subr.bf16.mxu0 %v5017
    %7159 = vmatpush2.bf16.msra.mxu0 %v5016
    %7160 = vmatprep.mubr.bf16.mxu0 %v1357
    %7161 = vmatmul.mubr.bf16.gmra.mxu0 %v1356
    %v7162 = vpop.f32.mrf.mxu0
    %v7163 = vadd.f32 %v1221, %v7162
    %v7164 = vpop.f32.mrf.mxu0
    %v7165 = vadd.f32 %v1225, %v7164
    %v7166 = vpop.f32.mrf.mxu0
    %v7167 = vadd.f32 %v1221, %v7166
    %v7168 = vpop.f32.mrf.mxu0
    %v7169 = vadd.f32 %v1225, %v7168
    %7170 = vdwg.mxu0
    %7171 = vmatprep.subr.bf16.mxu0 %v5377
    %7172 = vmatpush1.bf16.msra.mxu0 %v5376
    %7173 = vmatprep.subr.bf16.mxu0 %v5353
    %7174 = vmatpush1.bf16.msra.mxu0 %v5352
    %7175 = vmatprep.subr.bf16.mxu0 %v5329
    %7176 = vmatpush1.bf16.msra.mxu0 %v5328
    %7177 = vmatprep.subr.bf16.mxu0 %v5305
    %7178 = vmatpush1.bf16.msra.mxu0 %v5304
    %7179 = vmatprep.subr.bf16.mxu0 %v5281
    %7180 = vmatpush1.bf16.msra.mxu0 %v5280
    %7181 = vmatprep.subr.bf16.mxu0 %v5257
    %7182 = vmatpush1.bf16.msra.mxu0 %v5256
    %7183 = vmatprep.subr.bf16.mxu0 %v5233
    %7184 = vmatpush1.bf16.msra.mxu0 %v5232
    %7185 = vmatprep.subr.bf16.mxu0 %v5209
    %7186 = vmatpush1.bf16.msra.mxu0 %v5208
    %7187 = vmatprep.subr.bf16.mxu0 %v5569
    %7188 = vmatpush2.bf16.msra.mxu0 %v5568
    %7189 = vmatprep.subr.bf16.mxu0 %v5545
    %7190 = vmatpush2.bf16.msra.mxu0 %v5544
    %7191 = vmatprep.subr.bf16.mxu0 %v5521
    %7192 = vmatpush2.bf16.msra.mxu0 %v5520
    %7193 = vmatprep.subr.bf16.mxu0 %v5497
    %7194 = vmatpush2.bf16.msra.mxu0 %v5496
    %7195 = vmatprep.subr.bf16.mxu0 %v5473
    %7196 = vmatpush2.bf16.msra.mxu0 %v5472
    %7197 = vmatprep.subr.bf16.mxu0 %v5449
    %7198 = vmatpush2.bf16.msra.mxu0 %v5448
    %7199 = vmatprep.subr.bf16.mxu0 %v5425
    %7200 = vmatpush2.bf16.msra.mxu0 %v5424
    %7201 = vmatprep.subr.bf16.mxu0 %v5401
    %7202 = vmatpush2.bf16.msra.mxu0 %v5400
    %7203 = vmatprep.mubr.bf16.mxu0 %v1359
    %7204 = vmatmul.mubr.bf16.gmra.mxu0 %v1358
    %v7205 = vpop.f32.mrf.mxu0
    %v7206 = vadd.f32 %v7163, %v7205
    %v7207 = vpop.f32.mrf.mxu0
    %v7208 = vadd.f32 %v7165, %v7207
    %v7209 = vpop.f32.mrf.mxu0
    %v7210 = vadd.f32 %v7167, %v7209
    %v7211 = vpop.f32.mrf.mxu0
    %v7212 = vadd.f32 %v7169, %v7211
    %7213 = vdwg.mxu0
    %7214 = vmatprep.subr.bf16.mxu0 %v5761
    %7215 = vmatpush1.bf16.msra.mxu0 %v5760
    %7216 = vmatprep.subr.bf16.mxu0 %v5737
    %7217 = vmatpush1.bf16.msra.mxu0 %v5736
    %7218 = vmatprep.subr.bf16.mxu0 %v5713
    %7219 = vmatpush1.bf16.msra.mxu0 %v5712
    %7220 = vmatprep.subr.bf16.mxu0 %v5689
    %7221 = vmatpush1.bf16.msra.mxu0 %v5688
    %7222 = vmatprep.subr.bf16.mxu0 %v5665
    %7223 = vmatpush1.bf16.msra.mxu0 %v5664
    %7224 = vmatprep.subr.bf16.mxu0 %v5641
    %7225 = vmatpush1.bf16.msra.mxu0 %v5640
    %7226 = vmatprep.subr.bf16.mxu0 %v5617
    %7227 = vmatpush1.bf16.msra.mxu0 %v5616
    %7228 = vmatprep.subr.bf16.mxu0 %v5593
    %7229 = vmatpush1.bf16.msra.mxu0 %v5592
    %7230 = vmatprep.subr.bf16.mxu0 %v5953
    %7231 = vmatpush2.bf16.msra.mxu0 %v5952
    %7232 = vmatprep.subr.bf16.mxu0 %v5929
    %7233 = vmatpush2.bf16.msra.mxu0 %v5928
    %7234 = vmatprep.subr.bf16.mxu0 %v5905
    %7235 = vmatpush2.bf16.msra.mxu0 %v5904
    %7236 = vmatprep.subr.bf16.mxu0 %v5881
    %7237 = vmatpush2.bf16.msra.mxu0 %v5880
    %7238 = vmatprep.subr.bf16.mxu0 %v5857
    %7239 = vmatpush2.bf16.msra.mxu0 %v5856
    %7240 = vmatprep.subr.bf16.mxu0 %v5833
    %7241 = vmatpush2.bf16.msra.mxu0 %v5832
    %7242 = vmatprep.subr.bf16.mxu0 %v5809
    %7243 = vmatpush2.bf16.msra.mxu0 %v5808
    %7244 = vmatprep.subr.bf16.mxu0 %v5785
    %7245 = vmatpush2.bf16.msra.mxu0 %v5784
    %7246 = vmatprep.mubr.bf16.mxu0 %v1361
    %7247 = vmatmul.mubr.bf16.gmra.mxu0 %v1360
    %v7248 = vpop.f32.mrf.mxu0
    %v7249 = vadd.f32 %v7206, %v7248
    %v7250 = vpop.f32.mrf.mxu0
    %v7251 = vadd.f32 %v7208, %v7250
    %v7252 = vpop.f32.mrf.mxu0
    %v7253 = vadd.f32 %v7210, %v7252
    %v7254 = vpop.f32.mrf.mxu0
    %v7255 = vadd.f32 %v7212, %v7254
    %7256 = vdwg.mxu0
    %7257 = vmatprep.subr.bf16.mxu0 %v4995
    %7258 = vmatpush1.bf16.msra.mxu0 %v4994
    %7259 = vmatprep.subr.bf16.mxu0 %v4971
    %7260 = vmatpush1.bf16.msra.mxu0 %v4970
    %7261 = vmatprep.subr.bf16.mxu0 %v4947
    %7262 = vmatpush1.bf16.msra.mxu0 %v4946
    %7263 = vmatprep.subr.bf16.mxu0 %v4923
    %7264 = vmatpush1.bf16.msra.mxu0 %v4922
    %7265 = vmatprep.subr.bf16.mxu0 %v4899
    %7266 = vmatpush1.bf16.msra.mxu0 %v4898
    %7267 = vmatprep.subr.bf16.mxu0 %v4875
    %7268 = vmatpush1.bf16.msra.mxu0 %v4874
    %7269 = vmatprep.subr.bf16.mxu0 %v4851
    %7270 = vmatpush1.bf16.msra.mxu0 %v4850
    %7271 = vmatprep.subr.bf16.mxu0 %v4827
    %7272 = vmatpush1.bf16.msra.mxu0 %v4826
    %7273 = vmatprep.subr.bf16.mxu0 %v5187
    %7274 = vmatpush2.bf16.msra.mxu0 %v5186
    %7275 = vmatprep.subr.bf16.mxu0 %v5163
    %7276 = vmatpush2.bf16.msra.mxu0 %v5162
    %7277 = vmatprep.subr.bf16.mxu0 %v5139
    %7278 = vmatpush2.bf16.msra.mxu0 %v5138
    %7279 = vmatprep.subr.bf16.mxu0 %v5115
    %7280 = vmatpush2.bf16.msra.mxu0 %v5114
    %7281 = vmatprep.subr.bf16.mxu0 %v5091
    %7282 = vmatpush2.bf16.msra.mxu0 %v5090
    %7283 = vmatprep.subr.bf16.mxu0 %v5067
    %7284 = vmatpush2.bf16.msra.mxu0 %v5066
    %7285 = vmatprep.subr.bf16.mxu0 %v5043
    %7286 = vmatpush2.bf16.msra.mxu0 %v5042
    %7287 = vmatprep.subr.bf16.mxu0 %v5019
    %7288 = vmatpush2.bf16.msra.mxu0 %v5018
    %7289 = vmatprep.mubr.bf16.mxu0 %v1357
    %7290 = vmatmul.mubr.bf16.gmra.mxu0 %v1356
    %v7291 = vpop.f32.mrf.mxu0
    %v7292 = vadd.f32 %v1229, %v7291
    %v7293 = vpop.f32.mrf.mxu0
    %v7294 = vadd.f32 %v1233, %v7293
    %v7295 = vpop.f32.mrf.mxu0
    %v7296 = vadd.f32 %v1229, %v7295
    %v7297 = vpop.f32.mrf.mxu0
    %v7298 = vadd.f32 %v1233, %v7297
    %7299 = vdwg.mxu0
    %7300 = vmatprep.subr.bf16.mxu0 %v5379
    %7301 = vmatpush1.bf16.msra.mxu0 %v5378
    %7302 = vmatprep.subr.bf16.mxu0 %v5355
    %7303 = vmatpush1.bf16.msra.mxu0 %v5354
    %7304 = vmatprep.subr.bf16.mxu0 %v5331
    %7305 = vmatpush1.bf16.msra.mxu0 %v5330
    %7306 = vmatprep.subr.bf16.mxu0 %v5307
    %7307 = vmatpush1.bf16.msra.mxu0 %v5306
    %7308 = vmatprep.subr.bf16.mxu0 %v5283
    %7309 = vmatpush1.bf16.msra.mxu0 %v5282
    %7310 = vmatprep.subr.bf16.mxu0 %v5259
    %7311 = vmatpush1.bf16.msra.mxu0 %v5258
    %7312 = vmatprep.subr.bf16.mxu0 %v5235
    %7313 = vmatpush1.bf16.msra.mxu0 %v5234
    %7314 = vmatprep.subr.bf16.mxu0 %v5211
    %7315 = vmatpush1.bf16.msra.mxu0 %v5210
    %7316 = vmatprep.subr.bf16.mxu0 %v5571
    %7317 = vmatpush2.bf16.msra.mxu0 %v5570
    %7318 = vmatprep.subr.bf16.mxu0 %v5547
    %7319 = vmatpush2.bf16.msra.mxu0 %v5546
    %7320 = vmatprep.subr.bf16.mxu0 %v5523
    %7321 = vmatpush2.bf16.msra.mxu0 %v5522
    %7322 = vmatprep.subr.bf16.mxu0 %v5499
    %7323 = vmatpush2.bf16.msra.mxu0 %v5498
    %7324 = vmatprep.subr.bf16.mxu0 %v5475
    %7325 = vmatpush2.bf16.msra.mxu0 %v5474
    %7326 = vmatprep.subr.bf16.mxu0 %v5451
    %7327 = vmatpush2.bf16.msra.mxu0 %v5450
    %7328 = vmatprep.subr.bf16.mxu0 %v5427
    %7329 = vmatpush2.bf16.msra.mxu0 %v5426
    %7330 = vmatprep.subr.bf16.mxu0 %v5403
    %7331 = vmatpush2.bf16.msra.mxu0 %v5402
    %7332 = vmatprep.mubr.bf16.mxu0 %v1359
    %7333 = vmatmul.mubr.bf16.gmra.mxu0 %v1358
    %v7334 = vpop.f32.mrf.mxu0
    %v7335 = vadd.f32 %v7292, %v7334
    %v7336 = vpop.f32.mrf.mxu0
    %v7337 = vadd.f32 %v7294, %v7336
    %v7338 = vpop.f32.mrf.mxu0
    %v7339 = vadd.f32 %v7296, %v7338
    %v7340 = vpop.f32.mrf.mxu0
    %v7341 = vadd.f32 %v7298, %v7340
    %7342 = vdwg.mxu0
    %7343 = vmatprep.subr.bf16.mxu0 %v5763
    %7344 = vmatpush1.bf16.msra.mxu0 %v5762
    %7345 = vmatprep.subr.bf16.mxu0 %v5739
    %7346 = vmatpush1.bf16.msra.mxu0 %v5738
    %7347 = vmatprep.subr.bf16.mxu0 %v5715
    %7348 = vmatpush1.bf16.msra.mxu0 %v5714
    %7349 = vmatprep.subr.bf16.mxu0 %v5691
    %7350 = vmatpush1.bf16.msra.mxu0 %v5690
    %7351 = vmatprep.subr.bf16.mxu0 %v5667
    %7352 = vmatpush1.bf16.msra.mxu0 %v5666
    %7353 = vmatprep.subr.bf16.mxu0 %v5643
    %7354 = vmatpush1.bf16.msra.mxu0 %v5642
    %7355 = vmatprep.subr.bf16.mxu0 %v5619
    %7356 = vmatpush1.bf16.msra.mxu0 %v5618
    %7357 = vmatprep.subr.bf16.mxu0 %v5595
    %7358 = vmatpush1.bf16.msra.mxu0 %v5594
    %7359 = vmatprep.subr.bf16.mxu0 %v5955
    %7360 = vmatpush2.bf16.msra.mxu0 %v5954
    %7361 = vmatprep.subr.bf16.mxu0 %v5931
    %7362 = vmatpush2.bf16.msra.mxu0 %v5930
    %7363 = vmatprep.subr.bf16.mxu0 %v5907
    %7364 = vmatpush2.bf16.msra.mxu0 %v5906
    %7365 = vmatprep.subr.bf16.mxu0 %v5883
    %7366 = vmatpush2.bf16.msra.mxu0 %v5882
    %7367 = vmatprep.subr.bf16.mxu0 %v5859
    %7368 = vmatpush2.bf16.msra.mxu0 %v5858
    %7369 = vmatprep.subr.bf16.mxu0 %v5835
    %7370 = vmatpush2.bf16.msra.mxu0 %v5834
    %7371 = vmatprep.subr.bf16.mxu0 %v5811
    %7372 = vmatpush2.bf16.msra.mxu0 %v5810
    %7373 = vmatprep.subr.bf16.mxu0 %v5787
    %7374 = vmatpush2.bf16.msra.mxu0 %v5786
    %7375 = vmatprep.mubr.bf16.mxu0 %v1361
    %7376 = vmatmul.mubr.bf16.gmra.mxu0 %v1360
    %v7377 = vpop.f32.mrf.mxu0
    %v7378 = vadd.f32 %v7335, %v7377
    %v7379 = vpop.f32.mrf.mxu0
    %v7380 = vadd.f32 %v7337, %v7379
    %v7381 = vpop.f32.mrf.mxu0
    %v7382 = vadd.f32 %v7339, %v7381
    %v7383 = vpop.f32.mrf.mxu0
    %v7384 = vadd.f32 %v7341, %v7383
    %7385 = vdwg.mxu0
    %7386 = vmatprep.subr.bf16.mxu0 %v4997
    %7387 = vmatpush1.bf16.msra.mxu0 %v4996
    %7388 = vmatprep.subr.bf16.mxu0 %v4973
    %7389 = vmatpush1.bf16.msra.mxu0 %v4972
    %7390 = vmatprep.subr.bf16.mxu0 %v4949
    %7391 = vmatpush1.bf16.msra.mxu0 %v4948
    %7392 = vmatprep.subr.bf16.mxu0 %v4925
    %7393 = vmatpush1.bf16.msra.mxu0 %v4924
    %7394 = vmatprep.subr.bf16.mxu0 %v4901
    %7395 = vmatpush1.bf16.msra.mxu0 %v4900
    %7396 = vmatprep.subr.bf16.mxu0 %v4877
    %7397 = vmatpush1.bf16.msra.mxu0 %v4876
    %7398 = vmatprep.subr.bf16.mxu0 %v4853
    %7399 = vmatpush1.bf16.msra.mxu0 %v4852
    %7400 = vmatprep.subr.bf16.mxu0 %v4829
    %7401 = vmatpush1.bf16.msra.mxu0 %v4828
    %7402 = vmatprep.subr.bf16.mxu0 %v5189
    %7403 = vmatpush2.bf16.msra.mxu0 %v5188
    %7404 = vmatprep.subr.bf16.mxu0 %v5165
    %7405 = vmatpush2.bf16.msra.mxu0 %v5164
    %7406 = vmatprep.subr.bf16.mxu0 %v5141
    %7407 = vmatpush2.bf16.msra.mxu0 %v5140
    %7408 = vmatprep.subr.bf16.mxu0 %v5117
    %7409 = vmatpush2.bf16.msra.mxu0 %v5116
    %7410 = vmatprep.subr.bf16.mxu0 %v5093
    %7411 = vmatpush2.bf16.msra.mxu0 %v5092
    %7412 = vmatprep.subr.bf16.mxu0 %v5069
    %7413 = vmatpush2.bf16.msra.mxu0 %v5068
    %7414 = vmatprep.subr.bf16.mxu0 %v5045
    %7415 = vmatpush2.bf16.msra.mxu0 %v5044
    %7416 = vmatprep.subr.bf16.mxu0 %v5021
    %7417 = vmatpush2.bf16.msra.mxu0 %v5020
    %7418 = vmatprep.mubr.bf16.mxu0 %v1357
    %7419 = vmatmul.mubr.bf16.gmra.mxu0 %v1356
    %v7420 = vpop.f32.mrf.mxu0
    %v7421 = vadd.f32 %v1237, %v7420
    %v7422 = vpop.f32.mrf.mxu0
    %v7423 = vadd.f32 %v1241, %v7422
    %v7424 = vpop.f32.mrf.mxu0
    %v7425 = vadd.f32 %v1237, %v7424
    %v7426 = vpop.f32.mrf.mxu0
    %v7427 = vadd.f32 %v1241, %v7426
    %7428 = vdwg.mxu0
    %7429 = vmatprep.subr.bf16.mxu0 %v5381
    %7430 = vmatpush1.bf16.msra.mxu0 %v5380
    %7431 = vmatprep.subr.bf16.mxu0 %v5357
    %7432 = vmatpush1.bf16.msra.mxu0 %v5356
    %7433 = vmatprep.subr.bf16.mxu0 %v5333
    %7434 = vmatpush1.bf16.msra.mxu0 %v5332
    %7435 = vmatprep.subr.bf16.mxu0 %v5309
    %7436 = vmatpush1.bf16.msra.mxu0 %v5308
    %7437 = vmatprep.subr.bf16.mxu0 %v5285
    %7438 = vmatpush1.bf16.msra.mxu0 %v5284
    %7439 = vmatprep.subr.bf16.mxu0 %v5261
    %7440 = vmatpush1.bf16.msra.mxu0 %v5260
    %7441 = vmatprep.subr.bf16.mxu0 %v5237
    %7442 = vmatpush1.bf16.msra.mxu0 %v5236
    %7443 = vmatprep.subr.bf16.mxu0 %v5213
    %7444 = vmatpush1.bf16.msra.mxu0 %v5212
    %7445 = vmatprep.subr.bf16.mxu0 %v5573
    %7446 = vmatpush2.bf16.msra.mxu0 %v5572
    %7447 = vmatprep.subr.bf16.mxu0 %v5549
    %7448 = vmatpush2.bf16.msra.mxu0 %v5548
    %7449 = vmatprep.subr.bf16.mxu0 %v5525
    %7450 = vmatpush2.bf16.msra.mxu0 %v5524
    %7451 = vmatprep.subr.bf16.mxu0 %v5501
    %7452 = vmatpush2.bf16.msra.mxu0 %v5500
    %7453 = vmatprep.subr.bf16.mxu0 %v5477
    %7454 = vmatpush2.bf16.msra.mxu0 %v5476
    %7455 = vmatprep.subr.bf16.mxu0 %v5453
    %7456 = vmatpush2.bf16.msra.mxu0 %v5452
    %7457 = vmatprep.subr.bf16.mxu0 %v5429
    %7458 = vmatpush2.bf16.msra.mxu0 %v5428
    %7459 = vmatprep.subr.bf16.mxu0 %v5405
    %7460 = vmatpush2.bf16.msra.mxu0 %v5404
    %7461 = vmatprep.mubr.bf16.mxu0 %v1359
    %7462 = vmatmul.mubr.bf16.gmra.mxu0 %v1358
    %v7463 = vpop.f32.mrf.mxu0
    %v7464 = vadd.f32 %v7421, %v7463
    %v7465 = vpop.f32.mrf.mxu0
    %v7466 = vadd.f32 %v7423, %v7465
    %v7467 = vpop.f32.mrf.mxu0
    %v7468 = vadd.f32 %v7425, %v7467
    %v7469 = vpop.f32.mrf.mxu0
    %v7470 = vadd.f32 %v7427, %v7469
    %7471 = vdwg.mxu0
    %7472 = vmatprep.subr.bf16.mxu0 %v5765
    %7473 = vmatpush1.bf16.msra.mxu0 %v5764
    %7474 = vmatprep.subr.bf16.mxu0 %v5741
    %7475 = vmatpush1.bf16.msra.mxu0 %v5740
    %7476 = vmatprep.subr.bf16.mxu0 %v5717
    %7477 = vmatpush1.bf16.msra.mxu0 %v5716
    %7478 = vmatprep.subr.bf16.mxu0 %v5693
    %7479 = vmatpush1.bf16.msra.mxu0 %v5692
    %7480 = vmatprep.subr.bf16.mxu0 %v5669
    %7481 = vmatpush1.bf16.msra.mxu0 %v5668
    %7482 = vmatprep.subr.bf16.mxu0 %v5645
    %7483 = vmatpush1.bf16.msra.mxu0 %v5644
    %7484 = vmatprep.subr.bf16.mxu0 %v5621
    %7485 = vmatpush1.bf16.msra.mxu0 %v5620
    %7486 = vmatprep.subr.bf16.mxu0 %v5597
    %7487 = vmatpush1.bf16.msra.mxu0 %v5596
    %7488 = vmatprep.subr.bf16.mxu0 %v5957
    %7489 = vmatpush2.bf16.msra.mxu0 %v5956
    %7490 = vmatprep.subr.bf16.mxu0 %v5933
    %7491 = vmatpush2.bf16.msra.mxu0 %v5932
    %7492 = vmatprep.subr.bf16.mxu0 %v5909
    %7493 = vmatpush2.bf16.msra.mxu0 %v5908
    %7494 = vmatprep.subr.bf16.mxu0 %v5885
    %7495 = vmatpush2.bf16.msra.mxu0 %v5884
    %7496 = vmatprep.subr.bf16.mxu0 %v5861
    %7497 = vmatpush2.bf16.msra.mxu0 %v5860
    %7498 = vmatprep.subr.bf16.mxu0 %v5837
    %7499 = vmatpush2.bf16.msra.mxu0 %v5836
    %7500 = vmatprep.subr.bf16.mxu0 %v5813
    %7501 = vmatpush2.bf16.msra.mxu0 %v5812
    %7502 = vmatprep.subr.bf16.mxu0 %v5789
    %7503 = vmatpush2.bf16.msra.mxu0 %v5788
    %7504 = vmatprep.mubr.bf16.mxu0 %v1361
    %7505 = vmatmul.mubr.bf16.gmra.mxu0 %v1360
    %v7506 = vpop.f32.mrf.mxu0
    %v7507 = vadd.f32 %v7464, %v7506
    %v7508 = vpop.f32.mrf.mxu0
    %v7509 = vadd.f32 %v7466, %v7508
    %v7510 = vpop.f32.mrf.mxu0
    %v7511 = vadd.f32 %v7468, %v7510
    %v7512 = vpop.f32.mrf.mxu0
    %v7513 = vadd.f32 %v7470, %v7512
    %7514 = vdwg.mxu0
    %7515 = vmatprep.subr.bf16.mxu0 %v4999
    %7516 = vmatpush1.bf16.msra.mxu0 %v4998
    %7517 = vmatprep.subr.bf16.mxu0 %v4975
    %7518 = vmatpush1.bf16.msra.mxu0 %v4974
    %7519 = vmatprep.subr.bf16.mxu0 %v4951
    %7520 = vmatpush1.bf16.msra.mxu0 %v4950
    %7521 = vmatprep.subr.bf16.mxu0 %v4927
    %7522 = vmatpush1.bf16.msra.mxu0 %v4926
    %7523 = vmatprep.subr.bf16.mxu0 %v4903
    %7524 = vmatpush1.bf16.msra.mxu0 %v4902
    %7525 = vmatprep.subr.bf16.mxu0 %v4879
    %7526 = vmatpush1.bf16.msra.mxu0 %v4878
    %7527 = vmatprep.subr.bf16.mxu0 %v4855
    %7528 = vmatpush1.bf16.msra.mxu0 %v4854
    %7529 = vmatprep.subr.bf16.mxu0 %v4831
    %7530 = vmatpush1.bf16.msra.mxu0 %v4830
    %7531 = vmatprep.subr.bf16.mxu0 %v5191
    %7532 = vmatpush2.bf16.msra.mxu0 %v5190
    %7533 = vmatprep.subr.bf16.mxu0 %v5167
    %7534 = vmatpush2.bf16.msra.mxu0 %v5166
    %7535 = vmatprep.subr.bf16.mxu0 %v5143
    %7536 = vmatpush2.bf16.msra.mxu0 %v5142
    %7537 = vmatprep.subr.bf16.mxu0 %v5119
    %7538 = vmatpush2.bf16.msra.mxu0 %v5118
    %7539 = vmatprep.subr.bf16.mxu0 %v5095
    %7540 = vmatpush2.bf16.msra.mxu0 %v5094
    %7541 = vmatprep.subr.bf16.mxu0 %v5071
    %7542 = vmatpush2.bf16.msra.mxu0 %v5070
    %7543 = vmatprep.subr.bf16.mxu0 %v5047
    %7544 = vmatpush2.bf16.msra.mxu0 %v5046
    %7545 = vmatprep.subr.bf16.mxu0 %v5023
    %7546 = vmatpush2.bf16.msra.mxu0 %v5022
    %7547 = vmatprep.mubr.bf16.mxu0 %v1357
    %7548 = vmatmul.mubr.bf16.gmra.mxu0 %v1356
    %v7549 = vpop.f32.mrf.mxu0
    %v7550 = vadd.f32 %v1245, %v7549
    %v7551 = vpop.f32.mrf.mxu0
    %v7552 = vadd.f32 %v1249, %v7551
    %v7553 = vpop.f32.mrf.mxu0
    %v7554 = vadd.f32 %v1245, %v7553
    %v7555 = vpop.f32.mrf.mxu0
    %v7556 = vadd.f32 %v1249, %v7555
    %7557 = vdwg.mxu0
    %7558 = vmatprep.subr.bf16.mxu0 %v5383
    %7559 = vmatpush1.bf16.msra.mxu0 %v5382
    %7560 = vmatprep.subr.bf16.mxu0 %v5359
    %7561 = vmatpush1.bf16.msra.mxu0 %v5358
    %7562 = vmatprep.subr.bf16.mxu0 %v5335
    %7563 = vmatpush1.bf16.msra.mxu0 %v5334
    %7564 = vmatprep.subr.bf16.mxu0 %v5311
    %7565 = vmatpush1.bf16.msra.mxu0 %v5310
    %7566 = vmatprep.subr.bf16.mxu0 %v5287
    %7567 = vmatpush1.bf16.msra.mxu0 %v5286
    %7568 = vmatprep.subr.bf16.mxu0 %v5263
    %7569 = vmatpush1.bf16.msra.mxu0 %v5262
    %7570 = vmatprep.subr.bf16.mxu0 %v5239
    %7571 = vmatpush1.bf16.msra.mxu0 %v5238
    %7572 = vmatprep.subr.bf16.mxu0 %v5215
    %7573 = vmatpush1.bf16.msra.mxu0 %v5214
    %7574 = vmatprep.subr.bf16.mxu0 %v5575
    %7575 = vmatpush2.bf16.msra.mxu0 %v5574
    %7576 = vmatprep.subr.bf16.mxu0 %v5551
    %7577 = vmatpush2.bf16.msra.mxu0 %v5550
    %7578 = vmatprep.subr.bf16.mxu0 %v5527
    %7579 = vmatpush2.bf16.msra.mxu0 %v5526
    %7580 = vmatprep.subr.bf16.mxu0 %v5503
    %7581 = vmatpush2.bf16.msra.mxu0 %v5502
    %7582 = vmatprep.subr.bf16.mxu0 %v5479
    %7583 = vmatpush2.bf16.msra.mxu0 %v5478
    %7584 = vmatprep.subr.bf16.mxu0 %v5455
    %7585 = vmatpush2.bf16.msra.mxu0 %v5454
    %7586 = vmatprep.subr.bf16.mxu0 %v5431
    %7587 = vmatpush2.bf16.msra.mxu0 %v5430
    %7588 = vmatprep.subr.bf16.mxu0 %v5407
    %7589 = vmatpush2.bf16.msra.mxu0 %v5406
    %7590 = vmatprep.mubr.bf16.mxu0 %v1359
    %7591 = vmatmul.mubr.bf16.gmra.mxu0 %v1358
    %v7592 = vpop.f32.mrf.mxu0
    %v7593 = vadd.f32 %v7550, %v7592
    %v7594 = vpop.f32.mrf.mxu0
    %v7595 = vadd.f32 %v7552, %v7594
    %v7596 = vpop.f32.mrf.mxu0
    %v7597 = vadd.f32 %v7554, %v7596
    %v7598 = vpop.f32.mrf.mxu0
    %v7599 = vadd.f32 %v7556, %v7598
    %7600 = vdwg.mxu0
    %7601 = vmatprep.subr.bf16.mxu0 %v5767
    %7602 = vmatpush1.bf16.msra.mxu0 %v5766
    %7603 = vmatprep.subr.bf16.mxu0 %v5743
    %7604 = vmatpush1.bf16.msra.mxu0 %v5742
    %7605 = vmatprep.subr.bf16.mxu0 %v5719
    %7606 = vmatpush1.bf16.msra.mxu0 %v5718
    %7607 = vmatprep.subr.bf16.mxu0 %v5695
    %7608 = vmatpush1.bf16.msra.mxu0 %v5694
    %7609 = vmatprep.subr.bf16.mxu0 %v5671
    %7610 = vmatpush1.bf16.msra.mxu0 %v5670
    %7611 = vmatprep.subr.bf16.mxu0 %v5647
    %7612 = vmatpush1.bf16.msra.mxu0 %v5646
    %7613 = vmatprep.subr.bf16.mxu0 %v5623
    %7614 = vmatpush1.bf16.msra.mxu0 %v5622
    %7615 = vmatprep.subr.bf16.mxu0 %v5599
    %7616 = vmatpush1.bf16.msra.mxu0 %v5598
    %7617 = vmatprep.subr.bf16.mxu0 %v5959
    %7618 = vmatpush2.bf16.msra.mxu0 %v5958
    %7619 = vmatprep.subr.bf16.mxu0 %v5935
    %7620 = vmatpush2.bf16.msra.mxu0 %v5934
    %7621 = vmatprep.subr.bf16.mxu0 %v5911
    %7622 = vmatpush2.bf16.msra.mxu0 %v5910
    %7623 = vmatprep.subr.bf16.mxu0 %v5887
    %7624 = vmatpush2.bf16.msra.mxu0 %v5886
    %7625 = vmatprep.subr.bf16.mxu0 %v5863
    %7626 = vmatpush2.bf16.msra.mxu0 %v5862
    %7627 = vmatprep.subr.bf16.mxu0 %v5839
    %7628 = vmatpush2.bf16.msra.mxu0 %v5838
    %7629 = vmatprep.subr.bf16.mxu0 %v5815
    %7630 = vmatpush2.bf16.msra.mxu0 %v5814
    %7631 = vmatprep.subr.bf16.mxu0 %v5791
    %7632 = vmatpush2.bf16.msra.mxu0 %v5790
    %7633 = vmatprep.mubr.bf16.mxu0 %v1361
    %7634 = vmatmul.mubr.bf16.gmra.mxu0 %v1360
    %v7635 = vpop.f32.mrf.mxu0
    %v7636 = vadd.f32 %v7593, %v7635
    %v7637 = vpop.f32.mrf.mxu0
    %v7638 = vadd.f32 %v7595, %v7637
    %v7639 = vpop.f32.mrf.mxu0
    %v7640 = vadd.f32 %v7597, %v7639
    %v7641 = vpop.f32.mrf.mxu0
    %v7642 = vadd.f32 %v7599, %v7641
    %7643 = vdwg.mxu0
    %7644 = vmatprep.subr.bf16.mxu0 %v5001
    %7645 = vmatpush1.bf16.msra.mxu0 %v5000
    %7646 = vmatprep.subr.bf16.mxu0 %v4977
    %7647 = vmatpush1.bf16.msra.mxu0 %v4976
    %7648 = vmatprep.subr.bf16.mxu0 %v4953
    %7649 = vmatpush1.bf16.msra.mxu0 %v4952
    %7650 = vmatprep.subr.bf16.mxu0 %v4929
    %7651 = vmatpush1.bf16.msra.mxu0 %v4928
    %7652 = vmatprep.subr.bf16.mxu0 %v4905
    %7653 = vmatpush1.bf16.msra.mxu0 %v4904
    %7654 = vmatprep.subr.bf16.mxu0 %v4881
    %7655 = vmatpush1.bf16.msra.mxu0 %v4880
    %7656 = vmatprep.subr.bf16.mxu0 %v4857
    %7657 = vmatpush1.bf16.msra.mxu0 %v4856
    %7658 = vmatprep.subr.bf16.mxu0 %v4833
    %7659 = vmatpush1.bf16.msra.mxu0 %v4832
    %7660 = vmatprep.subr.bf16.mxu0 %v5193
    %7661 = vmatpush2.bf16.msra.mxu0 %v5192
    %7662 = vmatprep.subr.bf16.mxu0 %v5169
    %7663 = vmatpush2.bf16.msra.mxu0 %v5168
    %7664 = vmatprep.subr.bf16.mxu0 %v5145
    %7665 = vmatpush2.bf16.msra.mxu0 %v5144
    %7666 = vmatprep.subr.bf16.mxu0 %v5121
    %7667 = vmatpush2.bf16.msra.mxu0 %v5120
    %7668 = vmatprep.subr.bf16.mxu0 %v5097
    %7669 = vmatpush2.bf16.msra.mxu0 %v5096
    %7670 = vmatprep.subr.bf16.mxu0 %v5073
    %7671 = vmatpush2.bf16.msra.mxu0 %v5072
    %7672 = vmatprep.subr.bf16.mxu0 %v5049
    %7673 = vmatpush2.bf16.msra.mxu0 %v5048
    %7674 = vmatprep.subr.bf16.mxu0 %v5025
    %7675 = vmatpush2.bf16.msra.mxu0 %v5024
    %7676 = vmatprep.mubr.bf16.mxu0 %v1357
    %7677 = vmatmul.mubr.bf16.gmra.mxu0 %v1356
    %v7678 = vpop.f32.mrf.mxu0
    %v7679 = vadd.f32 %v1253, %v7678
    %v7680 = vpop.f32.mrf.mxu0
    %v7681 = vadd.f32 %v1257, %v7680
    %v7682 = vpop.f32.mrf.mxu0
    %v7683 = vadd.f32 %v1253, %v7682
    %v7684 = vpop.f32.mrf.mxu0
    %v7685 = vadd.f32 %v1257, %v7684
    %7686 = vdwg.mxu0
    %7687 = vmatprep.subr.bf16.mxu0 %v5385
    %7688 = vmatpush1.bf16.msra.mxu0 %v5384
    %7689 = vmatprep.subr.bf16.mxu0 %v5361
    %7690 = vmatpush1.bf16.msra.mxu0 %v5360
    %7691 = vmatprep.subr.bf16.mxu0 %v5337
    %7692 = vmatpush1.bf16.msra.mxu0 %v5336
    %7693 = vmatprep.subr.bf16.mxu0 %v5313
    %7694 = vmatpush1.bf16.msra.mxu0 %v5312
    %7695 = vmatprep.subr.bf16.mxu0 %v5289
    %7696 = vmatpush1.bf16.msra.mxu0 %v5288
    %7697 = vmatprep.subr.bf16.mxu0 %v5265
    %7698 = vmatpush1.bf16.msra.mxu0 %v5264
    %7699 = vmatprep.subr.bf16.mxu0 %v5241
    %7700 = vmatpush1.bf16.msra.mxu0 %v5240
    %7701 = vmatprep.subr.bf16.mxu0 %v5217
    %7702 = vmatpush1.bf16.msra.mxu0 %v5216
    %7703 = vmatprep.subr.bf16.mxu0 %v5577
    %7704 = vmatpush2.bf16.msra.mxu0 %v5576
    %7705 = vmatprep.subr.bf16.mxu0 %v5553
    %7706 = vmatpush2.bf16.msra.mxu0 %v5552
    %7707 = vmatprep.subr.bf16.mxu0 %v5529
    %7708 = vmatpush2.bf16.msra.mxu0 %v5528
    %7709 = vmatprep.subr.bf16.mxu0 %v5505
    %7710 = vmatpush2.bf16.msra.mxu0 %v5504
    %7711 = vmatprep.subr.bf16.mxu0 %v5481
    %7712 = vmatpush2.bf16.msra.mxu0 %v5480
    %7713 = vmatprep.subr.bf16.mxu0 %v5457
    %7714 = vmatpush2.bf16.msra.mxu0 %v5456
    %7715 = vmatprep.subr.bf16.mxu0 %v5433
    %7716 = vmatpush2.bf16.msra.mxu0 %v5432
    %7717 = vmatprep.subr.bf16.mxu0 %v5409
    %7718 = vmatpush2.bf16.msra.mxu0 %v5408
    %7719 = vmatprep.mubr.bf16.mxu0 %v1359
    %7720 = vmatmul.mubr.bf16.gmra.mxu0 %v1358
    %v7721 = vpop.f32.mrf.mxu0
    %v7722 = vadd.f32 %v7679, %v7721
    %v7723 = vpop.f32.mrf.mxu0
    %v7724 = vadd.f32 %v7681, %v7723
    %v7725 = vpop.f32.mrf.mxu0
    %v7726 = vadd.f32 %v7683, %v7725
    %v7727 = vpop.f32.mrf.mxu0
    %v7728 = vadd.f32 %v7685, %v7727
    %7729 = vdwg.mxu0
    %7730 = vmatprep.subr.bf16.mxu0 %v5769
    %7731 = vmatpush1.bf16.msra.mxu0 %v5768
    %7732 = vmatprep.subr.bf16.mxu0 %v5745
    %7733 = vmatpush1.bf16.msra.mxu0 %v5744
    %7734 = vmatprep.subr.bf16.mxu0 %v5721
    %7735 = vmatpush1.bf16.msra.mxu0 %v5720
    %7736 = vmatprep.subr.bf16.mxu0 %v5697
    %7737 = vmatpush1.bf16.msra.mxu0 %v5696
    %7738 = vmatprep.subr.bf16.mxu0 %v5673
    %7739 = vmatpush1.bf16.msra.mxu0 %v5672
    %7740 = vmatprep.subr.bf16.mxu0 %v5649
    %7741 = vmatpush1.bf16.msra.mxu0 %v5648
    %7742 = vmatprep.subr.bf16.mxu0 %v5625
    %7743 = vmatpush1.bf16.msra.mxu0 %v5624
    %7744 = vmatprep.subr.bf16.mxu0 %v5601
    %7745 = vmatpush1.bf16.msra.mxu0 %v5600
    %7746 = vmatprep.subr.bf16.mxu0 %v5961
    %7747 = vmatpush2.bf16.msra.mxu0 %v5960
    %7748 = vmatprep.subr.bf16.mxu0 %v5937
    %7749 = vmatpush2.bf16.msra.mxu0 %v5936
    %7750 = vmatprep.subr.bf16.mxu0 %v5913
    %7751 = vmatpush2.bf16.msra.mxu0 %v5912
    %7752 = vmatprep.subr.bf16.mxu0 %v5889
    %7753 = vmatpush2.bf16.msra.mxu0 %v5888
    %7754 = vmatprep.subr.bf16.mxu0 %v5865
    %7755 = vmatpush2.bf16.msra.mxu0 %v5864
    %7756 = vmatprep.subr.bf16.mxu0 %v5841
    %7757 = vmatpush2.bf16.msra.mxu0 %v5840
    %7758 = vmatprep.subr.bf16.mxu0 %v5817
    %7759 = vmatpush2.bf16.msra.mxu0 %v5816
    %7760 = vmatprep.subr.bf16.mxu0 %v5793
    %7761 = vmatpush2.bf16.msra.mxu0 %v5792
    %7762 = vmatprep.mubr.bf16.mxu0 %v1361
    %7763 = vmatmul.mubr.bf16.gmra.mxu0 %v1360
    %v7764 = vpop.f32.mrf.mxu0
    %v7765 = vadd.f32 %v7722, %v7764
    %v7766 = vpop.f32.mrf.mxu0
    %v7767 = vadd.f32 %v7724, %v7766
    %v7768 = vpop.f32.mrf.mxu0
    %v7769 = vadd.f32 %v7726, %v7768
    %v7770 = vpop.f32.mrf.mxu0
    %v7771 = vadd.f32 %v7728, %v7770
    %7772 = vdwg.mxu0
    %7773 = vmatprep.subr.bf16.mxu0 %v5003
    %7774 = vmatpush1.bf16.msra.mxu0 %v5002
    %7775 = vmatprep.subr.bf16.mxu0 %v4979
    %7776 = vmatpush1.bf16.msra.mxu0 %v4978
    %7777 = vmatprep.subr.bf16.mxu0 %v4955
    %7778 = vmatpush1.bf16.msra.mxu0 %v4954
    %7779 = vmatprep.subr.bf16.mxu0 %v4931
    %7780 = vmatpush1.bf16.msra.mxu0 %v4930
    %7781 = vmatprep.subr.bf16.mxu0 %v4907
    %7782 = vmatpush1.bf16.msra.mxu0 %v4906
    %7783 = vmatprep.subr.bf16.mxu0 %v4883
    %7784 = vmatpush1.bf16.msra.mxu0 %v4882
    %7785 = vmatprep.subr.bf16.mxu0 %v4859
    %7786 = vmatpush1.bf16.msra.mxu0 %v4858
    %7787 = vmatprep.subr.bf16.mxu0 %v4835
    %7788 = vmatpush1.bf16.msra.mxu0 %v4834
    %7789 = vmatprep.subr.bf16.mxu0 %v5195
    %7790 = vmatpush2.bf16.msra.mxu0 %v5194
    %7791 = vmatprep.subr.bf16.mxu0 %v5171
    %7792 = vmatpush2.bf16.msra.mxu0 %v5170
    %7793 = vmatprep.subr.bf16.mxu0 %v5147
    %7794 = vmatpush2.bf16.msra.mxu0 %v5146
    %7795 = vmatprep.subr.bf16.mxu0 %v5123
    %7796 = vmatpush2.bf16.msra.mxu0 %v5122
    %7797 = vmatprep.subr.bf16.mxu0 %v5099
    %7798 = vmatpush2.bf16.msra.mxu0 %v5098
    %7799 = vmatprep.subr.bf16.mxu0 %v5075
    %7800 = vmatpush2.bf16.msra.mxu0 %v5074
    %7801 = vmatprep.subr.bf16.mxu0 %v5051
    %7802 = vmatpush2.bf16.msra.mxu0 %v5050
    %7803 = vmatprep.subr.bf16.mxu0 %v5027
    %7804 = vmatpush2.bf16.msra.mxu0 %v5026
    %7805 = vmatprep.mubr.bf16.mxu0 %v1357
    %7806 = vmatmul.mubr.bf16.gmra.mxu0 %v1356
    %v7807 = vpop.f32.mrf.mxu0
    %v7808 = vadd.f32 %v1261, %v7807
    %v7809 = vpop.f32.mrf.mxu0
    %v7810 = vadd.f32 %v1265, %v7809
    %v7811 = vpop.f32.mrf.mxu0
    %v7812 = vadd.f32 %v1261, %v7811
    %v7813 = vpop.f32.mrf.mxu0
    %v7814 = vadd.f32 %v1265, %v7813
    %7815 = vdwg.mxu0
    %7816 = vmatprep.subr.bf16.mxu0 %v5387
    %7817 = vmatpush1.bf16.msra.mxu0 %v5386
    %7818 = vmatprep.subr.bf16.mxu0 %v5363
    %7819 = vmatpush1.bf16.msra.mxu0 %v5362
    %7820 = vmatprep.subr.bf16.mxu0 %v5339
    %7821 = vmatpush1.bf16.msra.mxu0 %v5338
    %7822 = vmatprep.subr.bf16.mxu0 %v5315
    %7823 = vmatpush1.bf16.msra.mxu0 %v5314
    %7824 = vmatprep.subr.bf16.mxu0 %v5291
    %7825 = vmatpush1.bf16.msra.mxu0 %v5290
    %7826 = vmatprep.subr.bf16.mxu0 %v5267
    %7827 = vmatpush1.bf16.msra.mxu0 %v5266
    %7828 = vmatprep.subr.bf16.mxu0 %v5243
    %7829 = vmatpush1.bf16.msra.mxu0 %v5242
    %7830 = vmatprep.subr.bf16.mxu0 %v5219
    %7831 = vmatpush1.bf16.msra.mxu0 %v5218
    %7832 = vmatprep.subr.bf16.mxu0 %v5579
    %7833 = vmatpush2.bf16.msra.mxu0 %v5578
    %7834 = vmatprep.subr.bf16.mxu0 %v5555
    %7835 = vmatpush2.bf16.msra.mxu0 %v5554
    %7836 = vmatprep.subr.bf16.mxu0 %v5531
    %7837 = vmatpush2.bf16.msra.mxu0 %v5530
    %7838 = vmatprep.subr.bf16.mxu0 %v5507
    %7839 = vmatpush2.bf16.msra.mxu0 %v5506
    %7840 = vmatprep.subr.bf16.mxu0 %v5483
    %7841 = vmatpush2.bf16.msra.mxu0 %v5482
    %7842 = vmatprep.subr.bf16.mxu0 %v5459
    %7843 = vmatpush2.bf16.msra.mxu0 %v5458
    %7844 = vmatprep.subr.bf16.mxu0 %v5435
    %7845 = vmatpush2.bf16.msra.mxu0 %v5434
    %7846 = vmatprep.subr.bf16.mxu0 %v5411
    %7847 = vmatpush2.bf16.msra.mxu0 %v5410
    %7848 = vmatprep.mubr.bf16.mxu0 %v1359
    %7849 = vmatmul.mubr.bf16.gmra.mxu0 %v1358
    %v7850 = vpop.f32.mrf.mxu0
    %v7851 = vadd.f32 %v7808, %v7850
    %v7852 = vpop.f32.mrf.mxu0
    %v7853 = vadd.f32 %v7810, %v7852
    %v7854 = vpop.f32.mrf.mxu0
    %v7855 = vadd.f32 %v7812, %v7854
    %v7856 = vpop.f32.mrf.mxu0
    %v7857 = vadd.f32 %v7814, %v7856
    %7858 = vdwg.mxu0
    %7859 = vmatprep.subr.bf16.mxu0 %v5771
    %7860 = vmatpush1.bf16.msra.mxu0 %v5770
    %7861 = vmatprep.subr.bf16.mxu0 %v5747
    %7862 = vmatpush1.bf16.msra.mxu0 %v5746
    %7863 = vmatprep.subr.bf16.mxu0 %v5723
    %7864 = vmatpush1.bf16.msra.mxu0 %v5722
    %7865 = vmatprep.subr.bf16.mxu0 %v5699
    %7866 = vmatpush1.bf16.msra.mxu0 %v5698
    %7867 = vmatprep.subr.bf16.mxu0 %v5675
    %7868 = vmatpush1.bf16.msra.mxu0 %v5674
    %7869 = vmatprep.subr.bf16.mxu0 %v5651
    %7870 = vmatpush1.bf16.msra.mxu0 %v5650
    %7871 = vmatprep.subr.bf16.mxu0 %v5627
    %7872 = vmatpush1.bf16.msra.mxu0 %v5626
    %7873 = vmatprep.subr.bf16.mxu0 %v5603
    %7874 = vmatpush1.bf16.msra.mxu0 %v5602
    %7875 = vmatprep.subr.bf16.mxu0 %v5963
    %7876 = vmatpush2.bf16.msra.mxu0 %v5962
    %7877 = vmatprep.subr.bf16.mxu0 %v5939
    %7878 = vmatpush2.bf16.msra.mxu0 %v5938
    %7879 = vmatprep.subr.bf16.mxu0 %v5915
    %7880 = vmatpush2.bf16.msra.mxu0 %v5914
    %7881 = vmatprep.subr.bf16.mxu0 %v5891
    %7882 = vmatpush2.bf16.msra.mxu0 %v5890
    %7883 = vmatprep.subr.bf16.mxu0 %v5867
    %7884 = vmatpush2.bf16.msra.mxu0 %v5866
    %7885 = vmatprep.subr.bf16.mxu0 %v5843
    %7886 = vmatpush2.bf16.msra.mxu0 %v5842
    %7887 = vmatprep.subr.bf16.mxu0 %v5819
    %7888 = vmatpush2.bf16.msra.mxu0 %v5818
    %7889 = vmatprep.subr.bf16.mxu0 %v5795
    %7890 = vmatpush2.bf16.msra.mxu0 %v5794
    %7891 = vmatprep.mubr.bf16.mxu0 %v1361
    %7892 = vmatmul.mubr.bf16.gmra.mxu0 %v1360
    %v7893 = vpop.f32.mrf.mxu0
    %v7894 = vadd.f32 %v7851, %v7893
    %v7895 = vpop.f32.mrf.mxu0
    %v7896 = vadd.f32 %v7853, %v7895
    %v7897 = vpop.f32.mrf.mxu0
    %v7898 = vadd.f32 %v7855, %v7897
    %v7899 = vpop.f32.mrf.mxu0
    %v7900 = vadd.f32 %v7857, %v7899
    %7901 = vdwg.mxu0
    %7902 = vmatprep.subr.bf16.mxu0 %v5005
    %7903 = vmatpush1.bf16.msra.mxu0 %v5004
    %7904 = vmatprep.subr.bf16.mxu0 %v4981
    %7905 = vmatpush1.bf16.msra.mxu0 %v4980
    %7906 = vmatprep.subr.bf16.mxu0 %v4957
    %7907 = vmatpush1.bf16.msra.mxu0 %v4956
    %7908 = vmatprep.subr.bf16.mxu0 %v4933
    %7909 = vmatpush1.bf16.msra.mxu0 %v4932
    %7910 = vmatprep.subr.bf16.mxu0 %v4909
    %7911 = vmatpush1.bf16.msra.mxu0 %v4908
    %7912 = vmatprep.subr.bf16.mxu0 %v4885
    %7913 = vmatpush1.bf16.msra.mxu0 %v4884
    %7914 = vmatprep.subr.bf16.mxu0 %v4861
    %7915 = vmatpush1.bf16.msra.mxu0 %v4860
    %7916 = vmatprep.subr.bf16.mxu0 %v4837
    %7917 = vmatpush1.bf16.msra.mxu0 %v4836
    %7918 = vmatprep.subr.bf16.mxu0 %v5197
    %7919 = vmatpush2.bf16.msra.mxu0 %v5196
    %7920 = vmatprep.subr.bf16.mxu0 %v5173
    %7921 = vmatpush2.bf16.msra.mxu0 %v5172
    %7922 = vmatprep.subr.bf16.mxu0 %v5149
    %7923 = vmatpush2.bf16.msra.mxu0 %v5148
    %7924 = vmatprep.subr.bf16.mxu0 %v5125
    %7925 = vmatpush2.bf16.msra.mxu0 %v5124
    %7926 = vmatprep.subr.bf16.mxu0 %v5101
    %7927 = vmatpush2.bf16.msra.mxu0 %v5100
    %7928 = vmatprep.subr.bf16.mxu0 %v5077
    %7929 = vmatpush2.bf16.msra.mxu0 %v5076
    %7930 = vmatprep.subr.bf16.mxu0 %v5053
    %7931 = vmatpush2.bf16.msra.mxu0 %v5052
    %7932 = vmatprep.subr.bf16.mxu0 %v5029
    %7933 = vmatpush2.bf16.msra.mxu0 %v5028
    %7934 = vmatprep.mubr.bf16.mxu0 %v1357
    %7935 = vmatmul.mubr.bf16.gmra.mxu0 %v1356
    %v7936 = vpop.f32.mrf.mxu0
    %v7937 = vadd.f32 %v1269, %v7936
    %v7938 = vpop.f32.mrf.mxu0
    %v7939 = vadd.f32 %v1273, %v7938
    %v7940 = vpop.f32.mrf.mxu0
    %v7941 = vadd.f32 %v1269, %v7940
    %v7942 = vpop.f32.mrf.mxu0
    %v7943 = vadd.f32 %v1273, %v7942
    %7944 = vdwg.mxu0
    %7945 = vmatprep.subr.bf16.mxu0 %v5389
    %7946 = vmatpush1.bf16.msra.mxu0 %v5388
    %7947 = vmatprep.subr.bf16.mxu0 %v5365
    %7948 = vmatpush1.bf16.msra.mxu0 %v5364
    %7949 = vmatprep.subr.bf16.mxu0 %v5341
    %7950 = vmatpush1.bf16.msra.mxu0 %v5340
    %7951 = vmatprep.subr.bf16.mxu0 %v5317
    %7952 = vmatpush1.bf16.msra.mxu0 %v5316
    %7953 = vmatprep.subr.bf16.mxu0 %v5293
    %7954 = vmatpush1.bf16.msra.mxu0 %v5292
    %7955 = vmatprep.subr.bf16.mxu0 %v5269
    %7956 = vmatpush1.bf16.msra.mxu0 %v5268
    %7957 = vmatprep.subr.bf16.mxu0 %v5245
    %7958 = vmatpush1.bf16.msra.mxu0 %v5244
    %7959 = vmatprep.subr.bf16.mxu0 %v5221
    %7960 = vmatpush1.bf16.msra.mxu0 %v5220
    %7961 = vmatprep.subr.bf16.mxu0 %v5581
    %7962 = vmatpush2.bf16.msra.mxu0 %v5580
    %7963 = vmatprep.subr.bf16.mxu0 %v5557
    %7964 = vmatpush2.bf16.msra.mxu0 %v5556
    %7965 = vmatprep.subr.bf16.mxu0 %v5533
    %7966 = vmatpush2.bf16.msra.mxu0 %v5532
    %7967 = vmatprep.subr.bf16.mxu0 %v5509
    %7968 = vmatpush2.bf16.msra.mxu0 %v5508
    %7969 = vmatprep.subr.bf16.mxu0 %v5485
    %7970 = vmatpush2.bf16.msra.mxu0 %v5484
    %7971 = vmatprep.subr.bf16.mxu0 %v5461
    %7972 = vmatpush2.bf16.msra.mxu0 %v5460
    %7973 = vmatprep.subr.bf16.mxu0 %v5437
    %7974 = vmatpush2.bf16.msra.mxu0 %v5436
    %7975 = vmatprep.subr.bf16.mxu0 %v5413
    %7976 = vmatpush2.bf16.msra.mxu0 %v5412
    %7977 = vmatprep.mubr.bf16.mxu0 %v1359
    %7978 = vmatmul.mubr.bf16.gmra.mxu0 %v1358
    %v7979 = vpop.f32.mrf.mxu0
    %v7980 = vadd.f32 %v7937, %v7979
    %v7981 = vpop.f32.mrf.mxu0
    %v7982 = vadd.f32 %v7939, %v7981
    %v7983 = vpop.f32.mrf.mxu0
    %v7984 = vadd.f32 %v7941, %v7983
    %v7985 = vpop.f32.mrf.mxu0
    %v7986 = vadd.f32 %v7943, %v7985
    %7987 = vdwg.mxu0
    %7988 = vmatprep.subr.bf16.mxu0 %v5773
    %7989 = vmatpush1.bf16.msra.mxu0 %v5772
    %7990 = vmatprep.subr.bf16.mxu0 %v5749
    %7991 = vmatpush1.bf16.msra.mxu0 %v5748
    %7992 = vmatprep.subr.bf16.mxu0 %v5725
    %7993 = vmatpush1.bf16.msra.mxu0 %v5724
    %7994 = vmatprep.subr.bf16.mxu0 %v5701
    %7995 = vmatpush1.bf16.msra.mxu0 %v5700
    %7996 = vmatprep.subr.bf16.mxu0 %v5677
    %7997 = vmatpush1.bf16.msra.mxu0 %v5676
    %7998 = vmatprep.subr.bf16.mxu0 %v5653
    %7999 = vmatpush1.bf16.msra.mxu0 %v5652
    %8000 = vmatprep.subr.bf16.mxu0 %v5629
    %8001 = vmatpush1.bf16.msra.mxu0 %v5628
    %8002 = vmatprep.subr.bf16.mxu0 %v5605
    %8003 = vmatpush1.bf16.msra.mxu0 %v5604
    %8004 = vmatprep.subr.bf16.mxu0 %v5965
    %8005 = vmatpush2.bf16.msra.mxu0 %v5964
    %8006 = vmatprep.subr.bf16.mxu0 %v5941
    %8007 = vmatpush2.bf16.msra.mxu0 %v5940
    %8008 = vmatprep.subr.bf16.mxu0 %v5917
    %8009 = vmatpush2.bf16.msra.mxu0 %v5916
    %8010 = vmatprep.subr.bf16.mxu0 %v5893
    %8011 = vmatpush2.bf16.msra.mxu0 %v5892
    %8012 = vmatprep.subr.bf16.mxu0 %v5869
    %8013 = vmatpush2.bf16.msra.mxu0 %v5868
    %8014 = vmatprep.subr.bf16.mxu0 %v5845
    %8015 = vmatpush2.bf16.msra.mxu0 %v5844
    %8016 = vmatprep.subr.bf16.mxu0 %v5821
    %8017 = vmatpush2.bf16.msra.mxu0 %v5820
    %8018 = vmatprep.subr.bf16.mxu0 %v5797
    %8019 = vmatpush2.bf16.msra.mxu0 %v5796
    %8020 = vmatprep.mubr.bf16.mxu0 %v1361
    %8021 = vmatmul.mubr.bf16.gmra.mxu0 %v1360
    %v8022 = vpop.f32.mrf.mxu0
    %v8023 = vadd.f32 %v7980, %v8022
    %v8024 = vpop.f32.mrf.mxu0
    %v8025 = vadd.f32 %v7982, %v8024
    %v8026 = vpop.f32.mrf.mxu0
    %v8027 = vadd.f32 %v7984, %v8026
    %v8028 = vpop.f32.mrf.mxu0
    %v8029 = vadd.f32 %v7986, %v8028
    %8030 = vdwg.mxu0
    %8031 = vmatprep.subr.bf16.mxu0 %v5007
    %8032 = vmatpush1.bf16.msra.mxu0 %v5006
    %8033 = vmatprep.subr.bf16.mxu0 %v4983
    %8034 = vmatpush1.bf16.msra.mxu0 %v4982
    %8035 = vmatprep.subr.bf16.mxu0 %v4959
    %8036 = vmatpush1.bf16.msra.mxu0 %v4958
    %8037 = vmatprep.subr.bf16.mxu0 %v4935
    %8038 = vmatpush1.bf16.msra.mxu0 %v4934
    %8039 = vmatprep.subr.bf16.mxu0 %v4911
    %8040 = vmatpush1.bf16.msra.mxu0 %v4910
    %8041 = vmatprep.subr.bf16.mxu0 %v4887
    %8042 = vmatpush1.bf16.msra.mxu0 %v4886
    %8043 = vmatprep.subr.bf16.mxu0 %v4863
    %8044 = vmatpush1.bf16.msra.mxu0 %v4862
    %8045 = vmatprep.subr.bf16.mxu0 %v4839
    %8046 = vmatpush1.bf16.msra.mxu0 %v4838
    %8047 = vmatprep.subr.bf16.mxu0 %v5199
    %8048 = vmatpush2.bf16.msra.mxu0 %v5198
    %8049 = vmatprep.subr.bf16.mxu0 %v5175
    %8050 = vmatpush2.bf16.msra.mxu0 %v5174
    %8051 = vmatprep.subr.bf16.mxu0 %v5151
    %8052 = vmatpush2.bf16.msra.mxu0 %v5150
    %8053 = vmatprep.subr.bf16.mxu0 %v5127
    %8054 = vmatpush2.bf16.msra.mxu0 %v5126
    %8055 = vmatprep.subr.bf16.mxu0 %v5103
    %8056 = vmatpush2.bf16.msra.mxu0 %v5102
    %8057 = vmatprep.subr.bf16.mxu0 %v5079
    %8058 = vmatpush2.bf16.msra.mxu0 %v5078
    %8059 = vmatprep.subr.bf16.mxu0 %v5055
    %8060 = vmatpush2.bf16.msra.mxu0 %v5054
    %8061 = vmatprep.subr.bf16.mxu0 %v5031
    %8062 = vmatpush2.bf16.msra.mxu0 %v5030
    %8063 = vmatprep.mubr.bf16.mxu0 %v1357
    %8064 = vmatmul.mubr.bf16.gmra.mxu0 %v1356
    %v8065 = vpop.f32.mrf.mxu0
    %v8066 = vadd.f32 %v1277, %v8065
    %v8067 = vpop.f32.mrf.mxu0
    %v8068 = vadd.f32 %v1281, %v8067
    %v8069 = vpop.f32.mrf.mxu0
    %v8070 = vadd.f32 %v1277, %v8069
    %v8071 = vpop.f32.mrf.mxu0
    %v8072 = vadd.f32 %v1281, %v8071
    %8073 = vdwg.mxu0
    %8074 = vmatprep.subr.bf16.mxu0 %v5391
    %8075 = vmatpush1.bf16.msra.mxu0 %v5390
    %8076 = vmatprep.subr.bf16.mxu0 %v5367
    %8077 = vmatpush1.bf16.msra.mxu0 %v5366
    %8078 = vmatprep.subr.bf16.mxu0 %v5343
    %8079 = vmatpush1.bf16.msra.mxu0 %v5342
    %8080 = vmatprep.subr.bf16.mxu0 %v5319
    %8081 = vmatpush1.bf16.msra.mxu0 %v5318
    %8082 = vmatprep.subr.bf16.mxu0 %v5295
    %8083 = vmatpush1.bf16.msra.mxu0 %v5294
    %8084 = vmatprep.subr.bf16.mxu0 %v5271
    %8085 = vmatpush1.bf16.msra.mxu0 %v5270
    %8086 = vmatprep.subr.bf16.mxu0 %v5247
    %8087 = vmatpush1.bf16.msra.mxu0 %v5246
    %8088 = vmatprep.subr.bf16.mxu0 %v5223
    %8089 = vmatpush1.bf16.msra.mxu0 %v5222
    %8090 = vmatprep.subr.bf16.mxu0 %v5583
    %8091 = vmatpush2.bf16.msra.mxu0 %v5582
    %8092 = vmatprep.subr.bf16.mxu0 %v5559
    %8093 = vmatpush2.bf16.msra.mxu0 %v5558
    %8094 = vmatprep.subr.bf16.mxu0 %v5535
    %8095 = vmatpush2.bf16.msra.mxu0 %v5534
    %8096 = vmatprep.subr.bf16.mxu0 %v5511
    %8097 = vmatpush2.bf16.msra.mxu0 %v5510
    %8098 = vmatprep.subr.bf16.mxu0 %v5487
    %8099 = vmatpush2.bf16.msra.mxu0 %v5486
    %8100 = vmatprep.subr.bf16.mxu0 %v5463
    %8101 = vmatpush2.bf16.msra.mxu0 %v5462
    %8102 = vmatprep.subr.bf16.mxu0 %v5439
    %8103 = vmatpush2.bf16.msra.mxu0 %v5438
    %8104 = vmatprep.subr.bf16.mxu0 %v5415
    %8105 = vmatpush2.bf16.msra.mxu0 %v5414
    %8106 = vmatprep.mubr.bf16.mxu0 %v1359
    %8107 = vmatmul.mubr.bf16.gmra.mxu0 %v1358
    %v8108 = vpop.f32.mrf.mxu0
    %v8109 = vadd.f32 %v8066, %v8108
    %v8110 = vpop.f32.mrf.mxu0
    %v8111 = vadd.f32 %v8068, %v8110
    %v8112 = vpop.f32.mrf.mxu0
    %v8113 = vadd.f32 %v8070, %v8112
    %v8114 = vpop.f32.mrf.mxu0
    %v8115 = vadd.f32 %v8072, %v8114
    %8116 = vdwg.mxu0
    %8117 = vmatprep.subr.bf16.mxu0 %v5775
    %8118 = vmatpush1.bf16.msra.mxu0 %v5774
    %8119 = vmatprep.subr.bf16.mxu0 %v5751
    %8120 = vmatpush1.bf16.msra.mxu0 %v5750
    %8121 = vmatprep.subr.bf16.mxu0 %v5727
    %8122 = vmatpush1.bf16.msra.mxu0 %v5726
    %8123 = vmatprep.subr.bf16.mxu0 %v5703
    %8124 = vmatpush1.bf16.msra.mxu0 %v5702
    %8125 = vmatprep.subr.bf16.mxu0 %v5679
    %8126 = vmatpush1.bf16.msra.mxu0 %v5678
    %8127 = vmatprep.subr.bf16.mxu0 %v5655
    %8128 = vmatpush1.bf16.msra.mxu0 %v5654
    %8129 = vmatprep.subr.bf16.mxu0 %v5631
    %8130 = vmatpush1.bf16.msra.mxu0 %v5630
    %8131 = vmatprep.subr.bf16.mxu0 %v5607
    %8132 = vmatpush1.bf16.msra.mxu0 %v5606
    %8133 = vmatprep.subr.bf16.mxu0 %v5967
    %8134 = vmatpush2.bf16.msra.mxu0 %v5966
    %8135 = vmatprep.subr.bf16.mxu0 %v5943
    %8136 = vmatpush2.bf16.msra.mxu0 %v5942
    %8137 = vmatprep.subr.bf16.mxu0 %v5919
    %8138 = vmatpush2.bf16.msra.mxu0 %v5918
    %8139 = vmatprep.subr.bf16.mxu0 %v5895
    %8140 = vmatpush2.bf16.msra.mxu0 %v5894
    %8141 = vmatprep.subr.bf16.mxu0 %v5871
    %8142 = vmatpush2.bf16.msra.mxu0 %v5870
    %8143 = vmatprep.subr.bf16.mxu0 %v5847
    %8144 = vmatpush2.bf16.msra.mxu0 %v5846
    %8145 = vmatprep.subr.bf16.mxu0 %v5823
    %8146 = vmatpush2.bf16.msra.mxu0 %v5822
    %8147 = vmatprep.subr.bf16.mxu0 %v5799
    %8148 = vmatpush2.bf16.msra.mxu0 %v5798
    %8149 = vmatprep.mubr.bf16.mxu0 %v1361
    %8150 = vmatmul.mubr.bf16.gmra.mxu0 %v1360
    %v8151 = vpop.f32.mrf.mxu0
    %v8152 = vadd.f32 %v8109, %v8151
    %v8153 = vpop.f32.mrf.mxu0
    %v8154 = vadd.f32 %v8111, %v8153
    %v8155 = vpop.f32.mrf.mxu0
    %v8156 = vadd.f32 %v8113, %v8155
    %v8157 = vpop.f32.mrf.mxu0
    %v8158 = vadd.f32 %v8115, %v8157
    %8159 = vdwg.mxu0
    %8160 = vmatprep.subr.bf16.mxu0 %v5009
    %8161 = vmatpush1.bf16.msra.mxu0 %v5008
    %8162 = vmatprep.subr.bf16.mxu0 %v4985
    %8163 = vmatpush1.bf16.msra.mxu0 %v4984
    %8164 = vmatprep.subr.bf16.mxu0 %v4961
    %8165 = vmatpush1.bf16.msra.mxu0 %v4960
    %8166 = vmatprep.subr.bf16.mxu0 %v4937
    %8167 = vmatpush1.bf16.msra.mxu0 %v4936
    %8168 = vmatprep.subr.bf16.mxu0 %v4913
    %8169 = vmatpush1.bf16.msra.mxu0 %v4912
    %8170 = vmatprep.subr.bf16.mxu0 %v4889
    %8171 = vmatpush1.bf16.msra.mxu0 %v4888
    %8172 = vmatprep.subr.bf16.mxu0 %v4865
    %8173 = vmatpush1.bf16.msra.mxu0 %v4864
    %8174 = vmatprep.subr.bf16.mxu0 %v4841
    %8175 = vmatpush1.bf16.msra.mxu0 %v4840
    %8176 = vmatprep.subr.bf16.mxu0 %v5201
    %8177 = vmatpush2.bf16.msra.mxu0 %v5200
    %8178 = vmatprep.subr.bf16.mxu0 %v5177
    %8179 = vmatpush2.bf16.msra.mxu0 %v5176
    %8180 = vmatprep.subr.bf16.mxu0 %v5153
    %8181 = vmatpush2.bf16.msra.mxu0 %v5152
    %8182 = vmatprep.subr.bf16.mxu0 %v5129
    %8183 = vmatpush2.bf16.msra.mxu0 %v5128
    %8184 = vmatprep.subr.bf16.mxu0 %v5105
    %8185 = vmatpush2.bf16.msra.mxu0 %v5104
    %8186 = vmatprep.subr.bf16.mxu0 %v5081
    %8187 = vmatpush2.bf16.msra.mxu0 %v5080
    %8188 = vmatprep.subr.bf16.mxu0 %v5057
    %8189 = vmatpush2.bf16.msra.mxu0 %v5056
    %8190 = vmatprep.subr.bf16.mxu0 %v5033
    %8191 = vmatpush2.bf16.msra.mxu0 %v5032
    %8192 = vmatprep.mubr.bf16.mxu0 %v1357
    %8193 = vmatmul.mubr.bf16.gmra.mxu0 %v1356
    %v8194 = vpop.f32.mrf.mxu0
    %v8195 = vadd.f32 %v1285, %v8194
    %v8196 = vpop.f32.mrf.mxu0
    %v8197 = vadd.f32 %v1289, %v8196
    %v8198 = vpop.f32.mrf.mxu0
    %v8199 = vadd.f32 %v1285, %v8198
    %v8200 = vpop.f32.mrf.mxu0
    %v8201 = vadd.f32 %v1289, %v8200
    %8202 = vdwg.mxu0
    %8203 = vmatprep.subr.bf16.mxu0 %v5393
    %8204 = vmatpush1.bf16.msra.mxu0 %v5392
    %8205 = vmatprep.subr.bf16.mxu0 %v5369
    %8206 = vmatpush1.bf16.msra.mxu0 %v5368
    %8207 = vmatprep.subr.bf16.mxu0 %v5345
    %8208 = vmatpush1.bf16.msra.mxu0 %v5344
    %8209 = vmatprep.subr.bf16.mxu0 %v5321
    %8210 = vmatpush1.bf16.msra.mxu0 %v5320
    %8211 = vmatprep.subr.bf16.mxu0 %v5297
    %8212 = vmatpush1.bf16.msra.mxu0 %v5296
    %8213 = vmatprep.subr.bf16.mxu0 %v5273
    %8214 = vmatpush1.bf16.msra.mxu0 %v5272
    %8215 = vmatprep.subr.bf16.mxu0 %v5249
    %8216 = vmatpush1.bf16.msra.mxu0 %v5248
    %8217 = vmatprep.subr.bf16.mxu0 %v5225
    %8218 = vmatpush1.bf16.msra.mxu0 %v5224
    %8219 = vmatprep.subr.bf16.mxu0 %v5585
    %8220 = vmatpush2.bf16.msra.mxu0 %v5584
    %8221 = vmatprep.subr.bf16.mxu0 %v5561
    %8222 = vmatpush2.bf16.msra.mxu0 %v5560
    %8223 = vmatprep.subr.bf16.mxu0 %v5537
    %8224 = vmatpush2.bf16.msra.mxu0 %v5536
    %8225 = vmatprep.subr.bf16.mxu0 %v5513
    %8226 = vmatpush2.bf16.msra.mxu0 %v5512
    %8227 = vmatprep.subr.bf16.mxu0 %v5489
    %8228 = vmatpush2.bf16.msra.mxu0 %v5488
    %8229 = vmatprep.subr.bf16.mxu0 %v5465
    %8230 = vmatpush2.bf16.msra.mxu0 %v5464
    %8231 = vmatprep.subr.bf16.mxu0 %v5441
    %8232 = vmatpush2.bf16.msra.mxu0 %v5440
    %8233 = vmatprep.subr.bf16.mxu0 %v5417
    %8234 = vmatpush2.bf16.msra.mxu0 %v5416
    %8235 = vmatprep.mubr.bf16.mxu0 %v1359
    %8236 = vmatmul.mubr.bf16.gmra.mxu0 %v1358
    %v8237 = vpop.f32.mrf.mxu0
    %v8238 = vadd.f32 %v8195, %v8237
    %v8239 = vpop.f32.mrf.mxu0
    %v8240 = vadd.f32 %v8197, %v8239
    %v8241 = vpop.f32.mrf.mxu0
    %v8242 = vadd.f32 %v8199, %v8241
    %v8243 = vpop.f32.mrf.mxu0
    %v8244 = vadd.f32 %v8201, %v8243
    %8245 = vdwg.mxu0
    %8246 = vmatprep.subr.bf16.mxu0 %v5777
    %8247 = vmatpush1.bf16.msra.mxu0 %v5776
    %8248 = vmatprep.subr.bf16.mxu0 %v5753
    %8249 = vmatpush1.bf16.msra.mxu0 %v5752
    %8250 = vmatprep.subr.bf16.mxu0 %v5729
    %8251 = vmatpush1.bf16.msra.mxu0 %v5728
    %8252 = vmatprep.subr.bf16.mxu0 %v5705
    %8253 = vmatpush1.bf16.msra.mxu0 %v5704
    %8254 = vmatprep.subr.bf16.mxu0 %v5681
    %8255 = vmatpush1.bf16.msra.mxu0 %v5680
    %8256 = vmatprep.subr.bf16.mxu0 %v5657
    %8257 = vmatpush1.bf16.msra.mxu0 %v5656
    %8258 = vmatprep.subr.bf16.mxu0 %v5633
    %8259 = vmatpush1.bf16.msra.mxu0 %v5632
    %8260 = vmatprep.subr.bf16.mxu0 %v5609
    %8261 = vmatpush1.bf16.msra.mxu0 %v5608
    %8262 = vmatprep.subr.bf16.mxu0 %v5969
    %8263 = vmatpush2.bf16.msra.mxu0 %v5968
    %8264 = vmatprep.subr.bf16.mxu0 %v5945
    %8265 = vmatpush2.bf16.msra.mxu0 %v5944
    %8266 = vmatprep.subr.bf16.mxu0 %v5921
    %8267 = vmatpush2.bf16.msra.mxu0 %v5920
    %8268 = vmatprep.subr.bf16.mxu0 %v5897
    %8269 = vmatpush2.bf16.msra.mxu0 %v5896
    %8270 = vmatprep.subr.bf16.mxu0 %v5873
    %8271 = vmatpush2.bf16.msra.mxu0 %v5872
    %8272 = vmatprep.subr.bf16.mxu0 %v5849
    %8273 = vmatpush2.bf16.msra.mxu0 %v5848
    %8274 = vmatprep.subr.bf16.mxu0 %v5825
    %8275 = vmatpush2.bf16.msra.mxu0 %v5824
    %8276 = vmatprep.subr.bf16.mxu0 %v5801
    %8277 = vmatpush2.bf16.msra.mxu0 %v5800
    %8278 = vmatprep.mubr.bf16.mxu0 %v1361
    %8279 = vmatmul.mubr.bf16.gmra.mxu0 %v1360
    %v8280 = vpop.f32.mrf.mxu0
    %v8281 = vadd.f32 %v8238, %v8280
    %v8282 = vpop.f32.mrf.mxu0
    %v8283 = vadd.f32 %v8240, %v8282
    %v8284 = vpop.f32.mrf.mxu0
    %v8285 = vadd.f32 %v8242, %v8284
    %v8286 = vpop.f32.mrf.mxu0
    %v8287 = vadd.f32 %v8244, %v8286
    %8288 = vdwg.mxu0
    %8289 = vmatprep.subr.bf16.mxu0 %v5011
    %8290 = vmatpush1.bf16.msra.mxu0 %v5010
    %8291 = vmatprep.subr.bf16.mxu0 %v4987
    %8292 = vmatpush1.bf16.msra.mxu0 %v4986
    %8293 = vmatprep.subr.bf16.mxu0 %v4963
    %8294 = vmatpush1.bf16.msra.mxu0 %v4962
    %8295 = vmatprep.subr.bf16.mxu0 %v4939
    %8296 = vmatpush1.bf16.msra.mxu0 %v4938
    %8297 = vmatprep.subr.bf16.mxu0 %v4915
    %8298 = vmatpush1.bf16.msra.mxu0 %v4914
    %8299 = vmatprep.subr.bf16.mxu0 %v4891
    %8300 = vmatpush1.bf16.msra.mxu0 %v4890
    %8301 = vmatprep.subr.bf16.mxu0 %v4867
    %8302 = vmatpush1.bf16.msra.mxu0 %v4866
    %8303 = vmatprep.subr.bf16.mxu0 %v4843
    %8304 = vmatpush1.bf16.msra.mxu0 %v4842
    %8305 = vmatprep.subr.bf16.mxu0 %v5203
    %8306 = vmatpush2.bf16.msra.mxu0 %v5202
    %8307 = vmatprep.subr.bf16.mxu0 %v5179
    %8308 = vmatpush2.bf16.msra.mxu0 %v5178
    %8309 = vmatprep.subr.bf16.mxu0 %v5155
    %8310 = vmatpush2.bf16.msra.mxu0 %v5154
    %8311 = vmatprep.subr.bf16.mxu0 %v5131
    %8312 = vmatpush2.bf16.msra.mxu0 %v5130
    %8313 = vmatprep.subr.bf16.mxu0 %v5107
    %8314 = vmatpush2.bf16.msra.mxu0 %v5106
    %8315 = vmatprep.subr.bf16.mxu0 %v5083
    %8316 = vmatpush2.bf16.msra.mxu0 %v5082
    %8317 = vmatprep.subr.bf16.mxu0 %v5059
    %8318 = vmatpush2.bf16.msra.mxu0 %v5058
    %8319 = vmatprep.subr.bf16.mxu0 %v5035
    %8320 = vmatpush2.bf16.msra.mxu0 %v5034
    %8321 = vmatprep.mubr.bf16.mxu0 %v1357
    %8322 = vmatmul.mubr.bf16.gmra.mxu0 %v1356
    %v8323 = vpop.f32.mrf.mxu0
    %v8324 = vadd.f32 %v1293, %v8323
    %v8325 = vpop.f32.mrf.mxu0
    %v8326 = vadd.f32 %v1297, %v8325
    %v8327 = vpop.f32.mrf.mxu0
    %v8328 = vadd.f32 %v1293, %v8327
    %v8329 = vpop.f32.mrf.mxu0
    %v8330 = vadd.f32 %v1297, %v8329
    %8331 = vdwg.mxu0
    %8332 = vmatprep.subr.bf16.mxu0 %v5395
    %8333 = vmatpush1.bf16.msra.mxu0 %v5394
    %8334 = vmatprep.subr.bf16.mxu0 %v5371
    %8335 = vmatpush1.bf16.msra.mxu0 %v5370
    %8336 = vmatprep.subr.bf16.mxu0 %v5347
    %8337 = vmatpush1.bf16.msra.mxu0 %v5346
    %8338 = vmatprep.subr.bf16.mxu0 %v5323
    %8339 = vmatpush1.bf16.msra.mxu0 %v5322
    %8340 = vmatprep.subr.bf16.mxu0 %v5299
    %8341 = vmatpush1.bf16.msra.mxu0 %v5298
    %8342 = vmatprep.subr.bf16.mxu0 %v5275
    %8343 = vmatpush1.bf16.msra.mxu0 %v5274
    %8344 = vmatprep.subr.bf16.mxu0 %v5251
    %8345 = vmatpush1.bf16.msra.mxu0 %v5250
    %8346 = vmatprep.subr.bf16.mxu0 %v5227
    %8347 = vmatpush1.bf16.msra.mxu0 %v5226
    %8348 = vmatprep.subr.bf16.mxu0 %v5587
    %8349 = vmatpush2.bf16.msra.mxu0 %v5586
    %8350 = vmatprep.subr.bf16.mxu0 %v5563
    %8351 = vmatpush2.bf16.msra.mxu0 %v5562
    %8352 = vmatprep.subr.bf16.mxu0 %v5539
    %8353 = vmatpush2.bf16.msra.mxu0 %v5538
    %8354 = vmatprep.subr.bf16.mxu0 %v5515
    %8355 = vmatpush2.bf16.msra.mxu0 %v5514
    %8356 = vmatprep.subr.bf16.mxu0 %v5491
    %8357 = vmatpush2.bf16.msra.mxu0 %v5490
    %8358 = vmatprep.subr.bf16.mxu0 %v5467
    %8359 = vmatpush2.bf16.msra.mxu0 %v5466
    %8360 = vmatprep.subr.bf16.mxu0 %v5443
    %8361 = vmatpush2.bf16.msra.mxu0 %v5442
    %8362 = vmatprep.subr.bf16.mxu0 %v5419
    %8363 = vmatpush2.bf16.msra.mxu0 %v5418
    %8364 = vmatprep.mubr.bf16.mxu0 %v1359
    %8365 = vmatmul.mubr.bf16.gmra.mxu0 %v1358
    %v8366 = vpop.f32.mrf.mxu0
    %v8367 = vadd.f32 %v8324, %v8366
    %v8368 = vpop.f32.mrf.mxu0
    %v8369 = vadd.f32 %v8326, %v8368
    %v8370 = vpop.f32.mrf.mxu0
    %v8371 = vadd.f32 %v8328, %v8370
    %v8372 = vpop.f32.mrf.mxu0
    %v8373 = vadd.f32 %v8330, %v8372
    %8374 = vdwg.mxu0
    %8375 = vmatprep.subr.bf16.mxu0 %v5779
    %8376 = vmatpush1.bf16.msra.mxu0 %v5778
    %8377 = vmatprep.subr.bf16.mxu0 %v5755
    %8378 = vmatpush1.bf16.msra.mxu0 %v5754
    %8379 = vmatprep.subr.bf16.mxu0 %v5731
    %8380 = vmatpush1.bf16.msra.mxu0 %v5730
    %8381 = vmatprep.subr.bf16.mxu0 %v5707
    %8382 = vmatpush1.bf16.msra.mxu0 %v5706
    %8383 = vmatprep.subr.bf16.mxu0 %v5683
    %8384 = vmatpush1.bf16.msra.mxu0 %v5682
    %8385 = vmatprep.subr.bf16.mxu0 %v5659
    %8386 = vmatpush1.bf16.msra.mxu0 %v5658
    %8387 = vmatprep.subr.bf16.mxu0 %v5635
    %8388 = vmatpush1.bf16.msra.mxu0 %v5634
    %8389 = vmatprep.subr.bf16.mxu0 %v5611
    %8390 = vmatpush1.bf16.msra.mxu0 %v5610
    %8391 = vmatprep.subr.bf16.mxu0 %v5971
    %8392 = vmatpush2.bf16.msra.mxu0 %v5970
    %8393 = vmatprep.subr.bf16.mxu0 %v5947
    %8394 = vmatpush2.bf16.msra.mxu0 %v5946
    %8395 = vmatprep.subr.bf16.mxu0 %v5923
    %8396 = vmatpush2.bf16.msra.mxu0 %v5922
    %8397 = vmatprep.subr.bf16.mxu0 %v5899
    %8398 = vmatpush2.bf16.msra.mxu0 %v5898
    %8399 = vmatprep.subr.bf16.mxu0 %v5875
    %8400 = vmatpush2.bf16.msra.mxu0 %v5874
    %8401 = vmatprep.subr.bf16.mxu0 %v5851
    %8402 = vmatpush2.bf16.msra.mxu0 %v5850
    %8403 = vmatprep.subr.bf16.mxu0 %v5827
    %8404 = vmatpush2.bf16.msra.mxu0 %v5826
    %8405 = vmatprep.subr.bf16.mxu0 %v5803
    %8406 = vmatpush2.bf16.msra.mxu0 %v5802
    %8407 = vmatprep.mubr.bf16.mxu0 %v1361
    %8408 = vmatmul.mubr.bf16.gmra.mxu0 %v1360
    %v8409 = vpop.f32.mrf.mxu0
    %v8410 = vadd.f32 %v8367, %v8409
    %v8411 = vpop.f32.mrf.mxu0
    %v8412 = vadd.f32 %v8369, %v8411
    %v8413 = vpop.f32.mrf.mxu0
    %v8414 = vadd.f32 %v8371, %v8413
    %v8415 = vpop.f32.mrf.mxu0
    %v8416 = vadd.f32 %v8373, %v8415
    %8417 = vdwg.mxu0
    %8418 = vmatprep.subr.bf16.mxu0 %v5013
    %8419 = vmatpush1.bf16.msra.mxu0 %v5012
    %8420 = vmatprep.subr.bf16.mxu0 %v4989
    %8421 = vmatpush1.bf16.msra.mxu0 %v4988
    %8422 = vmatprep.subr.bf16.mxu0 %v4965
    %8423 = vmatpush1.bf16.msra.mxu0 %v4964
    %8424 = vmatprep.subr.bf16.mxu0 %v4941
    %8425 = vmatpush1.bf16.msra.mxu0 %v4940
    %8426 = vmatprep.subr.bf16.mxu0 %v4917
    %8427 = vmatpush1.bf16.msra.mxu0 %v4916
    %8428 = vmatprep.subr.bf16.mxu0 %v4893
    %8429 = vmatpush1.bf16.msra.mxu0 %v4892
    %8430 = vmatprep.subr.bf16.mxu0 %v4869
    %8431 = vmatpush1.bf16.msra.mxu0 %v4868
    %8432 = vmatprep.subr.bf16.mxu0 %v4845
    %8433 = vmatpush1.bf16.msra.mxu0 %v4844
    %8434 = vmatprep.subr.bf16.mxu0 %v5205
    %8435 = vmatpush2.bf16.msra.mxu0 %v5204
    %8436 = vmatprep.subr.bf16.mxu0 %v5181
    %8437 = vmatpush2.bf16.msra.mxu0 %v5180
    %8438 = vmatprep.subr.bf16.mxu0 %v5157
    %8439 = vmatpush2.bf16.msra.mxu0 %v5156
    %8440 = vmatprep.subr.bf16.mxu0 %v5133
    %8441 = vmatpush2.bf16.msra.mxu0 %v5132
    %8442 = vmatprep.subr.bf16.mxu0 %v5109
    %8443 = vmatpush2.bf16.msra.mxu0 %v5108
    %8444 = vmatprep.subr.bf16.mxu0 %v5085
    %8445 = vmatpush2.bf16.msra.mxu0 %v5084
    %8446 = vmatprep.subr.bf16.mxu0 %v5061
    %8447 = vmatpush2.bf16.msra.mxu0 %v5060
    %8448 = vmatprep.subr.bf16.mxu0 %v5037
    %8449 = vmatpush2.bf16.msra.mxu0 %v5036
    %8450 = vmatprep.mubr.bf16.mxu0 %v1357
    %8451 = vmatmul.mubr.bf16.gmra.mxu0 %v1356
    %v8452 = vpop.f32.mrf.mxu0
    %v8453 = vadd.f32 %v1301, %v8452
    %v8454 = vpop.f32.mrf.mxu0
    %v8455 = vadd.f32 %v1305, %v8454
    %v8456 = vpop.f32.mrf.mxu0
    %v8457 = vadd.f32 %v1301, %v8456
    %v8458 = vpop.f32.mrf.mxu0
    %v8459 = vadd.f32 %v1305, %v8458
    %8460 = vdwg.mxu0
    %8461 = vmatprep.subr.bf16.mxu0 %v5397
    %8462 = vmatpush1.bf16.msra.mxu0 %v5396
    %8463 = vmatprep.subr.bf16.mxu0 %v5373
    %8464 = vmatpush1.bf16.msra.mxu0 %v5372
    %8465 = vmatprep.subr.bf16.mxu0 %v5349
    %8466 = vmatpush1.bf16.msra.mxu0 %v5348
    %8467 = vmatprep.subr.bf16.mxu0 %v5325
    %8468 = vmatpush1.bf16.msra.mxu0 %v5324
    %8469 = vmatprep.subr.bf16.mxu0 %v5301
    %8470 = vmatpush1.bf16.msra.mxu0 %v5300
    %8471 = vmatprep.subr.bf16.mxu0 %v5277
    %8472 = vmatpush1.bf16.msra.mxu0 %v5276
    %8473 = vmatprep.subr.bf16.mxu0 %v5253
    %8474 = vmatpush1.bf16.msra.mxu0 %v5252
    %8475 = vmatprep.subr.bf16.mxu0 %v5229
    %8476 = vmatpush1.bf16.msra.mxu0 %v5228
    %8477 = vmatprep.subr.bf16.mxu0 %v5589
    %8478 = vmatpush2.bf16.msra.mxu0 %v5588
    %8479 = vmatprep.subr.bf16.mxu0 %v5565
    %8480 = vmatpush2.bf16.msra.mxu0 %v5564
    %8481 = vmatprep.subr.bf16.mxu0 %v5541
    %8482 = vmatpush2.bf16.msra.mxu0 %v5540
    %8483 = vmatprep.subr.bf16.mxu0 %v5517
    %8484 = vmatpush2.bf16.msra.mxu0 %v5516
    %8485 = vmatprep.subr.bf16.mxu0 %v5493
    %8486 = vmatpush2.bf16.msra.mxu0 %v5492
    %8487 = vmatprep.subr.bf16.mxu0 %v5469
    %8488 = vmatpush2.bf16.msra.mxu0 %v5468
    %8489 = vmatprep.subr.bf16.mxu0 %v5445
    %8490 = vmatpush2.bf16.msra.mxu0 %v5444
    %8491 = vmatprep.subr.bf16.mxu0 %v5421
    %8492 = vmatpush2.bf16.msra.mxu0 %v5420
    %8493 = vmatprep.mubr.bf16.mxu0 %v1359
    %8494 = vmatmul.mubr.bf16.gmra.mxu0 %v1358
    %v8495 = vpop.f32.mrf.mxu0
    %v8496 = vadd.f32 %v8453, %v8495
    %v8497 = vpop.f32.mrf.mxu0
    %v8498 = vadd.f32 %v8455, %v8497
    %v8499 = vpop.f32.mrf.mxu0
    %v8500 = vadd.f32 %v8457, %v8499
    %v8501 = vpop.f32.mrf.mxu0
    %v8502 = vadd.f32 %v8459, %v8501
    %8503 = vdwg.mxu0
    %8504 = vmatprep.subr.bf16.mxu0 %v5781
    %8505 = vmatpush1.bf16.msra.mxu0 %v5780
    %8506 = vmatprep.subr.bf16.mxu0 %v5757
    %8507 = vmatpush1.bf16.msra.mxu0 %v5756
    %8508 = vmatprep.subr.bf16.mxu0 %v5733
    %8509 = vmatpush1.bf16.msra.mxu0 %v5732
    %8510 = vmatprep.subr.bf16.mxu0 %v5709
    %8511 = vmatpush1.bf16.msra.mxu0 %v5708
    %8512 = vmatprep.subr.bf16.mxu0 %v5685
    %8513 = vmatpush1.bf16.msra.mxu0 %v5684
    %8514 = vmatprep.subr.bf16.mxu0 %v5661
    %8515 = vmatpush1.bf16.msra.mxu0 %v5660
    %8516 = vmatprep.subr.bf16.mxu0 %v5637
    %8517 = vmatpush1.bf16.msra.mxu0 %v5636
    %8518 = vmatprep.subr.bf16.mxu0 %v5613
    %8519 = vmatpush1.bf16.msra.mxu0 %v5612
    %8520 = vmatprep.subr.bf16.mxu0 %v5973
    %8521 = vmatpush2.bf16.msra.mxu0 %v5972
    %8522 = vmatprep.subr.bf16.mxu0 %v5949
    %8523 = vmatpush2.bf16.msra.mxu0 %v5948
    %8524 = vmatprep.subr.bf16.mxu0 %v5925
    %8525 = vmatpush2.bf16.msra.mxu0 %v5924
    %8526 = vmatprep.subr.bf16.mxu0 %v5901
    %8527 = vmatpush2.bf16.msra.mxu0 %v5900
    %8528 = vmatprep.subr.bf16.mxu0 %v5877
    %8529 = vmatpush2.bf16.msra.mxu0 %v5876
    %8530 = vmatprep.subr.bf16.mxu0 %v5853
    %8531 = vmatpush2.bf16.msra.mxu0 %v5852
    %8532 = vmatprep.subr.bf16.mxu0 %v5829
    %8533 = vmatpush2.bf16.msra.mxu0 %v5828
    %8534 = vmatprep.subr.bf16.mxu0 %v5805
    %8535 = vmatpush2.bf16.msra.mxu0 %v5804
    %8536 = vmatprep.mubr.bf16.mxu0 %v1361
    %8537 = vmatmul.mubr.bf16.gmra.mxu0 %v1360
    %v8538 = vpop.f32.mrf.mxu0
    %v8539 = vadd.f32 %v8496, %v8538
    %v8540 = vpop.f32.mrf.mxu0
    %v8541 = vadd.f32 %v8498, %v8540
    %v8542 = vpop.f32.mrf.mxu0
    %v8543 = vadd.f32 %v8500, %v8542
    %v8544 = vpop.f32.mrf.mxu0
    %v8545 = vadd.f32 %v8502, %v8544
    %8546 = vdwg.mxu0
    %8547 = vmatprep.subr.bf16.mxu0 %v5015
    %8548 = vmatpush1.bf16.msra.mxu0 %v5014
    %8549 = vmatprep.subr.bf16.mxu0 %v4991
    %8550 = vmatpush1.bf16.msra.mxu0 %v4990
    %8551 = vmatprep.subr.bf16.mxu0 %v4967
    %8552 = vmatpush1.bf16.msra.mxu0 %v4966
    %8553 = vmatprep.subr.bf16.mxu0 %v4943
    %8554 = vmatpush1.bf16.msra.mxu0 %v4942
    %8555 = vmatprep.subr.bf16.mxu0 %v4919
    %8556 = vmatpush1.bf16.msra.mxu0 %v4918
    %8557 = vmatprep.subr.bf16.mxu0 %v4895
    %8558 = vmatpush1.bf16.msra.mxu0 %v4894
    %8559 = vmatprep.subr.bf16.mxu0 %v4871
    %8560 = vmatpush1.bf16.msra.mxu0 %v4870
    %8561 = vmatprep.subr.bf16.mxu0 %v4847
    %8562 = vmatpush1.bf16.msra.mxu0 %v4846
    %8563 = vmatprep.subr.bf16.mxu0 %v5207
    %8564 = vmatpush2.bf16.msra.mxu0 %v5206
    %8565 = vmatprep.subr.bf16.mxu0 %v5183
    %8566 = vmatpush2.bf16.msra.mxu0 %v5182
    %8567 = vmatprep.subr.bf16.mxu0 %v5159
    %8568 = vmatpush2.bf16.msra.mxu0 %v5158
    %8569 = vmatprep.subr.bf16.mxu0 %v5135
    %8570 = vmatpush2.bf16.msra.mxu0 %v5134
    %8571 = vmatprep.subr.bf16.mxu0 %v5111
    %8572 = vmatpush2.bf16.msra.mxu0 %v5110
    %8573 = vmatprep.subr.bf16.mxu0 %v5087
    %8574 = vmatpush2.bf16.msra.mxu0 %v5086
    %8575 = vmatprep.subr.bf16.mxu0 %v5063
    %8576 = vmatpush2.bf16.msra.mxu0 %v5062
    %8577 = vmatprep.subr.bf16.mxu0 %v5039
    %8578 = vmatpush2.bf16.msra.mxu0 %v5038
    %8579 = vmatprep.mubr.bf16.mxu0 %v1357
    %8580 = vmatmul.mubr.bf16.gmra.mxu0 %v1356
    %v8581 = vpop.f32.mrf.mxu0
    %v8582 = vadd.f32 %v1309, %v8581
    %v8583 = vpop.f32.mrf.mxu0
    %v8584 = vadd.f32 %v1313, %v8583
    %v8585 = vpop.f32.mrf.mxu0
    %v8586 = vadd.f32 %v1309, %v8585
    %v8587 = vpop.f32.mrf.mxu0
    %v8588 = vadd.f32 %v1313, %v8587
    %8589 = vdwg.mxu0
    %8590 = vmatprep.subr.bf16.mxu0 %v5399
    %8591 = vmatpush1.bf16.msra.mxu0 %v5398
    %8592 = vmatprep.subr.bf16.mxu0 %v5375
    %8593 = vmatpush1.bf16.msra.mxu0 %v5374
    %8594 = vmatprep.subr.bf16.mxu0 %v5351
    %8595 = vmatpush1.bf16.msra.mxu0 %v5350
    %8596 = vmatprep.subr.bf16.mxu0 %v5327
    %8597 = vmatpush1.bf16.msra.mxu0 %v5326
    %8598 = vmatprep.subr.bf16.mxu0 %v5303
    %8599 = vmatpush1.bf16.msra.mxu0 %v5302
    %8600 = vmatprep.subr.bf16.mxu0 %v5279
    %8601 = vmatpush1.bf16.msra.mxu0 %v5278
    %8602 = vmatprep.subr.bf16.mxu0 %v5255
    %8603 = vmatpush1.bf16.msra.mxu0 %v5254
    %8604 = vmatprep.subr.bf16.mxu0 %v5231
    %8605 = vmatpush1.bf16.msra.mxu0 %v5230
    %8606 = vmatprep.subr.bf16.mxu0 %v5591
    %8607 = vmatpush2.bf16.msra.mxu0 %v5590
    %8608 = vmatprep.subr.bf16.mxu0 %v5567
    %8609 = vmatpush2.bf16.msra.mxu0 %v5566
    %8610 = vmatprep.subr.bf16.mxu0 %v5543
    %8611 = vmatpush2.bf16.msra.mxu0 %v5542
    %8612 = vmatprep.subr.bf16.mxu0 %v5519
    %8613 = vmatpush2.bf16.msra.mxu0 %v5518
    %8614 = vmatprep.subr.bf16.mxu0 %v5495
    %8615 = vmatpush2.bf16.msra.mxu0 %v5494
    %8616 = vmatprep.subr.bf16.mxu0 %v5471
    %8617 = vmatpush2.bf16.msra.mxu0 %v5470
    %8618 = vmatprep.subr.bf16.mxu0 %v5447
    %8619 = vmatpush2.bf16.msra.mxu0 %v5446
    %8620 = vmatprep.subr.bf16.mxu0 %v5423
    %8621 = vmatpush2.bf16.msra.mxu0 %v5422
    %8622 = vmatprep.mubr.bf16.mxu0 %v1359
    %8623 = vmatmul.mubr.bf16.gmra.mxu0 %v1358
    %v8624 = vpop.f32.mrf.mxu0
    %v8625 = vadd.f32 %v8582, %v8624
    %v8626 = vpop.f32.mrf.mxu0
    %v8627 = vadd.f32 %v8584, %v8626
    %v8628 = vpop.f32.mrf.mxu0
    %v8629 = vadd.f32 %v8586, %v8628
    %v8630 = vpop.f32.mrf.mxu0
    %v8631 = vadd.f32 %v8588, %v8630
    %8632 = vdwg.mxu0
    %8633 = vmatprep.subr.bf16.mxu0 %v5783
    %8634 = vmatpush1.bf16.msra.mxu0 %v5782
    %8635 = vmatprep.subr.bf16.mxu0 %v5759
    %8636 = vmatpush1.bf16.msra.mxu0 %v5758
    %8637 = vmatprep.subr.bf16.mxu0 %v5735
    %8638 = vmatpush1.bf16.msra.mxu0 %v5734
    %8639 = vmatprep.subr.bf16.mxu0 %v5711
    %8640 = vmatpush1.bf16.msra.mxu0 %v5710
    %8641 = vmatprep.subr.bf16.mxu0 %v5687
    %8642 = vmatpush1.bf16.msra.mxu0 %v5686
    %8643 = vmatprep.subr.bf16.mxu0 %v5663
    %8644 = vmatpush1.bf16.msra.mxu0 %v5662
    %8645 = vmatprep.subr.bf16.mxu0 %v5639
    %8646 = vmatpush1.bf16.msra.mxu0 %v5638
    %8647 = vmatprep.subr.bf16.mxu0 %v5615
    %8648 = vmatpush1.bf16.msra.mxu0 %v5614
    %8649 = vmatprep.subr.bf16.mxu0 %v5975
    %8650 = vmatpush2.bf16.msra.mxu0 %v5974
    %8651 = vmatprep.subr.bf16.mxu0 %v5951
    %8652 = vmatpush2.bf16.msra.mxu0 %v5950
    %8653 = vmatprep.subr.bf16.mxu0 %v5927
    %8654 = vmatpush2.bf16.msra.mxu0 %v5926
    %8655 = vmatprep.subr.bf16.mxu0 %v5903
    %8656 = vmatpush2.bf16.msra.mxu0 %v5902
    %8657 = vmatprep.subr.bf16.mxu0 %v5879
    %8658 = vmatpush2.bf16.msra.mxu0 %v5878
    %8659 = vmatprep.subr.bf16.mxu0 %v5855
    %8660 = vmatpush2.bf16.msra.mxu0 %v5854
    %8661 = vmatprep.subr.bf16.mxu0 %v5831
    %8662 = vmatpush2.bf16.msra.mxu0 %v5830
    %8663 = vmatprep.subr.bf16.mxu0 %v5807
    %8664 = vmatpush2.bf16.msra.mxu0 %v5806
    %8665 = vmatprep.mubr.bf16.mxu0 %v1361
    %8666 = vmatmul.mubr.bf16.gmra.mxu0 %v1360
    %v8667 = vpop.f32.mrf.mxu0
    %v8668 = vadd.f32 %v8625, %v8667
    %v8669 = vpop.f32.mrf.mxu0
    %v8670 = vadd.f32 %v8627, %v8669
    %v8671 = vpop.f32.mrf.mxu0
    %v8672 = vadd.f32 %v8629, %v8671
    %v8673 = vpop.f32.mrf.mxu0
    %v8674 = vadd.f32 %v8631, %v8673
    %8675 = vdwg.mxu0
    %v8676 = vmul.f32 %v7249, 0.5
    %v8677 = vmul.f32 %v7251, 0.5
    %v8678 = vmul.f32 %v7378, 0.5
    %v8679 = vmul.f32 %v7380, 0.5
    %v8680 = vmul.f32 %v7507, 0.5
    %v8681 = vmul.f32 %v7509, 0.5
    %v8682 = vmul.f32 %v7636, 0.5
    %v8683 = vmul.f32 %v7638, 0.5
    %v8684 = vmul.f32 %v7765, 0.5
    %v8685 = vmul.f32 %v7767, 0.5
    %v8686 = vmul.f32 %v7894, 0.5
    %v8687 = vmul.f32 %v7896, 0.5
    %v8688 = vmul.f32 %v8023, 0.5
    %v8689 = vmul.f32 %v8025, 0.5
    %v8690 = vmul.f32 %v8152, 0.5
    %v8691 = vmul.f32 %v8154, 0.5
    %v8692 = vmul.f32 %v8281, 0.5
    %v8693 = vmul.f32 %v8283, 0.5
    %v8694 = vmul.f32 %v8410, 0.5
    %v8695 = vmul.f32 %v8412, 0.5
    %v8696 = vmul.f32 %v8539, 0.5
    %v8697 = vmul.f32 %v8541, 0.5
    %v8698 = vmul.f32 %v8668, 0.5
    %v8699 = vmul.f32 %v8670, 0.5
    %v8700 = vmul.f32 %v7253, 0.5
    %v8701 = vmul.f32 %v7255, 0.5
    %v8702 = vmul.f32 %v7382, 0.5
    %v8703 = vmul.f32 %v7384, 0.5
    %v8704 = vmul.f32 %v7511, 0.5
    %v8705 = vmul.f32 %v7513, 0.5
    %v8706 = vmul.f32 %v7640, 0.5
    %v8707 = vmul.f32 %v7642, 0.5
    %v8708 = vmul.f32 %v7769, 0.5
    %v8709 = vmul.f32 %v7771, 0.5
    %v8710 = vmul.f32 %v7898, 0.5
    %v8711 = vmul.f32 %v7900, 0.5
    %v8712 = vmul.f32 %v8027, 0.5
    %v8713 = vmul.f32 %v8029, 0.5
    %v8714 = vmul.f32 %v8156, 0.5
    %v8715 = vmul.f32 %v8158, 0.5
    %v8716 = vmul.f32 %v8285, 0.5
    %v8717 = vmul.f32 %v8287, 0.5
    %v8718 = vmul.f32 %v8414, 0.5
    %v8719 = vmul.f32 %v8416, 0.5
    %v8720 = vmul.f32 %v8543, 0.5
    %v8721 = vmul.f32 %v8545, 0.5
    %v8722 = vmul.f32 %v8672, 0.5
    %v8723 = vmul.f32 %v8674, 0.5
    %v8724 = vmul.f32 %v7249, 0.70710677
    %v8725 = vmul.f32 %v7251, 0.70710677
    %v8726 = vmul.f32 %v7378, 0.70710677
    %v8727 = vmul.f32 %v7380, 0.70710677
    %v8728 = vmul.f32 %v7507, 0.70710677
    %v8729 = vmul.f32 %v7509, 0.70710677
    %v8730 = vmul.f32 %v7636, 0.70710677
    %v8731 = vmul.f32 %v7638, 0.70710677
    %v8732 = vmul.f32 %v7765, 0.70710677
    %v8733 = vmul.f32 %v7767, 0.70710677
    %v8734 = vmul.f32 %v7894, 0.70710677
    %v8735 = vmul.f32 %v7896, 0.70710677
    %v8736 = vmul.f32 %v8023, 0.70710677
    %v8737 = vmul.f32 %v8025, 0.70710677
    %v8738 = vmul.f32 %v8152, 0.70710677
    %v8739 = vmul.f32 %v8154, 0.70710677
    %v8740 = vmul.f32 %v8281, 0.70710677
    %v8741 = vmul.f32 %v8283, 0.70710677
    %v8742 = vmul.f32 %v8410, 0.70710677
    %v8743 = vmul.f32 %v8412, 0.70710677
    %v8744 = vmul.f32 %v8539, 0.70710677
    %v8745 = vmul.f32 %v8541, 0.70710677
    %v8746 = vmul.f32 %v8668, 0.70710677
    %v8747 = vmul.f32 %v8670, 0.70710677
    %v8748 = vmul.f32 %v7253, 0.70710677
    %v8749 = vmul.f32 %v7255, 0.70710677
    %v8750 = vmul.f32 %v7382, 0.70710677
    %v8751 = vmul.f32 %v7384, 0.70710677
    %v8752 = vmul.f32 %v7511, 0.70710677
    %v8753 = vmul.f32 %v7513, 0.70710677
    %v8754 = vmul.f32 %v7640, 0.70710677
    %v8755 = vmul.f32 %v7642, 0.70710677
    %v8756 = vmul.f32 %v7769, 0.70710677
    %v8757 = vmul.f32 %v7771, 0.70710677
    %v8758 = vmul.f32 %v7898, 0.70710677
    %v8759 = vmul.f32 %v7900, 0.70710677
    %v8760 = vmul.f32 %v8027, 0.70710677
    %v8761 = vmul.f32 %v8029, 0.70710677
    %v8762 = vmul.f32 %v8156, 0.70710677
    %v8763 = vmul.f32 %v8158, 0.70710677
    %v8764 = vmul.f32 %v8285, 0.70710677
    %v8765 = vmul.f32 %v8287, 0.70710677
    %v8766 = vmul.f32 %v8414, 0.70710677
    %v8767 = vmul.f32 %v8416, 0.70710677
    %v8768 = vmul.f32 %v8543, 0.70710677
    %v8769 = vmul.f32 %v8545, 0.70710677
    %v8770 = vmul.f32 %v8672, 0.70710677
    %v8771 = vmul.f32 %v8674, 0.70710677
    %v8772 = verf.f32.pop %v8724
    %v8773 = verf.f32.pop %v8725
    %v8774 = verf.f32.pop %v8726
    %v8775 = verf.f32.pop %v8727
    %v8776 = verf.f32.pop %v8728
    %v8777 = verf.f32.pop %v8729
    %v8778 = verf.f32.pop %v8730
    %v8779 = verf.f32.pop %v8731
    %v8780 = verf.f32.pop %v8732
    %v8781 = verf.f32.pop %v8733
    %v8782 = verf.f32.pop %v8734
    %v8783 = verf.f32.pop %v8735
    %v8784 = verf.f32.pop %v8736
    %v8785 = verf.f32.pop %v8737
    %v8786 = verf.f32.pop %v8738
    %v8787 = verf.f32.pop %v8739
    %v8788 = verf.f32.pop %v8740
    %v8789 = verf.f32.pop %v8741
    %v8790 = verf.f32.pop %v8742
    %v8791 = verf.f32.pop %v8743
    %v8792 = verf.f32.pop %v8744
    %v8793 = verf.f32.pop %v8745
    %v8794 = verf.f32.pop %v8746
    %v8795 = verf.f32.pop %v8747
    %v8796 = verf.f32.pop %v8748
    %v8797 = verf.f32.pop %v8749
    %v8798 = verf.f32.pop %v8750
    %v8799 = verf.f32.pop %v8751
    %v8800 = verf.f32.pop %v8752
    %v8801 = verf.f32.pop %v8753
    %v8802 = verf.f32.pop %v8754
    %v8803 = verf.f32.pop %v8755
    %v8804 = verf.f32.pop %v8756
    %v8805 = verf.f32.pop %v8757
    %v8806 = verf.f32.pop %v8758
    %v8807 = verf.f32.pop %v8759
    %v8808 = verf.f32.pop %v8760
    %v8809 = verf.f32.pop %v8761
    %v8810 = verf.f32.pop %v8762
    %v8811 = verf.f32.pop %v8763
    %v8812 = verf.f32.pop %v8764
    %v8813 = verf.f32.pop %v8765
    %v8814 = verf.f32.pop %v8766
    %v8815 = verf.f32.pop %v8767
    %v8816 = verf.f32.pop %v8768
    %v8817 = verf.f32.pop %v8769
    %v8818 = verf.f32.pop %v8770
    %v8819 = verf.f32.pop %v8771
    %v8820 = vadd.f32 %v8772, 1.0
    %v8821 = vadd.f32 %v8773, 1.0
    %v8822 = vadd.f32 %v8774, 1.0
    %v8823 = vadd.f32 %v8775, 1.0
    %v8824 = vadd.f32 %v8776, 1.0
    %v8825 = vadd.f32 %v8777, 1.0
    %v8826 = vadd.f32 %v8778, 1.0
    %v8827 = vadd.f32 %v8779, 1.0
    %v8828 = vadd.f32 %v8780, 1.0
    %v8829 = vadd.f32 %v8781, 1.0
    %v8830 = vadd.f32 %v8782, 1.0
    %v8831 = vadd.f32 %v8783, 1.0
    %v8832 = vadd.f32 %v8784, 1.0
    %v8833 = vadd.f32 %v8785, 1.0
    %v8834 = vadd.f32 %v8786, 1.0
    %v8835 = vadd.f32 %v8787, 1.0
    %v8836 = vadd.f32 %v8788, 1.0
    %v8837 = vadd.f32 %v8789, 1.0
    %v8838 = vadd.f32 %v8790, 1.0
    %v8839 = vadd.f32 %v8791, 1.0
    %v8840 = vadd.f32 %v8792, 1.0
    %v8841 = vadd.f32 %v8793, 1.0
    %v8842 = vadd.f32 %v8794, 1.0
    %v8843 = vadd.f32 %v8795, 1.0
    %v8844 = vadd.f32 %v8796, 1.0
    %v8845 = vadd.f32 %v8797, 1.0
    %v8846 = vadd.f32 %v8798, 1.0
    %v8847 = vadd.f32 %v8799, 1.0
    %v8848 = vadd.f32 %v8800, 1.0
    %v8849 = vadd.f32 %v8801, 1.0
    %v8850 = vadd.f32 %v8802, 1.0
    %v8851 = vadd.f32 %v8803, 1.0
    %v8852 = vadd.f32 %v8804, 1.0
    %v8853 = vadd.f32 %v8805, 1.0
    %v8854 = vadd.f32 %v8806, 1.0
    %v8855 = vadd.f32 %v8807, 1.0
    %v8856 = vadd.f32 %v8808, 1.0
    %v8857 = vadd.f32 %v8809, 1.0
    %v8858 = vadd.f32 %v8810, 1.0
    %v8859 = vadd.f32 %v8811, 1.0
    %v8860 = vadd.f32 %v8812, 1.0
    %v8861 = vadd.f32 %v8813, 1.0
    %v8862 = vadd.f32 %v8814, 1.0
    %v8863 = vadd.f32 %v8815, 1.0
    %v8864 = vadd.f32 %v8816, 1.0
    %v8865 = vadd.f32 %v8817, 1.0
    %v8866 = vadd.f32 %v8818, 1.0
    %v8867 = vadd.f32 %v8819, 1.0
    %v8868 = vmul.f32 %v8676, %v8820
    %v8869 = vmul.f32 %v8677, %v8821
    %v8870 = vmul.f32 %v8678, %v8822
    %v8871 = vmul.f32 %v8679, %v8823
    %v8872 = vmul.f32 %v8680, %v8824
    %v8873 = vmul.f32 %v8681, %v8825
    %v8874 = vmul.f32 %v8682, %v8826
    %v8875 = vmul.f32 %v8683, %v8827
    %v8876 = vmul.f32 %v8684, %v8828
    %v8877 = vmul.f32 %v8685, %v8829
    %v8878 = vmul.f32 %v8686, %v8830
    %v8879 = vmul.f32 %v8687, %v8831
    %v8880 = vmul.f32 %v8688, %v8832
    %v8881 = vmul.f32 %v8689, %v8833
    %v8882 = vmul.f32 %v8690, %v8834
    %v8883 = vmul.f32 %v8691, %v8835
    %v8884 = vmul.f32 %v8692, %v8836
    %v8885 = vmul.f32 %v8693, %v8837
    %v8886 = vmul.f32 %v8694, %v8838
    %v8887 = vmul.f32 %v8695, %v8839
    %v8888 = vmul.f32 %v8696, %v8840
    %v8889 = vmul.f32 %v8697, %v8841
    %v8890 = vmul.f32 %v8698, %v8842
    %v8891 = vmul.f32 %v8699, %v8843
    %v8892 = vmul.f32 %v8700, %v8844
    %v8893 = vmul.f32 %v8701, %v8845
    %v8894 = vmul.f32 %v8702, %v8846
    %v8895 = vmul.f32 %v8703, %v8847
    %v8896 = vmul.f32 %v8704, %v8848
    %v8897 = vmul.f32 %v8705, %v8849
    %v8898 = vmul.f32 %v8706, %v8850
    %v8899 = vmul.f32 %v8707, %v8851
    %v8900 = vmul.f32 %v8708, %v8852
    %v8901 = vmul.f32 %v8709, %v8853
    %v8902 = vmul.f32 %v8710, %v8854
    %v8903 = vmul.f32 %v8711, %v8855
    %v8904 = vmul.f32 %v8712, %v8856
    %v8905 = vmul.f32 %v8713, %v8857
    %v8906 = vmul.f32 %v8714, %v8858
    %v8907 = vmul.f32 %v8715, %v8859
    %v8908 = vmul.f32 %v8716, %v8860
    %v8909 = vmul.f32 %v8717, %v8861
    %v8910 = vmul.f32 %v8718, %v8862
    %v8911 = vmul.f32 %v8719, %v8863
    %v8912 = vmul.f32 %v8720, %v8864
    %v8913 = vmul.f32 %v8721, %v8865
    %v8914 = vmul.f32 %v8722, %v8866
    %v8915 = vmul.f32 %v8723, %v8867
    %8916 = vst [vmem:[#allocation8] sm:$0xff] %v8868
    %8917 = vst [vmem:[#allocation8 + $0x8] sm:$0xff] %v8869
    %8918 = vst [vmem:[#allocation8 + $0x10] sm:$0xff] %v8870
    %8919 = vst [vmem:[#allocation8 + $0x18] sm:$0xff] %v8871
    %8920 = vst [vmem:[#allocation8 + $0x20] sm:$0xff] %v8872
    %8921 = vst [vmem:[#allocation8 + $0x28] sm:$0xff] %v8873
    %8922 = vst [vmem:[#allocation8 + $0x30] sm:$0xff] %v8874
    %8923 = vst [vmem:[#allocation8 + $0x38] sm:$0xff] %v8875
    %8924 = vst [vmem:[#allocation8 + $0x40] sm:$0xff] %v8876
    %8925 = vst [vmem:[#allocation8 + $0x48] sm:$0xff] %v8877
    %8926 = vst [vmem:[#allocation8 + $0x50] sm:$0xff] %v8878
    %8927 = vst [vmem:[#allocation8 + $0x58] sm:$0xff] %v8879
    %8928 = vst [vmem:[#allocation8 + $0x60] sm:$0xff] %v8880
    %8929 = vst [vmem:[#allocation8 + $0x68] sm:$0xff] %v8881
    %8930 = vst [vmem:[#allocation8 + $0x70] sm:$0xff] %v8882
    %8931 = vst [vmem:[#allocation8 + $0x78] sm:$0xff] %v8883
    %8932 = vst [vmem:[#allocation8 + $0x80] sm:$0xff] %v8884
    %8933 = vst [vmem:[#allocation8 + $0x88] sm:$0xff] %v8885
    %8934 = vst [vmem:[#allocation8 + $0x90] sm:$0xff] %v8886
    %8935 = vst [vmem:[#allocation8 + $0x98] sm:$0xff] %v8887
    %8936 = vst [vmem:[#allocation8 + $0xa0] sm:$0xff] %v8888
    %8937 = vst [vmem:[#allocation8 + $0xa8] sm:$0xff] %v8889
    %8938 = vst [vmem:[#allocation8 + $0xb0] sm:$0xff] %v8890
    %8939 = vst [vmem:[#allocation8 + $0xb8] sm:$0xff] %v8891
    %8940 = vst [vmem:[#allocation8 + $0xc0] sm:$0xff] %v8892
    %8941 = vst [vmem:[#allocation8 + $0xc8] sm:$0xff] %v8893
    %8942 = vst [vmem:[#allocation8 + $0xd0] sm:$0xff] %v8894
    %8943 = vst [vmem:[#allocation8 + $0xd8] sm:$0xff] %v8895
    %8944 = vst [vmem:[#allocation8 + $0xe0] sm:$0xff] %v8896
    %8945 = vst [vmem:[#allocation8 + $0xe8] sm:$0xff] %v8897
    %8946 = vst [vmem:[#allocation8 + $0xf0] sm:$0xff] %v8898
    %8947 = vst [vmem:[#allocation8 + $0xf8] sm:$0xff] %v8899
    %8948 = vst [vmem:[#allocation8 + $0x100] sm:$0xff] %v8900
    %8949 = vst [vmem:[#allocation8 + $0x108] sm:$0xff] %v8901
    %8950 = vst [vmem:[#allocation8 + $0x110] sm:$0xff] %v8902
    %8951 = vst [vmem:[#allocation8 + $0x118] sm:$0xff] %v8903
    %8952 = vst [vmem:[#allocation8 + $0x120] sm:$0xff] %v8904
    %8953 = vst [vmem:[#allocation8 + $0x128] sm:$0xff] %v8905
    %8954 = vst [vmem:[#allocation8 + $0x130] sm:$0xff] %v8906
    %8955 = vst [vmem:[#allocation8 + $0x138] sm:$0xff] %v8907
    %8956 = vst [vmem:[#allocation8 + $0x140] sm:$0xff] %v8908
    %8957 = vst [vmem:[#allocation8 + $0x148] sm:$0xff] %v8909
    %8958 = vst [vmem:[#allocation8 + $0x150] sm:$0xff] %v8910
    %8959 = vst [vmem:[#allocation8 + $0x158] sm:$0xff] %v8911
    %8960 = vst [vmem:[#allocation8 + $0x160] sm:$0xff] %v8912
    %8961 = vst [vmem:[#allocation8 + $0x168] sm:$0xff] %v8913
    %8962 = vst [vmem:[#allocation8 + $0x170] sm:$0xff] %v8914
    %8963 = vst [vmem:[#allocation8 + $0x178] sm:$0xff] %v8915
    // Predicated region
    $region26: #{tpu_custom_call.1} parent=1 // pred_check
      _
    $region27: #{tpu_custom_call.1} parent=1 // pred_check_branch
      %8965 = sbr.rel (0) target = $region29
    $region28: #{tpu_custom_call.1} parent=1 // pred_region
      %s8967 = ssub.s32 6144, 6144
      %8968 = vsyncadd [#allocation4], %s8967
      %s8969 = sshll.u32 [#allocation8], 4
      %s8970 = int_to_ptr.vmem [resolvable:$true] %s8969
      %8975 = dma.vmem_to_hbm [thread:$0]  %s8970, 6144, %s3, [#allocation4], 3072, 3072, 192
    $region29: #{tpu_custom_call.1} parent=1 // pred_fallthru
      _
    // Predicated region
    $region30: #{tpu_custom_call.1} parent=1 // pred_check
      _
    $region31: #{tpu_custom_call.1} parent=1 // pred_check_branch
      %8977 = sbr.rel (0) target = $region33
    $region32: #{tpu_custom_call.1} parent=1 // pred_region
      %8978 = dma.done [#allocation4], 6144
    $region33: #{tpu_custom_call.1} parent=1 // pred_fallthru
      _
    %8979 = vsyncpa [#allocation3], 1
    %8980 = vsyncpa [#allocation6], 1
    %8981 = vsyncpa [#allocation4], 1

</llo_original>
